<compile_context>
chip_gen: v7x
topology: tpu7x:2x2x1
jax: 0.10.0
libtpu: 0.0.40
codegen_flags: <defaults>
</compile_context>

<pallas_src>
import math

import jax
import jax.numpy as jnp
from jax.experimental import pallas as pl
from jax.experimental.pallas import tpu as pltpu

LANE = 128                       # channel dims padded to a multiple of this
HALO = 8                         # interior column offset in the halo scratch (8-aligned)
MATMUL_DTYPE = jnp.bfloat16      # MXU operand dtype; accumulation stays f32
VMEM_BUDGET = 28 * 1024 * 1024   # per-step working-set target for NB selection
VMEM_LIMIT = 48 * 1024 * 1024    # scoped VMEM limit (leaves headroom on v7x's 64 MiB)


def _round_up(n, m=LANE):
    return ((n + m - 1) // m) * m


# ---------------------------------------------------------------------------
# Fused conv3x3 (padding=1) + bias + ReLU [+ 2x2 max-pool] kernel
# ---------------------------------------------------------------------------

def _make_conv_kernel(NB, H, W, Cin, K, Cout, pool, act_dtype, mm_dtype):
    """One batch-block (NB images) x ALL Cout channels per grid step.
       x_ref : (NB, H, W, Cin)            activations (Cin = 3 for the first layer,
                                          otherwise a multiple of 128)
       w_ref : (K, Cout)                  K-stacked weights, (dy,dx,cin) major->minor
       b_ref : (1, Cout)
       o_ref : (NB, H, W, Cout)           or (NB, H//2, W//2, Cout) when pool
       xpad  : (NB, H+2, W+HALO+1, Cin)   halo scratch, interior at [1:H+1, 8:8+W]
       col   : (NB*H*W, K)                im2col column buffer (one big matmul)
    """
    Hh, Wh = H // 2, W // 2
    M = NB * H * W
    Wp = W + HALO + 1
    ktap = 9 * Cin

    def kernel(x_ref, w_ref, b_ref, o_ref, xpad_ref, col_ref):
        # Zero only the halo ring (top/bottom rows + the two read halo columns);
        # the interior is fully overwritten every step anyway.
        xpad_ref[:, 0:1, :, :] = jnp.zeros((NB, 1, Wp, Cin), act_dtype)
        xpad_ref[:, H + 1:H + 2, :, :] = jnp.zeros((NB, 1, Wp, Cin), act_dtype)
        xpad_ref[:, :, HALO - 1:HALO, :] = jnp.zeros((NB, H + 2, 1, Cin), act_dtype)
        xpad_ref[:, :, HALO + W:HALO + W + 1, :] = jnp.zeros((NB, H + 2, 1, Cin), act_dtype)
        # Interior copy at an 8-aligned sublane offset along W.
        xpad_ref[:, 1:H + 1, HALO:HALO + W, :] = x_ref[...]

        # First layer only: zero the padded K tail so uninitialized scratch can't
        # turn the zero weight rows into NaNs.
        if K > ktap:
            col_ref[:, ktap:] = jnp.zeros((M, K - ktap), mm_dtype)

        # Stack the 9 shifted taps into the K-major column buffer: a single matmul
        # with K = 9*Cin (or 128 for the first layer) keeps the MXU deep and busy.
        for t in range(9):
            dy, dx = t // 3, t % 3
            patch = xpad_ref[:, dy:dy + H, HALO - 1 + dx:HALO - 1 + dx + W, :]
            col_ref[:, t * Cin:(t + 1) * Cin] = patch.reshape(M, Cin).astype(mm_dtype)

        acc = jnp.dot(col_ref[...], w_ref[...],
                      preferred_element_type=jnp.float32)                 # (M, Cout) f32
        act = jnp.maximum(acc + b_ref[...].astype(jnp.float32), 0.0)      # bias + ReLU

        if not pool:
            o_ref[...] = act.reshape(NB, H, W, Cout).astype(o_ref.dtype)
        else:
            # Fused 2x2/stride-2 max-pool on the in-register result (no staging).
            a3 = act.reshape(M // 2, 2, Cout)                  # adjacent-w pairs (W even)
            aw = jnp.maximum(a3[:, 0, :], a3[:, 1, :])         # (NB*H*Wh, Cout)
            a4 = aw.reshape(NB * Hh, 2, Wh, Cout)              # adjacent-h pairs
            ph = jnp.maximum(a4[:, 0], a4[:, 1])               # (NB*Hh, Wh, Cout)
            o_ref[...] = ph.reshape(NB, Hh, Wh, Cout).astype(o_ref.dtype)

    return kernel


def _conv_vmem_bytes(NB, H, W, Cin, K, Cout, pool):
    """Pessimistic per-step VMEM estimate (lane dim rounded up to 128)."""
    cin_l = _round_up(Cin)
    act_b = 4
    mm_b = jnp.dtype(MATMUL_DTYPE).itemsize
    Ho, Wo = (H // 2, W // 2) if pool else (H, W)
    xin = 2 * NB * H * W * cin_l * act_b           # double-buffered input block
    out = 2 * NB * Ho * Wo * Cout * act_b          # double-buffered output block
    wgt = 2 * K * Cout * mm_b                      # (fetched once, but 2 buffers)
    xpad = NB * (H + 2) * (W + HALO + 1) * cin_l * act_b
    col = NB * H * W * K * mm_b
    return xin + out + wgt + xpad + col


def _choose_nb(N, H, W, Cin, K, Cout, pool):
    """Images per grid step: largest divisor of N fitting the VMEM budget,
       stopping once the MXU M dimension is ample; prefer >=2 grid steps (v7x)."""
    best = 1
    for nb in range(1, N + 1):
        if N % nb:
            continue
        if _conv_vmem_bytes(nb, H, W, Cin, K, Cout, pool) > VMEM_BUDGET:
            break
        best = nb
        if nb * H * W >= 2048:
            break
    if best == N and N >= 2:
        for d in range(N // 2, 0, -1):
            if N % d == 0 and d * H * W >= 256:
                best = d
                break
    return best


def conv3x3_relu(x, w2d, b, *, pool=False):
    """x: (N, H, W, Cin) f32 (Cin = true channels for the first layer, otherwise a
       multiple of 128); w2d: (K, Cout_p) with K = 9*Cin (padded up to 128 for the
       first layer); b: (1, Cout_p).  Optionally fuses the 2x2/stride-2 max-pool."""
    N, H, W, Cin = x.shape
    K, Cout = w2d.shape
    assert K >= 9 * Cin and Cout % LANE == 0
    if pool:
        assert H % 2 == 0 and W % 2 == 0
    Ho, Wo = (H // 2, W // 2) if pool else (H, W)

    NB = _choose_nb(N, H, W, Cin, K, Cout, pool)
    n_steps = N // NB
    kernel = _make_conv_kernel(NB, H, W, Cin, K, Cout, pool, x.dtype, w2d.dtype)

    flops = 2 * N * H * W * K * Cout
    bytes_acc = (x.size * x.dtype.itemsize
                 + w2d.size * w2d.dtype.itemsize
                 + b.size * b.dtype.itemsize
                 + N * Ho * Wo * Cout * x.dtype.itemsize)

    # TODO(synk): ImageNet-scale H,W (e.g. 224) need an extra spatial-row grid axis
    # with halo re-fetch; blocks here are whole-image, sufficient for CIFAR/64 inputs.
    return pl.pallas_call(
        kernel,
        out_shape=jax.ShapeDtypeStruct((N, Ho, Wo, Cout), x.dtype),
        grid=(n_steps,),
        in_specs=[
            pl.BlockSpec((NB, H, W, Cin), lambda i: (i, 0, 0, 0)),
            pl.BlockSpec((K, Cout), lambda i: (0, 0)),     # weight-stationary
            pl.BlockSpec((1, Cout), lambda i: (0, 0)),
        ],
        out_specs=pl.BlockSpec((NB, Ho, Wo, Cout), lambda i: (i, 0, 0, 0)),
        scratch_shapes=[
            pltpu.VMEM((NB, H + 2, W + HALO + 1, Cin), x.dtype),   # halo buffer
            pltpu.VMEM((NB * H * W, K), w2d.dtype),                # im2col buffer (bf16)
        ],
        compiler_params=pltpu.CompilerParams(
            dimension_semantics=("parallel",),
            vmem_limit_bytes=VMEM_LIMIT),
        cost_estimate=pl.CostEstimate(flops=flops, transcendentals=0,
                                      bytes_accessed=bytes_acc),
    )(x, w2d, b)


# ---------------------------------------------------------------------------
# Fused AdaptiveAvgPool2d((1,1)) + flatten + Linear classifier
# ---------------------------------------------------------------------------

def _avgpool_fc_kernel(x_ref, w_ref, b_ref, o_ref):
    x = x_ref[...].astype(jnp.float32)                 # (N, H, W, C)
    pooled = jnp.mean(x, axis=(1, 2))                  # (N, C)
    o_ref[...] = (jnp.dot(pooled.astype(w_ref.dtype), w_ref[...],
                          preferred_element_type=jnp.float32)
                  + b_ref[...]).astype(o_ref.dtype)


_VMEM = pl.BlockSpec(memory_space=pltpu.MemorySpace.VMEM)


def avgpool_fc(x, w_fc, b_fc):
    N = x.shape[0]
    ncp = w_fc.shape[-1]
    return pl.pallas_call(
        _avgpool_fc_kernel,
        out_shape=jax.ShapeDtypeStruct((N, ncp), x.dtype),
        in_specs=[_VMEM, _VMEM, _VMEM],
        out_specs=_VMEM,
        compiler_params=pltpu.CompilerParams(vmem_limit_bytes=32 * 1024 * 1024),
    )(x, w_fc, b_fc)


# ---------------------------------------------------------------------------
# VGG parameter init (mirrors VGG._initialize_weights) and forward (mode='fc')
# ---------------------------------------------------------------------------

def init_vgg_params(key, cfg_blocks, num_classes, in_channels=3):
    """Weights are stored channel-padded to a multiple of 128 (zero padding keeps
       the math exact) and K-stacked to (9*Cin_p, Cout_p); the FIRST conv keeps its
       true Cin (K = round_up(9*Cin, 128))."""
    blocks = []
    c_in = in_channels
    first = True
    for blk in cfg_blocks:
        convs = []
        for c_out in blk:
            cout_p = _round_up(c_out)
            key, kw = jax.random.split(key)
            std = math.sqrt(2.0 / (3 * 3 * c_out))
            w = std * jax.random.normal(kw, (3, 3, c_in, c_out), jnp.float32)
            if first:
                k_true = 9 * c_in
                k_pad = _round_up(k_true)
                w2d = jnp.zeros((k_pad, cout_p), jnp.float32)
                w2d = w2d.at[:k_true, :c_out].set(w.reshape(k_true, c_out))
            else:
                cin_p = _round_up(c_in)
                w_p = jnp.zeros((3, 3, cin_p, cout_p), jnp.float32)
                w_p = w_p.at[:, :, :c_in, :c_out].set(w)
                w2d = w_p.reshape(9 * cin_p, cout_p)
            bias = jnp.zeros((1, cout_p), jnp.float32)
            convs.append((w2d.astype(MATMUL_DTYPE), bias))
            c_in = c_out
            first = False
        blocks.append(convs)

    cin_p, ncp = _round_up(c_in), _round_up(num_classes)
    key, kw = jax.random.split(key)
    w_fc = 0.01 * jax.random.normal(kw, (c_in, num_classes), jnp.float32)
    w_fc_p = jnp.zeros((cin_p, ncp), jnp.float32).at[:c_in, :num_classes].set(w_fc)
    b_fc = jnp.zeros((1, ncp), jnp.float32)
    return blocks, (w_fc_p.astype(MATMUL_DTYPE), b_fc)


def vgg_forward(x_nchw, params, num_classes):
    """Reproduces VGG.forward(x, mode='fc', is_feat=False).
       In the reference every conv is followed by a ReLU (in-block ReLUs plus the
       explicit F.relu after each block), so conv+bias+ReLU is fused; the 2x2
       max-pool after blocks 0..2 (and after block 3 iff input h == 64) is fused
       into that block's last conv; pool4 + flatten + classifier are one kernel."""
    blocks, (w_fc, b_fc) = params
    h = x_nchw.shape[2]

    x = jnp.transpose(x_nchw, (0, 2, 3, 1))                  # NCHW -> NHWC (glue)
    # No channel pre-padding: the first conv consumes the raw 3 channels, and every
    # conv output is already lane-dense (Cout padded to a multiple of 128).

    pool_after = [True, True, True, h == 64, False]
    for convs, do_pool in zip(blocks, pool_after):
        last = len(convs) - 1
        for i, (w2d, bias) in enumerate(convs):
            x = conv3x3_relu(x, w2d, bias, pool=(do_pool and i == last))

    logits = avgpool_fc(x, w_fc, b_fc)                       # (N, padded num_classes)
    return logits[:, :num_classes]
    # TODO(synk): is_feat / preact feature taps and the 'crosskd' branch are not on
    # the default forward path and are omitted (as is the unused SPP module).


# ---------------------------------------------------------------------------
# Demo
# ---------------------------------------------------------------------------

if __name__ == "__main__":
    key = jax.random.PRNGKey(0)
    kx, kp = jax.random.split(key)

    # Scaled-down 'S' config (one conv per block) at small channel counts.
    cfg_small = [[8], [16], [16], [32], [32]]
    num_classes = 10

    x = jax.random.normal(kx, (2, 3, 16, 16), jnp.float32)   # NCHW like PyTorch
    params = init_vgg_params(kp, cfg_small, num_classes, in_channels=3)

    fwd = jax.jit(lambda inp: vgg_forward(inp, params, num_classes))
    out = fwd(x)
    jax.block_until_ready(out)

    assert out.shape == (2, num_classes), out.shape
    assert out.dtype == jnp.float32
    assert bool(jnp.all(jnp.isfinite(out)))
    print("KERNEL_OK")
</pallas_src>

<mosaic_0001>
module attributes {stable_mosaic.version = 11 : i64} {
  func.func @kernel(%arg0: i32, %arg1: memref<2x8x8x128xf32, #tpu.memory_space<vmem>>, %arg2: memref<1152x128xbf16, #tpu.memory_space<vmem>>, %arg3: memref<1x128xf32, #tpu.memory_space<vmem>>, %arg4: memref<2x4x4x128xf32, #tpu.memory_space<vmem>>, %arg5: memref<2x10x17x128xf32, #tpu.memory_space<vmem>>, %arg6: memref<128x1152xbf16, #tpu.memory_space<vmem>>) attributes {dimension_semantics = [#tpu.dimension_semantics<parallel>], iteration_bounds = array<i64: 1>, scalar_prefetch = 0 : i64, scratch_operands = 2 : i64, tpu.core_type = #tpu.core_type<tc>, window_params = [{transform_indices = @transform_0, window_bounds = array<i64: 2, 8, 8, 128>}, {pipeline_mode = #tpu.pipeline_mode<synchronous>, transform_indices = @transform_1, window_bounds = array<i64: 1152, 128>}, {pipeline_mode = #tpu.pipeline_mode<synchronous>, transform_indices = @transform_2, window_bounds = array<i64: 1, 128>}, {transform_indices = @transform_3, window_bounds = array<i64: 2, 4, 4, 128>}]} {
    %cst = arith.constant 0.000000e+00 : f32
    %0 = vector.broadcast %cst : f32 to vector<2x1x17x128xf32>
    %c0 = arith.constant 0 : index
    %c0_0 = arith.constant 0 : index
    %c0_1 = arith.constant 0 : index
    %c0_2 = arith.constant 0 : index
    %1 = vector.load %arg5[%c0, %c0_0, %c0_1, %c0_2] : memref<2x10x17x128xf32, #tpu.memory_space<vmem>>, vector<2x1x17x128xf32>
    tpu.vector_store %arg5[%c0, %c0_0, %c0_1, %c0_2], %0 {strides = array<i32>} : memref<2x10x17x128xf32, #tpu.memory_space<vmem>>, vector<2x1x17x128xf32>,
    %cst_3 = arith.constant 0.000000e+00 : f32
    %2 = vector.broadcast %cst_3 : f32 to vector<2x1x17x128xf32>
    %c0_4 = arith.constant 0 : index
    %c9 = arith.constant 9 : index
    %c0_5 = arith.constant 0 : index
    %c0_6 = arith.constant 0 : index
    %3 = vector.load %arg5[%c0_4, %c9, %c0_5, %c0_6] : memref<2x10x17x128xf32, #tpu.memory_space<vmem>>, vector<2x1x17x128xf32>
    tpu.vector_store %arg5[%c0_4, %c9, %c0_5, %c0_6], %2 {strides = array<i32>} : memref<2x10x17x128xf32, #tpu.memory_space<vmem>>, vector<2x1x17x128xf32>,
    %cst_7 = arith.constant 0.000000e+00 : f32
    %4 = vector.broadcast %cst_7 : f32 to vector<2x10x1x128xf32>
    %c0_8 = arith.constant 0 : index
    %c0_9 = arith.constant 0 : index
    %c7 = arith.constant 7 : index
    %c0_10 = arith.constant 0 : index
    %5 = vector.load %arg5[%c0_8, %c0_9, %c7, %c0_10] : memref<2x10x17x128xf32, #tpu.memory_space<vmem>>, vector<2x10x1x128xf32>
    tpu.vector_store %arg5[%c0_8, %c0_9, %c7, %c0_10], %4 {strides = array<i32>} : memref<2x10x17x128xf32, #tpu.memory_space<vmem>>, vector<2x10x1x128xf32>,
    %cst_11 = arith.constant 0.000000e+00 : f32
    %6 = vector.broadcast %cst_11 : f32 to vector<2x10x1x128xf32>
    %c0_12 = arith.constant 0 : index
    %c0_13 = arith.constant 0 : index
    %c16 = arith.constant 16 : index
    %c0_14 = arith.constant 0 : index
    %7 = vector.load %arg5[%c0_12, %c0_13, %c16, %c0_14] : memref<2x10x17x128xf32, #tpu.memory_space<vmem>>, vector<2x10x1x128xf32>
    tpu.vector_store %arg5[%c0_12, %c0_13, %c16, %c0_14], %6 {strides = array<i32>} : memref<2x10x17x128xf32, #tpu.memory_space<vmem>>, vector<2x10x1x128xf32>,
    %c0_15 = arith.constant 0 : index
    %c0_16 = arith.constant 0 : index
    %c0_17 = arith.constant 0 : index
    %c0_18 = arith.constant 0 : index
    %8 = vector.load %arg1[%c0_15, %c0_16, %c0_17, %c0_18] : memref<2x8x8x128xf32, #tpu.memory_space<vmem>>, vector<2x8x8x128xf32>
    %c0_19 = arith.constant 0 : index
    %c1 = arith.constant 1 : index
    %c8 = arith.constant 8 : index
    %c0_20 = arith.constant 0 : index
    %9 = vector.load %arg5[%c0_19, %c1, %c8, %c0_20] : memref<2x10x17x128xf32, #tpu.memory_space<vmem>>, vector<2x8x8x128xf32>
    tpu.vector_store %arg5[%c0_19, %c1, %c8, %c0_20], %8 {strides = array<i32>} : memref<2x10x17x128xf32, #tpu.memory_space<vmem>>, vector<2x8x8x128xf32>,
    %c0_21 = arith.constant 0 : index
    %c0_22 = arith.constant 0 : index
    %c7_23 = arith.constant 7 : index
    %c0_24 = arith.constant 0 : index
    %10 = vector.load %arg5[%c0_21, %c0_22, %c7_23, %c0_24] : memref<2x10x17x128xf32, #tpu.memory_space<vmem>>, vector<2x8x8x128xf32>
    %11 = vector.shape_cast %10 : vector<2x8x8x128xf32> to vector<128x128xf32>
    %12 = arith.truncf %11 : vector<128x128xf32> to vector<128x128xbf16>
    %c0_25 = arith.constant 0 : index
    %c0_26 = arith.constant 0 : index
    %13 = vector.load %arg6[%c0_25, %c0_26] : memref<128x1152xbf16, #tpu.memory_space<vmem>>, vector<128x128xbf16>
    tpu.vector_store %arg6[%c0_25, %c0_26], %12 {strides = array<i32>} : memref<128x1152xbf16, #tpu.memory_space<vmem>>, vector<128x128xbf16>,
    %c0_27 = arith.constant 0 : index
    %c0_28 = arith.constant 0 : index
    %c8_29 = arith.constant 8 : index
    %c0_30 = arith.constant 0 : index
    %14 = vector.load %arg5[%c0_27, %c0_28, %c8_29, %c0_30] : memref<2x10x17x128xf32, #tpu.memory_space<vmem>>, vector<2x8x8x128xf32>
    %15 = vector.shape_cast %14 : vector<2x8x8x128xf32> to vector<128x128xf32>
    %16 = arith.truncf %15 : vector<128x128xf32> to vector<128x128xbf16>
    %c0_31 = arith.constant 0 : index
    %c128 = arith.constant 128 : index
    %17 = vector.load %arg6[%c0_31, %c128] : memref<128x1152xbf16, #tpu.memory_space<vmem>>, vector<128x128xbf16>
    tpu.vector_store %arg6[%c0_31, %c128], %16 {strides = array<i32>} : memref<128x1152xbf16, #tpu.memory_space<vmem>>, vector<128x128xbf16>,
    %c0_32 = arith.constant 0 : index
    %c0_33 = arith.constant 0 : index
    %c9_34 = arith.constant 9 : index
    %c0_35 = arith.constant 0 : index
    %18 = vector.load %arg5[%c0_32, %c0_33, %c9_34, %c0_35] : memref<2x10x17x128xf32, #tpu.memory_space<vmem>>, vector<2x8x8x128xf32>
    %19 = vector.shape_cast %18 : vector<2x8x8x128xf32> to vector<128x128xf32>
    %20 = arith.truncf %19 : vector<128x128xf32> to vector<128x128xbf16>
    %c0_36 = arith.constant 0 : index
    %c256 = arith.constant 256 : index
    %21 = vector.load %arg6[%c0_36, %c256] : memref<128x1152xbf16, #tpu.memory_space<vmem>>, vector<128x128xbf16>
    tpu.vector_store %arg6[%c0_36, %c256], %20 {strides = array<i32>} : memref<128x1152xbf16, #tpu.memory_space<vmem>>, vector<128x128xbf16>,
    %c0_37 = arith.constant 0 : index
    %c1_38 = arith.constant 1 : index
    %c7_39 = arith.constant 7 : index
    %c0_40 = arith.constant 0 : index
    %22 = vector.load %arg5[%c0_37, %c1_38, %c7_39, %c0_40] : memref<2x10x17x128xf32, #tpu.memory_space<vmem>>, vector<2x8x8x128xf32>
    %23 = vector.shape_cast %22 : vector<2x8x8x128xf32> to vector<128x128xf32>
    %24 = arith.truncf %23 : vector<128x128xf32> to vector<128x128xbf16>
    %c0_41 = arith.constant 0 : index
    %c384 = arith.constant 384 : index
    %25 = vector.load %arg6[%c0_41, %c384] : memref<128x1152xbf16, #tpu.memory_space<vmem>>, vector<128x128xbf16>
    tpu.vector_store %arg6[%c0_41, %c384], %24 {strides = array<i32>} : memref<128x1152xbf16, #tpu.memory_space<vmem>>, vector<128x128xbf16>,
    %c0_42 = arith.constant 0 : index
    %c1_43 = arith.constant 1 : index
    %c8_44 = arith.constant 8 : index
    %c0_45 = arith.constant 0 : index
    %26 = vector.load %arg5[%c0_42, %c1_43, %c8_44, %c0_45] : memref<2x10x17x128xf32, #tpu.memory_space<vmem>>, vector<2x8x8x128xf32>
    %27 = vector.shape_cast %26 : vector<2x8x8x128xf32> to vector<128x128xf32>
    %28 = arith.truncf %27 : vector<128x128xf32> to vector<128x128xbf16>
    %c0_46 = arith.constant 0 : index
    %c512 = arith.constant 512 : index
    %29 = vector.load %arg6[%c0_46, %c512] : memref<128x1152xbf16, #tpu.memory_space<vmem>>, vector<128x128xbf16>
    tpu.vector_store %arg6[%c0_46, %c512], %28 {strides = array<i32>} : memref<128x1152xbf16, #tpu.memory_space<vmem>>, vector<128x128xbf16>,
    %c0_47 = arith.constant 0 : index
    %c1_48 = arith.constant 1 : index
    %c9_49 = arith.constant 9 : index
    %c0_50 = arith.constant 0 : index
    %30 = vector.load %arg5[%c0_47, %c1_48, %c9_49, %c0_50] : memref<2x10x17x128xf32, #tpu.memory_space<vmem>>, vector<2x8x8x128xf32>
    %31 = vector.shape_cast %30 : vector<2x8x8x128xf32> to vector<128x128xf32>
    %32 = arith.truncf %31 : vector<128x128xf32> to vector<128x128xbf16>
    %c0_51 = arith.constant 0 : index
    %c640 = arith.constant 640 : index
    %33 = vector.load %arg6[%c0_51, %c640] : memref<128x1152xbf16, #tpu.memory_space<vmem>>, vector<128x128xbf16>
    tpu.vector_store %arg6[%c0_51, %c640], %32 {strides = array<i32>} : memref<128x1152xbf16, #tpu.memory_space<vmem>>, vector<128x128xbf16>,
    %c0_52 = arith.constant 0 : index
    %c2 = arith.constant 2 : index
    %c7_53 = arith.constant 7 : index
    %c0_54 = arith.constant 0 : index
    %34 = vector.load %arg5[%c0_52, %c2, %c7_53, %c0_54] : memref<2x10x17x128xf32, #tpu.memory_space<vmem>>, vector<2x8x8x128xf32>
    %35 = vector.shape_cast %34 : vector<2x8x8x128xf32> to vector<128x128xf32>
    %36 = arith.truncf %35 : vector<128x128xf32> to vector<128x128xbf16>
    %c0_55 = arith.constant 0 : index
    %c768 = arith.constant 768 : index
    %37 = vector.load %arg6[%c0_55, %c768] : memref<128x1152xbf16, #tpu.memory_space<vmem>>, vector<128x128xbf16>
    tpu.vector_store %arg6[%c0_55, %c768], %36 {strides = array<i32>} : memref<128x1152xbf16, #tpu.memory_space<vmem>>, vector<128x128xbf16>,
    %c0_56 = arith.constant 0 : index
    %c2_57 = arith.constant 2 : index
    %c8_58 = arith.constant 8 : index
    %c0_59 = arith.constant 0 : index
    %38 = vector.load %arg5[%c0_56, %c2_57, %c8_58, %c0_59] : memref<2x10x17x128xf32, #tpu.memory_space<vmem>>, vector<2x8x8x128xf32>
    %39 = vector.shape_cast %38 : vector<2x8x8x128xf32> to vector<128x128xf32>
    %40 = arith.truncf %39 : vector<128x128xf32> to vector<128x128xbf16>
    %c0_60 = arith.constant 0 : index
    %c896 = arith.constant 896 : index
    %41 = vector.load %arg6[%c0_60, %c896] : memref<128x1152xbf16, #tpu.memory_space<vmem>>, vector<128x128xbf16>
    tpu.vector_store %arg6[%c0_60, %c896], %40 {strides = array<i32>} : memref<128x1152xbf16, #tpu.memory_space<vmem>>, vector<128x128xbf16>,
    %c0_61 = arith.constant 0 : index
    %c2_62 = arith.constant 2 : index
    %c9_63 = arith.constant 9 : index
    %c0_64 = arith.constant 0 : index
    %42 = vector.load %arg5[%c0_61, %c2_62, %c9_63, %c0_64] : memref<2x10x17x128xf32, #tpu.memory_space<vmem>>, vector<2x8x8x128xf32>
    %43 = vector.shape_cast %42 : vector<2x8x8x128xf32> to vector<128x128xf32>
    %44 = arith.truncf %43 : vector<128x128xf32> to vector<128x128xbf16>
    %c0_65 = arith.constant 0 : index
    %c1024 = arith.constant 1024 : index
    %45 = vector.load %arg6[%c0_65, %c1024] : memref<128x1152xbf16, #tpu.memory_space<vmem>>, vector<128x128xbf16>
    tpu.vector_store %arg6[%c0_65, %c1024], %44 {strides = array<i32>} : memref<128x1152xbf16, #tpu.memory_space<vmem>>, vector<128x128xbf16>,
    %c0_66 = arith.constant 0 : index
    %c0_67 = arith.constant 0 : index
    %46 = vector.load %arg6[%c0_66, %c0_67] : memref<128x1152xbf16, #tpu.memory_space<vmem>>, vector<128x1152xbf16>
    %c0_68 = arith.constant 0 : index
    %c0_69 = arith.constant 0 : index
    %47 = vector.load %arg2[%c0_68, %c0_69] : memref<1152x128xbf16, #tpu.memory_space<vmem>>, vector<1152x128xbf16>
    %cst_70 = arith.constant dense<0.000000e+00> : vector<128x128xf32>
    %48 = tpu.matmul %46, %47, %cst_70 {dimension_numbers = #tpu.dot_dimension_numbers<[1], [0], [0], [1], [0, 0, 1, 1], [], []>} : vector<128x1152xbf16>, vector<1152x128xbf16>, vector<128x128xf32> -> vector<128x128xf32>
    %c0_71 = arith.constant 0 : index
    %c0_72 = arith.constant 0 : index
    %49 = vector.load %arg3[%c0_71, %c0_72] : memref<1x128xf32, #tpu.memory_space<vmem>>, vector<1x128xf32>
    %50 = vector.broadcast %49 : vector<1x128xf32> to vector<128x128xf32>
    %51 = arith.addf %48, %50 : vector<128x128xf32>
    %cst_73 = arith.constant 0.000000e+00 : f32
    %52 = vector.broadcast %cst_73 : f32 to vector<128x128xf32>
    %53 = arith.maximumf %51, %52 : vector<128x128xf32>
    %54 = vector.shape_cast %53 : vector<128x128xf32> to vector<64x2x128xf32>
    %55 = vector.extract_strided_slice %54 {offsets = [0, 0, 0], sizes = [64, 1, 128], strides = [1, 1, 1]} : vector<64x2x128xf32> to vector<64x1x128xf32>
    %56 = vector.shape_cast %55 : vector<64x1x128xf32> to vector<64x128xf32>
    %57 = vector.extract_strided_slice %54 {offsets = [0, 1, 0], sizes = [64, 1, 128], strides = [1, 1, 1]} : vector<64x2x128xf32> to vector<64x1x128xf32>
    %58 = vector.shape_cast %57 : vector<64x1x128xf32> to vector<64x128xf32>
    %59 = arith.maximumf %56, %58 : vector<64x128xf32>
    %60 = vector.shape_cast %59 : vector<64x128xf32> to vector<8x2x4x128xf32>
    %61 = vector.extract_strided_slice %60 {offsets = [0, 0, 0, 0], sizes = [8, 1, 4, 128], strides = [1, 1, 1, 1]} : vector<8x2x4x128xf32> to vector<8x1x4x128xf32>
    %62 = vector.shape_cast %61 : vector<8x1x4x128xf32> to vector<8x4x128xf32>
    %63 = vector.extract_strided_slice %60 {offsets = [0, 1, 0, 0], sizes = [8, 1, 4, 128], strides = [1, 1, 1, 1]} : vector<8x2x4x128xf32> to vector<8x1x4x128xf32>
    %64 = vector.shape_cast %63 : vector<8x1x4x128xf32> to vector<8x4x128xf32>
    %65 = arith.maximumf %62, %64 : vector<8x4x128xf32>
    %66 = vector.shape_cast %65 : vector<8x4x128xf32> to vector<2x4x4x128xf32>
    %c0_74 = arith.constant 0 : index
    %c0_75 = arith.constant 0 : index
    %c0_76 = arith.constant 0 : index
    %c0_77 = arith.constant 0 : index
    %67 = vector.load %arg4[%c0_74, %c0_75, %c0_76, %c0_77] : memref<2x4x4x128xf32, #tpu.memory_space<vmem>>, vector<2x4x4x128xf32>
    tpu.vector_store %arg4[%c0_74, %c0_75, %c0_76, %c0_77], %66 {strides = array<i32>} : memref<2x4x4x128xf32, #tpu.memory_space<vmem>>, vector<2x4x4x128xf32>,
    return
  }
  func.func @transform_0(%arg0: i32) -> (i32, i32, i32, i32) {
    %c0_i32 = arith.constant 0 : i32
    %c0_i32_0 = arith.constant 0 : i32
    %c0_i32_1 = arith.constant 0 : i32
    %c0_i32_2 = arith.constant 0 : i32
    return %arg0, %c0_i32, %c0_i32_0, %c0_i32_1 : i32, i32, i32, i32
  }
  func.func @transform_1(%arg0: i32) -> (i32, i32) {
    %c0_i32 = arith.constant 0 : i32
    %c0_i32_0 = arith.constant 0 : i32
    %c0_i32_1 = arith.constant 0 : i32
    return %c0_i32, %c0_i32_0 : i32, i32
  }
  func.func @transform_2(%arg0: i32) -> (i32, i32) {
    %c0_i32 = arith.constant 0 : i32
    %c0_i32_0 = arith.constant 0 : i32
    %c0_i32_1 = arith.constant 0 : i32
    return %c0_i32, %c0_i32_0 : i32, i32
  }
  func.func @transform_3(%arg0: i32) -> (i32, i32, i32, i32) {
    %c0_i32 = arith.constant 0 : i32
    %c0_i32_0 = arith.constant 0 : i32
    %c0_i32_1 = arith.constant 0 : i32
    %c0_i32_2 = arith.constant 0 : i32
    return %arg0, %c0_i32, %c0_i32_0, %c0_i32_1 : i32, i32, i32, i32
  }
}

module attributes {stable_mosaic.version = 11 : i64} {
  func.func @kernel(%arg0: i32, %arg1: memref<1x16x16x3xf32, #tpu.memory_space<vmem>>, %arg2: memref<128x128xbf16, #tpu.memory_space<vmem>>, %arg3: memref<1x128xf32, #tpu.memory_space<vmem>>, %arg4: memref<1x8x8x128xf32, #tpu.memory_space<vmem>>, %arg5: memref<1x18x25x3xf32, #tpu.memory_space<vmem>>, %arg6: memref<256x128xbf16, #tpu.memory_space<vmem>>) attributes {dimension_semantics = [#tpu.dimension_semantics<parallel>], iteration_bounds = array<i64: 2>, scalar_prefetch = 0 : i64, scratch_operands = 2 : i64, tpu.core_type = #tpu.core_type<tc>, window_params = [{transform_indices = @transform_0, window_bounds = array<i64: 1, 16, 16, 3>}, {pipeline_mode = #tpu.pipeline_mode<synchronous>, transform_indices = @transform_1, window_bounds = array<i64: 128, 128>}, {pipeline_mode = #tpu.pipeline_mode<synchronous>, transform_indices = @transform_2, window_bounds = array<i64: 1, 128>}, {transform_indices = @transform_3, window_bounds = array<i64: 1, 8, 8, 128>}]} {
    %cst = arith.constant 0.000000e+00 : f32
    %0 = vector.broadcast %cst : f32 to vector<1x1x25x3xf32>
    %c0 = arith.constant 0 : index
    %c0_0 = arith.constant 0 : index
    %c0_1 = arith.constant 0 : index
    %c0_2 = arith.constant 0 : index
    %1 = vector.load %arg5[%c0, %c0_0, %c0_1, %c0_2] : memref<1x18x25x3xf32, #tpu.memory_space<vmem>>, vector<1x1x25x3xf32>
    tpu.vector_store %arg5[%c0, %c0_0, %c0_1, %c0_2], %0 {strides = array<i32>} : memref<1x18x25x3xf32, #tpu.memory_space<vmem>>, vector<1x1x25x3xf32>,
    %cst_3 = arith.constant 0.000000e+00 : f32
    %2 = vector.broadcast %cst_3 : f32 to vector<1x1x25x3xf32>
    %c0_4 = arith.constant 0 : index
    %c17 = arith.constant 17 : index
    %c0_5 = arith.constant 0 : index
    %c0_6 = arith.constant 0 : index
    %3 = vector.load %arg5[%c0_4, %c17, %c0_5, %c0_6] : memref<1x18x25x3xf32, #tpu.memory_space<vmem>>, vector<1x1x25x3xf32>
    tpu.vector_store %arg5[%c0_4, %c17, %c0_5, %c0_6], %2 {strides = array<i32>} : memref<1x18x25x3xf32, #tpu.memory_space<vmem>>, vector<1x1x25x3xf32>,
    %cst_7 = arith.constant 0.000000e+00 : f32
    %4 = vector.broadcast %cst_7 : f32 to vector<1x18x1x3xf32>
    %c0_8 = arith.constant 0 : index
    %c0_9 = arith.constant 0 : index
    %c7 = arith.constant 7 : index
    %c0_10 = arith.constant 0 : index
    %5 = vector.load %arg5[%c0_8, %c0_9, %c7, %c0_10] : memref<1x18x25x3xf32, #tpu.memory_space<vmem>>, vector<1x18x1x3xf32>
    tpu.vector_store %arg5[%c0_8, %c0_9, %c7, %c0_10], %4 {strides = array<i32>} : memref<1x18x25x3xf32, #tpu.memory_space<vmem>>, vector<1x18x1x3xf32>,
    %cst_11 = arith.constant 0.000000e+00 : f32
    %6 = vector.broadcast %cst_11 : f32 to vector<1x18x1x3xf32>
    %c0_12 = arith.constant 0 : index
    %c0_13 = arith.constant 0 : index
    %c24 = arith.constant 24 : index
    %c0_14 = arith.constant 0 : index
    %7 = vector.load %arg5[%c0_12, %c0_13, %c24, %c0_14] : memref<1x18x25x3xf32, #tpu.memory_space<vmem>>, vector<1x18x1x3xf32>
    tpu.vector_store %arg5[%c0_12, %c0_13, %c24, %c0_14], %6 {strides = array<i32>} : memref<1x18x25x3xf32, #tpu.memory_space<vmem>>, vector<1x18x1x3xf32>,
    %c0_15 = arith.constant 0 : index
    %c0_16 = arith.constant 0 : index
    %c0_17 = arith.constant 0 : index
    %c0_18 = arith.constant 0 : index
    %8 = vector.load %arg1[%c0_15, %c0_16, %c0_17, %c0_18] : memref<1x16x16x3xf32, #tpu.memory_space<vmem>>, vector<1x16x16x3xf32>
    %c0_19 = arith.constant 0 : index
    %c1 = arith.constant 1 : index
    %c8 = arith.constant 8 : index
    %c0_20 = arith.constant 0 : index
    %9 = vector.load %arg5[%c0_19, %c1, %c8, %c0_20] : memref<1x18x25x3xf32, #tpu.memory_space<vmem>>, vector<1x16x16x3xf32>
    tpu.vector_store %arg5[%c0_19, %c1, %c8, %c0_20], %8 {strides = array<i32>} : memref<1x18x25x3xf32, #tpu.memory_space<vmem>>, vector<1x16x16x3xf32>,
    %cst_21 = arith.constant 0.000000e+00 : bf16
    %10 = vector.broadcast %cst_21 : bf16 to vector<256x101xbf16>
    %c0_22 = arith.constant 0 : index
    %c27 = arith.constant 27 : index
    %11 = vector.load %arg6[%c0_22, %c27] : memref<256x128xbf16, #tpu.memory_space<vmem>>, vector<256x101xbf16>
    tpu.vector_store %arg6[%c0_22, %c27], %10 {strides = array<i32>} : memref<256x128xbf16, #tpu.memory_space<vmem>>, vector<256x101xbf16>,
    %c0_23 = arith.constant 0 : index
    %c0_24 = arith.constant 0 : index
    %c7_25 = arith.constant 7 : index
    %c0_26 = arith.constant 0 : index
    %12 = vector.load %arg5[%c0_23, %c0_24, %c7_25, %c0_26] : memref<1x18x25x3xf32, #tpu.memory_space<vmem>>, vector<1x16x16x3xf32>
    %13 = vector.shape_cast %12 : vector<1x16x16x3xf32> to vector<256x3xf32>
    %14 = arith.truncf %13 : vector<256x3xf32> to vector<256x3xbf16>
    %c0_27 = arith.constant 0 : index
    %c0_28 = arith.constant 0 : index
    %15 = vector.load %arg6[%c0_27, %c0_28] : memref<256x128xbf16, #tpu.memory_space<vmem>>, vector<256x3xbf16>
    tpu.vector_store %arg6[%c0_27, %c0_28], %14 {strides = array<i32>} : memref<256x128xbf16, #tpu.memory_space<vmem>>, vector<256x3xbf16>,
    %c0_29 = arith.constant 0 : index
    %c0_30 = arith.constant 0 : index
    %c8_31 = arith.constant 8 : index
    %c0_32 = arith.constant 0 : index
    %16 = vector.load %arg5[%c0_29, %c0_30, %c8_31, %c0_32] : memref<1x18x25x3xf32, #tpu.memory_space<vmem>>, vector<1x16x16x3xf32>
    %17 = vector.shape_cast %16 : vector<1x16x16x3xf32> to vector<256x3xf32>
    %18 = arith.truncf %17 : vector<256x3xf32> to vector<256x3xbf16>
    %c0_33 = arith.constant 0 : index
    %c3 = arith.constant 3 : index
    %19 = vector.load %arg6[%c0_33, %c3] : memref<256x128xbf16, #tpu.memory_space<vmem>>, vector<256x3xbf16>
    tpu.vector_store %arg6[%c0_33, %c3], %18 {strides = array<i32>} : memref<256x128xbf16, #tpu.memory_space<vmem>>, vector<256x3xbf16>,
    %c0_34 = arith.constant 0 : index
    %c0_35 = arith.constant 0 : index
    %c9 = arith.constant 9 : index
    %c0_36 = arith.constant 0 : index
    %20 = vector.load %arg5[%c0_34, %c0_35, %c9, %c0_36] : memref<1x18x25x3xf32, #tpu.memory_space<vmem>>, vector<1x16x16x3xf32>
    %21 = vector.shape_cast %20 : vector<1x16x16x3xf32> to vector<256x3xf32>
    %22 = arith.truncf %21 : vector<256x3xf32> to vector<256x3xbf16>
    %c0_37 = arith.constant 0 : index
    %c6 = arith.constant 6 : index
    %23 = vector.load %arg6[%c0_37, %c6] : memref<256x128xbf16, #tpu.memory_space<vmem>>, vector<256x3xbf16>
    tpu.vector_store %arg6[%c0_37, %c6], %22 {strides = array<i32>} : memref<256x128xbf16, #tpu.memory_space<vmem>>, vector<256x3xbf16>,
    %c0_38 = arith.constant 0 : index
    %c1_39 = arith.constant 1 : index
    %c7_40 = arith.constant 7 : index
    %c0_41 = arith.constant 0 : index
    %24 = vector.load %arg5[%c0_38, %c1_39, %c7_40, %c0_41] : memref<1x18x25x3xf32, #tpu.memory_space<vmem>>, vector<1x16x16x3xf32>
    %25 = vector.shape_cast %24 : vector<1x16x16x3xf32> to vector<256x3xf32>
    %26 = arith.truncf %25 : vector<256x3xf32> to vector<256x3xbf16>
    %c0_42 = arith.constant 0 : index
    %c9_43 = arith.constant 9 : index
    %27 = vector.load %arg6[%c0_42, %c9_43] : memref<256x128xbf16, #tpu.memory_space<vmem>>, vector<256x3xbf16>
    tpu.vector_store %arg6[%c0_42, %c9_43], %26 {strides = array<i32>} : memref<256x128xbf16, #tpu.memory_space<vmem>>, vector<256x3xbf16>,
    %c0_44 = arith.constant 0 : index
    %c1_45 = arith.constant 1 : index
    %c8_46 = arith.constant 8 : index
    %c0_47 = arith.constant 0 : index
    %28 = vector.load %arg5[%c0_44, %c1_45, %c8_46, %c0_47] : memref<1x18x25x3xf32, #tpu.memory_space<vmem>>, vector<1x16x16x3xf32>
    %29 = vector.shape_cast %28 : vector<1x16x16x3xf32> to vector<256x3xf32>
    %30 = arith.truncf %29 : vector<256x3xf32> to vector<256x3xbf16>
    %c0_48 = arith.constant 0 : index
    %c12 = arith.constant 12 : index
    %31 = vector.load %arg6[%c0_48, %c12] : memref<256x128xbf16, #tpu.memory_space<vmem>>, vector<256x3xbf16>
    tpu.vector_store %arg6[%c0_48, %c12], %30 {strides = array<i32>} : memref<256x128xbf16, #tpu.memory_space<vmem>>, vector<256x3xbf16>,
    %c0_49 = arith.constant 0 : index
    %c1_50 = arith.constant 1 : index
    %c9_51 = arith.constant 9 : index
    %c0_52 = arith.constant 0 : index
    %32 = vector.load %arg5[%c0_49, %c1_50, %c9_51, %c0_52] : memref<1x18x25x3xf32, #tpu.memory_space<vmem>>, vector<1x16x16x3xf32>
    %33 = vector.shape_cast %32 : vector<1x16x16x3xf32> to vector<256x3xf32>
    %34 = arith.truncf %33 : vector<256x3xf32> to vector<256x3xbf16>
    %c0_53 = arith.constant 0 : index
    %c15 = arith.constant 15 : index
    %35 = vector.load %arg6[%c0_53, %c15] : memref<256x128xbf16, #tpu.memory_space<vmem>>, vector<256x3xbf16>
    tpu.vector_store %arg6[%c0_53, %c15], %34 {strides = array<i32>} : memref<256x128xbf16, #tpu.memory_space<vmem>>, vector<256x3xbf16>,
    %c0_54 = arith.constant 0 : index
    %c2 = arith.constant 2 : index
    %c7_55 = arith.constant 7 : index
    %c0_56 = arith.constant 0 : index
    %36 = vector.load %arg5[%c0_54, %c2, %c7_55, %c0_56] : memref<1x18x25x3xf32, #tpu.memory_space<vmem>>, vector<1x16x16x3xf32>
    %37 = vector.shape_cast %36 : vector<1x16x16x3xf32> to vector<256x3xf32>
    %38 = arith.truncf %37 : vector<256x3xf32> to vector<256x3xbf16>
    %c0_57 = arith.constant 0 : index
    %c18 = arith.constant 18 : index
    %39 = vector.load %arg6[%c0_57, %c18] : memref<256x128xbf16, #tpu.memory_space<vmem>>, vector<256x3xbf16>
    tpu.vector_store %arg6[%c0_57, %c18], %38 {strides = array<i32>} : memref<256x128xbf16, #tpu.memory_space<vmem>>, vector<256x3xbf16>,
    %c0_58 = arith.constant 0 : index
    %c2_59 = arith.constant 2 : index
    %c8_60 = arith.constant 8 : index
    %c0_61 = arith.constant 0 : index
    %40 = vector.load %arg5[%c0_58, %c2_59, %c8_60, %c0_61] : memref<1x18x25x3xf32, #tpu.memory_space<vmem>>, vector<1x16x16x3xf32>
    %41 = vector.shape_cast %40 : vector<1x16x16x3xf32> to vector<256x3xf32>
    %42 = arith.truncf %41 : vector<256x3xf32> to vector<256x3xbf16>
    %c0_62 = arith.constant 0 : index
    %c21 = arith.constant 21 : index
    %43 = vector.load %arg6[%c0_62, %c21] : memref<256x128xbf16, #tpu.memory_space<vmem>>, vector<256x3xbf16>
    tpu.vector_store %arg6[%c0_62, %c21], %42 {strides = array<i32>} : memref<256x128xbf16, #tpu.memory_space<vmem>>, vector<256x3xbf16>,
    %c0_63 = arith.constant 0 : index
    %c2_64 = arith.constant 2 : index
    %c9_65 = arith.constant 9 : index
    %c0_66 = arith.constant 0 : index
    %44 = vector.load %arg5[%c0_63, %c2_64, %c9_65, %c0_66] : memref<1x18x25x3xf32, #tpu.memory_space<vmem>>, vector<1x16x16x3xf32>
    %45 = vector.shape_cast %44 : vector<1x16x16x3xf32> to vector<256x3xf32>
    %46 = arith.truncf %45 : vector<256x3xf32> to vector<256x3xbf16>
    %c0_67 = arith.constant 0 : index
    %c24_68 = arith.constant 24 : index
    %47 = vector.load %arg6[%c0_67, %c24_68] : memref<256x128xbf16, #tpu.memory_space<vmem>>, vector<256x3xbf16>
    tpu.vector_store %arg6[%c0_67, %c24_68], %46 {strides = array<i32>} : memref<256x128xbf16, #tpu.memory_space<vmem>>, vector<256x3xbf16>,
    %c0_69 = arith.constant 0 : index
    %c0_70 = arith.constant 0 : index
    %48 = vector.load %arg6[%c0_69, %c0_70] : memref<256x128xbf16, #tpu.memory_space<vmem>>, vector<256x128xbf16>
    %c0_71 = arith.constant 0 : index
    %c0_72 = arith.constant 0 : index
    %49 = vector.load %arg2[%c0_71, %c0_72] : memref<128x128xbf16, #tpu.memory_space<vmem>>, vector<128x128xbf16>
    %cst_73 = arith.constant dense<0.000000e+00> : vector<256x128xf32>
    %50 = tpu.matmul %48, %49, %cst_73 {dimension_numbers = #tpu.dot_dimension_numbers<[1], [0], [0], [1], [0, 0, 1, 1], [], []>} : vector<256x128xbf16>, vector<128x128xbf16>, vector<256x128xf32> -> vector<256x128xf32>
    %c0_74 = arith.constant 0 : index
    %c0_75 = arith.constant 0 : index
    %51 = vector.load %arg3[%c0_74, %c0_75] : memref<1x128xf32, #tpu.memory_space<vmem>>, vector<1x128xf32>
    %52 = vector.broadcast %51 : vector<1x128xf32> to vector<256x128xf32>
    %53 = arith.addf %50, %52 : vector<256x128xf32>
    %cst_76 = arith.constant 0.000000e+00 : f32
    %54 = vector.broadcast %cst_76 : f32 to vector<256x128xf32>
    %55 = arith.maximumf %53, %54 : vector<256x128xf32>
    %56 = vector.shape_cast %55 : vector<256x128xf32> to vector<128x2x128xf32>
    %57 = vector.extract_strided_slice %56 {offsets = [0, 0, 0], sizes = [128, 1, 128], strides = [1, 1, 1]} : vector<128x2x128xf32> to vector<128x1x128xf32>
    %58 = vector.shape_cast %57 : vector<128x1x128xf32> to vector<128x128xf32>
    %59 = vector.extract_strided_slice %56 {offsets = [0, 1, 0], sizes = [128, 1, 128], strides = [1, 1, 1]} : vector<128x2x128xf32> to vector<128x1x128xf32>
    %60 = vector.shape_cast %59 : vector<128x1x128xf32> to vector<128x128xf32>
    %61 = arith.maximumf %58, %60 : vector<128x128xf32>
    %62 = vector.shape_cast %61 : vector<128x128xf32> to vector<8x2x8x128xf32>
    %63 = vector.extract_strided_slice %62 {offsets = [0, 0, 0, 0], sizes = [8, 1, 8, 128], strides = [1, 1, 1, 1]} : vector<8x2x8x128xf32> to vector<8x1x8x128xf32>
    %64 = vector.shape_cast %63 : vector<8x1x8x128xf32> to vector<8x8x128xf32>
    %65 = vector.extract_strided_slice %62 {offsets = [0, 1, 0, 0], sizes = [8, 1, 8, 128], strides = [1, 1, 1, 1]} : vector<8x2x8x128xf32> to vector<8x1x8x128xf32>
    %66 = vector.shape_cast %65 : vector<8x1x8x128xf32> to vector<8x8x128xf32>
    %67 = arith.maximumf %64, %66 : vector<8x8x128xf32>
    %68 = vector.shape_cast %67 : vector<8x8x128xf32> to vector<1x8x8x128xf32>
    %c0_77 = arith.constant 0 : index
    %c0_78 = arith.constant 0 : index
    %c0_79 = arith.constant 0 : index
    %c0_80 = arith.constant 0 : index
    %69 = vector.load %arg4[%c0_77, %c0_78, %c0_79, %c0_80] : memref<1x8x8x128xf32, #tpu.memory_space<vmem>>, vector<1x8x8x128xf32>
    tpu.vector_store %arg4[%c0_77, %c0_78, %c0_79, %c0_80], %68 {strides = array<i32>} : memref<1x8x8x128xf32, #tpu.memory_space<vmem>>, vector<1x8x8x128xf32>,
    return
  }
  func.func @transform_0(%arg0: i32) -> (i32, i32, i32, i32) {
    %c0_i32 = arith.constant 0 : i32
    %c0_i32_0 = arith.constant 0 : i32
    %c0_i32_1 = arith.constant 0 : i32
    %c0_i32_2 = arith.constant 0 : i32
    return %arg0, %c0_i32, %c0_i32_0, %c0_i32_1 : i32, i32, i32, i32
  }
  func.func @transform_1(%arg0: i32) -> (i32, i32) {
    %c0_i32 = arith.constant 0 : i32
    %c0_i32_0 = arith.constant 0 : i32
    %c0_i32_1 = arith.constant 0 : i32
    return %c0_i32, %c0_i32_0 : i32, i32
  }
  func.func @transform_2(%arg0: i32) -> (i32, i32) {
    %c0_i32 = arith.constant 0 : i32
    %c0_i32_0 = arith.constant 0 : i32
    %c0_i32_1 = arith.constant 0 : i32
    return %c0_i32, %c0_i32_0 : i32, i32
  }
  func.func @transform_3(%arg0: i32) -> (i32, i32, i32, i32) {
    %c0_i32 = arith.constant 0 : i32
    %c0_i32_0 = arith.constant 0 : i32
    %c0_i32_1 = arith.constant 0 : i32
    %c0_i32_2 = arith.constant 0 : i32
    return %arg0, %c0_i32, %c0_i32_0, %c0_i32_1 : i32, i32, i32, i32
  }
}

module attributes {stable_mosaic.version = 11 : i64} {
  func.func @kernel(%arg0: i32, %arg1: memref<2x4x4x128xf32, #tpu.memory_space<vmem>>, %arg2: memref<1152x128xbf16, #tpu.memory_space<vmem>>, %arg3: memref<1x128xf32, #tpu.memory_space<vmem>>, %arg4: memref<2x2x2x128xf32, #tpu.memory_space<vmem>>, %arg5: memref<2x6x13x128xf32, #tpu.memory_space<vmem>>, %arg6: memref<32x1152xbf16, #tpu.memory_space<vmem>>) attributes {dimension_semantics = [#tpu.dimension_semantics<parallel>], iteration_bounds = array<i64: 1>, scalar_prefetch = 0 : i64, scratch_operands = 2 : i64, tpu.core_type = #tpu.core_type<tc>, window_params = [{transform_indices = @transform_0, window_bounds = array<i64: 2, 4, 4, 128>}, {pipeline_mode = #tpu.pipeline_mode<synchronous>, transform_indices = @transform_1, window_bounds = array<i64: 1152, 128>}, {pipeline_mode = #tpu.pipeline_mode<synchronous>, transform_indices = @transform_2, window_bounds = array<i64: 1, 128>}, {transform_indices = @transform_3, window_bounds = array<i64: 2, 2, 2, 128>}]} {
    %cst = arith.constant 0.000000e+00 : f32
    %0 = vector.broadcast %cst : f32 to vector<2x1x13x128xf32>
    %c0 = arith.constant 0 : index
    %c0_0 = arith.constant 0 : index
    %c0_1 = arith.constant 0 : index
    %c0_2 = arith.constant 0 : index
    %1 = vector.load %arg5[%c0, %c0_0, %c0_1, %c0_2] : memref<2x6x13x128xf32, #tpu.memory_space<vmem>>, vector<2x1x13x128xf32>
    tpu.vector_store %arg5[%c0, %c0_0, %c0_1, %c0_2], %0 {strides = array<i32>} : memref<2x6x13x128xf32, #tpu.memory_space<vmem>>, vector<2x1x13x128xf32>,
    %cst_3 = arith.constant 0.000000e+00 : f32
    %2 = vector.broadcast %cst_3 : f32 to vector<2x1x13x128xf32>
    %c0_4 = arith.constant 0 : index
    %c5 = arith.constant 5 : index
    %c0_5 = arith.constant 0 : index
    %c0_6 = arith.constant 0 : index
    %3 = vector.load %arg5[%c0_4, %c5, %c0_5, %c0_6] : memref<2x6x13x128xf32, #tpu.memory_space<vmem>>, vector<2x1x13x128xf32>
    tpu.vector_store %arg5[%c0_4, %c5, %c0_5, %c0_6], %2 {strides = array<i32>} : memref<2x6x13x128xf32, #tpu.memory_space<vmem>>, vector<2x1x13x128xf32>,
    %cst_7 = arith.constant 0.000000e+00 : f32
    %4 = vector.broadcast %cst_7 : f32 to vector<2x6x1x128xf32>
    %c0_8 = arith.constant 0 : index
    %c0_9 = arith.constant 0 : index
    %c7 = arith.constant 7 : index
    %c0_10 = arith.constant 0 : index
    %5 = vector.load %arg5[%c0_8, %c0_9, %c7, %c0_10] : memref<2x6x13x128xf32, #tpu.memory_space<vmem>>, vector<2x6x1x128xf32>
    tpu.vector_store %arg5[%c0_8, %c0_9, %c7, %c0_10], %4 {strides = array<i32>} : memref<2x6x13x128xf32, #tpu.memory_space<vmem>>, vector<2x6x1x128xf32>,
    %cst_11 = arith.constant 0.000000e+00 : f32
    %6 = vector.broadcast %cst_11 : f32 to vector<2x6x1x128xf32>
    %c0_12 = arith.constant 0 : index
    %c0_13 = arith.constant 0 : index
    %c12 = arith.constant 12 : index
    %c0_14 = arith.constant 0 : index
    %7 = vector.load %arg5[%c0_12, %c0_13, %c12, %c0_14] : memref<2x6x13x128xf32, #tpu.memory_space<vmem>>, vector<2x6x1x128xf32>
    tpu.vector_store %arg5[%c0_12, %c0_13, %c12, %c0_14], %6 {strides = array<i32>} : memref<2x6x13x128xf32, #tpu.memory_space<vmem>>, vector<2x6x1x128xf32>,
    %c0_15 = arith.constant 0 : index
    %c0_16 = arith.constant 0 : index
    %c0_17 = arith.constant 0 : index
    %c0_18 = arith.constant 0 : index
    %8 = vector.load %arg1[%c0_15, %c0_16, %c0_17, %c0_18] : memref<2x4x4x128xf32, #tpu.memory_space<vmem>>, vector<2x4x4x128xf32>
    %c0_19 = arith.constant 0 : index
    %c1 = arith.constant 1 : index
    %c8 = arith.constant 8 : index
    %c0_20 = arith.constant 0 : index
    %9 = vector.load %arg5[%c0_19, %c1, %c8, %c0_20] : memref<2x6x13x128xf32, #tpu.memory_space<vmem>>, vector<2x4x4x128xf32>
    tpu.vector_store %arg5[%c0_19, %c1, %c8, %c0_20], %8 {strides = array<i32>} : memref<2x6x13x128xf32, #tpu.memory_space<vmem>>, vector<2x4x4x128xf32>,
    %c0_21 = arith.constant 0 : index
    %c0_22 = arith.constant 0 : index
    %c7_23 = arith.constant 7 : index
    %c0_24 = arith.constant 0 : index
    %10 = vector.load %arg5[%c0_21, %c0_22, %c7_23, %c0_24] : memref<2x6x13x128xf32, #tpu.memory_space<vmem>>, vector<2x4x4x128xf32>
    %11 = vector.shape_cast %10 : vector<2x4x4x128xf32> to vector<32x128xf32>
    %12 = arith.truncf %11 : vector<32x128xf32> to vector<32x128xbf16>
    %c0_25 = arith.constant 0 : index
    %c0_26 = arith.constant 0 : index
    %13 = vector.load %arg6[%c0_25, %c0_26] : memref<32x1152xbf16, #tpu.memory_space<vmem>>, vector<32x128xbf16>
    tpu.vector_store %arg6[%c0_25, %c0_26], %12 {strides = array<i32>} : memref<32x1152xbf16, #tpu.memory_space<vmem>>, vector<32x128xbf16>,
    %c0_27 = arith.constant 0 : index
    %c0_28 = arith.constant 0 : index
    %c8_29 = arith.constant 8 : index
    %c0_30 = arith.constant 0 : index
    %14 = vector.load %arg5[%c0_27, %c0_28, %c8_29, %c0_30] : memref<2x6x13x128xf32, #tpu.memory_space<vmem>>, vector<2x4x4x128xf32>
    %15 = vector.shape_cast %14 : vector<2x4x4x128xf32> to vector<32x128xf32>
    %16 = arith.truncf %15 : vector<32x128xf32> to vector<32x128xbf16>
    %c0_31 = arith.constant 0 : index
    %c128 = arith.constant 128 : index
    %17 = vector.load %arg6[%c0_31, %c128] : memref<32x1152xbf16, #tpu.memory_space<vmem>>, vector<32x128xbf16>
    tpu.vector_store %arg6[%c0_31, %c128], %16 {strides = array<i32>} : memref<32x1152xbf16, #tpu.memory_space<vmem>>, vector<32x128xbf16>,
    %c0_32 = arith.constant 0 : index
    %c0_33 = arith.constant 0 : index
    %c9 = arith.constant 9 : index
    %c0_34 = arith.constant 0 : index
    %18 = vector.load %arg5[%c0_32, %c0_33, %c9, %c0_34] : memref<2x6x13x128xf32, #tpu.memory_space<vmem>>, vector<2x4x4x128xf32>
    %19 = vector.shape_cast %18 : vector<2x4x4x128xf32> to vector<32x128xf32>
    %20 = arith.truncf %19 : vector<32x128xf32> to vector<32x128xbf16>
    %c0_35 = arith.constant 0 : index
    %c256 = arith.constant 256 : index
    %21 = vector.load %arg6[%c0_35, %c256] : memref<32x1152xbf16, #tpu.memory_space<vmem>>, vector<32x128xbf16>
    tpu.vector_store %arg6[%c0_35, %c256], %20 {strides = array<i32>} : memref<32x1152xbf16, #tpu.memory_space<vmem>>, vector<32x128xbf16>,
    %c0_36 = arith.constant 0 : index
    %c1_37 = arith.constant 1 : index
    %c7_38 = arith.constant 7 : index
    %c0_39 = arith.constant 0 : index
    %22 = vector.load %arg5[%c0_36, %c1_37, %c7_38, %c0_39] : memref<2x6x13x128xf32, #tpu.memory_space<vmem>>, vector<2x4x4x128xf32>
    %23 = vector.shape_cast %22 : vector<2x4x4x128xf32> to vector<32x128xf32>
    %24 = arith.truncf %23 : vector<32x128xf32> to vector<32x128xbf16>
    %c0_40 = arith.constant 0 : index
    %c384 = arith.constant 384 : index
    %25 = vector.load %arg6[%c0_40, %c384] : memref<32x1152xbf16, #tpu.memory_space<vmem>>, vector<32x128xbf16>
    tpu.vector_store %arg6[%c0_40, %c384], %24 {strides = array<i32>} : memref<32x1152xbf16, #tpu.memory_space<vmem>>, vector<32x128xbf16>,
    %c0_41 = arith.constant 0 : index
    %c1_42 = arith.constant 1 : index
    %c8_43 = arith.constant 8 : index
    %c0_44 = arith.constant 0 : index
    %26 = vector.load %arg5[%c0_41, %c1_42, %c8_43, %c0_44] : memref<2x6x13x128xf32, #tpu.memory_space<vmem>>, vector<2x4x4x128xf32>
    %27 = vector.shape_cast %26 : vector<2x4x4x128xf32> to vector<32x128xf32>
    %28 = arith.truncf %27 : vector<32x128xf32> to vector<32x128xbf16>
    %c0_45 = arith.constant 0 : index
    %c512 = arith.constant 512 : index
    %29 = vector.load %arg6[%c0_45, %c512] : memref<32x1152xbf16, #tpu.memory_space<vmem>>, vector<32x128xbf16>
    tpu.vector_store %arg6[%c0_45, %c512], %28 {strides = array<i32>} : memref<32x1152xbf16, #tpu.memory_space<vmem>>, vector<32x128xbf16>,
    %c0_46 = arith.constant 0 : index
    %c1_47 = arith.constant 1 : index
    %c9_48 = arith.constant 9 : index
    %c0_49 = arith.constant 0 : index
    %30 = vector.load %arg5[%c0_46, %c1_47, %c9_48, %c0_49] : memref<2x6x13x128xf32, #tpu.memory_space<vmem>>, vector<2x4x4x128xf32>
    %31 = vector.shape_cast %30 : vector<2x4x4x128xf32> to vector<32x128xf32>
    %32 = arith.truncf %31 : vector<32x128xf32> to vector<32x128xbf16>
    %c0_50 = arith.constant 0 : index
    %c640 = arith.constant 640 : index
    %33 = vector.load %arg6[%c0_50, %c640] : memref<32x1152xbf16, #tpu.memory_space<vmem>>, vector<32x128xbf16>
    tpu.vector_store %arg6[%c0_50, %c640], %32 {strides = array<i32>} : memref<32x1152xbf16, #tpu.memory_space<vmem>>, vector<32x128xbf16>,
    %c0_51 = arith.constant 0 : index
    %c2 = arith.constant 2 : index
    %c7_52 = arith.constant 7 : index
    %c0_53 = arith.constant 0 : index
    %34 = vector.load %arg5[%c0_51, %c2, %c7_52, %c0_53] : memref<2x6x13x128xf32, #tpu.memory_space<vmem>>, vector<2x4x4x128xf32>
    %35 = vector.shape_cast %34 : vector<2x4x4x128xf32> to vector<32x128xf32>
    %36 = arith.truncf %35 : vector<32x128xf32> to vector<32x128xbf16>
    %c0_54 = arith.constant 0 : index
    %c768 = arith.constant 768 : index
    %37 = vector.load %arg6[%c0_54, %c768] : memref<32x1152xbf16, #tpu.memory_space<vmem>>, vector<32x128xbf16>
    tpu.vector_store %arg6[%c0_54, %c768], %36 {strides = array<i32>} : memref<32x1152xbf16, #tpu.memory_space<vmem>>, vector<32x128xbf16>,
    %c0_55 = arith.constant 0 : index
    %c2_56 = arith.constant 2 : index
    %c8_57 = arith.constant 8 : index
    %c0_58 = arith.constant 0 : index
    %38 = vector.load %arg5[%c0_55, %c2_56, %c8_57, %c0_58] : memref<2x6x13x128xf32, #tpu.memory_space<vmem>>, vector<2x4x4x128xf32>
    %39 = vector.shape_cast %38 : vector<2x4x4x128xf32> to vector<32x128xf32>
    %40 = arith.truncf %39 : vector<32x128xf32> to vector<32x128xbf16>
    %c0_59 = arith.constant 0 : index
    %c896 = arith.constant 896 : index
    %41 = vector.load %arg6[%c0_59, %c896] : memref<32x1152xbf16, #tpu.memory_space<vmem>>, vector<32x128xbf16>
    tpu.vector_store %arg6[%c0_59, %c896], %40 {strides = array<i32>} : memref<32x1152xbf16, #tpu.memory_space<vmem>>, vector<32x128xbf16>,
    %c0_60 = arith.constant 0 : index
    %c2_61 = arith.constant 2 : index
    %c9_62 = arith.constant 9 : index
    %c0_63 = arith.constant 0 : index
    %42 = vector.load %arg5[%c0_60, %c2_61, %c9_62, %c0_63] : memref<2x6x13x128xf32, #tpu.memory_space<vmem>>, vector<2x4x4x128xf32>
    %43 = vector.shape_cast %42 : vector<2x4x4x128xf32> to vector<32x128xf32>
    %44 = arith.truncf %43 : vector<32x128xf32> to vector<32x128xbf16>
    %c0_64 = arith.constant 0 : index
    %c1024 = arith.constant 1024 : index
    %45 = vector.load %arg6[%c0_64, %c1024] : memref<32x1152xbf16, #tpu.memory_space<vmem>>, vector<32x128xbf16>
    tpu.vector_store %arg6[%c0_64, %c1024], %44 {strides = array<i32>} : memref<32x1152xbf16, #tpu.memory_space<vmem>>, vector<32x128xbf16>,
    %c0_65 = arith.constant 0 : index
    %c0_66 = arith.constant 0 : index
    %46 = vector.load %arg6[%c0_65, %c0_66] : memref<32x1152xbf16, #tpu.memory_space<vmem>>, vector<32x1152xbf16>
    %c0_67 = arith.constant 0 : index
    %c0_68 = arith.constant 0 : index
    %47 = vector.load %arg2[%c0_67, %c0_68] : memref<1152x128xbf16, #tpu.memory_space<vmem>>, vector<1152x128xbf16>
    %cst_69 = arith.constant dense<0.000000e+00> : vector<32x128xf32>
    %48 = tpu.matmul %46, %47, %cst_69 {dimension_numbers = #tpu.dot_dimension_numbers<[1], [0], [0], [1], [0, 0, 1, 1], [], []>} : vector<32x1152xbf16>, vector<1152x128xbf16>, vector<32x128xf32> -> vector<32x128xf32>
    %c0_70 = arith.constant 0 : index
    %c0_71 = arith.constant 0 : index
    %49 = vector.load %arg3[%c0_70, %c0_71] : memref<1x128xf32, #tpu.memory_space<vmem>>, vector<1x128xf32>
    %50 = vector.broadcast %49 : vector<1x128xf32> to vector<32x128xf32>
    %51 = arith.addf %48, %50 : vector<32x128xf32>
    %cst_72 = arith.constant 0.000000e+00 : f32
    %52 = vector.broadcast %cst_72 : f32 to vector<32x128xf32>
    %53 = arith.maximumf %51, %52 : vector<32x128xf32>
    %54 = vector.shape_cast %53 : vector<32x128xf32> to vector<16x2x128xf32>
    %55 = vector.extract_strided_slice %54 {offsets = [0, 0, 0], sizes = [16, 1, 128], strides = [1, 1, 1]} : vector<16x2x128xf32> to vector<16x1x128xf32>
    %56 = vector.shape_cast %55 : vector<16x1x128xf32> to vector<16x128xf32>
    %57 = vector.extract_strided_slice %54 {offsets = [0, 1, 0], sizes = [16, 1, 128], strides = [1, 1, 1]} : vector<16x2x128xf32> to vector<16x1x128xf32>
    %58 = vector.shape_cast %57 : vector<16x1x128xf32> to vector<16x128xf32>
    %59 = arith.maximumf %56, %58 : vector<16x128xf32>
    %60 = vector.shape_cast %59 : vector<16x128xf32> to vector<4x2x2x128xf32>
    %61 = vector.extract_strided_slice %60 {offsets = [0, 0, 0, 0], sizes = [4, 1, 2, 128], strides = [1, 1, 1, 1]} : vector<4x2x2x128xf32> to vector<4x1x2x128xf32>
    %62 = vector.shape_cast %61 : vector<4x1x2x128xf32> to vector<4x2x128xf32>
    %63 = vector.extract_strided_slice %60 {offsets = [0, 1, 0, 0], sizes = [4, 1, 2, 128], strides = [1, 1, 1, 1]} : vector<4x2x2x128xf32> to vector<4x1x2x128xf32>
    %64 = vector.shape_cast %63 : vector<4x1x2x128xf32> to vector<4x2x128xf32>
    %65 = arith.maximumf %62, %64 : vector<4x2x128xf32>
    %66 = vector.shape_cast %65 : vector<4x2x128xf32> to vector<2x2x2x128xf32>
    %c0_73 = arith.constant 0 : index
    %c0_74 = arith.constant 0 : index
    %c0_75 = arith.constant 0 : index
    %c0_76 = arith.constant 0 : index
    %67 = vector.load %arg4[%c0_73, %c0_74, %c0_75, %c0_76] : memref<2x2x2x128xf32, #tpu.memory_space<vmem>>, vector<2x2x2x128xf32>
    tpu.vector_store %arg4[%c0_73, %c0_74, %c0_75, %c0_76], %66 {strides = array<i32>} : memref<2x2x2x128xf32, #tpu.memory_space<vmem>>, vector<2x2x2x128xf32>,
    return
  }
  func.func @transform_0(%arg0: i32) -> (i32, i32, i32, i32) {
    %c0_i32 = arith.constant 0 : i32
    %c0_i32_0 = arith.constant 0 : i32
    %c0_i32_1 = arith.constant 0 : i32
    %c0_i32_2 = arith.constant 0 : i32
    return %arg0, %c0_i32, %c0_i32_0, %c0_i32_1 : i32, i32, i32, i32
  }
  func.func @transform_1(%arg0: i32) -> (i32, i32) {
    %c0_i32 = arith.constant 0 : i32
    %c0_i32_0 = arith.constant 0 : i32
    %c0_i32_1 = arith.constant 0 : i32
    return %c0_i32, %c0_i32_0 : i32, i32
  }
  func.func @transform_2(%arg0: i32) -> (i32, i32) {
    %c0_i32 = arith.constant 0 : i32
    %c0_i32_0 = arith.constant 0 : i32
    %c0_i32_1 = arith.constant 0 : i32
    return %c0_i32, %c0_i32_0 : i32, i32
  }
  func.func @transform_3(%arg0: i32) -> (i32, i32, i32, i32) {
    %c0_i32 = arith.constant 0 : i32
    %c0_i32_0 = arith.constant 0 : i32
    %c0_i32_1 = arith.constant 0 : i32
    %c0_i32_2 = arith.constant 0 : i32
    return %arg0, %c0_i32, %c0_i32_0, %c0_i32_1 : i32, i32, i32, i32
  }
}

module attributes {stable_mosaic.version = 11 : i64} {
  func.func @kernel(%arg0: i32, %arg1: memref<2x2x2x128xf32, #tpu.memory_space<vmem>>, %arg2: memref<1152x128xbf16, #tpu.memory_space<vmem>>, %arg3: memref<1x128xf32, #tpu.memory_space<vmem>>, %arg4: memref<2x2x2x128xf32, #tpu.memory_space<vmem>>, %arg5: memref<2x4x11x128xf32, #tpu.memory_space<vmem>>, %arg6: memref<8x1152xbf16, #tpu.memory_space<vmem>>) attributes {dimension_semantics = [#tpu.dimension_semantics<parallel>], iteration_bounds = array<i64: 1>, scalar_prefetch = 0 : i64, scratch_operands = 2 : i64, tpu.core_type = #tpu.core_type<tc>, window_params = [{transform_indices = @transform_0, window_bounds = array<i64: 2, 2, 2, 128>}, {pipeline_mode = #tpu.pipeline_mode<synchronous>, transform_indices = @transform_1, window_bounds = array<i64: 1152, 128>}, {pipeline_mode = #tpu.pipeline_mode<synchronous>, transform_indices = @transform_2, window_bounds = array<i64: 1, 128>}, {transform_indices = @transform_3, window_bounds = array<i64: 2, 2, 2, 128>}]} {
    %cst = arith.constant 0.000000e+00 : f32
    %0 = vector.broadcast %cst : f32 to vector<2x1x11x128xf32>
    %c0 = arith.constant 0 : index
    %c0_0 = arith.constant 0 : index
    %c0_1 = arith.constant 0 : index
    %c0_2 = arith.constant 0 : index
    %1 = vector.load %arg5[%c0, %c0_0, %c0_1, %c0_2] : memref<2x4x11x128xf32, #tpu.memory_space<vmem>>, vector<2x1x11x128xf32>
    tpu.vector_store %arg5[%c0, %c0_0, %c0_1, %c0_2], %0 {strides = array<i32>} : memref<2x4x11x128xf32, #tpu.memory_space<vmem>>, vector<2x1x11x128xf32>,
    %cst_3 = arith.constant 0.000000e+00 : f32
    %2 = vector.broadcast %cst_3 : f32 to vector<2x1x11x128xf32>
    %c0_4 = arith.constant 0 : index
    %c3 = arith.constant 3 : index
    %c0_5 = arith.constant 0 : index
    %c0_6 = arith.constant 0 : index
    %3 = vector.load %arg5[%c0_4, %c3, %c0_5, %c0_6] : memref<2x4x11x128xf32, #tpu.memory_space<vmem>>, vector<2x1x11x128xf32>
    tpu.vector_store %arg5[%c0_4, %c3, %c0_5, %c0_6], %2 {strides = array<i32>} : memref<2x4x11x128xf32, #tpu.memory_space<vmem>>, vector<2x1x11x128xf32>,
    %cst_7 = arith.constant 0.000000e+00 : f32
    %4 = vector.broadcast %cst_7 : f32 to vector<2x4x1x128xf32>
    %c0_8 = arith.constant 0 : index
    %c0_9 = arith.constant 0 : index
    %c7 = arith.constant 7 : index
    %c0_10 = arith.constant 0 : index
    %5 = vector.load %arg5[%c0_8, %c0_9, %c7, %c0_10] : memref<2x4x11x128xf32, #tpu.memory_space<vmem>>, vector<2x4x1x128xf32>
    tpu.vector_store %arg5[%c0_8, %c0_9, %c7, %c0_10], %4 {strides = array<i32>} : memref<2x4x11x128xf32, #tpu.memory_space<vmem>>, vector<2x4x1x128xf32>,
    %cst_11 = arith.constant 0.000000e+00 : f32
    %6 = vector.broadcast %cst_11 : f32 to vector<2x4x1x128xf32>
    %c0_12 = arith.constant 0 : index
    %c0_13 = arith.constant 0 : index
    %c10 = arith.constant 10 : index
    %c0_14 = arith.constant 0 : index
    %7 = vector.load %arg5[%c0_12, %c0_13, %c10, %c0_14] : memref<2x4x11x128xf32, #tpu.memory_space<vmem>>, vector<2x4x1x128xf32>
    tpu.vector_store %arg5[%c0_12, %c0_13, %c10, %c0_14], %6 {strides = array<i32>} : memref<2x4x11x128xf32, #tpu.memory_space<vmem>>, vector<2x4x1x128xf32>,
    %c0_15 = arith.constant 0 : index
    %c0_16 = arith.constant 0 : index
    %c0_17 = arith.constant 0 : index
    %c0_18 = arith.constant 0 : index
    %8 = vector.load %arg1[%c0_15, %c0_16, %c0_17, %c0_18] : memref<2x2x2x128xf32, #tpu.memory_space<vmem>>, vector<2x2x2x128xf32>
    %c0_19 = arith.constant 0 : index
    %c1 = arith.constant 1 : index
    %c8 = arith.constant 8 : index
    %c0_20 = arith.constant 0 : index
    %9 = vector.load %arg5[%c0_19, %c1, %c8, %c0_20] : memref<2x4x11x128xf32, #tpu.memory_space<vmem>>, vector<2x2x2x128xf32>
    tpu.vector_store %arg5[%c0_19, %c1, %c8, %c0_20], %8 {strides = array<i32>} : memref<2x4x11x128xf32, #tpu.memory_space<vmem>>, vector<2x2x2x128xf32>,
    %c0_21 = arith.constant 0 : index
    %c0_22 = arith.constant 0 : index
    %c7_23 = arith.constant 7 : index
    %c0_24 = arith.constant 0 : index
    %10 = vector.load %arg5[%c0_21, %c0_22, %c7_23, %c0_24] : memref<2x4x11x128xf32, #tpu.memory_space<vmem>>, vector<2x2x2x128xf32>
    %11 = vector.shape_cast %10 : vector<2x2x2x128xf32> to vector<8x128xf32>
    %12 = arith.truncf %11 : vector<8x128xf32> to vector<8x128xbf16>
    %c0_25 = arith.constant 0 : index
    %c0_26 = arith.constant 0 : index
    %13 = vector.load %arg6[%c0_25, %c0_26] : memref<8x1152xbf16, #tpu.memory_space<vmem>>, vector<8x128xbf16>
    tpu.vector_store %arg6[%c0_25, %c0_26], %12 {strides = array<i32>} : memref<8x1152xbf16, #tpu.memory_space<vmem>>, vector<8x128xbf16>,
    %c0_27 = arith.constant 0 : index
    %c0_28 = arith.constant 0 : index
    %c8_29 = arith.constant 8 : index
    %c0_30 = arith.constant 0 : index
    %14 = vector.load %arg5[%c0_27, %c0_28, %c8_29, %c0_30] : memref<2x4x11x128xf32, #tpu.memory_space<vmem>>, vector<2x2x2x128xf32>
    %15 = vector.shape_cast %14 : vector<2x2x2x128xf32> to vector<8x128xf32>
    %16 = arith.truncf %15 : vector<8x128xf32> to vector<8x128xbf16>
    %c0_31 = arith.constant 0 : index
    %c128 = arith.constant 128 : index
    %17 = vector.load %arg6[%c0_31, %c128] : memref<8x1152xbf16, #tpu.memory_space<vmem>>, vector<8x128xbf16>
    tpu.vector_store %arg6[%c0_31, %c128], %16 {strides = array<i32>} : memref<8x1152xbf16, #tpu.memory_space<vmem>>, vector<8x128xbf16>,
    %c0_32 = arith.constant 0 : index
    %c0_33 = arith.constant 0 : index
    %c9 = arith.constant 9 : index
    %c0_34 = arith.constant 0 : index
    %18 = vector.load %arg5[%c0_32, %c0_33, %c9, %c0_34] : memref<2x4x11x128xf32, #tpu.memory_space<vmem>>, vector<2x2x2x128xf32>
    %19 = vector.shape_cast %18 : vector<2x2x2x128xf32> to vector<8x128xf32>
    %20 = arith.truncf %19 : vector<8x128xf32> to vector<8x128xbf16>
    %c0_35 = arith.constant 0 : index
    %c256 = arith.constant 256 : index
    %21 = vector.load %arg6[%c0_35, %c256] : memref<8x1152xbf16, #tpu.memory_space<vmem>>, vector<8x128xbf16>
    tpu.vector_store %arg6[%c0_35, %c256], %20 {strides = array<i32>} : memref<8x1152xbf16, #tpu.memory_space<vmem>>, vector<8x128xbf16>,
    %c0_36 = arith.constant 0 : index
    %c1_37 = arith.constant 1 : index
    %c7_38 = arith.constant 7 : index
    %c0_39 = arith.constant 0 : index
    %22 = vector.load %arg5[%c0_36, %c1_37, %c7_38, %c0_39] : memref<2x4x11x128xf32, #tpu.memory_space<vmem>>, vector<2x2x2x128xf32>
    %23 = vector.shape_cast %22 : vector<2x2x2x128xf32> to vector<8x128xf32>
    %24 = arith.truncf %23 : vector<8x128xf32> to vector<8x128xbf16>
    %c0_40 = arith.constant 0 : index
    %c384 = arith.constant 384 : index
    %25 = vector.load %arg6[%c0_40, %c384] : memref<8x1152xbf16, #tpu.memory_space<vmem>>, vector<8x128xbf16>
    tpu.vector_store %arg6[%c0_40, %c384], %24 {strides = array<i32>} : memref<8x1152xbf16, #tpu.memory_space<vmem>>, vector<8x128xbf16>,
    %c0_41 = arith.constant 0 : index
    %c1_42 = arith.constant 1 : index
    %c8_43 = arith.constant 8 : index
    %c0_44 = arith.constant 0 : index
    %26 = vector.load %arg5[%c0_41, %c1_42, %c8_43, %c0_44] : memref<2x4x11x128xf32, #tpu.memory_space<vmem>>, vector<2x2x2x128xf32>
    %27 = vector.shape_cast %26 : vector<2x2x2x128xf32> to vector<8x128xf32>
    %28 = arith.truncf %27 : vector<8x128xf32> to vector<8x128xbf16>
    %c0_45 = arith.constant 0 : index
    %c512 = arith.constant 512 : index
    %29 = vector.load %arg6[%c0_45, %c512] : memref<8x1152xbf16, #tpu.memory_space<vmem>>, vector<8x128xbf16>
    tpu.vector_store %arg6[%c0_45, %c512], %28 {strides = array<i32>} : memref<8x1152xbf16, #tpu.memory_space<vmem>>, vector<8x128xbf16>,
    %c0_46 = arith.constant 0 : index
    %c1_47 = arith.constant 1 : index
    %c9_48 = arith.constant 9 : index
    %c0_49 = arith.constant 0 : index
    %30 = vector.load %arg5[%c0_46, %c1_47, %c9_48, %c0_49] : memref<2x4x11x128xf32, #tpu.memory_space<vmem>>, vector<2x2x2x128xf32>
    %31 = vector.shape_cast %30 : vector<2x2x2x128xf32> to vector<8x128xf32>
    %32 = arith.truncf %31 : vector<8x128xf32> to vector<8x128xbf16>
    %c0_50 = arith.constant 0 : index
    %c640 = arith.constant 640 : index
    %33 = vector.load %arg6[%c0_50, %c640] : memref<8x1152xbf16, #tpu.memory_space<vmem>>, vector<8x128xbf16>
    tpu.vector_store %arg6[%c0_50, %c640], %32 {strides = array<i32>} : memref<8x1152xbf16, #tpu.memory_space<vmem>>, vector<8x128xbf16>,
    %c0_51 = arith.constant 0 : index
    %c2 = arith.constant 2 : index
    %c7_52 = arith.constant 7 : index
    %c0_53 = arith.constant 0 : index
    %34 = vector.load %arg5[%c0_51, %c2, %c7_52, %c0_53] : memref<2x4x11x128xf32, #tpu.memory_space<vmem>>, vector<2x2x2x128xf32>
    %35 = vector.shape_cast %34 : vector<2x2x2x128xf32> to vector<8x128xf32>
    %36 = arith.truncf %35 : vector<8x128xf32> to vector<8x128xbf16>
    %c0_54 = arith.constant 0 : index
    %c768 = arith.constant 768 : index
    %37 = vector.load %arg6[%c0_54, %c768] : memref<8x1152xbf16, #tpu.memory_space<vmem>>, vector<8x128xbf16>
    tpu.vector_store %arg6[%c0_54, %c768], %36 {strides = array<i32>} : memref<8x1152xbf16, #tpu.memory_space<vmem>>, vector<8x128xbf16>,
    %c0_55 = arith.constant 0 : index
    %c2_56 = arith.constant 2 : index
    %c8_57 = arith.constant 8 : index
    %c0_58 = arith.constant 0 : index
    %38 = vector.load %arg5[%c0_55, %c2_56, %c8_57, %c0_58] : memref<2x4x11x128xf32, #tpu.memory_space<vmem>>, vector<2x2x2x128xf32>
    %39 = vector.shape_cast %38 : vector<2x2x2x128xf32> to vector<8x128xf32>
    %40 = arith.truncf %39 : vector<8x128xf32> to vector<8x128xbf16>
    %c0_59 = arith.constant 0 : index
    %c896 = arith.constant 896 : index
    %41 = vector.load %arg6[%c0_59, %c896] : memref<8x1152xbf16, #tpu.memory_space<vmem>>, vector<8x128xbf16>
    tpu.vector_store %arg6[%c0_59, %c896], %40 {strides = array<i32>} : memref<8x1152xbf16, #tpu.memory_space<vmem>>, vector<8x128xbf16>,
    %c0_60 = arith.constant 0 : index
    %c2_61 = arith.constant 2 : index
    %c9_62 = arith.constant 9 : index
    %c0_63 = arith.constant 0 : index
    %42 = vector.load %arg5[%c0_60, %c2_61, %c9_62, %c0_63] : memref<2x4x11x128xf32, #tpu.memory_space<vmem>>, vector<2x2x2x128xf32>
    %43 = vector.shape_cast %42 : vector<2x2x2x128xf32> to vector<8x128xf32>
    %44 = arith.truncf %43 : vector<8x128xf32> to vector<8x128xbf16>
    %c0_64 = arith.constant 0 : index
    %c1024 = arith.constant 1024 : index
    %45 = vector.load %arg6[%c0_64, %c1024] : memref<8x1152xbf16, #tpu.memory_space<vmem>>, vector<8x128xbf16>
    tpu.vector_store %arg6[%c0_64, %c1024], %44 {strides = array<i32>} : memref<8x1152xbf16, #tpu.memory_space<vmem>>, vector<8x128xbf16>,
    %c0_65 = arith.constant 0 : index
    %c0_66 = arith.constant 0 : index
    %46 = vector.load %arg6[%c0_65, %c0_66] : memref<8x1152xbf16, #tpu.memory_space<vmem>>, vector<8x1152xbf16>
    %c0_67 = arith.constant 0 : index
    %c0_68 = arith.constant 0 : index
    %47 = vector.load %arg2[%c0_67, %c0_68] : memref<1152x128xbf16, #tpu.memory_space<vmem>>, vector<1152x128xbf16>
    %cst_69 = arith.constant dense<0.000000e+00> : vector<8x128xf32>
    %48 = tpu.matmul %46, %47, %cst_69 {dimension_numbers = #tpu.dot_dimension_numbers<[1], [0], [0], [1], [0, 0, 1, 1], [], []>} : vector<8x1152xbf16>, vector<1152x128xbf16>, vector<8x128xf32> -> vector<8x128xf32>
    %c0_70 = arith.constant 0 : index
    %c0_71 = arith.constant 0 : index
    %49 = vector.load %arg3[%c0_70, %c0_71] : memref<1x128xf32, #tpu.memory_space<vmem>>, vector<1x128xf32>
    %50 = vector.broadcast %49 : vector<1x128xf32> to vector<8x128xf32>
    %51 = arith.addf %48, %50 : vector<8x128xf32>
    %cst_72 = arith.constant 0.000000e+00 : f32
    %52 = vector.broadcast %cst_72 : f32 to vector<8x128xf32>
    %53 = arith.maximumf %51, %52 : vector<8x128xf32>
    %54 = vector.shape_cast %53 : vector<8x128xf32> to vector<2x2x2x128xf32>
    %c0_73 = arith.constant 0 : index
    %c0_74 = arith.constant 0 : index
    %c0_75 = arith.constant 0 : index
    %c0_76 = arith.constant 0 : index
    %55 = vector.load %arg4[%c0_73, %c0_74, %c0_75, %c0_76] : memref<2x2x2x128xf32, #tpu.memory_space<vmem>>, vector<2x2x2x128xf32>
    tpu.vector_store %arg4[%c0_73, %c0_74, %c0_75, %c0_76], %54 {strides = array<i32>} : memref<2x2x2x128xf32, #tpu.memory_space<vmem>>, vector<2x2x2x128xf32>,
    return
  }
  func.func @transform_0(%arg0: i32) -> (i32, i32, i32, i32) {
    %c0_i32 = arith.constant 0 : i32
    %c0_i32_0 = arith.constant 0 : i32
    %c0_i32_1 = arith.constant 0 : i32
    %c0_i32_2 = arith.constant 0 : i32
    return %arg0, %c0_i32, %c0_i32_0, %c0_i32_1 : i32, i32, i32, i32
  }
  func.func @transform_1(%arg0: i32) -> (i32, i32) {
    %c0_i32 = arith.constant 0 : i32
    %c0_i32_0 = arith.constant 0 : i32
    %c0_i32_1 = arith.constant 0 : i32
    return %c0_i32, %c0_i32_0 : i32, i32
  }
  func.func @transform_2(%arg0: i32) -> (i32, i32) {
    %c0_i32 = arith.constant 0 : i32
    %c0_i32_0 = arith.constant 0 : i32
    %c0_i32_1 = arith.constant 0 : i32
    return %c0_i32, %c0_i32_0 : i32, i32
  }
  func.func @transform_3(%arg0: i32) -> (i32, i32, i32, i32) {
    %c0_i32 = arith.constant 0 : i32
    %c0_i32_0 = arith.constant 0 : i32
    %c0_i32_1 = arith.constant 0 : i32
    %c0_i32_2 = arith.constant 0 : i32
    return %arg0, %c0_i32, %c0_i32_0, %c0_i32_1 : i32, i32, i32, i32
  }
}

module attributes {stable_mosaic.version = 11 : i64} {
  func.func @_avgpool_fc_kernel(%arg0: memref<2x2x2x128xf32, #tpu.memory_space<vmem>>, %arg1: memref<128x128xbf16, #tpu.memory_space<vmem>>, %arg2: memref<1x128xf32, #tpu.memory_space<vmem>>, %arg3: memref<2x128xf32, #tpu.memory_space<vmem>>) attributes {dimension_semantics = [], scalar_prefetch = 0 : i64, scratch_operands = 0 : i64, tpu.core_type = #tpu.core_type<tc>} {
    %c0 = arith.constant 0 : index
    %c0_0 = arith.constant 0 : index
    %c0_1 = arith.constant 0 : index
    %c0_2 = arith.constant 0 : index
    %0 = vector.load %arg0[%c0, %c0_0, %c0_1, %c0_2] : memref<2x2x2x128xf32, #tpu.memory_space<vmem>>, vector<2x2x2x128xf32>
    %cst = arith.constant dense<0.000000e+00> : vector<2x128xf32>
    %1 = vector.multi_reduction <add>, %0, %cst [1, 2] : vector<2x2x2x128xf32> to vector<2x128xf32>
    %cst_3 = arith.constant 4.000000e+00 : f32
    %2 = vector.broadcast %cst_3 : f32 to vector<2x128xf32>
    %3 = arith.divf %1, %2 : vector<2x128xf32>
    %4 = arith.truncf %3 : vector<2x128xf32> to vector<2x128xbf16>
    %c0_4 = arith.constant 0 : index
    %c0_5 = arith.constant 0 : index
    %5 = vector.load %arg1[%c0_4, %c0_5] : memref<128x128xbf16, #tpu.memory_space<vmem>>, vector<128x128xbf16>
    %cst_6 = arith.constant dense<0.000000e+00> : vector<2x128xf32>
    %6 = tpu.matmul %4, %5, %cst_6 {dimension_numbers = #tpu.dot_dimension_numbers<[1], [0], [0], [1], [0, 0, 1, 1], [], []>} : vector<2x128xbf16>, vector<128x128xbf16>, vector<2x128xf32> -> vector<2x128xf32>
    %c0_7 = arith.constant 0 : index
    %c0_8 = arith.constant 0 : index
    %7 = vector.load %arg2[%c0_7, %c0_8] : memref<1x128xf32, #tpu.memory_space<vmem>>, vector<1x128xf32>
    %8 = vector.broadcast %7 : vector<1x128xf32> to vector<2x128xf32>
    %9 = arith.addf %6, %8 : vector<2x128xf32>
    %c0_9 = arith.constant 0 : index
    %c0_10 = arith.constant 0 : index
    %10 = vector.load %arg3[%c0_9, %c0_10] : memref<2x128xf32, #tpu.memory_space<vmem>>, vector<2x128xf32>
    tpu.vector_store %arg3[%c0_9, %c0_10], %9 {strides = array<i32>} : memref<2x128xf32, #tpu.memory_space<vmem>>, vector<2x128xf32>,
    return
  }
}

</mosaic_0001>

<llo_original>
// kernel: _lambda_.7
$region0: #{_lambda_.7}
  #allocation0 [shape = 'u32[]', space=smem, size = 0x4, offset = 0x4, fixed_abs, tag = 'smem constant byte address 0x4 - core index']
  #allocation1 [shape = 'u32[144,128]{1,0:T(1,128)}', space=vmem, size = 0x12000, scoped, tag = 'internal scratch']
  #allocation2 [shape = 'f32[2,10,17,128]{3,2,1,0:T(8,128)}', space=vmem, size = 0x3c000, scoped, tag = 'scratch operand']
  #allocation3 [shape = 'bf16[128,1152]{1,0:T(16,128)(2,1)}', space=vmem, size = 0x48000, scoped, tag = 'scratch operand']
  %s0 = inlined_call_operand.vmem [shape: f32[2,8,8,128], index: 0, kind: input, shape index: {}]
  %s1 = inlined_call_operand.vmem [shape: bf16[1152,128], index: 1, kind: input, shape index: {}]
  %s2 = inlined_call_operand.vmem [shape: f32[1,128], index: 2, kind: input, shape index: {}]
  %s3 = inlined_call_operand.vmem [shape: f32[2,4,4,128], index: 3, kind: output, shape index: {}]
  %s4 = sld [smem:[#allocation0]]
  $region22: #{_lambda_.7} parent=0
    _
  %s6 = ssub.s32 1, %s4
  %s7 = scalar_select 0, %s6, %s4
  // Predicated region
  $region2: #{_lambda_.7} parent=0 // pred_check
    _
  $region3: #{_lambda_.7} parent=0 // pred_check_branch
    %9 = sbr.rel (0) target = $region5
  $region4: #{_lambda_.7} parent=0 // pred_region
    _
  $region5: #{_lambda_.7} parent=0 // pred_fallthru
    _
  // Predicated region
  $region6: #{_lambda_.7} parent=0 // pred_check
    _
  $region7: #{_lambda_.7} parent=0 // pred_check_branch
    %11 = sbr.rel (0) target = $region9
  $region8: #{_lambda_.7} parent=0 // pred_region
    _
  $region9: #{_lambda_.7} parent=0 // pred_fallthru
    _
  // Predicated region
  $region10: #{_lambda_.7} parent=0 // pred_check
    _
  $region11: #{_lambda_.7} parent=0 // pred_check_branch
    %13 = sbr.rel (0) target = $region13
  $region12: #{_lambda_.7} parent=0 // pred_region
    _
  $region13: #{_lambda_.7} parent=0 // pred_fallthru
    _
  %15 = vst [vmem:[#allocation2] sm:$0xff] 0.0
  %16 = vst [vmem:[#allocation2 + $0x8] sm:$0xff] 0.0
  %17 = vst [vmem:[#allocation2 + $0x10] sm:$0x1] 0.0
  %18 = vst [vmem:[#allocation2 + $0xf0] sm:$0xff] 0.0
  %19 = vst [vmem:[#allocation2 + $0xf8] sm:$0xff] 0.0
  %20 = vst [vmem:[#allocation2 + $0x100] sm:$0x1] 0.0
  %s21 = scalar_lea.vmem [#allocation2], 216
  %22 = vst [vmem:[%s21] sm:$0xff] 0.0
  %23 = vst [vmem:[%s21 + $0x8] sm:$0xff] 0.0
  %24 = vst [vmem:[%s21 + $0x10] sm:$0x1] 0.0
  %25 = vst [vmem:[%s21 + $0xf0] sm:$0xff] 0.0
  %26 = vst [vmem:[%s21 + $0xf8] sm:$0xff] 0.0
  %27 = vst [vmem:[%s21 + $0x100] sm:$0x1] 0.0
  %28 = vst [vmem:[#allocation2 + $0x7] sm:$0x1] 0.0
  %29 = vst [vmem:[#allocation2 + $0x1f] sm:$0x1] 0.0
  %30 = vst [vmem:[#allocation2 + $0x37] sm:$0x1] 0.0
  %31 = vst [vmem:[#allocation2 + $0x4f] sm:$0x1] 0.0
  %32 = vst [vmem:[#allocation2 + $0x67] sm:$0x1] 0.0
  %33 = vst [vmem:[#allocation2 + $0x7f] sm:$0x1] 0.0
  %34 = vst [vmem:[#allocation2 + $0x97] sm:$0x1] 0.0
  %35 = vst [vmem:[#allocation2 + $0xaf] sm:$0x1] 0.0
  %36 = vst [vmem:[#allocation2 + $0xc7] sm:$0x1] 0.0
  %37 = vst [vmem:[#allocation2 + $0xdf] sm:$0x1] 0.0
  %38 = vst [vmem:[#allocation2 + $0xf7] sm:$0x1] 0.0
  %39 = vst [vmem:[#allocation2 + $0x10f] sm:$0x1] 0.0
  %40 = vst [vmem:[#allocation2 + $0x127] sm:$0x1] 0.0
  %41 = vst [vmem:[#allocation2 + $0x13f] sm:$0x1] 0.0
  %42 = vst [vmem:[#allocation2 + $0x157] sm:$0x1] 0.0
  %43 = vst [vmem:[#allocation2 + $0x16f] sm:$0x1] 0.0
  %44 = vst [vmem:[#allocation2 + $0x187] sm:$0x1] 0.0
  %45 = vst [vmem:[#allocation2 + $0x19f] sm:$0x1] 0.0
  %46 = vst [vmem:[#allocation2 + $0x1b7] sm:$0x1] 0.0
  %47 = vst [vmem:[#allocation2 + $0x1cf] sm:$0x1] 0.0
  %48 = vst [vmem:[#allocation2 + $0x10] sm:$0x1] 0.0
  %49 = vst [vmem:[#allocation2 + $0x28] sm:$0x1] 0.0
  %50 = vst [vmem:[#allocation2 + $0x40] sm:$0x1] 0.0
  %51 = vst [vmem:[#allocation2 + $0x58] sm:$0x1] 0.0
  %52 = vst [vmem:[#allocation2 + $0x70] sm:$0x1] 0.0
  %53 = vst [vmem:[#allocation2 + $0x88] sm:$0x1] 0.0
  %54 = vst [vmem:[#allocation2 + $0xa0] sm:$0x1] 0.0
  %55 = vst [vmem:[#allocation2 + $0xb8] sm:$0x1] 0.0
  %56 = vst [vmem:[#allocation2 + $0xd0] sm:$0x1] 0.0
  %57 = vst [vmem:[#allocation2 + $0xe8] sm:$0x1] 0.0
  %58 = vst [vmem:[#allocation2 + $0x100] sm:$0x1] 0.0
  %59 = vst [vmem:[#allocation2 + $0x118] sm:$0x1] 0.0
  %60 = vst [vmem:[#allocation2 + $0x130] sm:$0x1] 0.0
  %61 = vst [vmem:[#allocation2 + $0x148] sm:$0x1] 0.0
  %62 = vst [vmem:[#allocation2 + $0x160] sm:$0x1] 0.0
  %63 = vst [vmem:[#allocation2 + $0x178] sm:$0x1] 0.0
  %64 = vst [vmem:[#allocation2 + $0x190] sm:$0x1] 0.0
  %65 = vst [vmem:[#allocation2 + $0x1a8] sm:$0x1] 0.0
  %66 = vst [vmem:[#allocation2 + $0x1c0] sm:$0x1] 0.0
  %67 = vst [vmem:[#allocation2 + $0x1d8] sm:$0x1] 0.0
  %v68 = vld [vmem:[%s0] sm:$0xff]
  %v69 = vld [vmem:[%s0 + $0x8] sm:$0xff]
  %v70 = vld [vmem:[%s0 + $0x10] sm:$0xff]
  %v71 = vld [vmem:[%s0 + $0x18] sm:$0xff]
  %v72 = vld [vmem:[%s0 + $0x20] sm:$0xff]
  %v73 = vld [vmem:[%s0 + $0x28] sm:$0xff]
  %v74 = vld [vmem:[%s0 + $0x30] sm:$0xff]
  %v75 = vld [vmem:[%s0 + $0x38] sm:$0xff]
  %v76 = vld [vmem:[%s0 + $0x40] sm:$0xff]
  %v77 = vld [vmem:[%s0 + $0x48] sm:$0xff]
  %v78 = vld [vmem:[%s0 + $0x50] sm:$0xff]
  %v79 = vld [vmem:[%s0 + $0x58] sm:$0xff]
  %v80 = vld [vmem:[%s0 + $0x60] sm:$0xff]
  %v81 = vld [vmem:[%s0 + $0x68] sm:$0xff]
  %v82 = vld [vmem:[%s0 + $0x70] sm:$0xff]
  %v83 = vld [vmem:[%s0 + $0x78] sm:$0xff]
  %s84 = scalar_lea.vmem [#allocation2], 24
  %85 = vst [vmem:[%s84 + $0x8] sm:$0xff] %v68
  %86 = vst [vmem:[%s84 + $0x20] sm:$0xff] %v69
  %87 = vst [vmem:[%s84 + $0x38] sm:$0xff] %v70
  %88 = vst [vmem:[%s84 + $0x50] sm:$0xff] %v71
  %89 = vst [vmem:[%s84 + $0x68] sm:$0xff] %v72
  %90 = vst [vmem:[%s84 + $0x80] sm:$0xff] %v73
  %91 = vst [vmem:[%s84 + $0x98] sm:$0xff] %v74
  %92 = vst [vmem:[%s84 + $0xb0] sm:$0xff] %v75
  %93 = vst [vmem:[%s84 + $0xf8] sm:$0xff] %v76
  %94 = vst [vmem:[%s84 + $0x110] sm:$0xff] %v77
  %95 = vst [vmem:[%s84 + $0x128] sm:$0xff] %v78
  %96 = vst [vmem:[%s84 + $0x140] sm:$0xff] %v79
  %97 = vst [vmem:[%s84 + $0x158] sm:$0xff] %v80
  %98 = vst [vmem:[%s84 + $0x170] sm:$0xff] %v81
  %99 = vst [vmem:[%s84 + $0x188] sm:$0xff] %v82
  %100 = vst [vmem:[%s84 + $0x1a0] sm:$0xff] %v83
  %v101 = vld [vmem:[#allocation2 + $0x7] sm:$0xff]
  %v102 = vld [vmem:[#allocation2 + $0x1f] sm:$0xff]
  %v103 = vld [vmem:[#allocation2 + $0x37] sm:$0xff]
  %v104 = vld [vmem:[#allocation2 + $0x4f] sm:$0xff]
  %v105 = vld [vmem:[#allocation2 + $0x67] sm:$0xff]
  %v106 = vld [vmem:[#allocation2 + $0x7f] sm:$0xff]
  %v107 = vld [vmem:[#allocation2 + $0x97] sm:$0xff]
  %v108 = vld [vmem:[#allocation2 + $0xaf] sm:$0xff]
  %v109 = vld [vmem:[#allocation2 + $0xf7] sm:$0xff]
  %v110 = vld [vmem:[#allocation2 + $0x10f] sm:$0xff]
  %v111 = vld [vmem:[#allocation2 + $0x127] sm:$0xff]
  %v112 = vld [vmem:[#allocation2 + $0x13f] sm:$0xff]
  %v113 = vld [vmem:[#allocation2 + $0x157] sm:$0xff]
  %v114 = vld [vmem:[#allocation2 + $0x16f] sm:$0xff]
  %v115 = vld [vmem:[#allocation2 + $0x187] sm:$0xff]
  %v116 = vld [vmem:[#allocation2 + $0x19f] sm:$0xff]
  %v117 = vpack.c.bf16 %v102, %v101
  %v118 = vpack.c.bf16 %v104, %v103
  %v119 = vpack.c.bf16 %v106, %v105
  %v120 = vpack.c.bf16 %v108, %v107
  %v121 = vpack.c.bf16 %v110, %v109
  %v122 = vpack.c.bf16 %v112, %v111
  %v123 = vpack.c.bf16 %v114, %v113
  %v124 = vpack.c.bf16 %v116, %v115
  %125 = vst [vmem:[#allocation3] sm:$0xff] %v117
  %126 = vst [vmem:[#allocation3 + $0x48] sm:$0xff] %v118
  %127 = vst [vmem:[#allocation3 + $0x90] sm:$0xff] %v119
  %128 = vst [vmem:[#allocation3 + $0xd8] sm:$0xff] %v120
  %129 = vst [vmem:[#allocation3 + $0x120] sm:$0xff] %v121
  %130 = vst [vmem:[#allocation3 + $0x168] sm:$0xff] %v122
  %131 = vst [vmem:[#allocation3 + $0x1b0] sm:$0xff] %v123
  %132 = vst [vmem:[#allocation3 + $0x1f8] sm:$0xff] %v124
  %v133 = vld [vmem:[#allocation2 + $0x8] sm:$0xff]
  %v134 = vld [vmem:[#allocation2 + $0x20] sm:$0xff]
  %v135 = vld [vmem:[#allocation2 + $0x38] sm:$0xff]
  %v136 = vld [vmem:[#allocation2 + $0x50] sm:$0xff]
  %v137 = vld [vmem:[#allocation2 + $0x68] sm:$0xff]
  %v138 = vld [vmem:[#allocation2 + $0x80] sm:$0xff]
  %v139 = vld [vmem:[#allocation2 + $0x98] sm:$0xff]
  %v140 = vld [vmem:[#allocation2 + $0xb0] sm:$0xff]
  %v141 = vld [vmem:[#allocation2 + $0xf8] sm:$0xff]
  %v142 = vld [vmem:[#allocation2 + $0x110] sm:$0xff]
  %v143 = vld [vmem:[#allocation2 + $0x128] sm:$0xff]
  %v144 = vld [vmem:[#allocation2 + $0x140] sm:$0xff]
  %v145 = vld [vmem:[#allocation2 + $0x158] sm:$0xff]
  %v146 = vld [vmem:[#allocation2 + $0x170] sm:$0xff]
  %v147 = vld [vmem:[#allocation2 + $0x188] sm:$0xff]
  %v148 = vld [vmem:[#allocation2 + $0x1a0] sm:$0xff]
  %v149 = vpack.c.bf16 %v134, %v133
  %v150 = vpack.c.bf16 %v136, %v135
  %v151 = vpack.c.bf16 %v138, %v137
  %v152 = vpack.c.bf16 %v140, %v139
  %v153 = vpack.c.bf16 %v142, %v141
  %v154 = vpack.c.bf16 %v144, %v143
  %v155 = vpack.c.bf16 %v146, %v145
  %v156 = vpack.c.bf16 %v148, %v147
  %157 = vst [vmem:[#allocation3 + $0x8] sm:$0xff] %v149
  %158 = vst [vmem:[#allocation3 + $0x50] sm:$0xff] %v150
  %159 = vst [vmem:[#allocation3 + $0x98] sm:$0xff] %v151
  %160 = vst [vmem:[#allocation3 + $0xe0] sm:$0xff] %v152
  %161 = vst [vmem:[#allocation3 + $0x128] sm:$0xff] %v153
  %162 = vst [vmem:[#allocation3 + $0x170] sm:$0xff] %v154
  %163 = vst [vmem:[#allocation3 + $0x1b8] sm:$0xff] %v155
  %164 = vst [vmem:[#allocation3 + $0x200] sm:$0xff] %v156
  %v165 = vld [vmem:[#allocation2 + $0x9] sm:$0xff]
  %v166 = vld [vmem:[#allocation2 + $0x21] sm:$0xff]
  %v167 = vld [vmem:[#allocation2 + $0x39] sm:$0xff]
  %v168 = vld [vmem:[#allocation2 + $0x51] sm:$0xff]
  %v169 = vld [vmem:[#allocation2 + $0x69] sm:$0xff]
  %v170 = vld [vmem:[#allocation2 + $0x81] sm:$0xff]
  %v171 = vld [vmem:[#allocation2 + $0x99] sm:$0xff]
  %v172 = vld [vmem:[#allocation2 + $0xb1] sm:$0xff]
  %v173 = vld [vmem:[#allocation2 + $0xf9] sm:$0xff]
  %v174 = vld [vmem:[#allocation2 + $0x111] sm:$0xff]
  %v175 = vld [vmem:[#allocation2 + $0x129] sm:$0xff]
  %v176 = vld [vmem:[#allocation2 + $0x141] sm:$0xff]
  %v177 = vld [vmem:[#allocation2 + $0x159] sm:$0xff]
  %v178 = vld [vmem:[#allocation2 + $0x171] sm:$0xff]
  %v179 = vld [vmem:[#allocation2 + $0x189] sm:$0xff]
  %v180 = vld [vmem:[#allocation2 + $0x1a1] sm:$0xff]
  %v181 = vpack.c.bf16 %v166, %v165
  %v182 = vpack.c.bf16 %v168, %v167
  %v183 = vpack.c.bf16 %v170, %v169
  %v184 = vpack.c.bf16 %v172, %v171
  %v185 = vpack.c.bf16 %v174, %v173
  %v186 = vpack.c.bf16 %v176, %v175
  %v187 = vpack.c.bf16 %v178, %v177
  %v188 = vpack.c.bf16 %v180, %v179
  %189 = vst [vmem:[#allocation3 + $0x10] sm:$0xff] %v181
  %190 = vst [vmem:[#allocation3 + $0x58] sm:$0xff] %v182
  %191 = vst [vmem:[#allocation3 + $0xa0] sm:$0xff] %v183
  %192 = vst [vmem:[#allocation3 + $0xe8] sm:$0xff] %v184
  %193 = vst [vmem:[#allocation3 + $0x130] sm:$0xff] %v185
  %194 = vst [vmem:[#allocation3 + $0x178] sm:$0xff] %v186
  %195 = vst [vmem:[#allocation3 + $0x1c0] sm:$0xff] %v187
  %196 = vst [vmem:[#allocation3 + $0x208] sm:$0xff] %v188
  %v197 = vld [vmem:[%s84 + $0x7] sm:$0xff]
  %v198 = vld [vmem:[%s84 + $0x1f] sm:$0xff]
  %v199 = vld [vmem:[%s84 + $0x37] sm:$0xff]
  %v200 = vld [vmem:[%s84 + $0x4f] sm:$0xff]
  %v201 = vld [vmem:[%s84 + $0x67] sm:$0xff]
  %v202 = vld [vmem:[%s84 + $0x7f] sm:$0xff]
  %v203 = vld [vmem:[%s84 + $0x97] sm:$0xff]
  %v204 = vld [vmem:[%s84 + $0xaf] sm:$0xff]
  %v205 = vld [vmem:[%s84 + $0xf7] sm:$0xff]
  %v206 = vld [vmem:[%s84 + $0x10f] sm:$0xff]
  %v207 = vld [vmem:[%s84 + $0x127] sm:$0xff]
  %v208 = vld [vmem:[%s84 + $0x13f] sm:$0xff]
  %v209 = vld [vmem:[%s84 + $0x157] sm:$0xff]
  %v210 = vld [vmem:[%s84 + $0x16f] sm:$0xff]
  %v211 = vld [vmem:[%s84 + $0x187] sm:$0xff]
  %v212 = vld [vmem:[%s84 + $0x19f] sm:$0xff]
  %v213 = vpack.c.bf16 %v198, %v197
  %v214 = vpack.c.bf16 %v200, %v199
  %v215 = vpack.c.bf16 %v202, %v201
  %v216 = vpack.c.bf16 %v204, %v203
  %v217 = vpack.c.bf16 %v206, %v205
  %v218 = vpack.c.bf16 %v208, %v207
  %v219 = vpack.c.bf16 %v210, %v209
  %v220 = vpack.c.bf16 %v212, %v211
  %221 = vst [vmem:[#allocation3 + $0x18] sm:$0xff] %v213
  %222 = vst [vmem:[#allocation3 + $0x60] sm:$0xff] %v214
  %223 = vst [vmem:[#allocation3 + $0xa8] sm:$0xff] %v215
  %224 = vst [vmem:[#allocation3 + $0xf0] sm:$0xff] %v216
  %225 = vst [vmem:[#allocation3 + $0x138] sm:$0xff] %v217
  %226 = vst [vmem:[#allocation3 + $0x180] sm:$0xff] %v218
  %227 = vst [vmem:[#allocation3 + $0x1c8] sm:$0xff] %v219
  %228 = vst [vmem:[#allocation3 + $0x210] sm:$0xff] %v220
  %v229 = vld [vmem:[%s84 + $0x8] sm:$0xff]
  %v230 = vld [vmem:[%s84 + $0x20] sm:$0xff]
  %v231 = vld [vmem:[%s84 + $0x38] sm:$0xff]
  %v232 = vld [vmem:[%s84 + $0x50] sm:$0xff]
  %v233 = vld [vmem:[%s84 + $0x68] sm:$0xff]
  %v234 = vld [vmem:[%s84 + $0x80] sm:$0xff]
  %v235 = vld [vmem:[%s84 + $0x98] sm:$0xff]
  %v236 = vld [vmem:[%s84 + $0xb0] sm:$0xff]
  %v237 = vld [vmem:[%s84 + $0xf8] sm:$0xff]
  %v238 = vld [vmem:[%s84 + $0x110] sm:$0xff]
  %v239 = vld [vmem:[%s84 + $0x128] sm:$0xff]
  %v240 = vld [vmem:[%s84 + $0x140] sm:$0xff]
  %v241 = vld [vmem:[%s84 + $0x158] sm:$0xff]
  %v242 = vld [vmem:[%s84 + $0x170] sm:$0xff]
  %v243 = vld [vmem:[%s84 + $0x188] sm:$0xff]
  %v244 = vld [vmem:[%s84 + $0x1a0] sm:$0xff]
  %v245 = vpack.c.bf16 %v230, %v229
  %v246 = vpack.c.bf16 %v232, %v231
  %v247 = vpack.c.bf16 %v234, %v233
  %v248 = vpack.c.bf16 %v236, %v235
  %v249 = vpack.c.bf16 %v238, %v237
  %v250 = vpack.c.bf16 %v240, %v239
  %v251 = vpack.c.bf16 %v242, %v241
  %v252 = vpack.c.bf16 %v244, %v243
  %253 = vst [vmem:[#allocation3 + $0x20] sm:$0xff] %v245
  %254 = vst [vmem:[#allocation3 + $0x68] sm:$0xff] %v246
  %255 = vst [vmem:[#allocation3 + $0xb0] sm:$0xff] %v247
  %256 = vst [vmem:[#allocation3 + $0xf8] sm:$0xff] %v248
  %257 = vst [vmem:[#allocation3 + $0x140] sm:$0xff] %v249
  %258 = vst [vmem:[#allocation3 + $0x188] sm:$0xff] %v250
  %259 = vst [vmem:[#allocation3 + $0x1d0] sm:$0xff] %v251
  %260 = vst [vmem:[#allocation3 + $0x218] sm:$0xff] %v252
  %v261 = vld [vmem:[%s84 + $0x9] sm:$0xff]
  %v262 = vld [vmem:[%s84 + $0x21] sm:$0xff]
  %v263 = vld [vmem:[%s84 + $0x39] sm:$0xff]
  %v264 = vld [vmem:[%s84 + $0x51] sm:$0xff]
  %v265 = vld [vmem:[%s84 + $0x69] sm:$0xff]
  %v266 = vld [vmem:[%s84 + $0x81] sm:$0xff]
  %v267 = vld [vmem:[%s84 + $0x99] sm:$0xff]
  %v268 = vld [vmem:[%s84 + $0xb1] sm:$0xff]
  %v269 = vld [vmem:[%s84 + $0xf9] sm:$0xff]
  %v270 = vld [vmem:[%s84 + $0x111] sm:$0xff]
  %v271 = vld [vmem:[%s84 + $0x129] sm:$0xff]
  %v272 = vld [vmem:[%s84 + $0x141] sm:$0xff]
  %v273 = vld [vmem:[%s84 + $0x159] sm:$0xff]
  %v274 = vld [vmem:[%s84 + $0x171] sm:$0xff]
  %v275 = vld [vmem:[%s84 + $0x189] sm:$0xff]
  %v276 = vld [vmem:[%s84 + $0x1a1] sm:$0xff]
  %v277 = vpack.c.bf16 %v262, %v261
  %v278 = vpack.c.bf16 %v264, %v263
  %v279 = vpack.c.bf16 %v266, %v265
  %v280 = vpack.c.bf16 %v268, %v267
  %v281 = vpack.c.bf16 %v270, %v269
  %v282 = vpack.c.bf16 %v272, %v271
  %v283 = vpack.c.bf16 %v274, %v273
  %v284 = vpack.c.bf16 %v276, %v275
  %285 = vst [vmem:[#allocation3 + $0x28] sm:$0xff] %v277
  %286 = vst [vmem:[#allocation3 + $0x70] sm:$0xff] %v278
  %287 = vst [vmem:[#allocation3 + $0xb8] sm:$0xff] %v279
  %288 = vst [vmem:[#allocation3 + $0x100] sm:$0xff] %v280
  %289 = vst [vmem:[#allocation3 + $0x148] sm:$0xff] %v281
  %290 = vst [vmem:[#allocation3 + $0x190] sm:$0xff] %v282
  %291 = vst [vmem:[#allocation3 + $0x1d8] sm:$0xff] %v283
  %292 = vst [vmem:[#allocation3 + $0x220] sm:$0xff] %v284
  %s293 = scalar_lea.vmem [#allocation2], 48
  %v294 = vld [vmem:[%s293 + $0x7] sm:$0xff]
  %v295 = vld [vmem:[%s293 + $0x1f] sm:$0xff]
  %v296 = vld [vmem:[%s293 + $0x37] sm:$0xff]
  %v297 = vld [vmem:[%s293 + $0x4f] sm:$0xff]
  %v298 = vld [vmem:[%s293 + $0x67] sm:$0xff]
  %v299 = vld [vmem:[%s293 + $0x7f] sm:$0xff]
  %v300 = vld [vmem:[%s293 + $0x97] sm:$0xff]
  %v301 = vld [vmem:[%s293 + $0xaf] sm:$0xff]
  %v302 = vld [vmem:[%s293 + $0xf7] sm:$0xff]
  %v303 = vld [vmem:[%s293 + $0x10f] sm:$0xff]
  %v304 = vld [vmem:[%s293 + $0x127] sm:$0xff]
  %v305 = vld [vmem:[%s293 + $0x13f] sm:$0xff]
  %v306 = vld [vmem:[%s293 + $0x157] sm:$0xff]
  %v307 = vld [vmem:[%s293 + $0x16f] sm:$0xff]
  %v308 = vld [vmem:[%s293 + $0x187] sm:$0xff]
  %v309 = vld [vmem:[%s293 + $0x19f] sm:$0xff]
  %v310 = vpack.c.bf16 %v295, %v294
  %v311 = vpack.c.bf16 %v297, %v296
  %v312 = vpack.c.bf16 %v299, %v298
  %v313 = vpack.c.bf16 %v301, %v300
  %v314 = vpack.c.bf16 %v303, %v302
  %v315 = vpack.c.bf16 %v305, %v304
  %v316 = vpack.c.bf16 %v307, %v306
  %v317 = vpack.c.bf16 %v309, %v308
  %318 = vst [vmem:[#allocation3 + $0x30] sm:$0xff] %v310
  %319 = vst [vmem:[#allocation3 + $0x78] sm:$0xff] %v311
  %320 = vst [vmem:[#allocation3 + $0xc0] sm:$0xff] %v312
  %321 = vst [vmem:[#allocation3 + $0x108] sm:$0xff] %v313
  %322 = vst [vmem:[#allocation3 + $0x150] sm:$0xff] %v314
  %323 = vst [vmem:[#allocation3 + $0x198] sm:$0xff] %v315
  %324 = vst [vmem:[#allocation3 + $0x1e0] sm:$0xff] %v316
  %325 = vst [vmem:[#allocation3 + $0x228] sm:$0xff] %v317
  %v326 = vld [vmem:[%s293 + $0x8] sm:$0xff]
  %v327 = vld [vmem:[%s293 + $0x20] sm:$0xff]
  %v328 = vld [vmem:[%s293 + $0x38] sm:$0xff]
  %v329 = vld [vmem:[%s293 + $0x50] sm:$0xff]
  %v330 = vld [vmem:[%s293 + $0x68] sm:$0xff]
  %v331 = vld [vmem:[%s293 + $0x80] sm:$0xff]
  %v332 = vld [vmem:[%s293 + $0x98] sm:$0xff]
  %v333 = vld [vmem:[%s293 + $0xb0] sm:$0xff]
  %v334 = vld [vmem:[%s293 + $0xf8] sm:$0xff]
  %v335 = vld [vmem:[%s293 + $0x110] sm:$0xff]
  %v336 = vld [vmem:[%s293 + $0x128] sm:$0xff]
  %v337 = vld [vmem:[%s293 + $0x140] sm:$0xff]
  %v338 = vld [vmem:[%s293 + $0x158] sm:$0xff]
  %v339 = vld [vmem:[%s293 + $0x170] sm:$0xff]
  %v340 = vld [vmem:[%s293 + $0x188] sm:$0xff]
  %v341 = vld [vmem:[%s293 + $0x1a0] sm:$0xff]
  %v342 = vpack.c.bf16 %v327, %v326
  %v343 = vpack.c.bf16 %v329, %v328
  %v344 = vpack.c.bf16 %v331, %v330
  %v345 = vpack.c.bf16 %v333, %v332
  %v346 = vpack.c.bf16 %v335, %v334
  %v347 = vpack.c.bf16 %v337, %v336
  %v348 = vpack.c.bf16 %v339, %v338
  %v349 = vpack.c.bf16 %v341, %v340
  %350 = vst [vmem:[#allocation3 + $0x38] sm:$0xff] %v342
  %351 = vst [vmem:[#allocation3 + $0x80] sm:$0xff] %v343
  %352 = vst [vmem:[#allocation3 + $0xc8] sm:$0xff] %v344
  %353 = vst [vmem:[#allocation3 + $0x110] sm:$0xff] %v345
  %354 = vst [vmem:[#allocation3 + $0x158] sm:$0xff] %v346
  %355 = vst [vmem:[#allocation3 + $0x1a0] sm:$0xff] %v347
  %356 = vst [vmem:[#allocation3 + $0x1e8] sm:$0xff] %v348
  %357 = vst [vmem:[#allocation3 + $0x230] sm:$0xff] %v349
  %v358 = vld [vmem:[%s293 + $0x9] sm:$0xff]
  %v359 = vld [vmem:[%s293 + $0x21] sm:$0xff]
  %v360 = vld [vmem:[%s293 + $0x39] sm:$0xff]
  %v361 = vld [vmem:[%s293 + $0x51] sm:$0xff]
  %v362 = vld [vmem:[%s293 + $0x69] sm:$0xff]
  %v363 = vld [vmem:[%s293 + $0x81] sm:$0xff]
  %v364 = vld [vmem:[%s293 + $0x99] sm:$0xff]
  %v365 = vld [vmem:[%s293 + $0xb1] sm:$0xff]
  %v366 = vld [vmem:[%s293 + $0xf9] sm:$0xff]
  %v367 = vld [vmem:[%s293 + $0x111] sm:$0xff]
  %v368 = vld [vmem:[%s293 + $0x129] sm:$0xff]
  %v369 = vld [vmem:[%s293 + $0x141] sm:$0xff]
  %v370 = vld [vmem:[%s293 + $0x159] sm:$0xff]
  %v371 = vld [vmem:[%s293 + $0x171] sm:$0xff]
  %v372 = vld [vmem:[%s293 + $0x189] sm:$0xff]
  %v373 = vld [vmem:[%s293 + $0x1a1] sm:$0xff]
  %v374 = vpack.c.bf16 %v359, %v358
  %v375 = vpack.c.bf16 %v361, %v360
  %v376 = vpack.c.bf16 %v363, %v362
  %v377 = vpack.c.bf16 %v365, %v364
  %v378 = vpack.c.bf16 %v367, %v366
  %v379 = vpack.c.bf16 %v369, %v368
  %v380 = vpack.c.bf16 %v371, %v370
  %v381 = vpack.c.bf16 %v373, %v372
  %382 = vst [vmem:[#allocation3 + $0x40] sm:$0xff] %v374
  %383 = vst [vmem:[#allocation3 + $0x88] sm:$0xff] %v375
  %384 = vst [vmem:[#allocation3 + $0xd0] sm:$0xff] %v376
  %385 = vst [vmem:[#allocation3 + $0x118] sm:$0xff] %v377
  %386 = vst [vmem:[#allocation3 + $0x160] sm:$0xff] %v378
  %387 = vst [vmem:[#allocation3 + $0x1a8] sm:$0xff] %v379
  %388 = vst [vmem:[#allocation3 + $0x1f0] sm:$0xff] %v380
  %389 = vst [vmem:[#allocation3 + $0x238] sm:$0xff] %v381
  %v390 = vld [vmem:[#allocation3] sm:$0xff]
  %v391 = vld [vmem:[#allocation3 + $0x8] sm:$0xff]
  %v392 = vld [vmem:[#allocation3 + $0x10] sm:$0xff]
  %v393 = vld [vmem:[#allocation3 + $0x18] sm:$0xff]
  %v394 = vld [vmem:[#allocation3 + $0x20] sm:$0xff]
  %v395 = vld [vmem:[#allocation3 + $0x28] sm:$0xff]
  %v396 = vld [vmem:[#allocation3 + $0x30] sm:$0xff]
  %v397 = vld [vmem:[#allocation3 + $0x38] sm:$0xff]
  %v398 = vld [vmem:[#allocation3 + $0x40] sm:$0xff]
  %v399 = vld [vmem:[#allocation3 + $0x48] sm:$0xff]
  %v400 = vld [vmem:[#allocation3 + $0x50] sm:$0xff]
  %v401 = vld [vmem:[#allocation3 + $0x58] sm:$0xff]
  %v402 = vld [vmem:[#allocation3 + $0x60] sm:$0xff]
  %v403 = vld [vmem:[#allocation3 + $0x68] sm:$0xff]
  %v404 = vld [vmem:[#allocation3 + $0x70] sm:$0xff]
  %v405 = vld [vmem:[#allocation3 + $0x78] sm:$0xff]
  %v406 = vld [vmem:[#allocation3 + $0x80] sm:$0xff]
  %v407 = vld [vmem:[#allocation3 + $0x88] sm:$0xff]
  %v408 = vld [vmem:[#allocation3 + $0x90] sm:$0xff]
  %v409 = vld [vmem:[#allocation3 + $0x98] sm:$0xff]
  %v410 = vld [vmem:[#allocation3 + $0xa0] sm:$0xff]
  %v411 = vld [vmem:[#allocation3 + $0xa8] sm:$0xff]
  %v412 = vld [vmem:[#allocation3 + $0xb0] sm:$0xff]
  %v413 = vld [vmem:[#allocation3 + $0xb8] sm:$0xff]
  %v414 = vld [vmem:[#allocation3 + $0xc0] sm:$0xff]
  %v415 = vld [vmem:[#allocation3 + $0xc8] sm:$0xff]
  %v416 = vld [vmem:[#allocation3 + $0xd0] sm:$0xff]
  %v417 = vld [vmem:[#allocation3 + $0xd8] sm:$0xff]
  %v418 = vld [vmem:[#allocation3 + $0xe0] sm:$0xff]
  %v419 = vld [vmem:[#allocation3 + $0xe8] sm:$0xff]
  %v420 = vld [vmem:[#allocation3 + $0xf0] sm:$0xff]
  %v421 = vld [vmem:[#allocation3 + $0xf8] sm:$0xff]
  %v422 = vld [vmem:[#allocation3 + $0x100] sm:$0xff]
  %v423 = vld [vmem:[#allocation3 + $0x108] sm:$0xff]
  %v424 = vld [vmem:[#allocation3 + $0x110] sm:$0xff]
  %v425 = vld [vmem:[#allocation3 + $0x118] sm:$0xff]
  %v426 = vld [vmem:[#allocation3 + $0x120] sm:$0xff]
  %v427 = vld [vmem:[#allocation3 + $0x128] sm:$0xff]
  %v428 = vld [vmem:[#allocation3 + $0x130] sm:$0xff]
  %v429 = vld [vmem:[#allocation3 + $0x138] sm:$0xff]
  %v430 = vld [vmem:[#allocation3 + $0x140] sm:$0xff]
  %v431 = vld [vmem:[#allocation3 + $0x148] sm:$0xff]
  %v432 = vld [vmem:[#allocation3 + $0x150] sm:$0xff]
  %v433 = vld [vmem:[#allocation3 + $0x158] sm:$0xff]
  %v434 = vld [vmem:[#allocation3 + $0x160] sm:$0xff]
  %v435 = vld [vmem:[#allocation3 + $0x168] sm:$0xff]
  %v436 = vld [vmem:[#allocation3 + $0x170] sm:$0xff]
  %v437 = vld [vmem:[#allocation3 + $0x178] sm:$0xff]
  %v438 = vld [vmem:[#allocation3 + $0x180] sm:$0xff]
  %v439 = vld [vmem:[#allocation3 + $0x188] sm:$0xff]
  %v440 = vld [vmem:[#allocation3 + $0x190] sm:$0xff]
  %v441 = vld [vmem:[#allocation3 + $0x198] sm:$0xff]
  %v442 = vld [vmem:[#allocation3 + $0x1a0] sm:$0xff]
  %v443 = vld [vmem:[#allocation3 + $0x1a8] sm:$0xff]
  %v444 = vld [vmem:[#allocation3 + $0x1b0] sm:$0xff]
  %v445 = vld [vmem:[#allocation3 + $0x1b8] sm:$0xff]
  %v446 = vld [vmem:[#allocation3 + $0x1c0] sm:$0xff]
  %v447 = vld [vmem:[#allocation3 + $0x1c8] sm:$0xff]
  %v448 = vld [vmem:[#allocation3 + $0x1d0] sm:$0xff]
  %v449 = vld [vmem:[#allocation3 + $0x1d8] sm:$0xff]
  %v450 = vld [vmem:[#allocation3 + $0x1e0] sm:$0xff]
  %v451 = vld [vmem:[#allocation3 + $0x1e8] sm:$0xff]
  %v452 = vld [vmem:[#allocation3 + $0x1f0] sm:$0xff]
  %v453 = vld [vmem:[#allocation3 + $0x1f8] sm:$0xff]
  %v454 = vld [vmem:[#allocation3 + $0x200] sm:$0xff]
  %v455 = vld [vmem:[#allocation3 + $0x208] sm:$0xff]
  %v456 = vld [vmem:[#allocation3 + $0x210] sm:$0xff]
  %v457 = vld [vmem:[#allocation3 + $0x218] sm:$0xff]
  %v458 = vld [vmem:[#allocation3 + $0x220] sm:$0xff]
  %v459 = vld [vmem:[#allocation3 + $0x228] sm:$0xff]
  %v460 = vld [vmem:[#allocation3 + $0x230] sm:$0xff]
  %v461 = vld [vmem:[#allocation3 + $0x238] sm:$0xff]
  %v462 = vld [vmem:[%s1] sm:$0xf]
  %v463 = vld [vmem:[%s1 + $0x4] sm:$0xf]
  %v464 = vld [vmem:[%s1 + $0x8] sm:$0xf]
  %v465 = vld [vmem:[%s1 + $0xc] sm:$0xf]
  %v466 = vld [vmem:[%s1 + $0x10] sm:$0xf]
  %v467 = vld [vmem:[%s1 + $0x14] sm:$0xf]
  %v468 = vld [vmem:[%s1 + $0x18] sm:$0xf]
  %v469 = vld [vmem:[%s1 + $0x1c] sm:$0xf]
  %v470 = vld [vmem:[%s1 + $0x20] sm:$0xf]
  %v471 = vld [vmem:[%s1 + $0x24] sm:$0xf]
  %v472 = vld [vmem:[%s1 + $0x28] sm:$0xf]
  %v473 = vld [vmem:[%s1 + $0x2c] sm:$0xf]
  %v474 = vld [vmem:[%s1 + $0x30] sm:$0xf]
  %v475 = vld [vmem:[%s1 + $0x34] sm:$0xf]
  %v476 = vld [vmem:[%s1 + $0x38] sm:$0xf]
  %v477 = vld [vmem:[%s1 + $0x3c] sm:$0xf]
  %v478 = vld [vmem:[%s1 + $0x40] sm:$0xf]
  %v479 = vld [vmem:[%s1 + $0x44] sm:$0xf]
  %v480 = vld [vmem:[%s1 + $0x48] sm:$0xf]
  %v481 = vld [vmem:[%s1 + $0x4c] sm:$0xf]
  %v482 = vld [vmem:[%s1 + $0x50] sm:$0xf]
  %v483 = vld [vmem:[%s1 + $0x54] sm:$0xf]
  %v484 = vld [vmem:[%s1 + $0x58] sm:$0xf]
  %v485 = vld [vmem:[%s1 + $0x5c] sm:$0xf]
  %v486 = vld [vmem:[%s1 + $0x60] sm:$0xf]
  %v487 = vld [vmem:[%s1 + $0x64] sm:$0xf]
  %v488 = vld [vmem:[%s1 + $0x68] sm:$0xf]
  %v489 = vld [vmem:[%s1 + $0x6c] sm:$0xf]
  %v490 = vld [vmem:[%s1 + $0x70] sm:$0xf]
  %v491 = vld [vmem:[%s1 + $0x74] sm:$0xf]
  %v492 = vld [vmem:[%s1 + $0x78] sm:$0xf]
  %v493 = vld [vmem:[%s1 + $0x7c] sm:$0xf]
  %v494 = vld [vmem:[%s1 + $0x80] sm:$0xf]
  %v495 = vld [vmem:[%s1 + $0x84] sm:$0xf]
  %v496 = vld [vmem:[%s1 + $0x88] sm:$0xf]
  %v497 = vld [vmem:[%s1 + $0x8c] sm:$0xf]
  %v498 = vld [vmem:[%s1 + $0x90] sm:$0xf]
  %v499 = vld [vmem:[%s1 + $0x94] sm:$0xf]
  %v500 = vld [vmem:[%s1 + $0x98] sm:$0xf]
  %v501 = vld [vmem:[%s1 + $0x9c] sm:$0xf]
  %v502 = vld [vmem:[%s1 + $0xa0] sm:$0xf]
  %v503 = vld [vmem:[%s1 + $0xa4] sm:$0xf]
  %v504 = vld [vmem:[%s1 + $0xa8] sm:$0xf]
  %v505 = vld [vmem:[%s1 + $0xac] sm:$0xf]
  %v506 = vld [vmem:[%s1 + $0xb0] sm:$0xf]
  %v507 = vld [vmem:[%s1 + $0xb4] sm:$0xf]
  %v508 = vld [vmem:[%s1 + $0xb8] sm:$0xf]
  %v509 = vld [vmem:[%s1 + $0xbc] sm:$0xf]
  %v510 = vld [vmem:[%s1 + $0xc0] sm:$0xf]
  %v511 = vld [vmem:[%s1 + $0xc4] sm:$0xf]
  %v512 = vld [vmem:[%s1 + $0xc8] sm:$0xf]
  %v513 = vld [vmem:[%s1 + $0xcc] sm:$0xf]
  %v514 = vld [vmem:[%s1 + $0xd0] sm:$0xf]
  %v515 = vld [vmem:[%s1 + $0xd4] sm:$0xf]
  %v516 = vld [vmem:[%s1 + $0xd8] sm:$0xf]
  %v517 = vld [vmem:[%s1 + $0xdc] sm:$0xf]
  %v518 = vld [vmem:[%s1 + $0xe0] sm:$0xf]
  %v519 = vld [vmem:[%s1 + $0xe4] sm:$0xf]
  %v520 = vld [vmem:[%s1 + $0xe8] sm:$0xf]
  %v521 = vld [vmem:[%s1 + $0xec] sm:$0xf]
  %v522 = vld [vmem:[%s1 + $0xf0] sm:$0xf]
  %v523 = vld [vmem:[%s1 + $0xf4] sm:$0xf]
  %v524 = vld [vmem:[%s1 + $0xf8] sm:$0xf]
  %v525 = vld [vmem:[%s1 + $0xfc] sm:$0xf]
  %v526 = vld [vmem:[%s1 + $0x100] sm:$0xf]
  %v527 = vld [vmem:[%s1 + $0x104] sm:$0xf]
  %v528 = vld [vmem:[%s1 + $0x108] sm:$0xf]
  %v529 = vld [vmem:[%s1 + $0x10c] sm:$0xf]
  %v530 = vld [vmem:[%s1 + $0x110] sm:$0xf]
  %v531 = vld [vmem:[%s1 + $0x114] sm:$0xf]
  %v532 = vld [vmem:[%s1 + $0x118] sm:$0xf]
  %v533 = vld [vmem:[%s1 + $0x11c] sm:$0xf]
  %v534 = vld [vmem:[%s1 + $0x120] sm:$0xf]
  %v535 = vld [vmem:[%s1 + $0x124] sm:$0xf]
  %v536 = vld [vmem:[%s1 + $0x128] sm:$0xf]
  %v537 = vld [vmem:[%s1 + $0x12c] sm:$0xf]
  %v538 = vld [vmem:[%s1 + $0x130] sm:$0xf]
  %v539 = vld [vmem:[%s1 + $0x134] sm:$0xf]
  %v540 = vld [vmem:[%s1 + $0x138] sm:$0xf]
  %v541 = vld [vmem:[%s1 + $0x13c] sm:$0xf]
  %v542 = vld [vmem:[%s1 + $0x140] sm:$0xf]
  %v543 = vld [vmem:[%s1 + $0x144] sm:$0xf]
  %v544 = vld [vmem:[%s1 + $0x148] sm:$0xf]
  %v545 = vld [vmem:[%s1 + $0x14c] sm:$0xf]
  %v546 = vld [vmem:[%s1 + $0x150] sm:$0xf]
  %v547 = vld [vmem:[%s1 + $0x154] sm:$0xf]
  %v548 = vld [vmem:[%s1 + $0x158] sm:$0xf]
  %v549 = vld [vmem:[%s1 + $0x15c] sm:$0xf]
  %v550 = vld [vmem:[%s1 + $0x160] sm:$0xf]
  %v551 = vld [vmem:[%s1 + $0x164] sm:$0xf]
  %v552 = vld [vmem:[%s1 + $0x168] sm:$0xf]
  %v553 = vld [vmem:[%s1 + $0x16c] sm:$0xf]
  %v554 = vld [vmem:[%s1 + $0x170] sm:$0xf]
  %v555 = vld [vmem:[%s1 + $0x174] sm:$0xf]
  %v556 = vld [vmem:[%s1 + $0x178] sm:$0xf]
  %v557 = vld [vmem:[%s1 + $0x17c] sm:$0xf]
  %v558 = vld [vmem:[%s1 + $0x180] sm:$0xf]
  %v559 = vld [vmem:[%s1 + $0x184] sm:$0xf]
  %v560 = vld [vmem:[%s1 + $0x188] sm:$0xf]
  %v561 = vld [vmem:[%s1 + $0x18c] sm:$0xf]
  %v562 = vld [vmem:[%s1 + $0x190] sm:$0xf]
  %v563 = vld [vmem:[%s1 + $0x194] sm:$0xf]
  %v564 = vld [vmem:[%s1 + $0x198] sm:$0xf]
  %v565 = vld [vmem:[%s1 + $0x19c] sm:$0xf]
  %v566 = vld [vmem:[%s1 + $0x1a0] sm:$0xf]
  %v567 = vld [vmem:[%s1 + $0x1a4] sm:$0xf]
  %v568 = vld [vmem:[%s1 + $0x1a8] sm:$0xf]
  %v569 = vld [vmem:[%s1 + $0x1ac] sm:$0xf]
  %v570 = vld [vmem:[%s1 + $0x1b0] sm:$0xf]
  %v571 = vld [vmem:[%s1 + $0x1b4] sm:$0xf]
  %v572 = vld [vmem:[%s1 + $0x1b8] sm:$0xf]
  %v573 = vld [vmem:[%s1 + $0x1bc] sm:$0xf]
  %v574 = vld [vmem:[%s1 + $0x1c0] sm:$0xf]
  %v575 = vld [vmem:[%s1 + $0x1c4] sm:$0xf]
  %v576 = vld [vmem:[%s1 + $0x1c8] sm:$0xf]
  %v577 = vld [vmem:[%s1 + $0x1cc] sm:$0xf]
  %v578 = vld [vmem:[%s1 + $0x1d0] sm:$0xf]
  %v579 = vld [vmem:[%s1 + $0x1d4] sm:$0xf]
  %v580 = vld [vmem:[%s1 + $0x1d8] sm:$0xf]
  %v581 = vld [vmem:[%s1 + $0x1dc] sm:$0xf]
  %v582 = vld [vmem:[%s1 + $0x1e0] sm:$0xf]
  %v583 = vld [vmem:[%s1 + $0x1e4] sm:$0xf]
  %v584 = vld [vmem:[%s1 + $0x1e8] sm:$0xf]
  %v585 = vld [vmem:[%s1 + $0x1ec] sm:$0xf]
  %v586 = vld [vmem:[%s1 + $0x1f0] sm:$0xf]
  %v587 = vld [vmem:[%s1 + $0x1f4] sm:$0xf]
  %v588 = vld [vmem:[%s1 + $0x1f8] sm:$0xf]
  %v589 = vld [vmem:[%s1 + $0x1fc] sm:$0xf]
  %v590 = vld [vmem:[%s1 + $0x200] sm:$0xf]
  %v591 = vld [vmem:[%s1 + $0x204] sm:$0xf]
  %v592 = vld [vmem:[%s1 + $0x208] sm:$0xf]
  %v593 = vld [vmem:[%s1 + $0x20c] sm:$0xf]
  %v594 = vld [vmem:[%s1 + $0x210] sm:$0xf]
  %v595 = vld [vmem:[%s1 + $0x214] sm:$0xf]
  %v596 = vld [vmem:[%s1 + $0x218] sm:$0xf]
  %v597 = vld [vmem:[%s1 + $0x21c] sm:$0xf]
  %v598 = vld [vmem:[%s1 + $0x220] sm:$0xf]
  %v599 = vld [vmem:[%s1 + $0x224] sm:$0xf]
  %v600 = vld [vmem:[%s1 + $0x228] sm:$0xf]
  %v601 = vld [vmem:[%s1 + $0x22c] sm:$0xf]
  %v602 = vld [vmem:[%s1 + $0x230] sm:$0xf]
  %v603 = vld [vmem:[%s1 + $0x234] sm:$0xf]
  %v604 = vld [vmem:[%s1 + $0x238] sm:$0xf]
  %v605 = vld [vmem:[%s1 + $0x23c] sm:$0xf]
  %v606 = vld [vmem:[%s2] sm:$0x1]
  %v608 = vlaneseq
  %v609 = vshrl.u32 %v608, 7
  %v610 = vsub.s32 0, %v609
  %v611 = vrot.slane %v606, %v610
  %v757 = vunpack.c.l.b16 %v462
  %v758 = vunpack.c.l.b16 %v463
  %v759 = vunpack.c.l.b16 %v464
  %v760 = vunpack.c.l.b16 %v465
  %v761 = vunpack.c.l.b16 %v466
  %v762 = vunpack.c.l.b16 %v467
  %v763 = vunpack.c.l.b16 %v468
  %v764 = vunpack.c.l.b16 %v469
  %v765 = vunpack.c.l.b16 %v470
  %v766 = vunpack.c.l.b16 %v471
  %v767 = vunpack.c.l.b16 %v472
  %v768 = vunpack.c.l.b16 %v473
  %v769 = vunpack.c.l.b16 %v474
  %v770 = vunpack.c.l.b16 %v475
  %v771 = vunpack.c.l.b16 %v476
  %v772 = vunpack.c.l.b16 %v477
  %v773 = vunpack.c.l.b16 %v478
  %v774 = vunpack.c.l.b16 %v479
  %v775 = vunpack.c.l.b16 %v480
  %v776 = vunpack.c.l.b16 %v481
  %v777 = vunpack.c.l.b16 %v482
  %v778 = vunpack.c.l.b16 %v483
  %v779 = vunpack.c.l.b16 %v484
  %v780 = vunpack.c.l.b16 %v485
  %v781 = vunpack.c.l.b16 %v486
  %v782 = vunpack.c.l.b16 %v487
  %v783 = vunpack.c.l.b16 %v488
  %v784 = vunpack.c.l.b16 %v489
  %v785 = vunpack.c.l.b16 %v490
  %v786 = vunpack.c.l.b16 %v491
  %v787 = vunpack.c.l.b16 %v492
  %v788 = vunpack.c.l.b16 %v493
  %v789 = vunpack.c.l.b16 %v494
  %v790 = vunpack.c.l.b16 %v495
  %v791 = vunpack.c.l.b16 %v496
  %v792 = vunpack.c.l.b16 %v497
  %v793 = vunpack.c.l.b16 %v498
  %v794 = vunpack.c.l.b16 %v499
  %v795 = vunpack.c.l.b16 %v500
  %v796 = vunpack.c.l.b16 %v501
  %v797 = vunpack.c.l.b16 %v502
  %v798 = vunpack.c.l.b16 %v503
  %v799 = vunpack.c.l.b16 %v504
  %v800 = vunpack.c.l.b16 %v505
  %v801 = vunpack.c.l.b16 %v506
  %v802 = vunpack.c.l.b16 %v507
  %v803 = vunpack.c.l.b16 %v508
  %v804 = vunpack.c.l.b16 %v509
  %v805 = vunpack.c.l.b16 %v510
  %v806 = vunpack.c.l.b16 %v511
  %v807 = vunpack.c.l.b16 %v512
  %v808 = vunpack.c.l.b16 %v513
  %v809 = vunpack.c.l.b16 %v514
  %v810 = vunpack.c.l.b16 %v515
  %v811 = vunpack.c.l.b16 %v516
  %v812 = vunpack.c.l.b16 %v517
  %v813 = vunpack.c.l.b16 %v518
  %v814 = vunpack.c.l.b16 %v519
  %v815 = vunpack.c.l.b16 %v520
  %v816 = vunpack.c.l.b16 %v521
  %v817 = vunpack.c.l.b16 %v522
  %v818 = vunpack.c.l.b16 %v523
  %v819 = vunpack.c.l.b16 %v524
  %v820 = vunpack.c.l.b16 %v525
  %v821 = vunpack.c.l.b16 %v526
  %v822 = vunpack.c.l.b16 %v527
  %v823 = vunpack.c.l.b16 %v528
  %v824 = vunpack.c.l.b16 %v529
  %v825 = vunpack.c.l.b16 %v530
  %v826 = vunpack.c.l.b16 %v531
  %v827 = vunpack.c.l.b16 %v532
  %v828 = vunpack.c.l.b16 %v533
  %v829 = vunpack.c.l.b16 %v534
  %v830 = vunpack.c.l.b16 %v535
  %v831 = vunpack.c.l.b16 %v536
  %v832 = vunpack.c.l.b16 %v537
  %v833 = vunpack.c.l.b16 %v538
  %v834 = vunpack.c.l.b16 %v539
  %v835 = vunpack.c.l.b16 %v540
  %v836 = vunpack.c.l.b16 %v541
  %v837 = vunpack.c.l.b16 %v542
  %v838 = vunpack.c.l.b16 %v543
  %v839 = vunpack.c.l.b16 %v544
  %v840 = vunpack.c.l.b16 %v545
  %v841 = vunpack.c.l.b16 %v546
  %v842 = vunpack.c.l.b16 %v547
  %v843 = vunpack.c.l.b16 %v548
  %v844 = vunpack.c.l.b16 %v549
  %v845 = vunpack.c.l.b16 %v550
  %v846 = vunpack.c.l.b16 %v551
  %v847 = vunpack.c.l.b16 %v552
  %v848 = vunpack.c.l.b16 %v553
  %v849 = vunpack.c.l.b16 %v554
  %v850 = vunpack.c.l.b16 %v555
  %v851 = vunpack.c.l.b16 %v556
  %v852 = vunpack.c.l.b16 %v557
  %v853 = vunpack.c.l.b16 %v558
  %v854 = vunpack.c.l.b16 %v559
  %v855 = vunpack.c.l.b16 %v560
  %v856 = vunpack.c.l.b16 %v561
  %v857 = vunpack.c.l.b16 %v562
  %v858 = vunpack.c.l.b16 %v563
  %v859 = vunpack.c.l.b16 %v564
  %v860 = vunpack.c.l.b16 %v565
  %v861 = vunpack.c.l.b16 %v566
  %v862 = vunpack.c.l.b16 %v567
  %v863 = vunpack.c.l.b16 %v568
  %v864 = vunpack.c.l.b16 %v569
  %v865 = vunpack.c.l.b16 %v570
  %v866 = vunpack.c.l.b16 %v571
  %v867 = vunpack.c.l.b16 %v572
  %v868 = vunpack.c.l.b16 %v573
  %v869 = vunpack.c.l.b16 %v574
  %v870 = vunpack.c.l.b16 %v575
  %v871 = vunpack.c.l.b16 %v576
  %v872 = vunpack.c.l.b16 %v577
  %v873 = vunpack.c.l.b16 %v578
  %v874 = vunpack.c.l.b16 %v579
  %v875 = vunpack.c.l.b16 %v580
  %v876 = vunpack.c.l.b16 %v581
  %v877 = vunpack.c.l.b16 %v582
  %v878 = vunpack.c.l.b16 %v583
  %v879 = vunpack.c.l.b16 %v584
  %v880 = vunpack.c.l.b16 %v585
  %v881 = vunpack.c.l.b16 %v586
  %v882 = vunpack.c.l.b16 %v587
  %v883 = vunpack.c.l.b16 %v588
  %v884 = vunpack.c.l.b16 %v589
  %v885 = vunpack.c.l.b16 %v590
  %v886 = vunpack.c.l.b16 %v591
  %v887 = vunpack.c.l.b16 %v592
  %v888 = vunpack.c.l.b16 %v593
  %v889 = vunpack.c.l.b16 %v594
  %v890 = vunpack.c.l.b16 %v595
  %v891 = vunpack.c.l.b16 %v596
  %v892 = vunpack.c.l.b16 %v597
  %v893 = vunpack.c.l.b16 %v598
  %v894 = vunpack.c.l.b16 %v599
  %v895 = vunpack.c.l.b16 %v600
  %v896 = vunpack.c.l.b16 %v601
  %v897 = vunpack.c.l.b16 %v602
  %v898 = vunpack.c.l.b16 %v603
  %v899 = vunpack.c.l.b16 %v604
  %v900 = vunpack.c.l.b16 %v605
  %v901 = vpack.c.b16 %v758, %v757
  %v902 = vpack.c.b16 %v760, %v759
  %v903 = vpack.c.b16 %v762, %v761
  %v904 = vpack.c.b16 %v764, %v763
  %v905 = vpack.c.b16 %v766, %v765
  %v906 = vpack.c.b16 %v768, %v767
  %v907 = vpack.c.b16 %v770, %v769
  %v908 = vpack.c.b16 %v772, %v771
  %v909 = vpack.c.b16 %v774, %v773
  %v910 = vpack.c.b16 %v776, %v775
  %v911 = vpack.c.b16 %v778, %v777
  %v912 = vpack.c.b16 %v780, %v779
  %v913 = vpack.c.b16 %v782, %v781
  %v914 = vpack.c.b16 %v784, %v783
  %v915 = vpack.c.b16 %v786, %v785
  %v916 = vpack.c.b16 %v788, %v787
  %v917 = vpack.c.b16 %v790, %v789
  %v918 = vpack.c.b16 %v792, %v791
  %v919 = vpack.c.b16 %v794, %v793
  %v920 = vpack.c.b16 %v796, %v795
  %v921 = vpack.c.b16 %v798, %v797
  %v922 = vpack.c.b16 %v800, %v799
  %v923 = vpack.c.b16 %v802, %v801
  %v924 = vpack.c.b16 %v804, %v803
  %v925 = vpack.c.b16 %v806, %v805
  %v926 = vpack.c.b16 %v808, %v807
  %v927 = vpack.c.b16 %v810, %v809
  %v928 = vpack.c.b16 %v812, %v811
  %v929 = vpack.c.b16 %v814, %v813
  %v930 = vpack.c.b16 %v816, %v815
  %v931 = vpack.c.b16 %v818, %v817
  %v932 = vpack.c.b16 %v820, %v819
  %v933 = vpack.c.b16 %v822, %v821
  %v934 = vpack.c.b16 %v824, %v823
  %v935 = vpack.c.b16 %v826, %v825
  %v936 = vpack.c.b16 %v828, %v827
  %v937 = vpack.c.b16 %v830, %v829
  %v938 = vpack.c.b16 %v832, %v831
  %v939 = vpack.c.b16 %v834, %v833
  %v940 = vpack.c.b16 %v836, %v835
  %v941 = vpack.c.b16 %v838, %v837
  %v942 = vpack.c.b16 %v840, %v839
  %v943 = vpack.c.b16 %v842, %v841
  %v944 = vpack.c.b16 %v844, %v843
  %v945 = vpack.c.b16 %v846, %v845
  %v946 = vpack.c.b16 %v848, %v847
  %v947 = vpack.c.b16 %v850, %v849
  %v948 = vpack.c.b16 %v852, %v851
  %v949 = vpack.c.b16 %v854, %v853
  %v950 = vpack.c.b16 %v856, %v855
  %v951 = vpack.c.b16 %v858, %v857
  %v952 = vpack.c.b16 %v860, %v859
  %v953 = vpack.c.b16 %v862, %v861
  %v954 = vpack.c.b16 %v864, %v863
  %v955 = vpack.c.b16 %v866, %v865
  %v956 = vpack.c.b16 %v868, %v867
  %v957 = vpack.c.b16 %v870, %v869
  %v958 = vpack.c.b16 %v872, %v871
  %v959 = vpack.c.b16 %v874, %v873
  %v960 = vpack.c.b16 %v876, %v875
  %v961 = vpack.c.b16 %v878, %v877
  %v962 = vpack.c.b16 %v880, %v879
  %v963 = vpack.c.b16 %v882, %v881
  %v964 = vpack.c.b16 %v884, %v883
  %v965 = vpack.c.b16 %v886, %v885
  %v966 = vpack.c.b16 %v888, %v887
  %v967 = vpack.c.b16 %v890, %v889
  %v968 = vpack.c.b16 %v892, %v891
  %v969 = vpack.c.b16 %v894, %v893
  %v970 = vpack.c.b16 %v896, %v895
  %v971 = vpack.c.b16 %v898, %v897
  %v972 = vpack.c.b16 %v900, %v899
  %1045 = vmatprep.subr.bf16.mxu0 0
  %1046 = vmatpush1.bf16.msra.mxu0 %v901
  %1047 = vmatprep.subr.bf16.mxu0 0
  %1048 = vmatpush1.bf16.msra.mxu0 %v902
  %1049 = vmatprep.subr.bf16.mxu0 0
  %1050 = vmatpush1.bf16.msra.mxu0 %v903
  %1051 = vmatprep.subr.bf16.mxu0 0
  %1052 = vmatpush1.bf16.msra.mxu0 %v904
  %1053 = vmatprep.subr.bf16.mxu0 0
  %1054 = vmatpush1.bf16.msra.mxu0 %v905
  %1055 = vmatprep.subr.bf16.mxu0 0
  %1056 = vmatpush1.bf16.msra.mxu0 %v906
  %1057 = vmatprep.subr.bf16.mxu0 0
  %1058 = vmatpush1.bf16.msra.mxu0 %v907
  %1059 = vmatprep.subr.bf16.mxu0 0
  %1060 = vmatpush1.bf16.msra.mxu0 %v908
  %1061 = vmatprep.subr.bf16.mxu0 0
  %1062 = vmatpush1.bf16.msra.mxu0 %v909
  %1063 = vmatprep.subr.bf16.mxu0 0
  %1064 = vmatpush1.bf16.msra.mxu0 %v910
  %1065 = vmatprep.subr.bf16.mxu0 0
  %1066 = vmatpush1.bf16.msra.mxu0 %v911
  %1067 = vmatprep.subr.bf16.mxu0 0
  %1068 = vmatpush1.bf16.msra.mxu0 %v912
  %1069 = vmatprep.subr.bf16.mxu0 0
  %1070 = vmatpush1.bf16.msra.mxu0 %v913
  %1071 = vmatprep.subr.bf16.mxu0 0
  %1072 = vmatpush1.bf16.msra.mxu0 %v914
  %1073 = vmatprep.subr.bf16.mxu0 0
  %1074 = vmatpush1.bf16.msra.mxu0 %v915
  %1075 = vmatprep.subr.bf16.mxu0 0
  %1076 = vmatpush1.bf16.msra.mxu0 %v916
  %1077 = vmatprep.mubr.bf16.mxu0 %v391
  %1078 = vmatmul.mubr.bf16.gmra.mrb[0].mxu0 %v390
  %v1079 = vpop.f32.mrb[0].mxu0
  %v1080 = vadd.f32 %v611, %v1079
  %v1081 = vpop.f32.mrb[0].mxu0
  %v1082 = vpop.f32.mrb[0].mxu0
  %v1083 = vadd.f32 %v611, %v1082
  %v1084 = vpop.f32.mrb[0].mxu0
  %1085 = vmatprep.mubr.bf16.mxu0 %v400
  %1086 = vmatmul.mubr.bf16.gmra.mrb[0].mxu0 %v399
  %v1087 = vpop.f32.mrb[0].mxu0
  %v1088 = vadd.f32 %v611, %v1087
  %v1089 = vpop.f32.mrb[0].mxu0
  %v1090 = vpop.f32.mrb[0].mxu0
  %v1091 = vadd.f32 %v611, %v1090
  %v1092 = vpop.f32.mrb[0].mxu0
  %1093 = vmatprep.mubr.bf16.mxu0 %v409
  %1094 = vmatmul.mubr.bf16.gmra.mrb[0].mxu0 %v408
  %v1095 = vpop.f32.mrb[0].mxu0
  %v1096 = vadd.f32 %v611, %v1095
  %v1097 = vpop.f32.mrb[0].mxu0
  %v1098 = vpop.f32.mrb[0].mxu0
  %v1099 = vadd.f32 %v611, %v1098
  %v1100 = vpop.f32.mrb[0].mxu0
  %1101 = vmatprep.mubr.bf16.mxu0 %v418
  %1102 = vmatmul.mubr.bf16.gmra.mrb[0].mxu0 %v417
  %v1103 = vpop.f32.mrb[0].mxu0
  %v1104 = vadd.f32 %v611, %v1103
  %v1105 = vpop.f32.mrb[0].mxu0
  %v1106 = vpop.f32.mrb[0].mxu0
  %v1107 = vadd.f32 %v611, %v1106
  %v1108 = vpop.f32.mrb[0].mxu0
  %1109 = vmatprep.mubr.bf16.mxu0 %v427
  %1110 = vmatmul.mubr.bf16.gmra.mrb[0].mxu0 %v426
  %v1111 = vpop.f32.mrb[0].mxu0
  %v1112 = vadd.f32 %v611, %v1111
  %v1113 = vpop.f32.mrb[0].mxu0
  %v1114 = vpop.f32.mrb[0].mxu0
  %v1115 = vadd.f32 %v611, %v1114
  %v1116 = vpop.f32.mrb[0].mxu0
  %1117 = vmatprep.mubr.bf16.mxu0 %v436
  %1118 = vmatmul.mubr.bf16.gmra.mrb[0].mxu0 %v435
  %v1119 = vpop.f32.mrb[0].mxu0
  %v1120 = vadd.f32 %v611, %v1119
  %v1121 = vpop.f32.mrb[0].mxu0
  %v1122 = vpop.f32.mrb[0].mxu0
  %v1123 = vadd.f32 %v611, %v1122
  %v1124 = vpop.f32.mrb[0].mxu0
  %1125 = vmatprep.mubr.bf16.mxu0 %v445
  %1126 = vmatmul.mubr.bf16.gmra.mrb[0].mxu0 %v444
  %v1127 = vpop.f32.mrb[0].mxu0
  %v1128 = vadd.f32 %v611, %v1127
  %v1129 = vpop.f32.mrb[0].mxu0
  %v1130 = vpop.f32.mrb[0].mxu0
  %v1131 = vadd.f32 %v611, %v1130
  %v1132 = vpop.f32.mrb[0].mxu0
  %1133 = vmatprep.mubr.bf16.mxu0 %v454
  %1134 = vmatmul.mubr.bf16.gmra.mrb[0].mxu0 %v453
  %v1135 = vpop.f32.mrb[0].mxu0
  %v1136 = vadd.f32 %v611, %v1135
  %v1137 = vpop.f32.mrb[0].mxu0
  %v1138 = vpop.f32.mrb[0].mxu0
  %v1139 = vadd.f32 %v611, %v1138
  %v1140 = vpop.f32.mrb[0].mxu0
  %1141 = vdwg.mxu0
  %1142 = vmatprep.subr.bf16.mxu0 0
  %1143 = vmatpush1.bf16.msra.mxu0 %v917
  %1144 = vmatprep.subr.bf16.mxu0 0
  %1145 = vmatpush1.bf16.msra.mxu0 %v918
  %1146 = vmatprep.subr.bf16.mxu0 0
  %1147 = vmatpush1.bf16.msra.mxu0 %v919
  %1148 = vmatprep.subr.bf16.mxu0 0
  %1149 = vmatpush1.bf16.msra.mxu0 %v920
  %1150 = vmatprep.subr.bf16.mxu0 0
  %1151 = vmatpush1.bf16.msra.mxu0 %v921
  %1152 = vmatprep.subr.bf16.mxu0 0
  %1153 = vmatpush1.bf16.msra.mxu0 %v922
  %1154 = vmatprep.subr.bf16.mxu0 0
  %1155 = vmatpush1.bf16.msra.mxu0 %v923
  %1156 = vmatprep.subr.bf16.mxu0 0
  %1157 = vmatpush1.bf16.msra.mxu0 %v924
  %1158 = vmatprep.subr.bf16.mxu0 0
  %1159 = vmatpush1.bf16.msra.mxu0 %v925
  %1160 = vmatprep.subr.bf16.mxu0 0
  %1161 = vmatpush1.bf16.msra.mxu0 %v926
  %1162 = vmatprep.subr.bf16.mxu0 0
  %1163 = vmatpush1.bf16.msra.mxu0 %v927
  %1164 = vmatprep.subr.bf16.mxu0 0
  %1165 = vmatpush1.bf16.msra.mxu0 %v928
  %1166 = vmatprep.subr.bf16.mxu0 0
  %1167 = vmatpush1.bf16.msra.mxu0 %v929
  %1168 = vmatprep.subr.bf16.mxu0 0
  %1169 = vmatpush1.bf16.msra.mxu0 %v930
  %1170 = vmatprep.subr.bf16.mxu0 0
  %1171 = vmatpush1.bf16.msra.mxu0 %v931
  %1172 = vmatprep.subr.bf16.mxu0 0
  %1173 = vmatpush1.bf16.msra.mxu0 %v932
  %1174 = vmatprep.mubr.bf16.mxu0 %v393
  %1175 = vmatmul.mubr.bf16.gmra.mrb[0].mxu0 %v392
  %v1176 = vpop.f32.mrb[0].mxu0
  %v1177 = vadd.f32 %v1080, %v1176
  %v1178 = vpop.f32.mrb[0].mxu0
  %v1179 = vpop.f32.mrb[0].mxu0
  %v1180 = vadd.f32 %v1083, %v1179
  %v1181 = vpop.f32.mrb[0].mxu0
  %1182 = vmatprep.mubr.bf16.mxu0 %v402
  %1183 = vmatmul.mubr.bf16.gmra.mrb[0].mxu0 %v401
  %v1184 = vpop.f32.mrb[0].mxu0
  %v1185 = vadd.f32 %v1088, %v1184
  %v1186 = vpop.f32.mrb[0].mxu0
  %v1187 = vpop.f32.mrb[0].mxu0
  %v1188 = vadd.f32 %v1091, %v1187
  %v1189 = vpop.f32.mrb[0].mxu0
  %1190 = vmatprep.mubr.bf16.mxu0 %v411
  %1191 = vmatmul.mubr.bf16.gmra.mrb[0].mxu0 %v410
  %v1192 = vpop.f32.mrb[0].mxu0
  %v1193 = vadd.f32 %v1096, %v1192
  %v1194 = vpop.f32.mrb[0].mxu0
  %v1195 = vpop.f32.mrb[0].mxu0
  %v1196 = vadd.f32 %v1099, %v1195
  %v1197 = vpop.f32.mrb[0].mxu0
  %1198 = vmatprep.mubr.bf16.mxu0 %v420
  %1199 = vmatmul.mubr.bf16.gmra.mrb[0].mxu0 %v419
  %v1200 = vpop.f32.mrb[0].mxu0
  %v1201 = vadd.f32 %v1104, %v1200
  %v1202 = vpop.f32.mrb[0].mxu0
  %v1203 = vpop.f32.mrb[0].mxu0
  %v1204 = vadd.f32 %v1107, %v1203
  %v1205 = vpop.f32.mrb[0].mxu0
  %1206 = vmatprep.mubr.bf16.mxu0 %v429
  %1207 = vmatmul.mubr.bf16.gmra.mrb[0].mxu0 %v428
  %v1208 = vpop.f32.mrb[0].mxu0
  %v1209 = vadd.f32 %v1112, %v1208
  %v1210 = vpop.f32.mrb[0].mxu0
  %v1211 = vpop.f32.mrb[0].mxu0
  %v1212 = vadd.f32 %v1115, %v1211
  %v1213 = vpop.f32.mrb[0].mxu0
  %1214 = vmatprep.mubr.bf16.mxu0 %v438
  %1215 = vmatmul.mubr.bf16.gmra.mrb[0].mxu0 %v437
  %v1216 = vpop.f32.mrb[0].mxu0
  %v1217 = vadd.f32 %v1120, %v1216
  %v1218 = vpop.f32.mrb[0].mxu0
  %v1219 = vpop.f32.mrb[0].mxu0
  %v1220 = vadd.f32 %v1123, %v1219
  %v1221 = vpop.f32.mrb[0].mxu0
  %1222 = vmatprep.mubr.bf16.mxu0 %v447
  %1223 = vmatmul.mubr.bf16.gmra.mrb[0].mxu0 %v446
  %v1224 = vpop.f32.mrb[0].mxu0
  %v1225 = vadd.f32 %v1128, %v1224
  %v1226 = vpop.f32.mrb[0].mxu0
  %v1227 = vpop.f32.mrb[0].mxu0
  %v1228 = vadd.f32 %v1131, %v1227
  %v1229 = vpop.f32.mrb[0].mxu0
  %1230 = vmatprep.mubr.bf16.mxu0 %v456
  %1231 = vmatmul.mubr.bf16.gmra.mrb[0].mxu0 %v455
  %v1232 = vpop.f32.mrb[0].mxu0
  %v1233 = vadd.f32 %v1136, %v1232
  %v1234 = vpop.f32.mrb[0].mxu0
  %v1235 = vpop.f32.mrb[0].mxu0
  %v1236 = vadd.f32 %v1139, %v1235
  %v1237 = vpop.f32.mrb[0].mxu0
  %1238 = vdwg.mxu0
  %1239 = vmatprep.subr.bf16.mxu0 0
  %1240 = vmatpush1.bf16.msra.mxu0 %v933
  %1241 = vmatprep.subr.bf16.mxu0 0
  %1242 = vmatpush1.bf16.msra.mxu0 %v934
  %1243 = vmatprep.subr.bf16.mxu0 0
  %1244 = vmatpush1.bf16.msra.mxu0 %v935
  %1245 = vmatprep.subr.bf16.mxu0 0
  %1246 = vmatpush1.bf16.msra.mxu0 %v936
  %1247 = vmatprep.subr.bf16.mxu0 0
  %1248 = vmatpush1.bf16.msra.mxu0 %v937
  %1249 = vmatprep.subr.bf16.mxu0 0
  %1250 = vmatpush1.bf16.msra.mxu0 %v938
  %1251 = vmatprep.subr.bf16.mxu0 0
  %1252 = vmatpush1.bf16.msra.mxu0 %v939
  %1253 = vmatprep.subr.bf16.mxu0 0
  %1254 = vmatpush1.bf16.msra.mxu0 %v940
  %1255 = vmatprep.subr.bf16.mxu0 0
  %1256 = vmatpush1.bf16.msra.mxu0 %v941
  %1257 = vmatprep.subr.bf16.mxu0 0
  %1258 = vmatpush1.bf16.msra.mxu0 %v942
  %1259 = vmatprep.subr.bf16.mxu0 0
  %1260 = vmatpush1.bf16.msra.mxu0 %v943
  %1261 = vmatprep.subr.bf16.mxu0 0
  %1262 = vmatpush1.bf16.msra.mxu0 %v944
  %1263 = vmatprep.subr.bf16.mxu0 0
  %1264 = vmatpush1.bf16.msra.mxu0 %v945
  %1265 = vmatprep.subr.bf16.mxu0 0
  %1266 = vmatpush1.bf16.msra.mxu0 %v946
  %1267 = vmatprep.subr.bf16.mxu0 0
  %1268 = vmatpush1.bf16.msra.mxu0 %v947
  %1269 = vmatprep.subr.bf16.mxu0 0
  %1270 = vmatpush1.bf16.msra.mxu0 %v948
  %1271 = vmatprep.mubr.bf16.mxu0 %v395
  %1272 = vmatmul.mubr.bf16.gmra.mrb[0].mxu0 %v394
  %v1273 = vpop.f32.mrb[0].mxu0
  %v1274 = vadd.f32 %v1177, %v1273
  %v1275 = vpop.f32.mrb[0].mxu0
  %v1276 = vpop.f32.mrb[0].mxu0
  %v1277 = vadd.f32 %v1180, %v1276
  %v1278 = vpop.f32.mrb[0].mxu0
  %1279 = vmatprep.mubr.bf16.mxu0 %v404
  %1280 = vmatmul.mubr.bf16.gmra.mrb[0].mxu0 %v403
  %v1281 = vpop.f32.mrb[0].mxu0
  %v1282 = vadd.f32 %v1185, %v1281
  %v1283 = vpop.f32.mrb[0].mxu0
  %v1284 = vpop.f32.mrb[0].mxu0
  %v1285 = vadd.f32 %v1188, %v1284
  %v1286 = vpop.f32.mrb[0].mxu0
  %1287 = vmatprep.mubr.bf16.mxu0 %v413
  %1288 = vmatmul.mubr.bf16.gmra.mrb[0].mxu0 %v412
  %v1289 = vpop.f32.mrb[0].mxu0
  %v1290 = vadd.f32 %v1193, %v1289
  %v1291 = vpop.f32.mrb[0].mxu0
  %v1292 = vpop.f32.mrb[0].mxu0
  %v1293 = vadd.f32 %v1196, %v1292
  %v1294 = vpop.f32.mrb[0].mxu0
  %1295 = vmatprep.mubr.bf16.mxu0 %v422
  %1296 = vmatmul.mubr.bf16.gmra.mrb[0].mxu0 %v421
  %v1297 = vpop.f32.mrb[0].mxu0
  %v1298 = vadd.f32 %v1201, %v1297
  %v1299 = vpop.f32.mrb[0].mxu0
  %v1300 = vpop.f32.mrb[0].mxu0
  %v1301 = vadd.f32 %v1204, %v1300
  %v1302 = vpop.f32.mrb[0].mxu0
  %1303 = vmatprep.mubr.bf16.mxu0 %v431
  %1304 = vmatmul.mubr.bf16.gmra.mrb[0].mxu0 %v430
  %v1305 = vpop.f32.mrb[0].mxu0
  %v1306 = vadd.f32 %v1209, %v1305
  %v1307 = vpop.f32.mrb[0].mxu0
  %v1308 = vpop.f32.mrb[0].mxu0
  %v1309 = vadd.f32 %v1212, %v1308
  %v1310 = vpop.f32.mrb[0].mxu0
  %1311 = vmatprep.mubr.bf16.mxu0 %v440
  %1312 = vmatmul.mubr.bf16.gmra.mrb[0].mxu0 %v439
  %v1313 = vpop.f32.mrb[0].mxu0
  %v1314 = vadd.f32 %v1217, %v1313
  %v1315 = vpop.f32.mrb[0].mxu0
  %v1316 = vpop.f32.mrb[0].mxu0
  %v1317 = vadd.f32 %v1220, %v1316
  %v1318 = vpop.f32.mrb[0].mxu0
  %1319 = vmatprep.mubr.bf16.mxu0 %v449
  %1320 = vmatmul.mubr.bf16.gmra.mrb[0].mxu0 %v448
  %v1321 = vpop.f32.mrb[0].mxu0
  %v1322 = vadd.f32 %v1225, %v1321
  %v1323 = vpop.f32.mrb[0].mxu0
  %v1324 = vpop.f32.mrb[0].mxu0
  %v1325 = vadd.f32 %v1228, %v1324
  %v1326 = vpop.f32.mrb[0].mxu0
  %1327 = vmatprep.mubr.bf16.mxu0 %v458
  %1328 = vmatmul.mubr.bf16.gmra.mrb[0].mxu0 %v457
  %v1329 = vpop.f32.mrb[0].mxu0
  %v1330 = vadd.f32 %v1233, %v1329
  %v1331 = vpop.f32.mrb[0].mxu0
  %v1332 = vpop.f32.mrb[0].mxu0
  %v1333 = vadd.f32 %v1236, %v1332
  %v1334 = vpop.f32.mrb[0].mxu0
  %1335 = vdwg.mxu0
  %1336 = vmatprep.subr.bf16.mxu0 0
  %1337 = vmatpush1.bf16.msra.mxu0 %v949
  %1338 = vmatprep.subr.bf16.mxu0 0
  %1339 = vmatpush1.bf16.msra.mxu0 %v950
  %1340 = vmatprep.subr.bf16.mxu0 0
  %1341 = vmatpush1.bf16.msra.mxu0 %v951
  %1342 = vmatprep.subr.bf16.mxu0 0
  %1343 = vmatpush1.bf16.msra.mxu0 %v952
  %1344 = vmatprep.subr.bf16.mxu0 0
  %1345 = vmatpush1.bf16.msra.mxu0 %v953
  %1346 = vmatprep.subr.bf16.mxu0 0
  %1347 = vmatpush1.bf16.msra.mxu0 %v954
  %1348 = vmatprep.subr.bf16.mxu0 0
  %1349 = vmatpush1.bf16.msra.mxu0 %v955
  %1350 = vmatprep.subr.bf16.mxu0 0
  %1351 = vmatpush1.bf16.msra.mxu0 %v956
  %1352 = vmatprep.subr.bf16.mxu0 0
  %1353 = vmatpush1.bf16.msra.mxu0 %v957
  %1354 = vmatprep.subr.bf16.mxu0 0
  %1355 = vmatpush1.bf16.msra.mxu0 %v958
  %1356 = vmatprep.subr.bf16.mxu0 0
  %1357 = vmatpush1.bf16.msra.mxu0 %v959
  %1358 = vmatprep.subr.bf16.mxu0 0
  %1359 = vmatpush1.bf16.msra.mxu0 %v960
  %1360 = vmatprep.subr.bf16.mxu0 0
  %1361 = vmatpush1.bf16.msra.mxu0 %v961
  %1362 = vmatprep.subr.bf16.mxu0 0
  %1363 = vmatpush1.bf16.msra.mxu0 %v962
  %1364 = vmatprep.subr.bf16.mxu0 0
  %1365 = vmatpush1.bf16.msra.mxu0 %v963
  %1366 = vmatprep.subr.bf16.mxu0 0
  %1367 = vmatpush1.bf16.msra.mxu0 %v964
  %1368 = vmatprep.mubr.bf16.mxu0 %v397
  %1369 = vmatmul.mubr.bf16.gmra.mrb[0].mxu0 %v396
  %v1370 = vpop.f32.mrb[0].mxu0
  %v1371 = vadd.f32 %v1274, %v1370
  %v1372 = vpop.f32.mrb[0].mxu0
  %v1373 = vpop.f32.mrb[0].mxu0
  %v1374 = vadd.f32 %v1277, %v1373
  %v1375 = vpop.f32.mrb[0].mxu0
  %1376 = vmatprep.mubr.bf16.mxu0 %v406
  %1377 = vmatmul.mubr.bf16.gmra.mrb[0].mxu0 %v405
  %v1378 = vpop.f32.mrb[0].mxu0
  %v1379 = vadd.f32 %v1282, %v1378
  %v1380 = vpop.f32.mrb[0].mxu0
  %v1381 = vpop.f32.mrb[0].mxu0
  %v1382 = vadd.f32 %v1285, %v1381
  %v1383 = vpop.f32.mrb[0].mxu0
  %1384 = vmatprep.mubr.bf16.mxu0 %v415
  %1385 = vmatmul.mubr.bf16.gmra.mrb[0].mxu0 %v414
  %v1386 = vpop.f32.mrb[0].mxu0
  %v1387 = vadd.f32 %v1290, %v1386
  %v1388 = vpop.f32.mrb[0].mxu0
  %v1389 = vpop.f32.mrb[0].mxu0
  %v1390 = vadd.f32 %v1293, %v1389
  %v1391 = vpop.f32.mrb[0].mxu0
  %1392 = vmatprep.mubr.bf16.mxu0 %v424
  %1393 = vmatmul.mubr.bf16.gmra.mrb[0].mxu0 %v423
  %v1394 = vpop.f32.mrb[0].mxu0
  %v1395 = vadd.f32 %v1298, %v1394
  %v1396 = vpop.f32.mrb[0].mxu0
  %v1397 = vpop.f32.mrb[0].mxu0
  %v1398 = vadd.f32 %v1301, %v1397
  %v1399 = vpop.f32.mrb[0].mxu0
  %1400 = vmatprep.mubr.bf16.mxu0 %v433
  %1401 = vmatmul.mubr.bf16.gmra.mrb[0].mxu0 %v432
  %v1402 = vpop.f32.mrb[0].mxu0
  %v1403 = vadd.f32 %v1306, %v1402
  %v1404 = vpop.f32.mrb[0].mxu0
  %v1405 = vpop.f32.mrb[0].mxu0
  %v1406 = vadd.f32 %v1309, %v1405
  %v1407 = vpop.f32.mrb[0].mxu0
  %1408 = vmatprep.mubr.bf16.mxu0 %v442
  %1409 = vmatmul.mubr.bf16.gmra.mrb[0].mxu0 %v441
  %v1410 = vpop.f32.mrb[0].mxu0
  %v1411 = vadd.f32 %v1314, %v1410
  %v1412 = vpop.f32.mrb[0].mxu0
  %v1413 = vpop.f32.mrb[0].mxu0
  %v1414 = vadd.f32 %v1317, %v1413
  %v1415 = vpop.f32.mrb[0].mxu0
  %1416 = vmatprep.mubr.bf16.mxu0 %v451
  %1417 = vmatmul.mubr.bf16.gmra.mrb[0].mxu0 %v450
  %v1418 = vpop.f32.mrb[0].mxu0
  %v1419 = vadd.f32 %v1322, %v1418
  %v1420 = vpop.f32.mrb[0].mxu0
  %v1421 = vpop.f32.mrb[0].mxu0
  %v1422 = vadd.f32 %v1325, %v1421
  %v1423 = vpop.f32.mrb[0].mxu0
  %1424 = vmatprep.mubr.bf16.mxu0 %v460
  %1425 = vmatmul.mubr.bf16.gmra.mrb[0].mxu0 %v459
  %v1426 = vpop.f32.mrb[0].mxu0
  %v1427 = vadd.f32 %v1330, %v1426
  %v1428 = vpop.f32.mrb[0].mxu0
  %v1429 = vpop.f32.mrb[0].mxu0
  %v1430 = vadd.f32 %v1333, %v1429
  %v1431 = vpop.f32.mrb[0].mxu0
  %1432 = vdwg.mxu0
  %1433 = vmatprep.subr.bf16.mxu0 0
  %1434 = vmatpush1.bf16.msra.mxu0 %v965
  %1435 = vmatprep.subr.bf16.mxu0 0
  %1436 = vmatpush1.bf16.msra.mxu0 %v966
  %1437 = vmatprep.subr.bf16.mxu0 0
  %1438 = vmatpush1.bf16.msra.mxu0 %v967
  %1439 = vmatprep.subr.bf16.mxu0 0
  %1440 = vmatpush1.bf16.msra.mxu0 %v968
  %1441 = vmatprep.subr.bf16.mxu0 0
  %1442 = vmatpush1.bf16.msra.mxu0 %v969
  %1443 = vmatprep.subr.bf16.mxu0 0
  %1444 = vmatpush1.bf16.msra.mxu0 %v970
  %1445 = vmatprep.subr.bf16.mxu0 0
  %1446 = vmatpush1.bf16.msra.mxu0 %v971
  %1447 = vmatprep.subr.bf16.mxu0 0
  %1448 = vmatpush1.bf16.msra.mxu0 %v972
  %1449 = vmatprep.subr.bf16.mxu0 0
  %1450 = vmatpush1.bf16.msra.mxu0 0
  %1451 = vmatprep.subr.bf16.mxu0 0
  %1452 = vmatpush1.bf16.msra.mxu0 0
  %1453 = vmatprep.subr.bf16.mxu0 0
  %1454 = vmatpush1.bf16.msra.mxu0 0
  %1455 = vmatprep.subr.bf16.mxu0 0
  %1456 = vmatpush1.bf16.msra.mxu0 0
  %1457 = vmatprep.subr.bf16.mxu0 0
  %1458 = vmatpush1.bf16.msra.mxu0 0
  %1459 = vmatprep.subr.bf16.mxu0 0
  %1460 = vmatpush1.bf16.msra.mxu0 0
  %1461 = vmatprep.subr.bf16.mxu0 0
  %1462 = vmatpush1.bf16.msra.mxu0 0
  %1463 = vmatprep.subr.bf16.mxu0 0
  %1464 = vmatpush1.bf16.msra.mxu0 0
  %1465 = vmatprep.mubr.bf16.mxu0 0
  %1466 = vmatmul.mubr.bf16.gmra.mrb[0].mxu0 %v398
  %v1467 = vpop.f32.mrb[0].mxu0
  %v1468 = vadd.f32 %v1371, %v1467
  %v1469 = vpop.f32.mrb[0].mxu0
  %v1470 = vpop.f32.mrb[0].mxu0
  %v1471 = vadd.f32 %v1374, %v1470
  %v1472 = vpop.f32.mrb[0].mxu0
  %1473 = vmatprep.mubr.bf16.mxu0 0
  %1474 = vmatmul.mubr.bf16.gmra.mrb[0].mxu0 %v407
  %v1475 = vpop.f32.mrb[0].mxu0
  %v1476 = vadd.f32 %v1379, %v1475
  %v1477 = vpop.f32.mrb[0].mxu0
  %v1478 = vpop.f32.mrb[0].mxu0
  %v1479 = vadd.f32 %v1382, %v1478
  %v1480 = vpop.f32.mrb[0].mxu0
  %1481 = vmatprep.mubr.bf16.mxu0 0
  %1482 = vmatmul.mubr.bf16.gmra.mrb[0].mxu0 %v416
  %v1483 = vpop.f32.mrb[0].mxu0
  %v1484 = vadd.f32 %v1387, %v1483
  %v1485 = vpop.f32.mrb[0].mxu0
  %v1486 = vpop.f32.mrb[0].mxu0
  %v1487 = vadd.f32 %v1390, %v1486
  %v1488 = vpop.f32.mrb[0].mxu0
  %1489 = vmatprep.mubr.bf16.mxu0 0
  %1490 = vmatmul.mubr.bf16.gmra.mrb[0].mxu0 %v425
  %v1491 = vpop.f32.mrb[0].mxu0
  %v1492 = vadd.f32 %v1395, %v1491
  %v1493 = vpop.f32.mrb[0].mxu0
  %v1494 = vpop.f32.mrb[0].mxu0
  %v1495 = vadd.f32 %v1398, %v1494
  %v1496 = vpop.f32.mrb[0].mxu0
  %1497 = vmatprep.mubr.bf16.mxu0 0
  %1498 = vmatmul.mubr.bf16.gmra.mrb[0].mxu0 %v434
  %v1499 = vpop.f32.mrb[0].mxu0
  %v1500 = vadd.f32 %v1403, %v1499
  %v1501 = vpop.f32.mrb[0].mxu0
  %v1502 = vpop.f32.mrb[0].mxu0
  %v1503 = vadd.f32 %v1406, %v1502
  %v1504 = vpop.f32.mrb[0].mxu0
  %1505 = vmatprep.mubr.bf16.mxu0 0
  %1506 = vmatmul.mubr.bf16.gmra.mrb[0].mxu0 %v443
  %v1507 = vpop.f32.mrb[0].mxu0
  %v1508 = vadd.f32 %v1411, %v1507
  %v1509 = vpop.f32.mrb[0].mxu0
  %v1510 = vpop.f32.mrb[0].mxu0
  %v1511 = vadd.f32 %v1414, %v1510
  %v1512 = vpop.f32.mrb[0].mxu0
  %1513 = vmatprep.mubr.bf16.mxu0 0
  %1514 = vmatmul.mubr.bf16.gmra.mrb[0].mxu0 %v452
  %v1515 = vpop.f32.mrb[0].mxu0
  %v1516 = vadd.f32 %v1419, %v1515
  %v1517 = vpop.f32.mrb[0].mxu0
  %v1518 = vpop.f32.mrb[0].mxu0
  %v1519 = vadd.f32 %v1422, %v1518
  %v1520 = vpop.f32.mrb[0].mxu0
  %1521 = vmatprep.mubr.bf16.mxu0 0
  %1522 = vmatmul.mubr.bf16.gmra.mrb[0].mxu0 %v461
  %v1523 = vpop.f32.mrb[0].mxu0
  %v1524 = vadd.f32 %v1427, %v1523
  %v1525 = vpop.f32.mrb[0].mxu0
  %v1526 = vpop.f32.mrb[0].mxu0
  %v1527 = vadd.f32 %v1430, %v1526
  %v1528 = vpop.f32.mrb[0].mxu0
  %1529 = vdwg.mxu0
  %v1530 = vmax.f32 %v1468, 0.0
  %v1531 = vmax.f32 %v1471, 0.0
  %v1532 = vmax.f32 %v1476, 0.0
  %v1533 = vmax.f32 %v1479, 0.0
  %v1534 = vmax.f32 %v1484, 0.0
  %v1535 = vmax.f32 %v1487, 0.0
  %v1536 = vmax.f32 %v1492, 0.0
  %v1537 = vmax.f32 %v1495, 0.0
  %v1538 = vmax.f32 %v1500, 0.0
  %v1539 = vmax.f32 %v1503, 0.0
  %v1540 = vmax.f32 %v1508, 0.0
  %v1541 = vmax.f32 %v1511, 0.0
  %v1542 = vmax.f32 %v1516, 0.0
  %v1543 = vmax.f32 %v1519, 0.0
  %v1544 = vmax.f32 %v1524, 0.0
  %v1545 = vmax.f32 %v1527, 0.0
  %v1562 = vcombine.high %v1530, %v1530
  %v1564 = vunpack.c.l.s4 1983009808
  %v1565 = vunpack.c.0.s8 %v1564
  %v1566 = vlaneseq
  %v1567 = vshrl.u32 %v1566, 7
  %v1568 = vsub.s32 %v1565, %v1567
  %v1569 = vrot.slane %v1530, %v1568
  %v1571 = vunpack.c.l.s4 1983009808
  %v1572 = vunpack.c.0.s8 %v1571
  %v1573 = vlaneseq
  %v1574 = vshrl.u32 %v1573, 7
  %v1575 = vsub.s32 %v1572, %v1574
  %v1576 = vrot.slane %v1562, %v1575
  %v1577 = vcombine.high %v1569, %v1569
  %v1578 = vcombine.high %v1576, %v1576
  %v1579 = vcombine.high %v1531, %v1531
  %v1581 = vunpack.c.l.s4 1983009808
  %v1582 = vunpack.c.0.s8 %v1581
  %v1583 = vlaneseq
  %v1584 = vshrl.u32 %v1583, 7
  %v1585 = vsub.s32 %v1582, %v1584
  %v1586 = vrot.slane %v1531, %v1585
  %v1588 = vunpack.c.l.s4 1983009808
  %v1589 = vunpack.c.0.s8 %v1588
  %v1590 = vlaneseq
  %v1591 = vshrl.u32 %v1590, 7
  %v1592 = vsub.s32 %v1589, %v1591
  %v1593 = vrot.slane %v1579, %v1592
  %v1594 = vcombine.high %v1586, %v1586
  %v1595 = vcombine.high %v1593, %v1593
  %v1596 = vcombine.high %v1532, %v1532
  %v1598 = vunpack.c.l.s4 1983009808
  %v1599 = vunpack.c.0.s8 %v1598
  %v1600 = vlaneseq
  %v1601 = vshrl.u32 %v1600, 7
  %v1602 = vsub.s32 %v1599, %v1601
  %v1603 = vrot.slane %v1532, %v1602
  %v1605 = vunpack.c.l.s4 1983009808
  %v1606 = vunpack.c.0.s8 %v1605
  %v1607 = vlaneseq
  %v1608 = vshrl.u32 %v1607, 7
  %v1609 = vsub.s32 %v1606, %v1608
  %v1610 = vrot.slane %v1596, %v1609
  %v1611 = vcombine.high %v1603, %v1603
  %v1612 = vcombine.high %v1610, %v1610
  %v1613 = vcombine.high %v1533, %v1533
  %v1615 = vunpack.c.l.s4 1983009808
  %v1616 = vunpack.c.0.s8 %v1615
  %v1617 = vlaneseq
  %v1618 = vshrl.u32 %v1617, 7
  %v1619 = vsub.s32 %v1616, %v1618
  %v1620 = vrot.slane %v1533, %v1619
  %v1622 = vunpack.c.l.s4 1983009808
  %v1623 = vunpack.c.0.s8 %v1622
  %v1624 = vlaneseq
  %v1625 = vshrl.u32 %v1624, 7
  %v1626 = vsub.s32 %v1623, %v1625
  %v1627 = vrot.slane %v1613, %v1626
  %v1628 = vcombine.high %v1620, %v1620
  %v1629 = vcombine.high %v1627, %v1627
  %v1630 = vcombine.high %v1534, %v1534
  %v1632 = vunpack.c.l.s4 1983009808
  %v1633 = vunpack.c.0.s8 %v1632
  %v1634 = vlaneseq
  %v1635 = vshrl.u32 %v1634, 7
  %v1636 = vsub.s32 %v1633, %v1635
  %v1637 = vrot.slane %v1534, %v1636
  %v1639 = vunpack.c.l.s4 1983009808
  %v1640 = vunpack.c.0.s8 %v1639
  %v1641 = vlaneseq
  %v1642 = vshrl.u32 %v1641, 7
  %v1643 = vsub.s32 %v1640, %v1642
  %v1644 = vrot.slane %v1630, %v1643
  %v1645 = vcombine.high %v1637, %v1637
  %v1646 = vcombine.high %v1644, %v1644
  %v1647 = vcombine.high %v1535, %v1535
  %v1649 = vunpack.c.l.s4 1983009808
  %v1650 = vunpack.c.0.s8 %v1649
  %v1651 = vlaneseq
  %v1652 = vshrl.u32 %v1651, 7
  %v1653 = vsub.s32 %v1650, %v1652
  %v1654 = vrot.slane %v1535, %v1653
  %v1656 = vunpack.c.l.s4 1983009808
  %v1657 = vunpack.c.0.s8 %v1656
  %v1658 = vlaneseq
  %v1659 = vshrl.u32 %v1658, 7
  %v1660 = vsub.s32 %v1657, %v1659
  %v1661 = vrot.slane %v1647, %v1660
  %v1662 = vcombine.high %v1654, %v1654
  %v1663 = vcombine.high %v1661, %v1661
  %v1664 = vcombine.high %v1536, %v1536
  %v1666 = vunpack.c.l.s4 1983009808
  %v1667 = vunpack.c.0.s8 %v1666
  %v1668 = vlaneseq
  %v1669 = vshrl.u32 %v1668, 7
  %v1670 = vsub.s32 %v1667, %v1669
  %v1671 = vrot.slane %v1536, %v1670
  %v1673 = vunpack.c.l.s4 1983009808
  %v1674 = vunpack.c.0.s8 %v1673
  %v1675 = vlaneseq
  %v1676 = vshrl.u32 %v1675, 7
  %v1677 = vsub.s32 %v1674, %v1676
  %v1678 = vrot.slane %v1664, %v1677
  %v1679 = vcombine.high %v1671, %v1671
  %v1680 = vcombine.high %v1678, %v1678
  %v1681 = vcombine.high %v1537, %v1537
  %v1683 = vunpack.c.l.s4 1983009808
  %v1684 = vunpack.c.0.s8 %v1683
  %v1685 = vlaneseq
  %v1686 = vshrl.u32 %v1685, 7
  %v1687 = vsub.s32 %v1684, %v1686
  %v1688 = vrot.slane %v1537, %v1687
  %v1690 = vunpack.c.l.s4 1983009808
  %v1691 = vunpack.c.0.s8 %v1690
  %v1692 = vlaneseq
  %v1693 = vshrl.u32 %v1692, 7
  %v1694 = vsub.s32 %v1691, %v1693
  %v1695 = vrot.slane %v1681, %v1694
  %v1696 = vcombine.high %v1688, %v1688
  %v1697 = vcombine.high %v1695, %v1695
  %v1698 = vcombine.high %v1538, %v1538
  %v1700 = vunpack.c.l.s4 1983009808
  %v1701 = vunpack.c.0.s8 %v1700
  %v1702 = vlaneseq
  %v1703 = vshrl.u32 %v1702, 7
  %v1704 = vsub.s32 %v1701, %v1703
  %v1705 = vrot.slane %v1538, %v1704
  %v1707 = vunpack.c.l.s4 1983009808
  %v1708 = vunpack.c.0.s8 %v1707
  %v1709 = vlaneseq
  %v1710 = vshrl.u32 %v1709, 7
  %v1711 = vsub.s32 %v1708, %v1710
  %v1712 = vrot.slane %v1698, %v1711
  %v1713 = vcombine.high %v1705, %v1705
  %v1714 = vcombine.high %v1712, %v1712
  %v1715 = vcombine.high %v1539, %v1539
  %v1717 = vunpack.c.l.s4 1983009808
  %v1718 = vunpack.c.0.s8 %v1717
  %v1719 = vlaneseq
  %v1720 = vshrl.u32 %v1719, 7
  %v1721 = vsub.s32 %v1718, %v1720
  %v1722 = vrot.slane %v1539, %v1721
  %v1724 = vunpack.c.l.s4 1983009808
  %v1725 = vunpack.c.0.s8 %v1724
  %v1726 = vlaneseq
  %v1727 = vshrl.u32 %v1726, 7
  %v1728 = vsub.s32 %v1725, %v1727
  %v1729 = vrot.slane %v1715, %v1728
  %v1730 = vcombine.high %v1722, %v1722
  %v1731 = vcombine.high %v1729, %v1729
  %v1732 = vcombine.high %v1540, %v1540
  %v1734 = vunpack.c.l.s4 1983009808
  %v1735 = vunpack.c.0.s8 %v1734
  %v1736 = vlaneseq
  %v1737 = vshrl.u32 %v1736, 7
  %v1738 = vsub.s32 %v1735, %v1737
  %v1739 = vrot.slane %v1540, %v1738
  %v1741 = vunpack.c.l.s4 1983009808
  %v1742 = vunpack.c.0.s8 %v1741
  %v1743 = vlaneseq
  %v1744 = vshrl.u32 %v1743, 7
  %v1745 = vsub.s32 %v1742, %v1744
  %v1746 = vrot.slane %v1732, %v1745
  %v1747 = vcombine.high %v1739, %v1739
  %v1748 = vcombine.high %v1746, %v1746
  %v1749 = vcombine.high %v1541, %v1541
  %v1751 = vunpack.c.l.s4 1983009808
  %v1752 = vunpack.c.0.s8 %v1751
  %v1753 = vlaneseq
  %v1754 = vshrl.u32 %v1753, 7
  %v1755 = vsub.s32 %v1752, %v1754
  %v1756 = vrot.slane %v1541, %v1755
  %v1758 = vunpack.c.l.s4 1983009808
  %v1759 = vunpack.c.0.s8 %v1758
  %v1760 = vlaneseq
  %v1761 = vshrl.u32 %v1760, 7
  %v1762 = vsub.s32 %v1759, %v1761
  %v1763 = vrot.slane %v1749, %v1762
  %v1764 = vcombine.high %v1756, %v1756
  %v1765 = vcombine.high %v1763, %v1763
  %v1766 = vcombine.high %v1542, %v1542
  %v1768 = vunpack.c.l.s4 1983009808
  %v1769 = vunpack.c.0.s8 %v1768
  %v1770 = vlaneseq
  %v1771 = vshrl.u32 %v1770, 7
  %v1772 = vsub.s32 %v1769, %v1771
  %v1773 = vrot.slane %v1542, %v1772
  %v1775 = vunpack.c.l.s4 1983009808
  %v1776 = vunpack.c.0.s8 %v1775
  %v1777 = vlaneseq
  %v1778 = vshrl.u32 %v1777, 7
  %v1779 = vsub.s32 %v1776, %v1778
  %v1780 = vrot.slane %v1766, %v1779
  %v1781 = vcombine.high %v1773, %v1773
  %v1782 = vcombine.high %v1780, %v1780
  %v1783 = vcombine.high %v1543, %v1543
  %v1785 = vunpack.c.l.s4 1983009808
  %v1786 = vunpack.c.0.s8 %v1785
  %v1787 = vlaneseq
  %v1788 = vshrl.u32 %v1787, 7
  %v1789 = vsub.s32 %v1786, %v1788
  %v1790 = vrot.slane %v1543, %v1789
  %v1792 = vunpack.c.l.s4 1983009808
  %v1793 = vunpack.c.0.s8 %v1792
  %v1794 = vlaneseq
  %v1795 = vshrl.u32 %v1794, 7
  %v1796 = vsub.s32 %v1793, %v1795
  %v1797 = vrot.slane %v1783, %v1796
  %v1798 = vcombine.high %v1790, %v1790
  %v1799 = vcombine.high %v1797, %v1797
  %v1800 = vcombine.high %v1544, %v1544
  %v1802 = vunpack.c.l.s4 1983009808
  %v1803 = vunpack.c.0.s8 %v1802
  %v1804 = vlaneseq
  %v1805 = vshrl.u32 %v1804, 7
  %v1806 = vsub.s32 %v1803, %v1805
  %v1807 = vrot.slane %v1544, %v1806
  %v1809 = vunpack.c.l.s4 1983009808
  %v1810 = vunpack.c.0.s8 %v1809
  %v1811 = vlaneseq
  %v1812 = vshrl.u32 %v1811, 7
  %v1813 = vsub.s32 %v1810, %v1812
  %v1814 = vrot.slane %v1800, %v1813
  %v1815 = vcombine.high %v1807, %v1807
  %v1816 = vcombine.high %v1814, %v1814
  %v1817 = vcombine.high %v1545, %v1545
  %v1819 = vunpack.c.l.s4 1983009808
  %v1820 = vunpack.c.0.s8 %v1819
  %v1821 = vlaneseq
  %v1822 = vshrl.u32 %v1821, 7
  %v1823 = vsub.s32 %v1820, %v1822
  %v1824 = vrot.slane %v1545, %v1823
  %v1826 = vunpack.c.l.s4 1983009808
  %v1827 = vunpack.c.0.s8 %v1826
  %v1828 = vlaneseq
  %v1829 = vshrl.u32 %v1828, 7
  %v1830 = vsub.s32 %v1827, %v1829
  %v1831 = vrot.slane %v1817, %v1830
  %v1832 = vcombine.high %v1824, %v1824
  %v1833 = vcombine.high %v1831, %v1831
  %v1898 = vrot.slane %v1569, 7
  %v1899 = vrot.slane %v1898, 2
  %v1900 = vrot.slane %v1577, 7
  %v1901 = vrot.slane %v1900, 2
  %v1902 = vrot.slane %v1576, 7
  %v1903 = vrot.slane %v1902, 2
  %v1904 = vrot.slane %v1578, 7
  %v1905 = vrot.slane %v1904, 2
  %v1906 = vrot.slane %v1586, 7
  %v1907 = vrot.slane %v1906, 2
  %v1908 = vrot.slane %v1594, 7
  %v1909 = vrot.slane %v1908, 2
  %v1910 = vrot.slane %v1593, 7
  %v1911 = vrot.slane %v1910, 2
  %v1912 = vrot.slane %v1595, 7
  %v1913 = vrot.slane %v1912, 2
  %v1914 = vrot.slane %v1603, 7
  %v1915 = vrot.slane %v1914, 2
  %v1916 = vrot.slane %v1611, 7
  %v1917 = vrot.slane %v1916, 2
  %v1918 = vrot.slane %v1610, 7
  %v1919 = vrot.slane %v1918, 2
  %v1920 = vrot.slane %v1612, 7
  %v1921 = vrot.slane %v1920, 2
  %v1922 = vrot.slane %v1620, 7
  %v1923 = vrot.slane %v1922, 2
  %v1924 = vrot.slane %v1628, 7
  %v1925 = vrot.slane %v1924, 2
  %v1926 = vrot.slane %v1627, 7
  %v1927 = vrot.slane %v1926, 2
  %v1928 = vrot.slane %v1629, 7
  %v1929 = vrot.slane %v1928, 2
  %v1930 = vrot.slane %v1637, 7
  %v1931 = vrot.slane %v1930, 2
  %v1932 = vrot.slane %v1645, 7
  %v1933 = vrot.slane %v1932, 2
  %v1934 = vrot.slane %v1644, 7
  %v1935 = vrot.slane %v1934, 2
  %v1936 = vrot.slane %v1646, 7
  %v1937 = vrot.slane %v1936, 2
  %v1938 = vrot.slane %v1654, 7
  %v1939 = vrot.slane %v1938, 2
  %v1940 = vrot.slane %v1662, 7
  %v1941 = vrot.slane %v1940, 2
  %v1942 = vrot.slane %v1661, 7
  %v1943 = vrot.slane %v1942, 2
  %v1944 = vrot.slane %v1663, 7
  %v1945 = vrot.slane %v1944, 2
  %v1946 = vrot.slane %v1671, 7
  %v1947 = vrot.slane %v1946, 2
  %v1948 = vrot.slane %v1679, 7
  %v1949 = vrot.slane %v1948, 2
  %v1950 = vrot.slane %v1678, 7
  %v1951 = vrot.slane %v1950, 2
  %v1952 = vrot.slane %v1680, 7
  %v1953 = vrot.slane %v1952, 2
  %v1954 = vrot.slane %v1688, 7
  %v1955 = vrot.slane %v1954, 2
  %v1956 = vrot.slane %v1696, 7
  %v1957 = vrot.slane %v1956, 2
  %v1958 = vrot.slane %v1695, 7
  %v1959 = vrot.slane %v1958, 2
  %v1960 = vrot.slane %v1697, 7
  %v1961 = vrot.slane %v1960, 2
  %v1962 = vrot.slane %v1705, 7
  %v1963 = vrot.slane %v1962, 2
  %v1964 = vrot.slane %v1713, 7
  %v1965 = vrot.slane %v1964, 2
  %v1966 = vrot.slane %v1712, 7
  %v1967 = vrot.slane %v1966, 2
  %v1968 = vrot.slane %v1714, 7
  %v1969 = vrot.slane %v1968, 2
  %v1970 = vrot.slane %v1722, 7
  %v1971 = vrot.slane %v1970, 2
  %v1972 = vrot.slane %v1730, 7
  %v1973 = vrot.slane %v1972, 2
  %v1974 = vrot.slane %v1729, 7
  %v1975 = vrot.slane %v1974, 2
  %v1976 = vrot.slane %v1731, 7
  %v1977 = vrot.slane %v1976, 2
  %v1978 = vrot.slane %v1739, 7
  %v1979 = vrot.slane %v1978, 2
  %v1980 = vrot.slane %v1747, 7
  %v1981 = vrot.slane %v1980, 2
  %v1982 = vrot.slane %v1746, 7
  %v1983 = vrot.slane %v1982, 2
  %v1984 = vrot.slane %v1748, 7
  %v1985 = vrot.slane %v1984, 2
  %v1986 = vrot.slane %v1756, 7
  %v1987 = vrot.slane %v1986, 2
  %v1988 = vrot.slane %v1764, 7
  %v1989 = vrot.slane %v1988, 2
  %v1990 = vrot.slane %v1763, 7
  %v1991 = vrot.slane %v1990, 2
  %v1992 = vrot.slane %v1765, 7
  %v1993 = vrot.slane %v1992, 2
  %v1994 = vrot.slane %v1773, 7
  %v1995 = vrot.slane %v1994, 2
  %v1996 = vrot.slane %v1781, 7
  %v1997 = vrot.slane %v1996, 2
  %v1998 = vrot.slane %v1780, 7
  %v1999 = vrot.slane %v1998, 2
  %v2000 = vrot.slane %v1782, 7
  %v2001 = vrot.slane %v2000, 2
  %v2002 = vrot.slane %v1790, 7
  %v2003 = vrot.slane %v2002, 2
  %v2004 = vrot.slane %v1798, 7
  %v2005 = vrot.slane %v2004, 2
  %v2006 = vrot.slane %v1797, 7
  %v2007 = vrot.slane %v2006, 2
  %v2008 = vrot.slane %v1799, 7
  %v2009 = vrot.slane %v2008, 2
  %v2010 = vrot.slane %v1807, 7
  %v2011 = vrot.slane %v2010, 2
  %v2012 = vrot.slane %v1815, 7
  %v2013 = vrot.slane %v2012, 2
  %v2014 = vrot.slane %v1814, 7
  %v2015 = vrot.slane %v2014, 2
  %v2016 = vrot.slane %v1816, 7
  %v2017 = vrot.slane %v2016, 2
  %v2018 = vrot.slane %v1824, 7
  %v2019 = vrot.slane %v2018, 2
  %v2020 = vrot.slane %v1832, 7
  %v2021 = vrot.slane %v2020, 2
  %v2022 = vrot.slane %v1831, 7
  %v2023 = vrot.slane %v2022, 2
  %v2024 = vrot.slane %v1833, 7
  %v2025 = vrot.slane %v2024, 2
  %v2090 = vmax.f32 %v1569, %v1899
  %v2091 = vmax.f32 %v1577, %v1901
  %v2092 = vmax.f32 %v1576, %v1903
  %v2093 = vmax.f32 %v1578, %v1905
  %v2094 = vmax.f32 %v1586, %v1907
  %v2095 = vmax.f32 %v1594, %v1909
  %v2096 = vmax.f32 %v1593, %v1911
  %v2097 = vmax.f32 %v1595, %v1913
  %v2098 = vmax.f32 %v1603, %v1915
  %v2099 = vmax.f32 %v1611, %v1917
  %v2100 = vmax.f32 %v1610, %v1919
  %v2101 = vmax.f32 %v1612, %v1921
  %v2102 = vmax.f32 %v1620, %v1923
  %v2103 = vmax.f32 %v1628, %v1925
  %v2104 = vmax.f32 %v1627, %v1927
  %v2105 = vmax.f32 %v1629, %v1929
  %v2106 = vmax.f32 %v1637, %v1931
  %v2107 = vmax.f32 %v1645, %v1933
  %v2108 = vmax.f32 %v1644, %v1935
  %v2109 = vmax.f32 %v1646, %v1937
  %v2110 = vmax.f32 %v1654, %v1939
  %v2111 = vmax.f32 %v1662, %v1941
  %v2112 = vmax.f32 %v1661, %v1943
  %v2113 = vmax.f32 %v1663, %v1945
  %v2114 = vmax.f32 %v1671, %v1947
  %v2115 = vmax.f32 %v1679, %v1949
  %v2116 = vmax.f32 %v1678, %v1951
  %v2117 = vmax.f32 %v1680, %v1953
  %v2118 = vmax.f32 %v1688, %v1955
  %v2119 = vmax.f32 %v1696, %v1957
  %v2120 = vmax.f32 %v1695, %v1959
  %v2121 = vmax.f32 %v1697, %v1961
  %v2122 = vmax.f32 %v1705, %v1963
  %v2123 = vmax.f32 %v1713, %v1965
  %v2124 = vmax.f32 %v1712, %v1967
  %v2125 = vmax.f32 %v1714, %v1969
  %v2126 = vmax.f32 %v1722, %v1971
  %v2127 = vmax.f32 %v1730, %v1973
  %v2128 = vmax.f32 %v1729, %v1975
  %v2129 = vmax.f32 %v1731, %v1977
  %v2130 = vmax.f32 %v1739, %v1979
  %v2131 = vmax.f32 %v1747, %v1981
  %v2132 = vmax.f32 %v1746, %v1983
  %v2133 = vmax.f32 %v1748, %v1985
  %v2134 = vmax.f32 %v1756, %v1987
  %v2135 = vmax.f32 %v1764, %v1989
  %v2136 = vmax.f32 %v1763, %v1991
  %v2137 = vmax.f32 %v1765, %v1993
  %v2138 = vmax.f32 %v1773, %v1995
  %v2139 = vmax.f32 %v1781, %v1997
  %v2140 = vmax.f32 %v1780, %v1999
  %v2141 = vmax.f32 %v1782, %v2001
  %v2142 = vmax.f32 %v1790, %v2003
  %v2143 = vmax.f32 %v1798, %v2005
  %v2144 = vmax.f32 %v1797, %v2007
  %v2145 = vmax.f32 %v1799, %v2009
  %v2146 = vmax.f32 %v1807, %v2011
  %v2147 = vmax.f32 %v1815, %v2013
  %v2148 = vmax.f32 %v1814, %v2015
  %v2149 = vmax.f32 %v1816, %v2017
  %v2150 = vmax.f32 %v1824, %v2019
  %v2151 = vmax.f32 %v1832, %v2021
  %v2152 = vmax.f32 %v1831, %v2023
  %v2153 = vmax.f32 %v1833, %v2025
  %v2154 = vmax.f32 %v2090, %v2094
  %v2155 = vmax.f32 %v2091, %v2095
  %v2156 = vmax.f32 %v2092, %v2096
  %v2157 = vmax.f32 %v2093, %v2097
  %v2158 = vmax.f32 %v2098, %v2102
  %v2159 = vmax.f32 %v2099, %v2103
  %v2160 = vmax.f32 %v2100, %v2104
  %v2161 = vmax.f32 %v2101, %v2105
  %v2162 = vmax.f32 %v2106, %v2110
  %v2163 = vmax.f32 %v2107, %v2111
  %v2164 = vmax.f32 %v2108, %v2112
  %v2165 = vmax.f32 %v2109, %v2113
  %v2166 = vmax.f32 %v2114, %v2118
  %v2167 = vmax.f32 %v2115, %v2119
  %v2168 = vmax.f32 %v2116, %v2120
  %v2169 = vmax.f32 %v2117, %v2121
  %v2170 = vmax.f32 %v2122, %v2126
  %v2171 = vmax.f32 %v2123, %v2127
  %v2172 = vmax.f32 %v2124, %v2128
  %v2173 = vmax.f32 %v2125, %v2129
  %v2174 = vmax.f32 %v2130, %v2134
  %v2175 = vmax.f32 %v2131, %v2135
  %v2176 = vmax.f32 %v2132, %v2136
  %v2177 = vmax.f32 %v2133, %v2137
  %v2178 = vmax.f32 %v2138, %v2142
  %v2179 = vmax.f32 %v2139, %v2143
  %v2180 = vmax.f32 %v2140, %v2144
  %v2181 = vmax.f32 %v2141, %v2145
  %v2182 = vmax.f32 %v2146, %v2150
  %v2183 = vmax.f32 %v2147, %v2151
  %v2184 = vmax.f32 %v2148, %v2152
  %v2185 = vmax.f32 %v2149, %v2153
  %v2218 = vlaneseq
  %v2219 = vshrl.u32 %v2218, 7
  %v2220 = vsub.s32 0, %v2219
  %v2221 = vrot.slane %v2154, %v2220
  %v2222 = vlaneseq
  %v2223 = vshrl.u32 %v2222, 7
  %v2224 = vsub.s32 0, %v2223
  %v2225 = vrot.slane %v2155, %v2224
  %v2226 = vlaneseq
  %v2227 = vshrl.u32 %v2226, 7
  %v2228 = vsub.s32 0, %v2227
  %v2229 = vrot.slane %v2156, %v2228
  %v2230 = vlaneseq
  %v2231 = vshrl.u32 %v2230, 7
  %v2232 = vsub.s32 0, %v2231
  %v2233 = vrot.slane %v2157, %v2232
  %v2234 = vlaneseq
  %v2235 = vshrl.u32 %v2234, 7
  %v2236 = vsub.s32 0, %v2235
  %v2237 = vrot.slane %v2158, %v2236
  %v2238 = vlaneseq
  %v2239 = vshrl.u32 %v2238, 7
  %v2240 = vsub.s32 0, %v2239
  %v2241 = vrot.slane %v2159, %v2240
  %v2242 = vlaneseq
  %v2243 = vshrl.u32 %v2242, 7
  %v2244 = vsub.s32 0, %v2243
  %v2245 = vrot.slane %v2160, %v2244
  %v2246 = vlaneseq
  %v2247 = vshrl.u32 %v2246, 7
  %v2248 = vsub.s32 0, %v2247
  %v2249 = vrot.slane %v2161, %v2248
  %v2250 = vlaneseq
  %v2251 = vshrl.u32 %v2250, 7
  %v2252 = vsub.s32 0, %v2251
  %v2253 = vrot.slane %v2162, %v2252
  %v2254 = vlaneseq
  %v2255 = vshrl.u32 %v2254, 7
  %v2256 = vsub.s32 0, %v2255
  %v2257 = vrot.slane %v2163, %v2256
  %v2258 = vlaneseq
  %v2259 = vshrl.u32 %v2258, 7
  %v2260 = vsub.s32 0, %v2259
  %v2261 = vrot.slane %v2164, %v2260
  %v2262 = vlaneseq
  %v2263 = vshrl.u32 %v2262, 7
  %v2264 = vsub.s32 0, %v2263
  %v2265 = vrot.slane %v2165, %v2264
  %v2266 = vlaneseq
  %v2267 = vshrl.u32 %v2266, 7
  %v2268 = vsub.s32 0, %v2267
  %v2269 = vrot.slane %v2166, %v2268
  %v2270 = vlaneseq
  %v2271 = vshrl.u32 %v2270, 7
  %v2272 = vsub.s32 0, %v2271
  %v2273 = vrot.slane %v2167, %v2272
  %v2274 = vlaneseq
  %v2275 = vshrl.u32 %v2274, 7
  %v2276 = vsub.s32 0, %v2275
  %v2277 = vrot.slane %v2168, %v2276
  %v2278 = vlaneseq
  %v2279 = vshrl.u32 %v2278, 7
  %v2280 = vsub.s32 0, %v2279
  %v2281 = vrot.slane %v2169, %v2280
  %v2282 = vlaneseq
  %v2283 = vshrl.u32 %v2282, 7
  %v2284 = vsub.s32 0, %v2283
  %v2285 = vrot.slane %v2170, %v2284
  %v2286 = vlaneseq
  %v2287 = vshrl.u32 %v2286, 7
  %v2288 = vsub.s32 0, %v2287
  %v2289 = vrot.slane %v2171, %v2288
  %v2290 = vlaneseq
  %v2291 = vshrl.u32 %v2290, 7
  %v2292 = vsub.s32 0, %v2291
  %v2293 = vrot.slane %v2172, %v2292
  %v2294 = vlaneseq
  %v2295 = vshrl.u32 %v2294, 7
  %v2296 = vsub.s32 0, %v2295
  %v2297 = vrot.slane %v2173, %v2296
  %v2298 = vlaneseq
  %v2299 = vshrl.u32 %v2298, 7
  %v2300 = vsub.s32 0, %v2299
  %v2301 = vrot.slane %v2174, %v2300
  %v2302 = vlaneseq
  %v2303 = vshrl.u32 %v2302, 7
  %v2304 = vsub.s32 0, %v2303
  %v2305 = vrot.slane %v2175, %v2304
  %v2306 = vlaneseq
  %v2307 = vshrl.u32 %v2306, 7
  %v2308 = vsub.s32 0, %v2307
  %v2309 = vrot.slane %v2176, %v2308
  %v2310 = vlaneseq
  %v2311 = vshrl.u32 %v2310, 7
  %v2312 = vsub.s32 0, %v2311
  %v2313 = vrot.slane %v2177, %v2312
  %v2314 = vlaneseq
  %v2315 = vshrl.u32 %v2314, 7
  %v2316 = vsub.s32 0, %v2315
  %v2317 = vrot.slane %v2178, %v2316
  %v2318 = vlaneseq
  %v2319 = vshrl.u32 %v2318, 7
  %v2320 = vsub.s32 0, %v2319
  %v2321 = vrot.slane %v2179, %v2320
  %v2322 = vlaneseq
  %v2323 = vshrl.u32 %v2322, 7
  %v2324 = vsub.s32 0, %v2323
  %v2325 = vrot.slane %v2180, %v2324
  %v2326 = vlaneseq
  %v2327 = vshrl.u32 %v2326, 7
  %v2328 = vsub.s32 0, %v2327
  %v2329 = vrot.slane %v2181, %v2328
  %v2330 = vlaneseq
  %v2331 = vshrl.u32 %v2330, 7
  %v2332 = vsub.s32 0, %v2331
  %v2333 = vrot.slane %v2182, %v2332
  %v2334 = vlaneseq
  %v2335 = vshrl.u32 %v2334, 7
  %v2336 = vsub.s32 0, %v2335
  %v2337 = vrot.slane %v2183, %v2336
  %v2338 = vlaneseq
  %v2339 = vshrl.u32 %v2338, 7
  %v2340 = vsub.s32 0, %v2339
  %v2341 = vrot.slane %v2184, %v2340
  %v2342 = vlaneseq
  %v2343 = vshrl.u32 %v2342, 7
  %v2344 = vsub.s32 0, %v2343
  %v2345 = vrot.slane %v2185, %v2344
  %vm2346 = vcmask 1041409
  %v2347 = vsel %vm2346, %v2225, %v2221
  %vm2348 = vcmask 1042434
  %v2349 = vsel %vm2348, %v2229, %v2347
  %vm2350 = vcmask 1043459
  %v2351 = vsel %vm2350, %v2233, %v2349
  %v2352 = vsel %vm2346, %v2241, %v2237
  %v2353 = vsel %vm2348, %v2245, %v2352
  %v2354 = vsel %vm2350, %v2249, %v2353
  %v2355 = vsel %vm2346, %v2257, %v2253
  %v2356 = vsel %vm2348, %v2261, %v2355
  %v2357 = vsel %vm2350, %v2265, %v2356
  %v2358 = vsel %vm2346, %v2273, %v2269
  %v2359 = vsel %vm2348, %v2277, %v2358
  %v2360 = vsel %vm2350, %v2281, %v2359
  %v2361 = vsel %vm2346, %v2289, %v2285
  %v2362 = vsel %vm2348, %v2293, %v2361
  %v2363 = vsel %vm2350, %v2297, %v2362
  %v2364 = vsel %vm2346, %v2305, %v2301
  %v2365 = vsel %vm2348, %v2309, %v2364
  %v2366 = vsel %vm2350, %v2313, %v2365
  %v2367 = vsel %vm2346, %v2321, %v2317
  %v2368 = vsel %vm2348, %v2325, %v2367
  %v2369 = vsel %vm2350, %v2329, %v2368
  %v2370 = vsel %vm2346, %v2337, %v2333
  %v2371 = vsel %vm2348, %v2341, %v2370
  %v2372 = vsel %vm2350, %v2345, %v2371
  %2381 = vst [vmem:[%s3] sm:$0xf] %v2351
  %2382 = vst [vmem:[%s3 + $0x4] sm:$0xf] %v2354
  %2383 = vst [vmem:[%s3 + $0x8] sm:$0xf] %v2357
  %2384 = vst [vmem:[%s3 + $0xc] sm:$0xf] %v2360
  %2385 = vst [vmem:[%s3 + $0x10] sm:$0xf] %v2363
  %2386 = vst [vmem:[%s3 + $0x14] sm:$0xf] %v2366
  %2387 = vst [vmem:[%s3 + $0x18] sm:$0xf] %v2369
  %2388 = vst [vmem:[%s3 + $0x1c] sm:$0xf] %v2372
  // Predicated region
  $region14: #{_lambda_.7} parent=0 // pred_check
    _
  $region15: #{_lambda_.7} parent=0 // pred_check_branch
    %2390 = sbr.rel (0) target = $region17
  $region16: #{_lambda_.7} parent=0 // pred_region
    _
  $region17: #{_lambda_.7} parent=0 // pred_fallthru
    _
  // Predicated region
  $region18: #{_lambda_.7} parent=0 // pred_check
    _
  $region19: #{_lambda_.7} parent=0 // pred_check_branch
    %2392 = sbr.rel (0) target = $region21
  $region20: #{_lambda_.7} parent=0 // pred_region
    _
  $region21: #{_lambda_.7} parent=0 // pred_fallthru
    _

// kernel: _lambda_.9
$region0: #{_lambda_.9}
  #allocation0 [shape = 'u32[]', space=smem, size = 0x4, offset = 0x4, fixed_abs, tag = 'smem constant byte address 0x4 - core index']
  #allocation1 [shape = 'u32[144,128]{1,0:T(1,128)}', space=vmem, size = 0x12000, scoped, tag = 'internal scratch']
  #allocation2 [shape = 'f32[2,4,11,128]{3,2,1,0:T(8,128)}', space=vmem, size = 0x10000, scoped, tag = 'scratch operand']
  #allocation3 [shape = 'bf16[8,1152]{1,0:T(8,128)(2,1)}', space=vmem, size = 0x4800, scoped, tag = 'scratch operand']
  %s0 = inlined_call_operand.vmem [shape: f32[2,2,2,128], index: 0, kind: input, shape index: {}]
  %s1 = inlined_call_operand.vmem [shape: bf16[1152,128], index: 1, kind: input, shape index: {}]
  %s2 = inlined_call_operand.vmem [shape: f32[1,128], index: 2, kind: input, shape index: {}]
  %s3 = inlined_call_operand.vmem [shape: f32[2,2,2,128], index: 3, kind: output, shape index: {}]
  %s4 = sld [smem:[#allocation0]]
  $region22: #{_lambda_.9} parent=0
    _
  %s6 = ssub.s32 1, %s4
  %s7 = scalar_select 0, %s6, %s4
  // Predicated region
  $region2: #{_lambda_.9} parent=0 // pred_check
    _
  $region3: #{_lambda_.9} parent=0 // pred_check_branch
    %9 = sbr.rel (0) target = $region5
  $region4: #{_lambda_.9} parent=0 // pred_region
    _
  $region5: #{_lambda_.9} parent=0 // pred_fallthru
    _
  // Predicated region
  $region6: #{_lambda_.9} parent=0 // pred_check
    _
  $region7: #{_lambda_.9} parent=0 // pred_check_branch
    %11 = sbr.rel (0) target = $region9
  $region8: #{_lambda_.9} parent=0 // pred_region
    _
  $region9: #{_lambda_.9} parent=0 // pred_fallthru
    _
  // Predicated region
  $region10: #{_lambda_.9} parent=0 // pred_check
    _
  $region11: #{_lambda_.9} parent=0 // pred_check_branch
    %13 = sbr.rel (0) target = $region13
  $region12: #{_lambda_.9} parent=0 // pred_region
    _
  $region13: #{_lambda_.9} parent=0 // pred_fallthru
    _
  %15 = vst [vmem:[#allocation2] sm:$0xff] 0.0
  %16 = vst [vmem:[#allocation2 + $0x8] sm:$0x7] 0.0
  %17 = vst [vmem:[#allocation2 + $0x40] sm:$0xff] 0.0
  %18 = vst [vmem:[#allocation2 + $0x48] sm:$0x7] 0.0
  %s19 = scalar_lea.vmem [#allocation2], 48
  %20 = vst [vmem:[%s19] sm:$0xff] 0.0
  %21 = vst [vmem:[%s19 + $0x8] sm:$0x7] 0.0
  %22 = vst [vmem:[%s19 + $0x40] sm:$0xff] 0.0
  %23 = vst [vmem:[%s19 + $0x48] sm:$0x7] 0.0
  %24 = vst [vmem:[#allocation2 + $0x7] sm:$0x1] 0.0
  %25 = vst [vmem:[#allocation2 + $0x17] sm:$0x1] 0.0
  %26 = vst [vmem:[#allocation2 + $0x27] sm:$0x1] 0.0
  %27 = vst [vmem:[#allocation2 + $0x37] sm:$0x1] 0.0
  %28 = vst [vmem:[#allocation2 + $0x47] sm:$0x1] 0.0
  %29 = vst [vmem:[#allocation2 + $0x57] sm:$0x1] 0.0
  %30 = vst [vmem:[#allocation2 + $0x67] sm:$0x1] 0.0
  %31 = vst [vmem:[#allocation2 + $0x77] sm:$0x1] 0.0
  %32 = vst [vmem:[#allocation2 + $0xa] sm:$0x1] 0.0
  %33 = vst [vmem:[#allocation2 + $0x1a] sm:$0x1] 0.0
  %34 = vst [vmem:[#allocation2 + $0x2a] sm:$0x1] 0.0
  %35 = vst [vmem:[#allocation2 + $0x3a] sm:$0x1] 0.0
  %36 = vst [vmem:[#allocation2 + $0x4a] sm:$0x1] 0.0
  %37 = vst [vmem:[#allocation2 + $0x5a] sm:$0x1] 0.0
  %38 = vst [vmem:[#allocation2 + $0x6a] sm:$0x1] 0.0
  %39 = vst [vmem:[#allocation2 + $0x7a] sm:$0x1] 0.0
  %v40 = vld [vmem:[%s0] sm:$0x3]
  %v41 = vld [vmem:[%s0 + $0x2] sm:$0x3]
  %v42 = vld [vmem:[%s0 + $0x4] sm:$0x3]
  %v43 = vld [vmem:[%s0 + $0x6] sm:$0x3]
  %s44 = scalar_lea.vmem [#allocation2], 16
  %45 = vst [vmem:[%s44 + $0x8] sm:$0x3] %v40
  %46 = vst [vmem:[%s44 + $0x18] sm:$0x3] %v41
  %47 = vst [vmem:[%s44 + $0x48] sm:$0x3] %v42
  %48 = vst [vmem:[%s44 + $0x58] sm:$0x3] %v43
  %v49 = vld [vmem:[#allocation2 + $0x7] sm:$0x3]
  %v50 = vld [vmem:[#allocation2 + $0x17] sm:$0x3]
  %v51 = vld [vmem:[#allocation2 + $0x47] sm:$0x3]
  %v52 = vld [vmem:[#allocation2 + $0x57] sm:$0x3]
  %v57 = vcombine.low %v49, %v50
  %v58 = vcombine.low %v51, %v52
  %v60 = vunpack.c.l.s4 1983009808
  %v61 = vunpack.c.0.s8 %v60
  %v62 = vlaneseq
  %v63 = vshrl.u32 %v62, 7
  %v64 = vsub.s32 %v61, %v63
  %v65 = vrot.slane %v57, %v64
  %v67 = vunpack.c.l.s4 1983009808
  %v68 = vunpack.c.0.s8 %v67
  %v69 = vlaneseq
  %v70 = vshrl.u32 %v69, 7
  %v71 = vsub.s32 %v68, %v70
  %v72 = vrot.slane %v58, %v71
  %v73 = vcombine.low %v65, %v72
  %v75 = vpack.c.bf16 %v73, %v73
  %76 = vst [vmem:[#allocation3] sm:$0xf] %v75
  %v77 = vld [vmem:[#allocation2 + $0x8] sm:$0x3]
  %v78 = vld [vmem:[#allocation2 + $0x18] sm:$0x3]
  %v79 = vld [vmem:[#allocation2 + $0x48] sm:$0x3]
  %v80 = vld [vmem:[#allocation2 + $0x58] sm:$0x3]
  %v85 = vcombine.low %v77, %v78
  %v86 = vcombine.low %v79, %v80
  %v88 = vunpack.c.l.s4 1983009808
  %v89 = vunpack.c.0.s8 %v88
  %v90 = vlaneseq
  %v91 = vshrl.u32 %v90, 7
  %v92 = vsub.s32 %v89, %v91
  %v93 = vrot.slane %v85, %v92
  %v95 = vunpack.c.l.s4 1983009808
  %v96 = vunpack.c.0.s8 %v95
  %v97 = vlaneseq
  %v98 = vshrl.u32 %v97, 7
  %v99 = vsub.s32 %v96, %v98
  %v100 = vrot.slane %v86, %v99
  %v101 = vcombine.low %v93, %v100
  %v103 = vpack.c.bf16 %v101, %v101
  %104 = vst [vmem:[#allocation3 + $0x4] sm:$0xf] %v103
  %v105 = vld [vmem:[#allocation2 + $0x9] sm:$0x3]
  %v106 = vld [vmem:[#allocation2 + $0x19] sm:$0x3]
  %v107 = vld [vmem:[#allocation2 + $0x49] sm:$0x3]
  %v108 = vld [vmem:[#allocation2 + $0x59] sm:$0x3]
  %v113 = vcombine.low %v105, %v106
  %v114 = vcombine.low %v107, %v108
  %v116 = vunpack.c.l.s4 1983009808
  %v117 = vunpack.c.0.s8 %v116
  %v118 = vlaneseq
  %v119 = vshrl.u32 %v118, 7
  %v120 = vsub.s32 %v117, %v119
  %v121 = vrot.slane %v113, %v120
  %v123 = vunpack.c.l.s4 1983009808
  %v124 = vunpack.c.0.s8 %v123
  %v125 = vlaneseq
  %v126 = vshrl.u32 %v125, 7
  %v127 = vsub.s32 %v124, %v126
  %v128 = vrot.slane %v114, %v127
  %v129 = vcombine.low %v121, %v128
  %v131 = vpack.c.bf16 %v129, %v129
  %132 = vst [vmem:[#allocation3 + $0x8] sm:$0xf] %v131
  %v133 = vld [vmem:[%s44 + $0x7] sm:$0x3]
  %v134 = vld [vmem:[%s44 + $0x17] sm:$0x3]
  %v135 = vld [vmem:[%s44 + $0x47] sm:$0x3]
  %v136 = vld [vmem:[%s44 + $0x57] sm:$0x3]
  %v141 = vcombine.low %v133, %v134
  %v142 = vcombine.low %v135, %v136
  %v144 = vunpack.c.l.s4 1983009808
  %v145 = vunpack.c.0.s8 %v144
  %v146 = vlaneseq
  %v147 = vshrl.u32 %v146, 7
  %v148 = vsub.s32 %v145, %v147
  %v149 = vrot.slane %v141, %v148
  %v151 = vunpack.c.l.s4 1983009808
  %v152 = vunpack.c.0.s8 %v151
  %v153 = vlaneseq
  %v154 = vshrl.u32 %v153, 7
  %v155 = vsub.s32 %v152, %v154
  %v156 = vrot.slane %v142, %v155
  %v157 = vcombine.low %v149, %v156
  %v159 = vpack.c.bf16 %v157, %v157
  %160 = vst [vmem:[#allocation3 + $0xc] sm:$0xf] %v159
  %v161 = vld [vmem:[%s44 + $0x8] sm:$0x3]
  %v162 = vld [vmem:[%s44 + $0x18] sm:$0x3]
  %v163 = vld [vmem:[%s44 + $0x48] sm:$0x3]
  %v164 = vld [vmem:[%s44 + $0x58] sm:$0x3]
  %v169 = vcombine.low %v161, %v162
  %v170 = vcombine.low %v163, %v164
  %v172 = vunpack.c.l.s4 1983009808
  %v173 = vunpack.c.0.s8 %v172
  %v174 = vlaneseq
  %v175 = vshrl.u32 %v174, 7
  %v176 = vsub.s32 %v173, %v175
  %v177 = vrot.slane %v169, %v176
  %v179 = vunpack.c.l.s4 1983009808
  %v180 = vunpack.c.0.s8 %v179
  %v181 = vlaneseq
  %v182 = vshrl.u32 %v181, 7
  %v183 = vsub.s32 %v180, %v182
  %v184 = vrot.slane %v170, %v183
  %v185 = vcombine.low %v177, %v184
  %v187 = vpack.c.bf16 %v185, %v185
  %188 = vst [vmem:[#allocation3 + $0x10] sm:$0xf] %v187
  %v189 = vld [vmem:[%s44 + $0x9] sm:$0x3]
  %v190 = vld [vmem:[%s44 + $0x19] sm:$0x3]
  %v191 = vld [vmem:[%s44 + $0x49] sm:$0x3]
  %v192 = vld [vmem:[%s44 + $0x59] sm:$0x3]
  %v197 = vcombine.low %v189, %v190
  %v198 = vcombine.low %v191, %v192
  %v200 = vunpack.c.l.s4 1983009808
  %v201 = vunpack.c.0.s8 %v200
  %v202 = vlaneseq
  %v203 = vshrl.u32 %v202, 7
  %v204 = vsub.s32 %v201, %v203
  %v205 = vrot.slane %v197, %v204
  %v207 = vunpack.c.l.s4 1983009808
  %v208 = vunpack.c.0.s8 %v207
  %v209 = vlaneseq
  %v210 = vshrl.u32 %v209, 7
  %v211 = vsub.s32 %v208, %v210
  %v212 = vrot.slane %v198, %v211
  %v213 = vcombine.low %v205, %v212
  %v215 = vpack.c.bf16 %v213, %v213
  %216 = vst [vmem:[#allocation3 + $0x14] sm:$0xf] %v215
  %s217 = scalar_lea.vmem [#allocation2], 32
  %v218 = vld [vmem:[%s217 + $0x7] sm:$0x3]
  %v219 = vld [vmem:[%s217 + $0x17] sm:$0x3]
  %v220 = vld [vmem:[%s217 + $0x47] sm:$0x3]
  %v221 = vld [vmem:[%s217 + $0x57] sm:$0x3]
  %v226 = vcombine.low %v218, %v219
  %v227 = vcombine.low %v220, %v221
  %v229 = vunpack.c.l.s4 1983009808
  %v230 = vunpack.c.0.s8 %v229
  %v231 = vlaneseq
  %v232 = vshrl.u32 %v231, 7
  %v233 = vsub.s32 %v230, %v232
  %v234 = vrot.slane %v226, %v233
  %v236 = vunpack.c.l.s4 1983009808
  %v237 = vunpack.c.0.s8 %v236
  %v238 = vlaneseq
  %v239 = vshrl.u32 %v238, 7
  %v240 = vsub.s32 %v237, %v239
  %v241 = vrot.slane %v227, %v240
  %v242 = vcombine.low %v234, %v241
  %v244 = vpack.c.bf16 %v242, %v242
  %245 = vst [vmem:[#allocation3 + $0x18] sm:$0xf] %v244
  %v246 = vld [vmem:[%s217 + $0x8] sm:$0x3]
  %v247 = vld [vmem:[%s217 + $0x18] sm:$0x3]
  %v248 = vld [vmem:[%s217 + $0x48] sm:$0x3]
  %v249 = vld [vmem:[%s217 + $0x58] sm:$0x3]
  %v254 = vcombine.low %v246, %v247
  %v255 = vcombine.low %v248, %v249
  %v257 = vunpack.c.l.s4 1983009808
  %v258 = vunpack.c.0.s8 %v257
  %v259 = vlaneseq
  %v260 = vshrl.u32 %v259, 7
  %v261 = vsub.s32 %v258, %v260
  %v262 = vrot.slane %v254, %v261
  %v264 = vunpack.c.l.s4 1983009808
  %v265 = vunpack.c.0.s8 %v264
  %v266 = vlaneseq
  %v267 = vshrl.u32 %v266, 7
  %v268 = vsub.s32 %v265, %v267
  %v269 = vrot.slane %v255, %v268
  %v270 = vcombine.low %v262, %v269
  %v272 = vpack.c.bf16 %v270, %v270
  %273 = vst [vmem:[#allocation3 + $0x1c] sm:$0xf] %v272
  %v274 = vld [vmem:[%s217 + $0x9] sm:$0x3]
  %v275 = vld [vmem:[%s217 + $0x19] sm:$0x3]
  %v276 = vld [vmem:[%s217 + $0x49] sm:$0x3]
  %v277 = vld [vmem:[%s217 + $0x59] sm:$0x3]
  %v282 = vcombine.low %v274, %v275
  %v283 = vcombine.low %v276, %v277
  %v285 = vunpack.c.l.s4 1983009808
  %v286 = vunpack.c.0.s8 %v285
  %v287 = vlaneseq
  %v288 = vshrl.u32 %v287, 7
  %v289 = vsub.s32 %v286, %v288
  %v290 = vrot.slane %v282, %v289
  %v292 = vunpack.c.l.s4 1983009808
  %v293 = vunpack.c.0.s8 %v292
  %v294 = vlaneseq
  %v295 = vshrl.u32 %v294, 7
  %v296 = vsub.s32 %v293, %v295
  %v297 = vrot.slane %v283, %v296
  %v298 = vcombine.low %v290, %v297
  %v300 = vpack.c.bf16 %v298, %v298
  %301 = vst [vmem:[#allocation3 + $0x20] sm:$0xf] %v300
  %v302 = vld [vmem:[#allocation3] sm:$0xff]
  %v303 = vld [vmem:[#allocation3 + $0x8] sm:$0xff]
  %v304 = vld [vmem:[#allocation3 + $0x10] sm:$0xff]
  %v305 = vld [vmem:[#allocation3 + $0x18] sm:$0xff]
  %v306 = vld [vmem:[#allocation3 + $0x20] sm:$0xf]
  %v307 = vld [vmem:[%s1] sm:$0xf]
  %v308 = vld [vmem:[%s1 + $0x4] sm:$0xf]
  %v309 = vld [vmem:[%s1 + $0x8] sm:$0xf]
  %v310 = vld [vmem:[%s1 + $0xc] sm:$0xf]
  %v311 = vld [vmem:[%s1 + $0x10] sm:$0xf]
  %v312 = vld [vmem:[%s1 + $0x14] sm:$0xf]
  %v313 = vld [vmem:[%s1 + $0x18] sm:$0xf]
  %v314 = vld [vmem:[%s1 + $0x1c] sm:$0xf]
  %v315 = vld [vmem:[%s1 + $0x20] sm:$0xf]
  %v316 = vld [vmem:[%s1 + $0x24] sm:$0xf]
  %v317 = vld [vmem:[%s1 + $0x28] sm:$0xf]
  %v318 = vld [vmem:[%s1 + $0x2c] sm:$0xf]
  %v319 = vld [vmem:[%s1 + $0x30] sm:$0xf]
  %v320 = vld [vmem:[%s1 + $0x34] sm:$0xf]
  %v321 = vld [vmem:[%s1 + $0x38] sm:$0xf]
  %v322 = vld [vmem:[%s1 + $0x3c] sm:$0xf]
  %v323 = vld [vmem:[%s1 + $0x40] sm:$0xf]
  %v324 = vld [vmem:[%s1 + $0x44] sm:$0xf]
  %v325 = vld [vmem:[%s1 + $0x48] sm:$0xf]
  %v326 = vld [vmem:[%s1 + $0x4c] sm:$0xf]
  %v327 = vld [vmem:[%s1 + $0x50] sm:$0xf]
  %v328 = vld [vmem:[%s1 + $0x54] sm:$0xf]
  %v329 = vld [vmem:[%s1 + $0x58] sm:$0xf]
  %v330 = vld [vmem:[%s1 + $0x5c] sm:$0xf]
  %v331 = vld [vmem:[%s1 + $0x60] sm:$0xf]
  %v332 = vld [vmem:[%s1 + $0x64] sm:$0xf]
  %v333 = vld [vmem:[%s1 + $0x68] sm:$0xf]
  %v334 = vld [vmem:[%s1 + $0x6c] sm:$0xf]
  %v335 = vld [vmem:[%s1 + $0x70] sm:$0xf]
  %v336 = vld [vmem:[%s1 + $0x74] sm:$0xf]
  %v337 = vld [vmem:[%s1 + $0x78] sm:$0xf]
  %v338 = vld [vmem:[%s1 + $0x7c] sm:$0xf]
  %v339 = vld [vmem:[%s1 + $0x80] sm:$0xf]
  %v340 = vld [vmem:[%s1 + $0x84] sm:$0xf]
  %v341 = vld [vmem:[%s1 + $0x88] sm:$0xf]
  %v342 = vld [vmem:[%s1 + $0x8c] sm:$0xf]
  %v343 = vld [vmem:[%s1 + $0x90] sm:$0xf]
  %v344 = vld [vmem:[%s1 + $0x94] sm:$0xf]
  %v345 = vld [vmem:[%s1 + $0x98] sm:$0xf]
  %v346 = vld [vmem:[%s1 + $0x9c] sm:$0xf]
  %v347 = vld [vmem:[%s1 + $0xa0] sm:$0xf]
  %v348 = vld [vmem:[%s1 + $0xa4] sm:$0xf]
  %v349 = vld [vmem:[%s1 + $0xa8] sm:$0xf]
  %v350 = vld [vmem:[%s1 + $0xac] sm:$0xf]
  %v351 = vld [vmem:[%s1 + $0xb0] sm:$0xf]
  %v352 = vld [vmem:[%s1 + $0xb4] sm:$0xf]
  %v353 = vld [vmem:[%s1 + $0xb8] sm:$0xf]
  %v354 = vld [vmem:[%s1 + $0xbc] sm:$0xf]
  %v355 = vld [vmem:[%s1 + $0xc0] sm:$0xf]
  %v356 = vld [vmem:[%s1 + $0xc4] sm:$0xf]
  %v357 = vld [vmem:[%s1 + $0xc8] sm:$0xf]
  %v358 = vld [vmem:[%s1 + $0xcc] sm:$0xf]
  %v359 = vld [vmem:[%s1 + $0xd0] sm:$0xf]
  %v360 = vld [vmem:[%s1 + $0xd4] sm:$0xf]
  %v361 = vld [vmem:[%s1 + $0xd8] sm:$0xf]
  %v362 = vld [vmem:[%s1 + $0xdc] sm:$0xf]
  %v363 = vld [vmem:[%s1 + $0xe0] sm:$0xf]
  %v364 = vld [vmem:[%s1 + $0xe4] sm:$0xf]
  %v365 = vld [vmem:[%s1 + $0xe8] sm:$0xf]
  %v366 = vld [vmem:[%s1 + $0xec] sm:$0xf]
  %v367 = vld [vmem:[%s1 + $0xf0] sm:$0xf]
  %v368 = vld [vmem:[%s1 + $0xf4] sm:$0xf]
  %v369 = vld [vmem:[%s1 + $0xf8] sm:$0xf]
  %v370 = vld [vmem:[%s1 + $0xfc] sm:$0xf]
  %v371 = vld [vmem:[%s1 + $0x100] sm:$0xf]
  %v372 = vld [vmem:[%s1 + $0x104] sm:$0xf]
  %v373 = vld [vmem:[%s1 + $0x108] sm:$0xf]
  %v374 = vld [vmem:[%s1 + $0x10c] sm:$0xf]
  %v375 = vld [vmem:[%s1 + $0x110] sm:$0xf]
  %v376 = vld [vmem:[%s1 + $0x114] sm:$0xf]
  %v377 = vld [vmem:[%s1 + $0x118] sm:$0xf]
  %v378 = vld [vmem:[%s1 + $0x11c] sm:$0xf]
  %v379 = vld [vmem:[%s1 + $0x120] sm:$0xf]
  %v380 = vld [vmem:[%s1 + $0x124] sm:$0xf]
  %v381 = vld [vmem:[%s1 + $0x128] sm:$0xf]
  %v382 = vld [vmem:[%s1 + $0x12c] sm:$0xf]
  %v383 = vld [vmem:[%s1 + $0x130] sm:$0xf]
  %v384 = vld [vmem:[%s1 + $0x134] sm:$0xf]
  %v385 = vld [vmem:[%s1 + $0x138] sm:$0xf]
  %v386 = vld [vmem:[%s1 + $0x13c] sm:$0xf]
  %v387 = vld [vmem:[%s1 + $0x140] sm:$0xf]
  %v388 = vld [vmem:[%s1 + $0x144] sm:$0xf]
  %v389 = vld [vmem:[%s1 + $0x148] sm:$0xf]
  %v390 = vld [vmem:[%s1 + $0x14c] sm:$0xf]
  %v391 = vld [vmem:[%s1 + $0x150] sm:$0xf]
  %v392 = vld [vmem:[%s1 + $0x154] sm:$0xf]
  %v393 = vld [vmem:[%s1 + $0x158] sm:$0xf]
  %v394 = vld [vmem:[%s1 + $0x15c] sm:$0xf]
  %v395 = vld [vmem:[%s1 + $0x160] sm:$0xf]
  %v396 = vld [vmem:[%s1 + $0x164] sm:$0xf]
  %v397 = vld [vmem:[%s1 + $0x168] sm:$0xf]
  %v398 = vld [vmem:[%s1 + $0x16c] sm:$0xf]
  %v399 = vld [vmem:[%s1 + $0x170] sm:$0xf]
  %v400 = vld [vmem:[%s1 + $0x174] sm:$0xf]
  %v401 = vld [vmem:[%s1 + $0x178] sm:$0xf]
  %v402 = vld [vmem:[%s1 + $0x17c] sm:$0xf]
  %v403 = vld [vmem:[%s1 + $0x180] sm:$0xf]
  %v404 = vld [vmem:[%s1 + $0x184] sm:$0xf]
  %v405 = vld [vmem:[%s1 + $0x188] sm:$0xf]
  %v406 = vld [vmem:[%s1 + $0x18c] sm:$0xf]
  %v407 = vld [vmem:[%s1 + $0x190] sm:$0xf]
  %v408 = vld [vmem:[%s1 + $0x194] sm:$0xf]
  %v409 = vld [vmem:[%s1 + $0x198] sm:$0xf]
  %v410 = vld [vmem:[%s1 + $0x19c] sm:$0xf]
  %v411 = vld [vmem:[%s1 + $0x1a0] sm:$0xf]
  %v412 = vld [vmem:[%s1 + $0x1a4] sm:$0xf]
  %v413 = vld [vmem:[%s1 + $0x1a8] sm:$0xf]
  %v414 = vld [vmem:[%s1 + $0x1ac] sm:$0xf]
  %v415 = vld [vmem:[%s1 + $0x1b0] sm:$0xf]
  %v416 = vld [vmem:[%s1 + $0x1b4] sm:$0xf]
  %v417 = vld [vmem:[%s1 + $0x1b8] sm:$0xf]
  %v418 = vld [vmem:[%s1 + $0x1bc] sm:$0xf]
  %v419 = vld [vmem:[%s1 + $0x1c0] sm:$0xf]
  %v420 = vld [vmem:[%s1 + $0x1c4] sm:$0xf]
  %v421 = vld [vmem:[%s1 + $0x1c8] sm:$0xf]
  %v422 = vld [vmem:[%s1 + $0x1cc] sm:$0xf]
  %v423 = vld [vmem:[%s1 + $0x1d0] sm:$0xf]
  %v424 = vld [vmem:[%s1 + $0x1d4] sm:$0xf]
  %v425 = vld [vmem:[%s1 + $0x1d8] sm:$0xf]
  %v426 = vld [vmem:[%s1 + $0x1dc] sm:$0xf]
  %v427 = vld [vmem:[%s1 + $0x1e0] sm:$0xf]
  %v428 = vld [vmem:[%s1 + $0x1e4] sm:$0xf]
  %v429 = vld [vmem:[%s1 + $0x1e8] sm:$0xf]
  %v430 = vld [vmem:[%s1 + $0x1ec] sm:$0xf]
  %v431 = vld [vmem:[%s1 + $0x1f0] sm:$0xf]
  %v432 = vld [vmem:[%s1 + $0x1f4] sm:$0xf]
  %v433 = vld [vmem:[%s1 + $0x1f8] sm:$0xf]
  %v434 = vld [vmem:[%s1 + $0x1fc] sm:$0xf]
  %v435 = vld [vmem:[%s1 + $0x200] sm:$0xf]
  %v436 = vld [vmem:[%s1 + $0x204] sm:$0xf]
  %v437 = vld [vmem:[%s1 + $0x208] sm:$0xf]
  %v438 = vld [vmem:[%s1 + $0x20c] sm:$0xf]
  %v439 = vld [vmem:[%s1 + $0x210] sm:$0xf]
  %v440 = vld [vmem:[%s1 + $0x214] sm:$0xf]
  %v441 = vld [vmem:[%s1 + $0x218] sm:$0xf]
  %v442 = vld [vmem:[%s1 + $0x21c] sm:$0xf]
  %v443 = vld [vmem:[%s1 + $0x220] sm:$0xf]
  %v444 = vld [vmem:[%s1 + $0x224] sm:$0xf]
  %v445 = vld [vmem:[%s1 + $0x228] sm:$0xf]
  %v446 = vld [vmem:[%s1 + $0x22c] sm:$0xf]
  %v447 = vld [vmem:[%s1 + $0x230] sm:$0xf]
  %v448 = vld [vmem:[%s1 + $0x234] sm:$0xf]
  %v449 = vld [vmem:[%s1 + $0x238] sm:$0xf]
  %v450 = vld [vmem:[%s1 + $0x23c] sm:$0xf]
  %v451 = vld [vmem:[%s2] sm:$0x1]
  %v453 = vlaneseq
  %v454 = vshrl.u32 %v453, 7
  %v455 = vsub.s32 0, %v454
  %v456 = vrot.slane %v451, %v455
  %v463 = vunpack.c.l.b16 %v302
  %v464 = vunpack.c.h.b16 %v302
  %v465 = vunpack.c.l.b16 %v303
  %v466 = vunpack.c.h.b16 %v303
  %v467 = vunpack.c.l.b16 %v304
  %v468 = vunpack.c.h.b16 %v304
  %v469 = vunpack.c.l.b16 %v305
  %v470 = vunpack.c.h.b16 %v305
  %v471 = vunpack.c.l.b16 %v306
  %v472 = vpack.c.b16 %v463, %v463
  %v473 = vpack.c.b16 %v464, %v464
  %v474 = vpack.c.b16 %v465, %v465
  %v475 = vpack.c.b16 %v466, %v466
  %v476 = vpack.c.b16 %v467, %v467
  %v477 = vpack.c.b16 %v468, %v468
  %v478 = vpack.c.b16 %v469, %v469
  %v479 = vpack.c.b16 %v470, %v470
  %v480 = vpack.c.b16 %v471, %v471
  %v634 = vunpack.c.l.b16 %v307
  %v635 = vunpack.c.l.b16 %v308
  %v636 = vunpack.c.l.b16 %v309
  %v637 = vunpack.c.l.b16 %v310
  %v638 = vunpack.c.l.b16 %v311
  %v639 = vunpack.c.l.b16 %v312
  %v640 = vunpack.c.l.b16 %v313
  %v641 = vunpack.c.l.b16 %v314
  %v642 = vunpack.c.l.b16 %v315
  %v643 = vunpack.c.l.b16 %v316
  %v644 = vunpack.c.l.b16 %v317
  %v645 = vunpack.c.l.b16 %v318
  %v646 = vunpack.c.l.b16 %v319
  %v647 = vunpack.c.l.b16 %v320
  %v648 = vunpack.c.l.b16 %v321
  %v649 = vunpack.c.l.b16 %v322
  %v650 = vunpack.c.l.b16 %v323
  %v651 = vunpack.c.l.b16 %v324
  %v652 = vunpack.c.l.b16 %v325
  %v653 = vunpack.c.l.b16 %v326
  %v654 = vunpack.c.l.b16 %v327
  %v655 = vunpack.c.l.b16 %v328
  %v656 = vunpack.c.l.b16 %v329
  %v657 = vunpack.c.l.b16 %v330
  %v658 = vunpack.c.l.b16 %v331
  %v659 = vunpack.c.l.b16 %v332
  %v660 = vunpack.c.l.b16 %v333
  %v661 = vunpack.c.l.b16 %v334
  %v662 = vunpack.c.l.b16 %v335
  %v663 = vunpack.c.l.b16 %v336
  %v664 = vunpack.c.l.b16 %v337
  %v665 = vunpack.c.l.b16 %v338
  %v666 = vunpack.c.l.b16 %v339
  %v667 = vunpack.c.l.b16 %v340
  %v668 = vunpack.c.l.b16 %v341
  %v669 = vunpack.c.l.b16 %v342
  %v670 = vunpack.c.l.b16 %v343
  %v671 = vunpack.c.l.b16 %v344
  %v672 = vunpack.c.l.b16 %v345
  %v673 = vunpack.c.l.b16 %v346
  %v674 = vunpack.c.l.b16 %v347
  %v675 = vunpack.c.l.b16 %v348
  %v676 = vunpack.c.l.b16 %v349
  %v677 = vunpack.c.l.b16 %v350
  %v678 = vunpack.c.l.b16 %v351
  %v679 = vunpack.c.l.b16 %v352
  %v680 = vunpack.c.l.b16 %v353
  %v681 = vunpack.c.l.b16 %v354
  %v682 = vunpack.c.l.b16 %v355
  %v683 = vunpack.c.l.b16 %v356
  %v684 = vunpack.c.l.b16 %v357
  %v685 = vunpack.c.l.b16 %v358
  %v686 = vunpack.c.l.b16 %v359
  %v687 = vunpack.c.l.b16 %v360
  %v688 = vunpack.c.l.b16 %v361
  %v689 = vunpack.c.l.b16 %v362
  %v690 = vunpack.c.l.b16 %v363
  %v691 = vunpack.c.l.b16 %v364
  %v692 = vunpack.c.l.b16 %v365
  %v693 = vunpack.c.l.b16 %v366
  %v694 = vunpack.c.l.b16 %v367
  %v695 = vunpack.c.l.b16 %v368
  %v696 = vunpack.c.l.b16 %v369
  %v697 = vunpack.c.l.b16 %v370
  %v698 = vunpack.c.l.b16 %v371
  %v699 = vunpack.c.l.b16 %v372
  %v700 = vunpack.c.l.b16 %v373
  %v701 = vunpack.c.l.b16 %v374
  %v702 = vunpack.c.l.b16 %v375
  %v703 = vunpack.c.l.b16 %v376
  %v704 = vunpack.c.l.b16 %v377
  %v705 = vunpack.c.l.b16 %v378
  %v706 = vunpack.c.l.b16 %v379
  %v707 = vunpack.c.l.b16 %v380
  %v708 = vunpack.c.l.b16 %v381
  %v709 = vunpack.c.l.b16 %v382
  %v710 = vunpack.c.l.b16 %v383
  %v711 = vunpack.c.l.b16 %v384
  %v712 = vunpack.c.l.b16 %v385
  %v713 = vunpack.c.l.b16 %v386
  %v714 = vunpack.c.l.b16 %v387
  %v715 = vunpack.c.l.b16 %v388
  %v716 = vunpack.c.l.b16 %v389
  %v717 = vunpack.c.l.b16 %v390
  %v718 = vunpack.c.l.b16 %v391
  %v719 = vunpack.c.l.b16 %v392
  %v720 = vunpack.c.l.b16 %v393
  %v721 = vunpack.c.l.b16 %v394
  %v722 = vunpack.c.l.b16 %v395
  %v723 = vunpack.c.l.b16 %v396
  %v724 = vunpack.c.l.b16 %v397
  %v725 = vunpack.c.l.b16 %v398
  %v726 = vunpack.c.l.b16 %v399
  %v727 = vunpack.c.l.b16 %v400
  %v728 = vunpack.c.l.b16 %v401
  %v729 = vunpack.c.l.b16 %v402
  %v730 = vunpack.c.l.b16 %v403
  %v731 = vunpack.c.l.b16 %v404
  %v732 = vunpack.c.l.b16 %v405
  %v733 = vunpack.c.l.b16 %v406
  %v734 = vunpack.c.l.b16 %v407
  %v735 = vunpack.c.l.b16 %v408
  %v736 = vunpack.c.l.b16 %v409
  %v737 = vunpack.c.l.b16 %v410
  %v738 = vunpack.c.l.b16 %v411
  %v739 = vunpack.c.l.b16 %v412
  %v740 = vunpack.c.l.b16 %v413
  %v741 = vunpack.c.l.b16 %v414
  %v742 = vunpack.c.l.b16 %v415
  %v743 = vunpack.c.l.b16 %v416
  %v744 = vunpack.c.l.b16 %v417
  %v745 = vunpack.c.l.b16 %v418
  %v746 = vunpack.c.l.b16 %v419
  %v747 = vunpack.c.l.b16 %v420
  %v748 = vunpack.c.l.b16 %v421
  %v749 = vunpack.c.l.b16 %v422
  %v750 = vunpack.c.l.b16 %v423
  %v751 = vunpack.c.l.b16 %v424
  %v752 = vunpack.c.l.b16 %v425
  %v753 = vunpack.c.l.b16 %v426
  %v754 = vunpack.c.l.b16 %v427
  %v755 = vunpack.c.l.b16 %v428
  %v756 = vunpack.c.l.b16 %v429
  %v757 = vunpack.c.l.b16 %v430
  %v758 = vunpack.c.l.b16 %v431
  %v759 = vunpack.c.l.b16 %v432
  %v760 = vunpack.c.l.b16 %v433
  %v761 = vunpack.c.l.b16 %v434
  %v762 = vunpack.c.l.b16 %v435
  %v763 = vunpack.c.l.b16 %v436
  %v764 = vunpack.c.l.b16 %v437
  %v765 = vunpack.c.l.b16 %v438
  %v766 = vunpack.c.l.b16 %v439
  %v767 = vunpack.c.l.b16 %v440
  %v768 = vunpack.c.l.b16 %v441
  %v769 = vunpack.c.l.b16 %v442
  %v770 = vunpack.c.l.b16 %v443
  %v771 = vunpack.c.l.b16 %v444
  %v772 = vunpack.c.l.b16 %v445
  %v773 = vunpack.c.l.b16 %v446
  %v774 = vunpack.c.l.b16 %v447
  %v775 = vunpack.c.l.b16 %v448
  %v776 = vunpack.c.l.b16 %v449
  %v777 = vunpack.c.l.b16 %v450
  %v778 = vpack.c.b16 %v635, %v634
  %v779 = vpack.c.b16 %v637, %v636
  %v780 = vpack.c.b16 %v639, %v638
  %v781 = vpack.c.b16 %v641, %v640
  %v782 = vpack.c.b16 %v643, %v642
  %v783 = vpack.c.b16 %v645, %v644
  %v784 = vpack.c.b16 %v647, %v646
  %v785 = vpack.c.b16 %v649, %v648
  %v786 = vpack.c.b16 %v651, %v650
  %v787 = vpack.c.b16 %v653, %v652
  %v788 = vpack.c.b16 %v655, %v654
  %v789 = vpack.c.b16 %v657, %v656
  %v790 = vpack.c.b16 %v659, %v658
  %v791 = vpack.c.b16 %v661, %v660
  %v792 = vpack.c.b16 %v663, %v662
  %v793 = vpack.c.b16 %v665, %v664
  %v794 = vpack.c.b16 %v667, %v666
  %v795 = vpack.c.b16 %v669, %v668
  %v796 = vpack.c.b16 %v671, %v670
  %v797 = vpack.c.b16 %v673, %v672
  %v798 = vpack.c.b16 %v675, %v674
  %v799 = vpack.c.b16 %v677, %v676
  %v800 = vpack.c.b16 %v679, %v678
  %v801 = vpack.c.b16 %v681, %v680
  %v802 = vpack.c.b16 %v683, %v682
  %v803 = vpack.c.b16 %v685, %v684
  %v804 = vpack.c.b16 %v687, %v686
  %v805 = vpack.c.b16 %v689, %v688
  %v806 = vpack.c.b16 %v691, %v690
  %v807 = vpack.c.b16 %v693, %v692
  %v808 = vpack.c.b16 %v695, %v694
  %v809 = vpack.c.b16 %v697, %v696
  %v810 = vpack.c.b16 %v699, %v698
  %v811 = vpack.c.b16 %v701, %v700
  %v812 = vpack.c.b16 %v703, %v702
  %v813 = vpack.c.b16 %v705, %v704
  %v814 = vpack.c.b16 %v707, %v706
  %v815 = vpack.c.b16 %v709, %v708
  %v816 = vpack.c.b16 %v711, %v710
  %v817 = vpack.c.b16 %v713, %v712
  %v818 = vpack.c.b16 %v715, %v714
  %v819 = vpack.c.b16 %v717, %v716
  %v820 = vpack.c.b16 %v719, %v718
  %v821 = vpack.c.b16 %v721, %v720
  %v822 = vpack.c.b16 %v723, %v722
  %v823 = vpack.c.b16 %v725, %v724
  %v824 = vpack.c.b16 %v727, %v726
  %v825 = vpack.c.b16 %v729, %v728
  %v826 = vpack.c.b16 %v731, %v730
  %v827 = vpack.c.b16 %v733, %v732
  %v828 = vpack.c.b16 %v735, %v734
  %v829 = vpack.c.b16 %v737, %v736
  %v830 = vpack.c.b16 %v739, %v738
  %v831 = vpack.c.b16 %v741, %v740
  %v832 = vpack.c.b16 %v743, %v742
  %v833 = vpack.c.b16 %v745, %v744
  %v834 = vpack.c.b16 %v747, %v746
  %v835 = vpack.c.b16 %v749, %v748
  %v836 = vpack.c.b16 %v751, %v750
  %v837 = vpack.c.b16 %v753, %v752
  %v838 = vpack.c.b16 %v755, %v754
  %v839 = vpack.c.b16 %v757, %v756
  %v840 = vpack.c.b16 %v759, %v758
  %v841 = vpack.c.b16 %v761, %v760
  %v842 = vpack.c.b16 %v763, %v762
  %v843 = vpack.c.b16 %v765, %v764
  %v844 = vpack.c.b16 %v767, %v766
  %v845 = vpack.c.b16 %v769, %v768
  %v846 = vpack.c.b16 %v771, %v770
  %v847 = vpack.c.b16 %v773, %v772
  %v848 = vpack.c.b16 %v775, %v774
  %v849 = vpack.c.b16 %v777, %v776
  %922 = vmatprep.subr.bf16.mxu0 0
  %923 = vmatpush1.bf16.msra.mxu0 %v778
  %924 = vmatprep.subr.bf16.mxu0 0
  %925 = vmatpush1.bf16.msra.mxu0 %v779
  %926 = vmatprep.subr.bf16.mxu0 0
  %927 = vmatpush1.bf16.msra.mxu0 %v780
  %928 = vmatprep.subr.bf16.mxu0 0
  %929 = vmatpush1.bf16.msra.mxu0 %v781
  %930 = vmatprep.subr.bf16.mxu0 0
  %931 = vmatpush1.bf16.msra.mxu0 %v782
  %932 = vmatprep.subr.bf16.mxu0 0
  %933 = vmatpush1.bf16.msra.mxu0 %v783
  %934 = vmatprep.subr.bf16.mxu0 0
  %935 = vmatpush1.bf16.msra.mxu0 %v784
  %936 = vmatprep.subr.bf16.mxu0 0
  %937 = vmatpush1.bf16.msra.mxu0 %v785
  %938 = vmatprep.subr.bf16.mxu0 0
  %939 = vmatpush1.bf16.msra.mxu0 %v786
  %940 = vmatprep.subr.bf16.mxu0 0
  %941 = vmatpush1.bf16.msra.mxu0 %v787
  %942 = vmatprep.subr.bf16.mxu0 0
  %943 = vmatpush1.bf16.msra.mxu0 %v788
  %944 = vmatprep.subr.bf16.mxu0 0
  %945 = vmatpush1.bf16.msra.mxu0 %v789
  %946 = vmatprep.subr.bf16.mxu0 0
  %947 = vmatpush1.bf16.msra.mxu0 %v790
  %948 = vmatprep.subr.bf16.mxu0 0
  %949 = vmatpush1.bf16.msra.mxu0 %v791
  %950 = vmatprep.subr.bf16.mxu0 0
  %951 = vmatpush1.bf16.msra.mxu0 %v792
  %952 = vmatprep.subr.bf16.mxu0 0
  %953 = vmatpush1.bf16.msra.mxu0 %v793
  %954 = vmatprep.mubr.bf16.mxu0 %v473
  %955 = vmatmul.mubr.bf16.gmra.mrb[0].mxu0 %v472
  %v956 = vpop.f32.mrb[0].mxu0
  %v957 = vadd.f32 %v456, %v956
  %v958 = vpop.f32.mrb[0].mxu0
  %v959 = vpop.f32.mrb[0].mxu0
  %v960 = vpop.f32.mrb[0].mxu0
  %961 = vdwg.mxu0
  %962 = vmatprep.subr.bf16.mxu0 0
  %963 = vmatpush1.bf16.msra.mxu0 %v794
  %964 = vmatprep.subr.bf16.mxu0 0
  %965 = vmatpush1.bf16.msra.mxu0 %v795
  %966 = vmatprep.subr.bf16.mxu0 0
  %967 = vmatpush1.bf16.msra.mxu0 %v796
  %968 = vmatprep.subr.bf16.mxu0 0
  %969 = vmatpush1.bf16.msra.mxu0 %v797
  %970 = vmatprep.subr.bf16.mxu0 0
  %971 = vmatpush1.bf16.msra.mxu0 %v798
  %972 = vmatprep.subr.bf16.mxu0 0
  %973 = vmatpush1.bf16.msra.mxu0 %v799
  %974 = vmatprep.subr.bf16.mxu0 0
  %975 = vmatpush1.bf16.msra.mxu0 %v800
  %976 = vmatprep.subr.bf16.mxu0 0
  %977 = vmatpush1.bf16.msra.mxu0 %v801
  %978 = vmatprep.subr.bf16.mxu0 0
  %979 = vmatpush1.bf16.msra.mxu0 %v802
  %980 = vmatprep.subr.bf16.mxu0 0
  %981 = vmatpush1.bf16.msra.mxu0 %v803
  %982 = vmatprep.subr.bf16.mxu0 0
  %983 = vmatpush1.bf16.msra.mxu0 %v804
  %984 = vmatprep.subr.bf16.mxu0 0
  %985 = vmatpush1.bf16.msra.mxu0 %v805
  %986 = vmatprep.subr.bf16.mxu0 0
  %987 = vmatpush1.bf16.msra.mxu0 %v806
  %988 = vmatprep.subr.bf16.mxu0 0
  %989 = vmatpush1.bf16.msra.mxu0 %v807
  %990 = vmatprep.subr.bf16.mxu0 0
  %991 = vmatpush1.bf16.msra.mxu0 %v808
  %992 = vmatprep.subr.bf16.mxu0 0
  %993 = vmatpush1.bf16.msra.mxu0 %v809
  %994 = vmatprep.mubr.bf16.mxu0 %v475
  %995 = vmatmul.mubr.bf16.gmra.mrb[0].mxu0 %v474
  %v996 = vpop.f32.mrb[0].mxu0
  %v997 = vadd.f32 %v957, %v996
  %v998 = vpop.f32.mrb[0].mxu0
  %v999 = vpop.f32.mrb[0].mxu0
  %v1000 = vpop.f32.mrb[0].mxu0
  %1001 = vdwg.mxu0
  %1002 = vmatprep.subr.bf16.mxu0 0
  %1003 = vmatpush1.bf16.msra.mxu0 %v810
  %1004 = vmatprep.subr.bf16.mxu0 0
  %1005 = vmatpush1.bf16.msra.mxu0 %v811
  %1006 = vmatprep.subr.bf16.mxu0 0
  %1007 = vmatpush1.bf16.msra.mxu0 %v812
  %1008 = vmatprep.subr.bf16.mxu0 0
  %1009 = vmatpush1.bf16.msra.mxu0 %v813
  %1010 = vmatprep.subr.bf16.mxu0 0
  %1011 = vmatpush1.bf16.msra.mxu0 %v814
  %1012 = vmatprep.subr.bf16.mxu0 0
  %1013 = vmatpush1.bf16.msra.mxu0 %v815
  %1014 = vmatprep.subr.bf16.mxu0 0
  %1015 = vmatpush1.bf16.msra.mxu0 %v816
  %1016 = vmatprep.subr.bf16.mxu0 0
  %1017 = vmatpush1.bf16.msra.mxu0 %v817
  %1018 = vmatprep.subr.bf16.mxu0 0
  %1019 = vmatpush1.bf16.msra.mxu0 %v818
  %1020 = vmatprep.subr.bf16.mxu0 0
  %1021 = vmatpush1.bf16.msra.mxu0 %v819
  %1022 = vmatprep.subr.bf16.mxu0 0
  %1023 = vmatpush1.bf16.msra.mxu0 %v820
  %1024 = vmatprep.subr.bf16.mxu0 0
  %1025 = vmatpush1.bf16.msra.mxu0 %v821
  %1026 = vmatprep.subr.bf16.mxu0 0
  %1027 = vmatpush1.bf16.msra.mxu0 %v822
  %1028 = vmatprep.subr.bf16.mxu0 0
  %1029 = vmatpush1.bf16.msra.mxu0 %v823
  %1030 = vmatprep.subr.bf16.mxu0 0
  %1031 = vmatpush1.bf16.msra.mxu0 %v824
  %1032 = vmatprep.subr.bf16.mxu0 0
  %1033 = vmatpush1.bf16.msra.mxu0 %v825
  %1034 = vmatprep.mubr.bf16.mxu0 %v477
  %1035 = vmatmul.mubr.bf16.gmra.mrb[0].mxu0 %v476
  %v1036 = vpop.f32.mrb[0].mxu0
  %v1037 = vadd.f32 %v997, %v1036
  %v1038 = vpop.f32.mrb[0].mxu0
  %v1039 = vpop.f32.mrb[0].mxu0
  %v1040 = vpop.f32.mrb[0].mxu0
  %1041 = vdwg.mxu0
  %1042 = vmatprep.subr.bf16.mxu0 0
  %1043 = vmatpush1.bf16.msra.mxu0 %v826
  %1044 = vmatprep.subr.bf16.mxu0 0
  %1045 = vmatpush1.bf16.msra.mxu0 %v827
  %1046 = vmatprep.subr.bf16.mxu0 0
  %1047 = vmatpush1.bf16.msra.mxu0 %v828
  %1048 = vmatprep.subr.bf16.mxu0 0
  %1049 = vmatpush1.bf16.msra.mxu0 %v829
  %1050 = vmatprep.subr.bf16.mxu0 0
  %1051 = vmatpush1.bf16.msra.mxu0 %v830
  %1052 = vmatprep.subr.bf16.mxu0 0
  %1053 = vmatpush1.bf16.msra.mxu0 %v831
  %1054 = vmatprep.subr.bf16.mxu0 0
  %1055 = vmatpush1.bf16.msra.mxu0 %v832
  %1056 = vmatprep.subr.bf16.mxu0 0
  %1057 = vmatpush1.bf16.msra.mxu0 %v833
  %1058 = vmatprep.subr.bf16.mxu0 0
  %1059 = vmatpush1.bf16.msra.mxu0 %v834
  %1060 = vmatprep.subr.bf16.mxu0 0
  %1061 = vmatpush1.bf16.msra.mxu0 %v835
  %1062 = vmatprep.subr.bf16.mxu0 0
  %1063 = vmatpush1.bf16.msra.mxu0 %v836
  %1064 = vmatprep.subr.bf16.mxu0 0
  %1065 = vmatpush1.bf16.msra.mxu0 %v837
  %1066 = vmatprep.subr.bf16.mxu0 0
  %1067 = vmatpush1.bf16.msra.mxu0 %v838
  %1068 = vmatprep.subr.bf16.mxu0 0
  %1069 = vmatpush1.bf16.msra.mxu0 %v839
  %1070 = vmatprep.subr.bf16.mxu0 0
  %1071 = vmatpush1.bf16.msra.mxu0 %v840
  %1072 = vmatprep.subr.bf16.mxu0 0
  %1073 = vmatpush1.bf16.msra.mxu0 %v841
  %1074 = vmatprep.mubr.bf16.mxu0 %v479
  %1075 = vmatmul.mubr.bf16.gmra.mrb[0].mxu0 %v478
  %v1076 = vpop.f32.mrb[0].mxu0
  %v1077 = vadd.f32 %v1037, %v1076
  %v1078 = vpop.f32.mrb[0].mxu0
  %v1079 = vpop.f32.mrb[0].mxu0
  %v1080 = vpop.f32.mrb[0].mxu0
  %1081 = vdwg.mxu0
  %1082 = vmatprep.subr.bf16.mxu0 0
  %1083 = vmatpush1.bf16.msra.mxu0 %v842
  %1084 = vmatprep.subr.bf16.mxu0 0
  %1085 = vmatpush1.bf16.msra.mxu0 %v843
  %1086 = vmatprep.subr.bf16.mxu0 0
  %1087 = vmatpush1.bf16.msra.mxu0 %v844
  %1088 = vmatprep.subr.bf16.mxu0 0
  %1089 = vmatpush1.bf16.msra.mxu0 %v845
  %1090 = vmatprep.subr.bf16.mxu0 0
  %1091 = vmatpush1.bf16.msra.mxu0 %v846
  %1092 = vmatprep.subr.bf16.mxu0 0
  %1093 = vmatpush1.bf16.msra.mxu0 %v847
  %1094 = vmatprep.subr.bf16.mxu0 0
  %1095 = vmatpush1.bf16.msra.mxu0 %v848
  %1096 = vmatprep.subr.bf16.mxu0 0
  %1097 = vmatpush1.bf16.msra.mxu0 %v849
  %1098 = vmatprep.subr.bf16.mxu0 0
  %1099 = vmatpush1.bf16.msra.mxu0 0
  %1100 = vmatprep.subr.bf16.mxu0 0
  %1101 = vmatpush1.bf16.msra.mxu0 0
  %1102 = vmatprep.subr.bf16.mxu0 0
  %1103 = vmatpush1.bf16.msra.mxu0 0
  %1104 = vmatprep.subr.bf16.mxu0 0
  %1105 = vmatpush1.bf16.msra.mxu0 0
  %1106 = vmatprep.subr.bf16.mxu0 0
  %1107 = vmatpush1.bf16.msra.mxu0 0
  %1108 = vmatprep.subr.bf16.mxu0 0
  %1109 = vmatpush1.bf16.msra.mxu0 0
  %1110 = vmatprep.subr.bf16.mxu0 0
  %1111 = vmatpush1.bf16.msra.mxu0 0
  %1112 = vmatprep.subr.bf16.mxu0 0
  %1113 = vmatpush1.bf16.msra.mxu0 0
  %1114 = vmatprep.mubr.bf16.mxu0 0
  %1115 = vmatmul.mubr.bf16.gmra.mrb[0].mxu0 %v480
  %v1116 = vpop.f32.mrb[0].mxu0
  %v1117 = vadd.f32 %v1077, %v1116
  %v1118 = vpop.f32.mrb[0].mxu0
  %v1119 = vpop.f32.mrb[0].mxu0
  %v1120 = vpop.f32.mrb[0].mxu0
  %1121 = vdwg.mxu0
  %v1122 = vmax.f32 %v1117, 0.0
  %v1124 = vcombine.high %v1122, %v1122
  %v1126 = vunpack.c.l.s4 1983009808
  %v1127 = vunpack.c.0.s8 %v1126
  %v1128 = vlaneseq
  %v1129 = vshrl.u32 %v1128, 7
  %v1130 = vsub.s32 %v1127, %v1129
  %v1131 = vrot.slane %v1122, %v1130
  %v1133 = vunpack.c.l.s4 1983009808
  %v1134 = vunpack.c.0.s8 %v1133
  %v1135 = vlaneseq
  %v1136 = vshrl.u32 %v1135, 7
  %v1137 = vsub.s32 %v1134, %v1136
  %v1138 = vrot.slane %v1124, %v1137
  %v1139 = vcombine.high %v1131, %v1131
  %v1140 = vcombine.high %v1138, %v1138
  %1145 = vst [vmem:[%s3] sm:$0x3] %v1131
  %1146 = vst [vmem:[%s3 + $0x2] sm:$0x3] %v1139
  %1147 = vst [vmem:[%s3 + $0x4] sm:$0x3] %v1138
  %1148 = vst [vmem:[%s3 + $0x6] sm:$0x3] %v1140
  // Predicated region
  $region14: #{_lambda_.9} parent=0 // pred_check
    _
  $region15: #{_lambda_.9} parent=0 // pred_check_branch
    %1150 = sbr.rel (0) target = $region17
  $region16: #{_lambda_.9} parent=0 // pred_region
    _
  $region17: #{_lambda_.9} parent=0 // pred_fallthru
    _
  // Predicated region
  $region18: #{_lambda_.9} parent=0 // pred_check
    _
  $region19: #{_lambda_.9} parent=0 // pred_check_branch
    %1152 = sbr.rel (0) target = $region21
  $region20: #{_lambda_.9} parent=0 // pred_region
    _
  $region21: #{_lambda_.9} parent=0 // pred_fallthru
    _

// kernel: _lambda_.8
$region0: #{_lambda_.8}
  #allocation0 [shape = 'u32[]', space=smem, size = 0x4, offset = 0x4, fixed_abs, tag = 'smem constant byte address 0x4 - core index']
  #allocation1 [shape = 'u32[144,128]{1,0:T(1,128)}', space=vmem, size = 0x12000, scoped, tag = 'internal scratch']
  #allocation2 [shape = 'f32[2,6,13,128]{3,2,1,0:T(8,128)}', space=vmem, size = 0x18000, scoped, tag = 'scratch operand']
  #allocation3 [shape = 'bf16[32,1152]{1,0:T(16,128)(2,1)}', space=vmem, size = 0x12000, scoped, tag = 'scratch operand']
  %s0 = inlined_call_operand.vmem [shape: f32[2,4,4,128], index: 0, kind: input, shape index: {}]
  %s1 = inlined_call_operand.vmem [shape: bf16[1152,128], index: 1, kind: input, shape index: {}]
  %s2 = inlined_call_operand.vmem [shape: f32[1,128], index: 2, kind: input, shape index: {}]
  %s3 = inlined_call_operand.vmem [shape: f32[2,2,2,128], index: 3, kind: output, shape index: {}]
  %s4 = sld [smem:[#allocation0]]
  $region22: #{_lambda_.8} parent=0
    _
  %s6 = ssub.s32 1, %s4
  %s7 = scalar_select 0, %s6, %s4
  // Predicated region
  $region2: #{_lambda_.8} parent=0 // pred_check
    _
  $region3: #{_lambda_.8} parent=0 // pred_check_branch
    %9 = sbr.rel (0) target = $region5
  $region4: #{_lambda_.8} parent=0 // pred_region
    _
  $region5: #{_lambda_.8} parent=0 // pred_fallthru
    _
  // Predicated region
  $region6: #{_lambda_.8} parent=0 // pred_check
    _
  $region7: #{_lambda_.8} parent=0 // pred_check_branch
    %11 = sbr.rel (0) target = $region9
  $region8: #{_lambda_.8} parent=0 // pred_region
    _
  $region9: #{_lambda_.8} parent=0 // pred_fallthru
    _
  // Predicated region
  $region10: #{_lambda_.8} parent=0 // pred_check
    _
  $region11: #{_lambda_.8} parent=0 // pred_check_branch
    %13 = sbr.rel (0) target = $region13
  $region12: #{_lambda_.8} parent=0 // pred_region
    _
  $region13: #{_lambda_.8} parent=0 // pred_fallthru
    _
  %15 = vst [vmem:[#allocation2] sm:$0xff] 0.0
  %16 = vst [vmem:[#allocation2 + $0x8] sm:$0x1f] 0.0
  %17 = vst [vmem:[#allocation2 + $0x60] sm:$0xff] 0.0
  %18 = vst [vmem:[#allocation2 + $0x68] sm:$0x1f] 0.0
  %s19 = scalar_lea.vmem [#allocation2], 80
  %20 = vst [vmem:[%s19] sm:$0xff] 0.0
  %21 = vst [vmem:[%s19 + $0x8] sm:$0x1f] 0.0
  %22 = vst [vmem:[%s19 + $0x60] sm:$0xff] 0.0
  %23 = vst [vmem:[%s19 + $0x68] sm:$0x1f] 0.0
  %24 = vst [vmem:[#allocation2 + $0x7] sm:$0x1] 0.0
  %25 = vst [vmem:[#allocation2 + $0x17] sm:$0x1] 0.0
  %26 = vst [vmem:[#allocation2 + $0x27] sm:$0x1] 0.0
  %27 = vst [vmem:[#allocation2 + $0x37] sm:$0x1] 0.0
  %28 = vst [vmem:[#allocation2 + $0x47] sm:$0x1] 0.0
  %29 = vst [vmem:[#allocation2 + $0x57] sm:$0x1] 0.0
  %30 = vst [vmem:[#allocation2 + $0x67] sm:$0x1] 0.0
  %31 = vst [vmem:[#allocation2 + $0x77] sm:$0x1] 0.0
  %32 = vst [vmem:[#allocation2 + $0x87] sm:$0x1] 0.0
  %33 = vst [vmem:[#allocation2 + $0x97] sm:$0x1] 0.0
  %34 = vst [vmem:[#allocation2 + $0xa7] sm:$0x1] 0.0
  %35 = vst [vmem:[#allocation2 + $0xb7] sm:$0x1] 0.0
  %36 = vst [vmem:[#allocation2 + $0xc] sm:$0x1] 0.0
  %37 = vst [vmem:[#allocation2 + $0x1c] sm:$0x1] 0.0
  %38 = vst [vmem:[#allocation2 + $0x2c] sm:$0x1] 0.0
  %39 = vst [vmem:[#allocation2 + $0x3c] sm:$0x1] 0.0
  %40 = vst [vmem:[#allocation2 + $0x4c] sm:$0x1] 0.0
  %41 = vst [vmem:[#allocation2 + $0x5c] sm:$0x1] 0.0
  %42 = vst [vmem:[#allocation2 + $0x6c] sm:$0x1] 0.0
  %43 = vst [vmem:[#allocation2 + $0x7c] sm:$0x1] 0.0
  %44 = vst [vmem:[#allocation2 + $0x8c] sm:$0x1] 0.0
  %45 = vst [vmem:[#allocation2 + $0x9c] sm:$0x1] 0.0
  %46 = vst [vmem:[#allocation2 + $0xac] sm:$0x1] 0.0
  %47 = vst [vmem:[#allocation2 + $0xbc] sm:$0x1] 0.0
  %v48 = vld [vmem:[%s0] sm:$0xf]
  %v49 = vld [vmem:[%s0 + $0x4] sm:$0xf]
  %v50 = vld [vmem:[%s0 + $0x8] sm:$0xf]
  %v51 = vld [vmem:[%s0 + $0xc] sm:$0xf]
  %v52 = vld [vmem:[%s0 + $0x10] sm:$0xf]
  %v53 = vld [vmem:[%s0 + $0x14] sm:$0xf]
  %v54 = vld [vmem:[%s0 + $0x18] sm:$0xf]
  %v55 = vld [vmem:[%s0 + $0x1c] sm:$0xf]
  %s56 = scalar_lea.vmem [#allocation2], 16
  %57 = vst [vmem:[%s56 + $0x8] sm:$0xf] %v48
  %58 = vst [vmem:[%s56 + $0x18] sm:$0xf] %v49
  %59 = vst [vmem:[%s56 + $0x28] sm:$0xf] %v50
  %60 = vst [vmem:[%s56 + $0x38] sm:$0xf] %v51
  %61 = vst [vmem:[%s56 + $0x68] sm:$0xf] %v52
  %62 = vst [vmem:[%s56 + $0x78] sm:$0xf] %v53
  %63 = vst [vmem:[%s56 + $0x88] sm:$0xf] %v54
  %64 = vst [vmem:[%s56 + $0x98] sm:$0xf] %v55
  %v65 = vld [vmem:[#allocation2 + $0x7] sm:$0xf]
  %v66 = vld [vmem:[#allocation2 + $0x17] sm:$0xf]
  %v67 = vld [vmem:[#allocation2 + $0x27] sm:$0xf]
  %v68 = vld [vmem:[#allocation2 + $0x37] sm:$0xf]
  %v69 = vld [vmem:[#allocation2 + $0x67] sm:$0xf]
  %v70 = vld [vmem:[#allocation2 + $0x77] sm:$0xf]
  %v71 = vld [vmem:[#allocation2 + $0x87] sm:$0xf]
  %v72 = vld [vmem:[#allocation2 + $0x97] sm:$0xf]
  %v81 = vcombine.low %v65, %v66
  %v82 = vcombine.low %v67, %v68
  %v83 = vcombine.low %v69, %v70
  %v84 = vcombine.low %v71, %v72
  %v89 = vpack.c.bf16 %v82, %v81
  %v90 = vpack.c.bf16 %v84, %v83
  %91 = vst [vmem:[#allocation3] sm:$0xff] %v89
  %92 = vst [vmem:[#allocation3 + $0x48] sm:$0xff] %v90
  %v93 = vld [vmem:[#allocation2 + $0x8] sm:$0xf]
  %v94 = vld [vmem:[#allocation2 + $0x18] sm:$0xf]
  %v95 = vld [vmem:[#allocation2 + $0x28] sm:$0xf]
  %v96 = vld [vmem:[#allocation2 + $0x38] sm:$0xf]
  %v97 = vld [vmem:[#allocation2 + $0x68] sm:$0xf]
  %v98 = vld [vmem:[#allocation2 + $0x78] sm:$0xf]
  %v99 = vld [vmem:[#allocation2 + $0x88] sm:$0xf]
  %v100 = vld [vmem:[#allocation2 + $0x98] sm:$0xf]
  %v109 = vcombine.low %v93, %v94
  %v110 = vcombine.low %v95, %v96
  %v111 = vcombine.low %v97, %v98
  %v112 = vcombine.low %v99, %v100
  %v117 = vpack.c.bf16 %v110, %v109
  %v118 = vpack.c.bf16 %v112, %v111
  %119 = vst [vmem:[#allocation3 + $0x8] sm:$0xff] %v117
  %120 = vst [vmem:[#allocation3 + $0x50] sm:$0xff] %v118
  %v121 = vld [vmem:[#allocation2 + $0x9] sm:$0xf]
  %v122 = vld [vmem:[#allocation2 + $0x19] sm:$0xf]
  %v123 = vld [vmem:[#allocation2 + $0x29] sm:$0xf]
  %v124 = vld [vmem:[#allocation2 + $0x39] sm:$0xf]
  %v125 = vld [vmem:[#allocation2 + $0x69] sm:$0xf]
  %v126 = vld [vmem:[#allocation2 + $0x79] sm:$0xf]
  %v127 = vld [vmem:[#allocation2 + $0x89] sm:$0xf]
  %v128 = vld [vmem:[#allocation2 + $0x99] sm:$0xf]
  %v137 = vcombine.low %v121, %v122
  %v138 = vcombine.low %v123, %v124
  %v139 = vcombine.low %v125, %v126
  %v140 = vcombine.low %v127, %v128
  %v145 = vpack.c.bf16 %v138, %v137
  %v146 = vpack.c.bf16 %v140, %v139
  %147 = vst [vmem:[#allocation3 + $0x10] sm:$0xff] %v145
  %148 = vst [vmem:[#allocation3 + $0x58] sm:$0xff] %v146
  %v149 = vld [vmem:[%s56 + $0x7] sm:$0xf]
  %v150 = vld [vmem:[%s56 + $0x17] sm:$0xf]
  %v151 = vld [vmem:[%s56 + $0x27] sm:$0xf]
  %v152 = vld [vmem:[%s56 + $0x37] sm:$0xf]
  %v153 = vld [vmem:[%s56 + $0x67] sm:$0xf]
  %v154 = vld [vmem:[%s56 + $0x77] sm:$0xf]
  %v155 = vld [vmem:[%s56 + $0x87] sm:$0xf]
  %v156 = vld [vmem:[%s56 + $0x97] sm:$0xf]
  %v165 = vcombine.low %v149, %v150
  %v166 = vcombine.low %v151, %v152
  %v167 = vcombine.low %v153, %v154
  %v168 = vcombine.low %v155, %v156
  %v173 = vpack.c.bf16 %v166, %v165
  %v174 = vpack.c.bf16 %v168, %v167
  %175 = vst [vmem:[#allocation3 + $0x18] sm:$0xff] %v173
  %176 = vst [vmem:[#allocation3 + $0x60] sm:$0xff] %v174
  %v177 = vld [vmem:[%s56 + $0x8] sm:$0xf]
  %v178 = vld [vmem:[%s56 + $0x18] sm:$0xf]
  %v179 = vld [vmem:[%s56 + $0x28] sm:$0xf]
  %v180 = vld [vmem:[%s56 + $0x38] sm:$0xf]
  %v181 = vld [vmem:[%s56 + $0x68] sm:$0xf]
  %v182 = vld [vmem:[%s56 + $0x78] sm:$0xf]
  %v183 = vld [vmem:[%s56 + $0x88] sm:$0xf]
  %v184 = vld [vmem:[%s56 + $0x98] sm:$0xf]
  %v193 = vcombine.low %v177, %v178
  %v194 = vcombine.low %v179, %v180
  %v195 = vcombine.low %v181, %v182
  %v196 = vcombine.low %v183, %v184
  %v201 = vpack.c.bf16 %v194, %v193
  %v202 = vpack.c.bf16 %v196, %v195
  %203 = vst [vmem:[#allocation3 + $0x20] sm:$0xff] %v201
  %204 = vst [vmem:[#allocation3 + $0x68] sm:$0xff] %v202
  %v205 = vld [vmem:[%s56 + $0x9] sm:$0xf]
  %v206 = vld [vmem:[%s56 + $0x19] sm:$0xf]
  %v207 = vld [vmem:[%s56 + $0x29] sm:$0xf]
  %v208 = vld [vmem:[%s56 + $0x39] sm:$0xf]
  %v209 = vld [vmem:[%s56 + $0x69] sm:$0xf]
  %v210 = vld [vmem:[%s56 + $0x79] sm:$0xf]
  %v211 = vld [vmem:[%s56 + $0x89] sm:$0xf]
  %v212 = vld [vmem:[%s56 + $0x99] sm:$0xf]
  %v221 = vcombine.low %v205, %v206
  %v222 = vcombine.low %v207, %v208
  %v223 = vcombine.low %v209, %v210
  %v224 = vcombine.low %v211, %v212
  %v229 = vpack.c.bf16 %v222, %v221
  %v230 = vpack.c.bf16 %v224, %v223
  %231 = vst [vmem:[#allocation3 + $0x28] sm:$0xff] %v229
  %232 = vst [vmem:[#allocation3 + $0x70] sm:$0xff] %v230
  %s233 = scalar_lea.vmem [#allocation2], 32
  %v234 = vld [vmem:[%s233 + $0x7] sm:$0xf]
  %v235 = vld [vmem:[%s233 + $0x17] sm:$0xf]
  %v236 = vld [vmem:[%s233 + $0x27] sm:$0xf]
  %v237 = vld [vmem:[%s233 + $0x37] sm:$0xf]
  %v238 = vld [vmem:[%s233 + $0x67] sm:$0xf]
  %v239 = vld [vmem:[%s233 + $0x77] sm:$0xf]
  %v240 = vld [vmem:[%s233 + $0x87] sm:$0xf]
  %v241 = vld [vmem:[%s233 + $0x97] sm:$0xf]
  %v250 = vcombine.low %v234, %v235
  %v251 = vcombine.low %v236, %v237
  %v252 = vcombine.low %v238, %v239
  %v253 = vcombine.low %v240, %v241
  %v258 = vpack.c.bf16 %v251, %v250
  %v259 = vpack.c.bf16 %v253, %v252
  %260 = vst [vmem:[#allocation3 + $0x30] sm:$0xff] %v258
  %261 = vst [vmem:[#allocation3 + $0x78] sm:$0xff] %v259
  %v262 = vld [vmem:[%s233 + $0x8] sm:$0xf]
  %v263 = vld [vmem:[%s233 + $0x18] sm:$0xf]
  %v264 = vld [vmem:[%s233 + $0x28] sm:$0xf]
  %v265 = vld [vmem:[%s233 + $0x38] sm:$0xf]
  %v266 = vld [vmem:[%s233 + $0x68] sm:$0xf]
  %v267 = vld [vmem:[%s233 + $0x78] sm:$0xf]
  %v268 = vld [vmem:[%s233 + $0x88] sm:$0xf]
  %v269 = vld [vmem:[%s233 + $0x98] sm:$0xf]
  %v278 = vcombine.low %v262, %v263
  %v279 = vcombine.low %v264, %v265
  %v280 = vcombine.low %v266, %v267
  %v281 = vcombine.low %v268, %v269
  %v286 = vpack.c.bf16 %v279, %v278
  %v287 = vpack.c.bf16 %v281, %v280
  %288 = vst [vmem:[#allocation3 + $0x38] sm:$0xff] %v286
  %289 = vst [vmem:[#allocation3 + $0x80] sm:$0xff] %v287
  %v290 = vld [vmem:[%s233 + $0x9] sm:$0xf]
  %v291 = vld [vmem:[%s233 + $0x19] sm:$0xf]
  %v292 = vld [vmem:[%s233 + $0x29] sm:$0xf]
  %v293 = vld [vmem:[%s233 + $0x39] sm:$0xf]
  %v294 = vld [vmem:[%s233 + $0x69] sm:$0xf]
  %v295 = vld [vmem:[%s233 + $0x79] sm:$0xf]
  %v296 = vld [vmem:[%s233 + $0x89] sm:$0xf]
  %v297 = vld [vmem:[%s233 + $0x99] sm:$0xf]
  %v306 = vcombine.low %v290, %v291
  %v307 = vcombine.low %v292, %v293
  %v308 = vcombine.low %v294, %v295
  %v309 = vcombine.low %v296, %v297
  %v314 = vpack.c.bf16 %v307, %v306
  %v315 = vpack.c.bf16 %v309, %v308
  %316 = vst [vmem:[#allocation3 + $0x40] sm:$0xff] %v314
  %317 = vst [vmem:[#allocation3 + $0x88] sm:$0xff] %v315
  %v318 = vld [vmem:[#allocation3] sm:$0xff]
  %v319 = vld [vmem:[#allocation3 + $0x8] sm:$0xff]
  %v320 = vld [vmem:[#allocation3 + $0x10] sm:$0xff]
  %v321 = vld [vmem:[#allocation3 + $0x18] sm:$0xff]
  %v322 = vld [vmem:[#allocation3 + $0x20] sm:$0xff]
  %v323 = vld [vmem:[#allocation3 + $0x28] sm:$0xff]
  %v324 = vld [vmem:[#allocation3 + $0x30] sm:$0xff]
  %v325 = vld [vmem:[#allocation3 + $0x38] sm:$0xff]
  %v326 = vld [vmem:[#allocation3 + $0x40] sm:$0xff]
  %v327 = vld [vmem:[#allocation3 + $0x48] sm:$0xff]
  %v328 = vld [vmem:[#allocation3 + $0x50] sm:$0xff]
  %v329 = vld [vmem:[#allocation3 + $0x58] sm:$0xff]
  %v330 = vld [vmem:[#allocation3 + $0x60] sm:$0xff]
  %v331 = vld [vmem:[#allocation3 + $0x68] sm:$0xff]
  %v332 = vld [vmem:[#allocation3 + $0x70] sm:$0xff]
  %v333 = vld [vmem:[#allocation3 + $0x78] sm:$0xff]
  %v334 = vld [vmem:[#allocation3 + $0x80] sm:$0xff]
  %v335 = vld [vmem:[#allocation3 + $0x88] sm:$0xff]
  %v336 = vld [vmem:[%s1] sm:$0xf]
  %v337 = vld [vmem:[%s1 + $0x4] sm:$0xf]
  %v338 = vld [vmem:[%s1 + $0x8] sm:$0xf]
  %v339 = vld [vmem:[%s1 + $0xc] sm:$0xf]
  %v340 = vld [vmem:[%s1 + $0x10] sm:$0xf]
  %v341 = vld [vmem:[%s1 + $0x14] sm:$0xf]
  %v342 = vld [vmem:[%s1 + $0x18] sm:$0xf]
  %v343 = vld [vmem:[%s1 + $0x1c] sm:$0xf]
  %v344 = vld [vmem:[%s1 + $0x20] sm:$0xf]
  %v345 = vld [vmem:[%s1 + $0x24] sm:$0xf]
  %v346 = vld [vmem:[%s1 + $0x28] sm:$0xf]
  %v347 = vld [vmem:[%s1 + $0x2c] sm:$0xf]
  %v348 = vld [vmem:[%s1 + $0x30] sm:$0xf]
  %v349 = vld [vmem:[%s1 + $0x34] sm:$0xf]
  %v350 = vld [vmem:[%s1 + $0x38] sm:$0xf]
  %v351 = vld [vmem:[%s1 + $0x3c] sm:$0xf]
  %v352 = vld [vmem:[%s1 + $0x40] sm:$0xf]
  %v353 = vld [vmem:[%s1 + $0x44] sm:$0xf]
  %v354 = vld [vmem:[%s1 + $0x48] sm:$0xf]
  %v355 = vld [vmem:[%s1 + $0x4c] sm:$0xf]
  %v356 = vld [vmem:[%s1 + $0x50] sm:$0xf]
  %v357 = vld [vmem:[%s1 + $0x54] sm:$0xf]
  %v358 = vld [vmem:[%s1 + $0x58] sm:$0xf]
  %v359 = vld [vmem:[%s1 + $0x5c] sm:$0xf]
  %v360 = vld [vmem:[%s1 + $0x60] sm:$0xf]
  %v361 = vld [vmem:[%s1 + $0x64] sm:$0xf]
  %v362 = vld [vmem:[%s1 + $0x68] sm:$0xf]
  %v363 = vld [vmem:[%s1 + $0x6c] sm:$0xf]
  %v364 = vld [vmem:[%s1 + $0x70] sm:$0xf]
  %v365 = vld [vmem:[%s1 + $0x74] sm:$0xf]
  %v366 = vld [vmem:[%s1 + $0x78] sm:$0xf]
  %v367 = vld [vmem:[%s1 + $0x7c] sm:$0xf]
  %v368 = vld [vmem:[%s1 + $0x80] sm:$0xf]
  %v369 = vld [vmem:[%s1 + $0x84] sm:$0xf]
  %v370 = vld [vmem:[%s1 + $0x88] sm:$0xf]
  %v371 = vld [vmem:[%s1 + $0x8c] sm:$0xf]
  %v372 = vld [vmem:[%s1 + $0x90] sm:$0xf]
  %v373 = vld [vmem:[%s1 + $0x94] sm:$0xf]
  %v374 = vld [vmem:[%s1 + $0x98] sm:$0xf]
  %v375 = vld [vmem:[%s1 + $0x9c] sm:$0xf]
  %v376 = vld [vmem:[%s1 + $0xa0] sm:$0xf]
  %v377 = vld [vmem:[%s1 + $0xa4] sm:$0xf]
  %v378 = vld [vmem:[%s1 + $0xa8] sm:$0xf]
  %v379 = vld [vmem:[%s1 + $0xac] sm:$0xf]
  %v380 = vld [vmem:[%s1 + $0xb0] sm:$0xf]
  %v381 = vld [vmem:[%s1 + $0xb4] sm:$0xf]
  %v382 = vld [vmem:[%s1 + $0xb8] sm:$0xf]
  %v383 = vld [vmem:[%s1 + $0xbc] sm:$0xf]
  %v384 = vld [vmem:[%s1 + $0xc0] sm:$0xf]
  %v385 = vld [vmem:[%s1 + $0xc4] sm:$0xf]
  %v386 = vld [vmem:[%s1 + $0xc8] sm:$0xf]
  %v387 = vld [vmem:[%s1 + $0xcc] sm:$0xf]
  %v388 = vld [vmem:[%s1 + $0xd0] sm:$0xf]
  %v389 = vld [vmem:[%s1 + $0xd4] sm:$0xf]
  %v390 = vld [vmem:[%s1 + $0xd8] sm:$0xf]
  %v391 = vld [vmem:[%s1 + $0xdc] sm:$0xf]
  %v392 = vld [vmem:[%s1 + $0xe0] sm:$0xf]
  %v393 = vld [vmem:[%s1 + $0xe4] sm:$0xf]
  %v394 = vld [vmem:[%s1 + $0xe8] sm:$0xf]
  %v395 = vld [vmem:[%s1 + $0xec] sm:$0xf]
  %v396 = vld [vmem:[%s1 + $0xf0] sm:$0xf]
  %v397 = vld [vmem:[%s1 + $0xf4] sm:$0xf]
  %v398 = vld [vmem:[%s1 + $0xf8] sm:$0xf]
  %v399 = vld [vmem:[%s1 + $0xfc] sm:$0xf]
  %v400 = vld [vmem:[%s1 + $0x100] sm:$0xf]
  %v401 = vld [vmem:[%s1 + $0x104] sm:$0xf]
  %v402 = vld [vmem:[%s1 + $0x108] sm:$0xf]
  %v403 = vld [vmem:[%s1 + $0x10c] sm:$0xf]
  %v404 = vld [vmem:[%s1 + $0x110] sm:$0xf]
  %v405 = vld [vmem:[%s1 + $0x114] sm:$0xf]
  %v406 = vld [vmem:[%s1 + $0x118] sm:$0xf]
  %v407 = vld [vmem:[%s1 + $0x11c] sm:$0xf]
  %v408 = vld [vmem:[%s1 + $0x120] sm:$0xf]
  %v409 = vld [vmem:[%s1 + $0x124] sm:$0xf]
  %v410 = vld [vmem:[%s1 + $0x128] sm:$0xf]
  %v411 = vld [vmem:[%s1 + $0x12c] sm:$0xf]
  %v412 = vld [vmem:[%s1 + $0x130] sm:$0xf]
  %v413 = vld [vmem:[%s1 + $0x134] sm:$0xf]
  %v414 = vld [vmem:[%s1 + $0x138] sm:$0xf]
  %v415 = vld [vmem:[%s1 + $0x13c] sm:$0xf]
  %v416 = vld [vmem:[%s1 + $0x140] sm:$0xf]
  %v417 = vld [vmem:[%s1 + $0x144] sm:$0xf]
  %v418 = vld [vmem:[%s1 + $0x148] sm:$0xf]
  %v419 = vld [vmem:[%s1 + $0x14c] sm:$0xf]
  %v420 = vld [vmem:[%s1 + $0x150] sm:$0xf]
  %v421 = vld [vmem:[%s1 + $0x154] sm:$0xf]
  %v422 = vld [vmem:[%s1 + $0x158] sm:$0xf]
  %v423 = vld [vmem:[%s1 + $0x15c] sm:$0xf]
  %v424 = vld [vmem:[%s1 + $0x160] sm:$0xf]
  %v425 = vld [vmem:[%s1 + $0x164] sm:$0xf]
  %v426 = vld [vmem:[%s1 + $0x168] sm:$0xf]
  %v427 = vld [vmem:[%s1 + $0x16c] sm:$0xf]
  %v428 = vld [vmem:[%s1 + $0x170] sm:$0xf]
  %v429 = vld [vmem:[%s1 + $0x174] sm:$0xf]
  %v430 = vld [vmem:[%s1 + $0x178] sm:$0xf]
  %v431 = vld [vmem:[%s1 + $0x17c] sm:$0xf]
  %v432 = vld [vmem:[%s1 + $0x180] sm:$0xf]
  %v433 = vld [vmem:[%s1 + $0x184] sm:$0xf]
  %v434 = vld [vmem:[%s1 + $0x188] sm:$0xf]
  %v435 = vld [vmem:[%s1 + $0x18c] sm:$0xf]
  %v436 = vld [vmem:[%s1 + $0x190] sm:$0xf]
  %v437 = vld [vmem:[%s1 + $0x194] sm:$0xf]
  %v438 = vld [vmem:[%s1 + $0x198] sm:$0xf]
  %v439 = vld [vmem:[%s1 + $0x19c] sm:$0xf]
  %v440 = vld [vmem:[%s1 + $0x1a0] sm:$0xf]
  %v441 = vld [vmem:[%s1 + $0x1a4] sm:$0xf]
  %v442 = vld [vmem:[%s1 + $0x1a8] sm:$0xf]
  %v443 = vld [vmem:[%s1 + $0x1ac] sm:$0xf]
  %v444 = vld [vmem:[%s1 + $0x1b0] sm:$0xf]
  %v445 = vld [vmem:[%s1 + $0x1b4] sm:$0xf]
  %v446 = vld [vmem:[%s1 + $0x1b8] sm:$0xf]
  %v447 = vld [vmem:[%s1 + $0x1bc] sm:$0xf]
  %v448 = vld [vmem:[%s1 + $0x1c0] sm:$0xf]
  %v449 = vld [vmem:[%s1 + $0x1c4] sm:$0xf]
  %v450 = vld [vmem:[%s1 + $0x1c8] sm:$0xf]
  %v451 = vld [vmem:[%s1 + $0x1cc] sm:$0xf]
  %v452 = vld [vmem:[%s1 + $0x1d0] sm:$0xf]
  %v453 = vld [vmem:[%s1 + $0x1d4] sm:$0xf]
  %v454 = vld [vmem:[%s1 + $0x1d8] sm:$0xf]
  %v455 = vld [vmem:[%s1 + $0x1dc] sm:$0xf]
  %v456 = vld [vmem:[%s1 + $0x1e0] sm:$0xf]
  %v457 = vld [vmem:[%s1 + $0x1e4] sm:$0xf]
  %v458 = vld [vmem:[%s1 + $0x1e8] sm:$0xf]
  %v459 = vld [vmem:[%s1 + $0x1ec] sm:$0xf]
  %v460 = vld [vmem:[%s1 + $0x1f0] sm:$0xf]
  %v461 = vld [vmem:[%s1 + $0x1f4] sm:$0xf]
  %v462 = vld [vmem:[%s1 + $0x1f8] sm:$0xf]
  %v463 = vld [vmem:[%s1 + $0x1fc] sm:$0xf]
  %v464 = vld [vmem:[%s1 + $0x200] sm:$0xf]
  %v465 = vld [vmem:[%s1 + $0x204] sm:$0xf]
  %v466 = vld [vmem:[%s1 + $0x208] sm:$0xf]
  %v467 = vld [vmem:[%s1 + $0x20c] sm:$0xf]
  %v468 = vld [vmem:[%s1 + $0x210] sm:$0xf]
  %v469 = vld [vmem:[%s1 + $0x214] sm:$0xf]
  %v470 = vld [vmem:[%s1 + $0x218] sm:$0xf]
  %v471 = vld [vmem:[%s1 + $0x21c] sm:$0xf]
  %v472 = vld [vmem:[%s1 + $0x220] sm:$0xf]
  %v473 = vld [vmem:[%s1 + $0x224] sm:$0xf]
  %v474 = vld [vmem:[%s1 + $0x228] sm:$0xf]
  %v475 = vld [vmem:[%s1 + $0x22c] sm:$0xf]
  %v476 = vld [vmem:[%s1 + $0x230] sm:$0xf]
  %v477 = vld [vmem:[%s1 + $0x234] sm:$0xf]
  %v478 = vld [vmem:[%s1 + $0x238] sm:$0xf]
  %v479 = vld [vmem:[%s1 + $0x23c] sm:$0xf]
  %v480 = vld [vmem:[%s2] sm:$0x1]
  %v482 = vlaneseq
  %v483 = vshrl.u32 %v482, 7
  %v484 = vsub.s32 0, %v483
  %v485 = vrot.slane %v480, %v484
  %v631 = vunpack.c.l.b16 %v336
  %v632 = vunpack.c.l.b16 %v337
  %v633 = vunpack.c.l.b16 %v338
  %v634 = vunpack.c.l.b16 %v339
  %v635 = vunpack.c.l.b16 %v340
  %v636 = vunpack.c.l.b16 %v341
  %v637 = vunpack.c.l.b16 %v342
  %v638 = vunpack.c.l.b16 %v343
  %v639 = vunpack.c.l.b16 %v344
  %v640 = vunpack.c.l.b16 %v345
  %v641 = vunpack.c.l.b16 %v346
  %v642 = vunpack.c.l.b16 %v347
  %v643 = vunpack.c.l.b16 %v348
  %v644 = vunpack.c.l.b16 %v349
  %v645 = vunpack.c.l.b16 %v350
  %v646 = vunpack.c.l.b16 %v351
  %v647 = vunpack.c.l.b16 %v352
  %v648 = vunpack.c.l.b16 %v353
  %v649 = vunpack.c.l.b16 %v354
  %v650 = vunpack.c.l.b16 %v355
  %v651 = vunpack.c.l.b16 %v356
  %v652 = vunpack.c.l.b16 %v357
  %v653 = vunpack.c.l.b16 %v358
  %v654 = vunpack.c.l.b16 %v359
  %v655 = vunpack.c.l.b16 %v360
  %v656 = vunpack.c.l.b16 %v361
  %v657 = vunpack.c.l.b16 %v362
  %v658 = vunpack.c.l.b16 %v363
  %v659 = vunpack.c.l.b16 %v364
  %v660 = vunpack.c.l.b16 %v365
  %v661 = vunpack.c.l.b16 %v366
  %v662 = vunpack.c.l.b16 %v367
  %v663 = vunpack.c.l.b16 %v368
  %v664 = vunpack.c.l.b16 %v369
  %v665 = vunpack.c.l.b16 %v370
  %v666 = vunpack.c.l.b16 %v371
  %v667 = vunpack.c.l.b16 %v372
  %v668 = vunpack.c.l.b16 %v373
  %v669 = vunpack.c.l.b16 %v374
  %v670 = vunpack.c.l.b16 %v375
  %v671 = vunpack.c.l.b16 %v376
  %v672 = vunpack.c.l.b16 %v377
  %v673 = vunpack.c.l.b16 %v378
  %v674 = vunpack.c.l.b16 %v379
  %v675 = vunpack.c.l.b16 %v380
  %v676 = vunpack.c.l.b16 %v381
  %v677 = vunpack.c.l.b16 %v382
  %v678 = vunpack.c.l.b16 %v383
  %v679 = vunpack.c.l.b16 %v384
  %v680 = vunpack.c.l.b16 %v385
  %v681 = vunpack.c.l.b16 %v386
  %v682 = vunpack.c.l.b16 %v387
  %v683 = vunpack.c.l.b16 %v388
  %v684 = vunpack.c.l.b16 %v389
  %v685 = vunpack.c.l.b16 %v390
  %v686 = vunpack.c.l.b16 %v391
  %v687 = vunpack.c.l.b16 %v392
  %v688 = vunpack.c.l.b16 %v393
  %v689 = vunpack.c.l.b16 %v394
  %v690 = vunpack.c.l.b16 %v395
  %v691 = vunpack.c.l.b16 %v396
  %v692 = vunpack.c.l.b16 %v397
  %v693 = vunpack.c.l.b16 %v398
  %v694 = vunpack.c.l.b16 %v399
  %v695 = vunpack.c.l.b16 %v400
  %v696 = vunpack.c.l.b16 %v401
  %v697 = vunpack.c.l.b16 %v402
  %v698 = vunpack.c.l.b16 %v403
  %v699 = vunpack.c.l.b16 %v404
  %v700 = vunpack.c.l.b16 %v405
  %v701 = vunpack.c.l.b16 %v406
  %v702 = vunpack.c.l.b16 %v407
  %v703 = vunpack.c.l.b16 %v408
  %v704 = vunpack.c.l.b16 %v409
  %v705 = vunpack.c.l.b16 %v410
  %v706 = vunpack.c.l.b16 %v411
  %v707 = vunpack.c.l.b16 %v412
  %v708 = vunpack.c.l.b16 %v413
  %v709 = vunpack.c.l.b16 %v414
  %v710 = vunpack.c.l.b16 %v415
  %v711 = vunpack.c.l.b16 %v416
  %v712 = vunpack.c.l.b16 %v417
  %v713 = vunpack.c.l.b16 %v418
  %v714 = vunpack.c.l.b16 %v419
  %v715 = vunpack.c.l.b16 %v420
  %v716 = vunpack.c.l.b16 %v421
  %v717 = vunpack.c.l.b16 %v422
  %v718 = vunpack.c.l.b16 %v423
  %v719 = vunpack.c.l.b16 %v424
  %v720 = vunpack.c.l.b16 %v425
  %v721 = vunpack.c.l.b16 %v426
  %v722 = vunpack.c.l.b16 %v427
  %v723 = vunpack.c.l.b16 %v428
  %v724 = vunpack.c.l.b16 %v429
  %v725 = vunpack.c.l.b16 %v430
  %v726 = vunpack.c.l.b16 %v431
  %v727 = vunpack.c.l.b16 %v432
  %v728 = vunpack.c.l.b16 %v433
  %v729 = vunpack.c.l.b16 %v434
  %v730 = vunpack.c.l.b16 %v435
  %v731 = vunpack.c.l.b16 %v436
  %v732 = vunpack.c.l.b16 %v437
  %v733 = vunpack.c.l.b16 %v438
  %v734 = vunpack.c.l.b16 %v439
  %v735 = vunpack.c.l.b16 %v440
  %v736 = vunpack.c.l.b16 %v441
  %v737 = vunpack.c.l.b16 %v442
  %v738 = vunpack.c.l.b16 %v443
  %v739 = vunpack.c.l.b16 %v444
  %v740 = vunpack.c.l.b16 %v445
  %v741 = vunpack.c.l.b16 %v446
  %v742 = vunpack.c.l.b16 %v447
  %v743 = vunpack.c.l.b16 %v448
  %v744 = vunpack.c.l.b16 %v449
  %v745 = vunpack.c.l.b16 %v450
  %v746 = vunpack.c.l.b16 %v451
  %v747 = vunpack.c.l.b16 %v452
  %v748 = vunpack.c.l.b16 %v453
  %v749 = vunpack.c.l.b16 %v454
  %v750 = vunpack.c.l.b16 %v455
  %v751 = vunpack.c.l.b16 %v456
  %v752 = vunpack.c.l.b16 %v457
  %v753 = vunpack.c.l.b16 %v458
  %v754 = vunpack.c.l.b16 %v459
  %v755 = vunpack.c.l.b16 %v460
  %v756 = vunpack.c.l.b16 %v461
  %v757 = vunpack.c.l.b16 %v462
  %v758 = vunpack.c.l.b16 %v463
  %v759 = vunpack.c.l.b16 %v464
  %v760 = vunpack.c.l.b16 %v465
  %v761 = vunpack.c.l.b16 %v466
  %v762 = vunpack.c.l.b16 %v467
  %v763 = vunpack.c.l.b16 %v468
  %v764 = vunpack.c.l.b16 %v469
  %v765 = vunpack.c.l.b16 %v470
  %v766 = vunpack.c.l.b16 %v471
  %v767 = vunpack.c.l.b16 %v472
  %v768 = vunpack.c.l.b16 %v473
  %v769 = vunpack.c.l.b16 %v474
  %v770 = vunpack.c.l.b16 %v475
  %v771 = vunpack.c.l.b16 %v476
  %v772 = vunpack.c.l.b16 %v477
  %v773 = vunpack.c.l.b16 %v478
  %v774 = vunpack.c.l.b16 %v479
  %v775 = vpack.c.b16 %v632, %v631
  %v776 = vpack.c.b16 %v634, %v633
  %v777 = vpack.c.b16 %v636, %v635
  %v778 = vpack.c.b16 %v638, %v637
  %v779 = vpack.c.b16 %v640, %v639
  %v780 = vpack.c.b16 %v642, %v641
  %v781 = vpack.c.b16 %v644, %v643
  %v782 = vpack.c.b16 %v646, %v645
  %v783 = vpack.c.b16 %v648, %v647
  %v784 = vpack.c.b16 %v650, %v649
  %v785 = vpack.c.b16 %v652, %v651
  %v786 = vpack.c.b16 %v654, %v653
  %v787 = vpack.c.b16 %v656, %v655
  %v788 = vpack.c.b16 %v658, %v657
  %v789 = vpack.c.b16 %v660, %v659
  %v790 = vpack.c.b16 %v662, %v661
  %v791 = vpack.c.b16 %v664, %v663
  %v792 = vpack.c.b16 %v666, %v665
  %v793 = vpack.c.b16 %v668, %v667
  %v794 = vpack.c.b16 %v670, %v669
  %v795 = vpack.c.b16 %v672, %v671
  %v796 = vpack.c.b16 %v674, %v673
  %v797 = vpack.c.b16 %v676, %v675
  %v798 = vpack.c.b16 %v678, %v677
  %v799 = vpack.c.b16 %v680, %v679
  %v800 = vpack.c.b16 %v682, %v681
  %v801 = vpack.c.b16 %v684, %v683
  %v802 = vpack.c.b16 %v686, %v685
  %v803 = vpack.c.b16 %v688, %v687
  %v804 = vpack.c.b16 %v690, %v689
  %v805 = vpack.c.b16 %v692, %v691
  %v806 = vpack.c.b16 %v694, %v693
  %v807 = vpack.c.b16 %v696, %v695
  %v808 = vpack.c.b16 %v698, %v697
  %v809 = vpack.c.b16 %v700, %v699
  %v810 = vpack.c.b16 %v702, %v701
  %v811 = vpack.c.b16 %v704, %v703
  %v812 = vpack.c.b16 %v706, %v705
  %v813 = vpack.c.b16 %v708, %v707
  %v814 = vpack.c.b16 %v710, %v709
  %v815 = vpack.c.b16 %v712, %v711
  %v816 = vpack.c.b16 %v714, %v713
  %v817 = vpack.c.b16 %v716, %v715
  %v818 = vpack.c.b16 %v718, %v717
  %v819 = vpack.c.b16 %v720, %v719
  %v820 = vpack.c.b16 %v722, %v721
  %v821 = vpack.c.b16 %v724, %v723
  %v822 = vpack.c.b16 %v726, %v725
  %v823 = vpack.c.b16 %v728, %v727
  %v824 = vpack.c.b16 %v730, %v729
  %v825 = vpack.c.b16 %v732, %v731
  %v826 = vpack.c.b16 %v734, %v733
  %v827 = vpack.c.b16 %v736, %v735
  %v828 = vpack.c.b16 %v738, %v737
  %v829 = vpack.c.b16 %v740, %v739
  %v830 = vpack.c.b16 %v742, %v741
  %v831 = vpack.c.b16 %v744, %v743
  %v832 = vpack.c.b16 %v746, %v745
  %v833 = vpack.c.b16 %v748, %v747
  %v834 = vpack.c.b16 %v750, %v749
  %v835 = vpack.c.b16 %v752, %v751
  %v836 = vpack.c.b16 %v754, %v753
  %v837 = vpack.c.b16 %v756, %v755
  %v838 = vpack.c.b16 %v758, %v757
  %v839 = vpack.c.b16 %v760, %v759
  %v840 = vpack.c.b16 %v762, %v761
  %v841 = vpack.c.b16 %v764, %v763
  %v842 = vpack.c.b16 %v766, %v765
  %v843 = vpack.c.b16 %v768, %v767
  %v844 = vpack.c.b16 %v770, %v769
  %v845 = vpack.c.b16 %v772, %v771
  %v846 = vpack.c.b16 %v774, %v773
  %919 = vmatprep.subr.bf16.mxu0 0
  %920 = vmatpush1.bf16.msra.mxu0 %v775
  %921 = vmatprep.subr.bf16.mxu0 0
  %922 = vmatpush1.bf16.msra.mxu0 %v776
  %923 = vmatprep.subr.bf16.mxu0 0
  %924 = vmatpush1.bf16.msra.mxu0 %v777
  %925 = vmatprep.subr.bf16.mxu0 0
  %926 = vmatpush1.bf16.msra.mxu0 %v778
  %927 = vmatprep.subr.bf16.mxu0 0
  %928 = vmatpush1.bf16.msra.mxu0 %v779
  %929 = vmatprep.subr.bf16.mxu0 0
  %930 = vmatpush1.bf16.msra.mxu0 %v780
  %931 = vmatprep.subr.bf16.mxu0 0
  %932 = vmatpush1.bf16.msra.mxu0 %v781
  %933 = vmatprep.subr.bf16.mxu0 0
  %934 = vmatpush1.bf16.msra.mxu0 %v782
  %935 = vmatprep.subr.bf16.mxu0 0
  %936 = vmatpush1.bf16.msra.mxu0 %v783
  %937 = vmatprep.subr.bf16.mxu0 0
  %938 = vmatpush1.bf16.msra.mxu0 %v784
  %939 = vmatprep.subr.bf16.mxu0 0
  %940 = vmatpush1.bf16.msra.mxu0 %v785
  %941 = vmatprep.subr.bf16.mxu0 0
  %942 = vmatpush1.bf16.msra.mxu0 %v786
  %943 = vmatprep.subr.bf16.mxu0 0
  %944 = vmatpush1.bf16.msra.mxu0 %v787
  %945 = vmatprep.subr.bf16.mxu0 0
  %946 = vmatpush1.bf16.msra.mxu0 %v788
  %947 = vmatprep.subr.bf16.mxu0 0
  %948 = vmatpush1.bf16.msra.mxu0 %v789
  %949 = vmatprep.subr.bf16.mxu0 0
  %950 = vmatpush1.bf16.msra.mxu0 %v790
  %951 = vmatprep.mubr.bf16.mxu0 %v319
  %952 = vmatmul.mubr.bf16.gmra.mrb[0].mxu0 %v318
  %v953 = vpop.f32.mrb[0].mxu0
  %v954 = vadd.f32 %v485, %v953
  %v955 = vpop.f32.mrb[0].mxu0
  %v956 = vpop.f32.mrb[0].mxu0
  %v957 = vadd.f32 %v485, %v956
  %v958 = vpop.f32.mrb[0].mxu0
  %959 = vmatprep.mubr.bf16.mxu0 %v328
  %960 = vmatmul.mubr.bf16.gmra.mrb[0].mxu0 %v327
  %v961 = vpop.f32.mrb[0].mxu0
  %v962 = vadd.f32 %v485, %v961
  %v963 = vpop.f32.mrb[0].mxu0
  %v964 = vpop.f32.mrb[0].mxu0
  %v965 = vadd.f32 %v485, %v964
  %v966 = vpop.f32.mrb[0].mxu0
  %967 = vdwg.mxu0
  %968 = vmatprep.subr.bf16.mxu0 0
  %969 = vmatpush1.bf16.msra.mxu0 %v791
  %970 = vmatprep.subr.bf16.mxu0 0
  %971 = vmatpush1.bf16.msra.mxu0 %v792
  %972 = vmatprep.subr.bf16.mxu0 0
  %973 = vmatpush1.bf16.msra.mxu0 %v793
  %974 = vmatprep.subr.bf16.mxu0 0
  %975 = vmatpush1.bf16.msra.mxu0 %v794
  %976 = vmatprep.subr.bf16.mxu0 0
  %977 = vmatpush1.bf16.msra.mxu0 %v795
  %978 = vmatprep.subr.bf16.mxu0 0
  %979 = vmatpush1.bf16.msra.mxu0 %v796
  %980 = vmatprep.subr.bf16.mxu0 0
  %981 = vmatpush1.bf16.msra.mxu0 %v797
  %982 = vmatprep.subr.bf16.mxu0 0
  %983 = vmatpush1.bf16.msra.mxu0 %v798
  %984 = vmatprep.subr.bf16.mxu0 0
  %985 = vmatpush1.bf16.msra.mxu0 %v799
  %986 = vmatprep.subr.bf16.mxu0 0
  %987 = vmatpush1.bf16.msra.mxu0 %v800
  %988 = vmatprep.subr.bf16.mxu0 0
  %989 = vmatpush1.bf16.msra.mxu0 %v801
  %990 = vmatprep.subr.bf16.mxu0 0
  %991 = vmatpush1.bf16.msra.mxu0 %v802
  %992 = vmatprep.subr.bf16.mxu0 0
  %993 = vmatpush1.bf16.msra.mxu0 %v803
  %994 = vmatprep.subr.bf16.mxu0 0
  %995 = vmatpush1.bf16.msra.mxu0 %v804
  %996 = vmatprep.subr.bf16.mxu0 0
  %997 = vmatpush1.bf16.msra.mxu0 %v805
  %998 = vmatprep.subr.bf16.mxu0 0
  %999 = vmatpush1.bf16.msra.mxu0 %v806
  %1000 = vmatprep.mubr.bf16.mxu0 %v321
  %1001 = vmatmul.mubr.bf16.gmra.mrb[0].mxu0 %v320
  %v1002 = vpop.f32.mrb[0].mxu0
  %v1003 = vadd.f32 %v954, %v1002
  %v1004 = vpop.f32.mrb[0].mxu0
  %v1005 = vpop.f32.mrb[0].mxu0
  %v1006 = vadd.f32 %v957, %v1005
  %v1007 = vpop.f32.mrb[0].mxu0
  %1008 = vmatprep.mubr.bf16.mxu0 %v330
  %1009 = vmatmul.mubr.bf16.gmra.mrb[0].mxu0 %v329
  %v1010 = vpop.f32.mrb[0].mxu0
  %v1011 = vadd.f32 %v962, %v1010
  %v1012 = vpop.f32.mrb[0].mxu0
  %v1013 = vpop.f32.mrb[0].mxu0
  %v1014 = vadd.f32 %v965, %v1013
  %v1015 = vpop.f32.mrb[0].mxu0
  %1016 = vdwg.mxu0
  %1017 = vmatprep.subr.bf16.mxu0 0
  %1018 = vmatpush1.bf16.msra.mxu0 %v807
  %1019 = vmatprep.subr.bf16.mxu0 0
  %1020 = vmatpush1.bf16.msra.mxu0 %v808
  %1021 = vmatprep.subr.bf16.mxu0 0
  %1022 = vmatpush1.bf16.msra.mxu0 %v809
  %1023 = vmatprep.subr.bf16.mxu0 0
  %1024 = vmatpush1.bf16.msra.mxu0 %v810
  %1025 = vmatprep.subr.bf16.mxu0 0
  %1026 = vmatpush1.bf16.msra.mxu0 %v811
  %1027 = vmatprep.subr.bf16.mxu0 0
  %1028 = vmatpush1.bf16.msra.mxu0 %v812
  %1029 = vmatprep.subr.bf16.mxu0 0
  %1030 = vmatpush1.bf16.msra.mxu0 %v813
  %1031 = vmatprep.subr.bf16.mxu0 0
  %1032 = vmatpush1.bf16.msra.mxu0 %v814
  %1033 = vmatprep.subr.bf16.mxu0 0
  %1034 = vmatpush1.bf16.msra.mxu0 %v815
  %1035 = vmatprep.subr.bf16.mxu0 0
  %1036 = vmatpush1.bf16.msra.mxu0 %v816
  %1037 = vmatprep.subr.bf16.mxu0 0
  %1038 = vmatpush1.bf16.msra.mxu0 %v817
  %1039 = vmatprep.subr.bf16.mxu0 0
  %1040 = vmatpush1.bf16.msra.mxu0 %v818
  %1041 = vmatprep.subr.bf16.mxu0 0
  %1042 = vmatpush1.bf16.msra.mxu0 %v819
  %1043 = vmatprep.subr.bf16.mxu0 0
  %1044 = vmatpush1.bf16.msra.mxu0 %v820
  %1045 = vmatprep.subr.bf16.mxu0 0
  %1046 = vmatpush1.bf16.msra.mxu0 %v821
  %1047 = vmatprep.subr.bf16.mxu0 0
  %1048 = vmatpush1.bf16.msra.mxu0 %v822
  %1049 = vmatprep.mubr.bf16.mxu0 %v323
  %1050 = vmatmul.mubr.bf16.gmra.mrb[0].mxu0 %v322
  %v1051 = vpop.f32.mrb[0].mxu0
  %v1052 = vadd.f32 %v1003, %v1051
  %v1053 = vpop.f32.mrb[0].mxu0
  %v1054 = vpop.f32.mrb[0].mxu0
  %v1055 = vadd.f32 %v1006, %v1054
  %v1056 = vpop.f32.mrb[0].mxu0
  %1057 = vmatprep.mubr.bf16.mxu0 %v332
  %1058 = vmatmul.mubr.bf16.gmra.mrb[0].mxu0 %v331
  %v1059 = vpop.f32.mrb[0].mxu0
  %v1060 = vadd.f32 %v1011, %v1059
  %v1061 = vpop.f32.mrb[0].mxu0
  %v1062 = vpop.f32.mrb[0].mxu0
  %v1063 = vadd.f32 %v1014, %v1062
  %v1064 = vpop.f32.mrb[0].mxu0
  %1065 = vdwg.mxu0
  %1066 = vmatprep.subr.bf16.mxu0 0
  %1067 = vmatpush1.bf16.msra.mxu0 %v823
  %1068 = vmatprep.subr.bf16.mxu0 0
  %1069 = vmatpush1.bf16.msra.mxu0 %v824
  %1070 = vmatprep.subr.bf16.mxu0 0
  %1071 = vmatpush1.bf16.msra.mxu0 %v825
  %1072 = vmatprep.subr.bf16.mxu0 0
  %1073 = vmatpush1.bf16.msra.mxu0 %v826
  %1074 = vmatprep.subr.bf16.mxu0 0
  %1075 = vmatpush1.bf16.msra.mxu0 %v827
  %1076 = vmatprep.subr.bf16.mxu0 0
  %1077 = vmatpush1.bf16.msra.mxu0 %v828
  %1078 = vmatprep.subr.bf16.mxu0 0
  %1079 = vmatpush1.bf16.msra.mxu0 %v829
  %1080 = vmatprep.subr.bf16.mxu0 0
  %1081 = vmatpush1.bf16.msra.mxu0 %v830
  %1082 = vmatprep.subr.bf16.mxu0 0
  %1083 = vmatpush1.bf16.msra.mxu0 %v831
  %1084 = vmatprep.subr.bf16.mxu0 0
  %1085 = vmatpush1.bf16.msra.mxu0 %v832
  %1086 = vmatprep.subr.bf16.mxu0 0
  %1087 = vmatpush1.bf16.msra.mxu0 %v833
  %1088 = vmatprep.subr.bf16.mxu0 0
  %1089 = vmatpush1.bf16.msra.mxu0 %v834
  %1090 = vmatprep.subr.bf16.mxu0 0
  %1091 = vmatpush1.bf16.msra.mxu0 %v835
  %1092 = vmatprep.subr.bf16.mxu0 0
  %1093 = vmatpush1.bf16.msra.mxu0 %v836
  %1094 = vmatprep.subr.bf16.mxu0 0
  %1095 = vmatpush1.bf16.msra.mxu0 %v837
  %1096 = vmatprep.subr.bf16.mxu0 0
  %1097 = vmatpush1.bf16.msra.mxu0 %v838
  %1098 = vmatprep.mubr.bf16.mxu0 %v325
  %1099 = vmatmul.mubr.bf16.gmra.mrb[0].mxu0 %v324
  %v1100 = vpop.f32.mrb[0].mxu0
  %v1101 = vadd.f32 %v1052, %v1100
  %v1102 = vpop.f32.mrb[0].mxu0
  %v1103 = vpop.f32.mrb[0].mxu0
  %v1104 = vadd.f32 %v1055, %v1103
  %v1105 = vpop.f32.mrb[0].mxu0
  %1106 = vmatprep.mubr.bf16.mxu0 %v334
  %1107 = vmatmul.mubr.bf16.gmra.mrb[0].mxu0 %v333
  %v1108 = vpop.f32.mrb[0].mxu0
  %v1109 = vadd.f32 %v1060, %v1108
  %v1110 = vpop.f32.mrb[0].mxu0
  %v1111 = vpop.f32.mrb[0].mxu0
  %v1112 = vadd.f32 %v1063, %v1111
  %v1113 = vpop.f32.mrb[0].mxu0
  %1114 = vdwg.mxu0
  %1115 = vmatprep.subr.bf16.mxu0 0
  %1116 = vmatpush1.bf16.msra.mxu0 %v839
  %1117 = vmatprep.subr.bf16.mxu0 0
  %1118 = vmatpush1.bf16.msra.mxu0 %v840
  %1119 = vmatprep.subr.bf16.mxu0 0
  %1120 = vmatpush1.bf16.msra.mxu0 %v841
  %1121 = vmatprep.subr.bf16.mxu0 0
  %1122 = vmatpush1.bf16.msra.mxu0 %v842
  %1123 = vmatprep.subr.bf16.mxu0 0
  %1124 = vmatpush1.bf16.msra.mxu0 %v843
  %1125 = vmatprep.subr.bf16.mxu0 0
  %1126 = vmatpush1.bf16.msra.mxu0 %v844
  %1127 = vmatprep.subr.bf16.mxu0 0
  %1128 = vmatpush1.bf16.msra.mxu0 %v845
  %1129 = vmatprep.subr.bf16.mxu0 0
  %1130 = vmatpush1.bf16.msra.mxu0 %v846
  %1131 = vmatprep.subr.bf16.mxu0 0
  %1132 = vmatpush1.bf16.msra.mxu0 0
  %1133 = vmatprep.subr.bf16.mxu0 0
  %1134 = vmatpush1.bf16.msra.mxu0 0
  %1135 = vmatprep.subr.bf16.mxu0 0
  %1136 = vmatpush1.bf16.msra.mxu0 0
  %1137 = vmatprep.subr.bf16.mxu0 0
  %1138 = vmatpush1.bf16.msra.mxu0 0
  %1139 = vmatprep.subr.bf16.mxu0 0
  %1140 = vmatpush1.bf16.msra.mxu0 0
  %1141 = vmatprep.subr.bf16.mxu0 0
  %1142 = vmatpush1.bf16.msra.mxu0 0
  %1143 = vmatprep.subr.bf16.mxu0 0
  %1144 = vmatpush1.bf16.msra.mxu0 0
  %1145 = vmatprep.subr.bf16.mxu0 0
  %1146 = vmatpush1.bf16.msra.mxu0 0
  %1147 = vmatprep.mubr.bf16.mxu0 0
  %1148 = vmatmul.mubr.bf16.gmra.mrb[0].mxu0 %v326
  %v1149 = vpop.f32.mrb[0].mxu0
  %v1150 = vadd.f32 %v1101, %v1149
  %v1151 = vpop.f32.mrb[0].mxu0
  %v1152 = vpop.f32.mrb[0].mxu0
  %v1153 = vadd.f32 %v1104, %v1152
  %v1154 = vpop.f32.mrb[0].mxu0
  %1155 = vmatprep.mubr.bf16.mxu0 0
  %1156 = vmatmul.mubr.bf16.gmra.mrb[0].mxu0 %v335
  %v1157 = vpop.f32.mrb[0].mxu0
  %v1158 = vadd.f32 %v1109, %v1157
  %v1159 = vpop.f32.mrb[0].mxu0
  %v1160 = vpop.f32.mrb[0].mxu0
  %v1161 = vadd.f32 %v1112, %v1160
  %v1162 = vpop.f32.mrb[0].mxu0
  %1163 = vdwg.mxu0
  %v1164 = vmax.f32 %v1150, 0.0
  %v1165 = vmax.f32 %v1153, 0.0
  %v1166 = vmax.f32 %v1158, 0.0
  %v1167 = vmax.f32 %v1161, 0.0
  %v1172 = vcombine.high %v1164, %v1164
  %v1174 = vunpack.c.l.s4 1983009808
  %v1175 = vunpack.c.0.s8 %v1174
  %v1176 = vlaneseq
  %v1177 = vshrl.u32 %v1176, 7
  %v1178 = vsub.s32 %v1175, %v1177
  %v1179 = vrot.slane %v1164, %v1178
  %v1181 = vunpack.c.l.s4 1983009808
  %v1182 = vunpack.c.0.s8 %v1181
  %v1183 = vlaneseq
  %v1184 = vshrl.u32 %v1183, 7
  %v1185 = vsub.s32 %v1182, %v1184
  %v1186 = vrot.slane %v1172, %v1185
  %v1187 = vcombine.high %v1179, %v1179
  %v1188 = vcombine.high %v1186, %v1186
  %v1189 = vcombine.high %v1165, %v1165
  %v1191 = vunpack.c.l.s4 1983009808
  %v1192 = vunpack.c.0.s8 %v1191
  %v1193 = vlaneseq
  %v1194 = vshrl.u32 %v1193, 7
  %v1195 = vsub.s32 %v1192, %v1194
  %v1196 = vrot.slane %v1165, %v1195
  %v1198 = vunpack.c.l.s4 1983009808
  %v1199 = vunpack.c.0.s8 %v1198
  %v1200 = vlaneseq
  %v1201 = vshrl.u32 %v1200, 7
  %v1202 = vsub.s32 %v1199, %v1201
  %v1203 = vrot.slane %v1189, %v1202
  %v1204 = vcombine.high %v1196, %v1196
  %v1205 = vcombine.high %v1203, %v1203
  %v1206 = vcombine.high %v1166, %v1166
  %v1208 = vunpack.c.l.s4 1983009808
  %v1209 = vunpack.c.0.s8 %v1208
  %v1210 = vlaneseq
  %v1211 = vshrl.u32 %v1210, 7
  %v1212 = vsub.s32 %v1209, %v1211
  %v1213 = vrot.slane %v1166, %v1212
  %v1215 = vunpack.c.l.s4 1983009808
  %v1216 = vunpack.c.0.s8 %v1215
  %v1217 = vlaneseq
  %v1218 = vshrl.u32 %v1217, 7
  %v1219 = vsub.s32 %v1216, %v1218
  %v1220 = vrot.slane %v1206, %v1219
  %v1221 = vcombine.high %v1213, %v1213
  %v1222 = vcombine.high %v1220, %v1220
  %v1223 = vcombine.high %v1167, %v1167
  %v1225 = vunpack.c.l.s4 1983009808
  %v1226 = vunpack.c.0.s8 %v1225
  %v1227 = vlaneseq
  %v1228 = vshrl.u32 %v1227, 7
  %v1229 = vsub.s32 %v1226, %v1228
  %v1230 = vrot.slane %v1167, %v1229
  %v1232 = vunpack.c.l.s4 1983009808
  %v1233 = vunpack.c.0.s8 %v1232
  %v1234 = vlaneseq
  %v1235 = vshrl.u32 %v1234, 7
  %v1236 = vsub.s32 %v1233, %v1235
  %v1237 = vrot.slane %v1223, %v1236
  %v1238 = vcombine.high %v1230, %v1230
  %v1239 = vcombine.high %v1237, %v1237
  %v1256 = vrot.slane %v1179, 7
  %v1257 = vrot.slane %v1256, 2
  %v1258 = vrot.slane %v1187, 7
  %v1259 = vrot.slane %v1258, 2
  %v1260 = vrot.slane %v1186, 7
  %v1261 = vrot.slane %v1260, 2
  %v1262 = vrot.slane %v1188, 7
  %v1263 = vrot.slane %v1262, 2
  %v1264 = vrot.slane %v1196, 7
  %v1265 = vrot.slane %v1264, 2
  %v1266 = vrot.slane %v1204, 7
  %v1267 = vrot.slane %v1266, 2
  %v1268 = vrot.slane %v1203, 7
  %v1269 = vrot.slane %v1268, 2
  %v1270 = vrot.slane %v1205, 7
  %v1271 = vrot.slane %v1270, 2
  %v1272 = vrot.slane %v1213, 7
  %v1273 = vrot.slane %v1272, 2
  %v1274 = vrot.slane %v1221, 7
  %v1275 = vrot.slane %v1274, 2
  %v1276 = vrot.slane %v1220, 7
  %v1277 = vrot.slane %v1276, 2
  %v1278 = vrot.slane %v1222, 7
  %v1279 = vrot.slane %v1278, 2
  %v1280 = vrot.slane %v1230, 7
  %v1281 = vrot.slane %v1280, 2
  %v1282 = vrot.slane %v1238, 7
  %v1283 = vrot.slane %v1282, 2
  %v1284 = vrot.slane %v1237, 7
  %v1285 = vrot.slane %v1284, 2
  %v1286 = vrot.slane %v1239, 7
  %v1287 = vrot.slane %v1286, 2
  %v1304 = vmax.f32 %v1179, %v1257
  %v1305 = vmax.f32 %v1187, %v1259
  %v1306 = vmax.f32 %v1186, %v1261
  %v1307 = vmax.f32 %v1188, %v1263
  %v1308 = vmax.f32 %v1196, %v1265
  %v1309 = vmax.f32 %v1204, %v1267
  %v1310 = vmax.f32 %v1203, %v1269
  %v1311 = vmax.f32 %v1205, %v1271
  %v1312 = vmax.f32 %v1213, %v1273
  %v1313 = vmax.f32 %v1221, %v1275
  %v1314 = vmax.f32 %v1220, %v1277
  %v1315 = vmax.f32 %v1222, %v1279
  %v1316 = vmax.f32 %v1230, %v1281
  %v1317 = vmax.f32 %v1238, %v1283
  %v1318 = vmax.f32 %v1237, %v1285
  %v1319 = vmax.f32 %v1239, %v1287
  %v1320 = vmax.f32 %v1304, %v1306
  %v1321 = vmax.f32 %v1305, %v1307
  %v1322 = vmax.f32 %v1308, %v1310
  %v1323 = vmax.f32 %v1309, %v1311
  %v1324 = vmax.f32 %v1312, %v1314
  %v1325 = vmax.f32 %v1313, %v1315
  %v1326 = vmax.f32 %v1316, %v1318
  %v1327 = vmax.f32 %v1317, %v1319
  %v1336 = vlaneseq
  %v1337 = vshrl.u32 %v1336, 7
  %v1338 = vsub.s32 0, %v1337
  %v1339 = vrot.slane %v1320, %v1338
  %v1340 = vlaneseq
  %v1341 = vshrl.u32 %v1340, 7
  %v1342 = vsub.s32 0, %v1341
  %v1343 = vrot.slane %v1321, %v1342
  %v1344 = vlaneseq
  %v1345 = vshrl.u32 %v1344, 7
  %v1346 = vsub.s32 0, %v1345
  %v1347 = vrot.slane %v1322, %v1346
  %v1348 = vlaneseq
  %v1349 = vshrl.u32 %v1348, 7
  %v1350 = vsub.s32 0, %v1349
  %v1351 = vrot.slane %v1323, %v1350
  %v1352 = vlaneseq
  %v1353 = vshrl.u32 %v1352, 7
  %v1354 = vsub.s32 0, %v1353
  %v1355 = vrot.slane %v1324, %v1354
  %v1356 = vlaneseq
  %v1357 = vshrl.u32 %v1356, 7
  %v1358 = vsub.s32 0, %v1357
  %v1359 = vrot.slane %v1325, %v1358
  %v1360 = vlaneseq
  %v1361 = vshrl.u32 %v1360, 7
  %v1362 = vsub.s32 0, %v1361
  %v1363 = vrot.slane %v1326, %v1362
  %v1364 = vlaneseq
  %v1365 = vshrl.u32 %v1364, 7
  %v1366 = vsub.s32 0, %v1365
  %v1367 = vrot.slane %v1327, %v1366
  %vm1368 = vcmask 1041409
  %v1369 = vsel %vm1368, %v1343, %v1339
  %v1370 = vsel %vm1368, %v1351, %v1347
  %v1371 = vsel %vm1368, %v1359, %v1355
  %v1372 = vsel %vm1368, %v1367, %v1363
  %1377 = vst [vmem:[%s3] sm:$0x3] %v1369
  %1378 = vst [vmem:[%s3 + $0x2] sm:$0x3] %v1370
  %1379 = vst [vmem:[%s3 + $0x4] sm:$0x3] %v1371
  %1380 = vst [vmem:[%s3 + $0x6] sm:$0x3] %v1372
  // Predicated region
  $region14: #{_lambda_.8} parent=0 // pred_check
    _
  $region15: #{_lambda_.8} parent=0 // pred_check_branch
    %1382 = sbr.rel (0) target = $region17
  $region16: #{_lambda_.8} parent=0 // pred_region
    _
  $region17: #{_lambda_.8} parent=0 // pred_fallthru
    _
  // Predicated region
  $region18: #{_lambda_.8} parent=0 // pred_check
    _
  $region19: #{_lambda_.8} parent=0 // pred_check_branch
    %1384 = sbr.rel (0) target = $region21
  $region20: #{_lambda_.8} parent=0 // pred_region
    _
  $region21: #{_lambda_.8} parent=0 // pred_fallthru
    _

// kernel: _lambda_.6
$region0: #{_lambda_.6}
  #allocation0 [shape = 'u32[]', space=smem, size = 0x4, offset = 0x4, fixed_abs, tag = 'smem constant byte address 0x4 - core index']
  #allocation1 [shape = 'u32[144,128]{1,0:T(1,128)}', space=vmem, size = 0x12000, scoped, tag = 'internal scratch']
  #allocation2 [shape = 'f32[1,18,25,3]{3,2,1,0:T(8,128)}', space=vmem, size = 0x48000, scoped, tag = 'scratch operand']
  #allocation3 [shape = 'bf16[256,128]{1,0:T(16,128)(2,1)}', space=vmem, size = 0x10000, scoped, tag = 'scratch operand']
  %s0 = inlined_call_operand.vmem [shape: f32[2,16,16,3], index: 0, kind: input, shape index: {}]
  %s1 = inlined_call_operand.vmem [shape: bf16[128,128], index: 1, kind: input, shape index: {}]
  %s2 = inlined_call_operand.vmem [shape: f32[1,128], index: 2, kind: input, shape index: {}]
  %s3 = inlined_call_operand.vmem [shape: f32[2,8,8,128], index: 3, kind: output, shape index: {}]
  %s4 = sld [smem:[#allocation0]]
  $region45: #{_lambda_.6} parent=0
    _
  %s6 = ssub.s32 1, %s4
  %s7 = scalar_select 0, %s6, %s4
  loop: start=0, step=1, limit=4
  $region2: #{_lambda_.6} parent=0 // loop_pre_header
    _
  $region3: #{_lambda_.6} parent=0 // loop_header
    %s9 = sphi 0, %s13
    %p10 = scmp.ge.s32.totalorder %s9, 4
    %s19 = sphi 0, %s21
    %s22 = sphi 0, %s19
    %s23 = sphi 0, %s22
    %s39 = sphi 0, %s23
    %s43 = sphi 0, %s43
    %s45 = sphi 0, %s43
    %s46 = sphi 0, %s45
    %s60 = sphi 0, %s46
    %s64 = sphi 0, %s64
    %s66 = sphi 0, %s64
    %s67 = sphi 0, %s66
    %s81 = sphi 0, %s67
    %s87 = sphi 0, %s89
    %s90 = sphi 0, %s87
    %s91 = sphi 0, %s90
    %s107 = sphi 0, %s91
  $region4: #{_lambda_.6} parent=0 // loop_header_branch
    %12 = sbr.rel (%p10) target = $region8
  $region5: #{_lambda_.6} parent=0 // loop_body
    %s14 = ssub.s32 %s9, 1
    %s15 = ssub.s32 %s9, 2
    %s16 = sadd.s32 %s9, 1
    %s17 = ssub.s32 %s9, %s16
    %p18 = scmp.eq.s32.totalorder %s17, 0
    %s20 = sadd.s32 %s19, 1
    %s21 = scalar_select %p18, %s19, %s20
    %p24 = pneg %p18
    %p25 = scmp.eq.s32.totalorder %s9, 1
    %p26 = por %p24, %p25
    %p27 = scmp.ne.s32.totalorder %s19, %s22
    %p28 = scmp.eq.s32.totalorder %s9, 0
    %p29 = por %p27, %p28
    %p30 = scmp.ne.s32.totalorder %s19, %s22
    %p31 = scmp.eq.s32.totalorder %s14, 1
    %p32 = por %p30, %p31
    %p33 = scmp.ne.s32.totalorder %s22, %s23
    %p34 = scmp.eq.s32.totalorder %s14, 0
    %p35 = por %p33, %p34
    %p36 = scmp.ne.s32.totalorder %s22, %s23
    %p37 = scmp.eq.s32.totalorder %s15, 1
    %p38 = por %p36, %p37
    %p40 = scmp.ne.s32.totalorder %s23, %s39
    %p41 = scmp.eq.s32.totalorder %s15, 0
    %p42 = por %p40, %p41
    %s44 = sadd.s32 %s43, 1
    %p47 = scmp.eq.s32.totalorder %s9, 1
    %p48 = scmp.ne.s32.totalorder %s43, %s45
    %p49 = scmp.eq.s32.totalorder %s9, 0
    %p50 = por %p48, %p49
    %p51 = scmp.ne.s32.totalorder %s43, %s45
    %p52 = scmp.eq.s32.totalorder %s14, 1
    %p53 = por %p51, %p52
    %p54 = scmp.ne.s32.totalorder %s45, %s46
    %p55 = scmp.eq.s32.totalorder %s14, 0
    %p56 = por %p54, %p55
    %p57 = scmp.ne.s32.totalorder %s45, %s46
    %p58 = scmp.eq.s32.totalorder %s15, 1
    %p59 = por %p57, %p58
    %p61 = scmp.ne.s32.totalorder %s46, %s60
    %p62 = scmp.eq.s32.totalorder %s15, 0
    %p63 = por %p61, %p62
    %s65 = sadd.s32 %s64, 1
    %p68 = scmp.eq.s32.totalorder %s9, 1
    %p69 = scmp.ne.s32.totalorder %s64, %s66
    %p70 = scmp.eq.s32.totalorder %s9, 0
    %p71 = por %p69, %p70
    %p72 = scmp.ne.s32.totalorder %s64, %s66
    %p73 = scmp.eq.s32.totalorder %s14, 1
    %p74 = por %p72, %p73
    %p75 = scmp.ne.s32.totalorder %s66, %s67
    %p76 = scmp.eq.s32.totalorder %s14, 0
    %p77 = por %p75, %p76
    %p78 = scmp.ne.s32.totalorder %s66, %s67
    %p79 = scmp.eq.s32.totalorder %s15, 1
    %p80 = por %p78, %p79
    %p82 = scmp.ne.s32.totalorder %s67, %s81
    %p83 = scmp.eq.s32.totalorder %s15, 0
    %p84 = por %p82, %p83
    %s85 = ssub.s32 %s9, %s16
    %p86 = scmp.eq.s32.totalorder %s85, 0
    %s88 = sadd.s32 %s87, 1
    %s89 = scalar_select %p86, %s87, %s88
    %p92 = pneg %p86
    %p93 = scmp.eq.s32.totalorder %s9, 1
    %p94 = por %p92, %p93
    %p95 = scmp.ne.s32.totalorder %s87, %s90
    %p96 = scmp.eq.s32.totalorder %s9, 0
    %p97 = por %p95, %p96
    %p98 = scmp.ne.s32.totalorder %s87, %s90
    %p99 = scmp.eq.s32.totalorder %s14, 1
    %p100 = por %p98, %p99
    %p101 = scmp.ne.s32.totalorder %s90, %s91
    %p102 = scmp.eq.s32.totalorder %s14, 0
    %p103 = por %p101, %p102
    %p104 = scmp.ne.s32.totalorder %s90, %s91
    %p105 = scmp.eq.s32.totalorder %s15, 1
    %p106 = por %p104, %p105
    %p108 = scmp.ne.s32.totalorder %s91, %s107
    %p109 = scmp.eq.s32.totalorder %s15, 0
    %p110 = por %p108, %p109
    %p111 = scmp.le.s32.totalorder 1, %s9
    %p112 = scmp.lt.s32.totalorder %s9, 3
    %p113 = pnand %p111, %p112
    %p114 = pneg %p113
    // Predicated region
    $region9: #{_lambda_.6} parent=5 // pred_check
      _
    $region10: #{_lambda_.6} parent=5 // pred_check_branch
      %116 = sbr.rel (%p113) target = $region12
    $region11: #{_lambda_.6} parent=5 // pred_region
      %s117 = ssub.s32 %s9, 1
      // Predicated region
      $region13: #{_lambda_.6} parent=11 // pred_check
        %p118 = pneg %p56
      $region14: #{_lambda_.6} parent=11 // pred_check_branch
        %120 = sbr.rel (%p118) target = $region16
      $region15: #{_lambda_.6} parent=11 // pred_region
        _
      $region16: #{_lambda_.6} parent=11 // pred_fallthru
        _
      // Predicated region
      $region17: #{_lambda_.6} parent=11 // pred_check
        %p121 = pneg %p77
      $region18: #{_lambda_.6} parent=11 // pred_check_branch
        %123 = sbr.rel (%p121) target = $region20
      $region19: #{_lambda_.6} parent=11 // pred_region
        _
      $region20: #{_lambda_.6} parent=11 // pred_fallthru
        _
    $region12: #{_lambda_.6} parent=5 // pred_fallthru
      _
    %p124 = scmp.lt.s32.totalorder %s9, 2
    // Predicated region
    $region21: #{_lambda_.6} parent=5 // pred_check
      %p125 = pneg %p124
    $region22: #{_lambda_.6} parent=5 // pred_check_branch
      %127 = sbr.rel (%p125) target = $region24
    $region23: #{_lambda_.6} parent=5 // pred_region
      // Predicated region
      $region25: #{_lambda_.6} parent=23 // pred_check
        %p128 = pneg %p29
      $region26: #{_lambda_.6} parent=23 // pred_check_branch
        %130 = sbr.rel (%p128) target = $region28
      $region27: #{_lambda_.6} parent=23 // pred_region
        %p131 = scmp.lt.s32.totalorder %s9, 1
        %s132 = scalar_select %p131, %s9, 1
        %s133 = smul.addr %s132, 32
        %s134 = smul.addr %s133, 8
        %s135 = scalar_lea.vmem %s0, %s134
      $region28: #{_lambda_.6} parent=23 // pred_fallthru
        _
    $region24: #{_lambda_.6} parent=5 // pred_fallthru
      _
    %p136 = scmp.le.s32.totalorder 1, %s9
    %p137 = scmp.lt.s32.totalorder %s9, 3
    %p138 = pnand %p136, %p137
    %p139 = pneg %p138
    // Predicated region
    $region29: #{_lambda_.6} parent=5 // pred_check
      _
    $region30: #{_lambda_.6} parent=5 // pred_check_branch
      %141 = sbr.rel (%p138) target = $region32
    $region31: #{_lambda_.6} parent=5 // pred_region
      %s142 = ssub.s32 %s9, 1
      %p143 = scmp.lt.s32.totalorder %s14, 1
      %s144 = scalar_select %p143, %s14, 1
      %s145 = smul.addr %s144, 32
      %s146 = smul.addr %s145, 8
      %s147 = scalar_lea.vmem %s0, %s146
      %p148 = pneg %p35
      %p149 = pneg %p32
      %p150 = pneg %p56
      %p151 = pneg %p53
      %p152 = pneg %p77
      %p153 = pneg %p74
      %p154 = pneg %p103
      %p155 = pneg %p100
      %p156 = scmp.lt.s32.totalorder %s14, 1
      %s157 = scalar_select %p156, %s14, 1
      %s158 = smul.addr %s157, 8
      %s159 = smul.addr %s158, 8
      %s160 = scalar_lea.vmem %s3, %s159
      %p161 = scmp.lt.s32.totalorder %s14, 1
      %s162 = scalar_select %p161, %s14, 1
      %s163 = smul.addr %s162, 32
      %s164 = smul.addr %s163, 8
      %s165 = scalar_lea.vmem %s0, %s164
      %p166 = scmp.lt.s32.totalorder %s14, 1
      %s167 = scalar_select %p166, %s14, 1
      %s168 = smul.addr %s167, 8
      %s169 = smul.addr %s168, 8
      %s170 = scalar_lea.vmem %s3, %s169
      %vm172 = vcmask 23552
      %173 = vst.msk [vmem:[#allocation2] sm:$0xff] %vm172, 0.0
      %174 = vst.msk [vmem:[#allocation2 + $0x8] sm:$0xff] %vm172, 0.0
      %175 = vst.msk [vmem:[#allocation2 + $0x10] sm:$0xff] %vm172, 0.0
      %vm176 = vcmask 16384
      %177 = vst.msk [vmem:[#allocation2 + $0x18] sm:$0x1] %vm176, 0.0
      %s178 = scalar_lea.vmem [#allocation2], 544
      %179 = vst.msk [vmem:[%s178] sm:$0xff] %vm172, 0.0
      %180 = vst.msk [vmem:[%s178 + $0x8] sm:$0xff] %vm172, 0.0
      %181 = vst.msk [vmem:[%s178 + $0x10] sm:$0xff] %vm172, 0.0
      %182 = vst.msk [vmem:[%s178 + $0x18] sm:$0x1] %vm176, 0.0
      %183 = vst.msk [vmem:[#allocation2 + $0x7] sm:$0x1] %vm176, 0.0
      %184 = vst.msk [vmem:[#allocation2 + $0x27] sm:$0x1] %vm176, 0.0
      %185 = vst.msk [vmem:[#allocation2 + $0x47] sm:$0x1] %vm176, 0.0
      %186 = vst.msk [vmem:[#allocation2 + $0x67] sm:$0x1] %vm176, 0.0
      %187 = vst.msk [vmem:[#allocation2 + $0x87] sm:$0x1] %vm176, 0.0
      %188 = vst.msk [vmem:[#allocation2 + $0xa7] sm:$0x1] %vm176, 0.0
      %189 = vst.msk [vmem:[#allocation2 + $0xc7] sm:$0x1] %vm176, 0.0
      %190 = vst.msk [vmem:[#allocation2 + $0xe7] sm:$0x1] %vm176, 0.0
      %191 = vst.msk [vmem:[#allocation2 + $0x107] sm:$0x1] %vm176, 0.0
      %192 = vst.msk [vmem:[#allocation2 + $0x127] sm:$0x1] %vm176, 0.0
      %193 = vst.msk [vmem:[#allocation2 + $0x147] sm:$0x1] %vm176, 0.0
      %194 = vst.msk [vmem:[#allocation2 + $0x167] sm:$0x1] %vm176, 0.0
      %195 = vst.msk [vmem:[#allocation2 + $0x187] sm:$0x1] %vm176, 0.0
      %196 = vst.msk [vmem:[#allocation2 + $0x1a7] sm:$0x1] %vm176, 0.0
      %197 = vst.msk [vmem:[#allocation2 + $0x1c7] sm:$0x1] %vm176, 0.0
      %198 = vst.msk [vmem:[#allocation2 + $0x1e7] sm:$0x1] %vm176, 0.0
      %199 = vst.msk [vmem:[#allocation2 + $0x207] sm:$0x1] %vm176, 0.0
      %200 = vst.msk [vmem:[#allocation2 + $0x227] sm:$0x1] %vm176, 0.0
      %201 = vst.msk [vmem:[#allocation2 + $0x18] sm:$0x1] %vm176, 0.0
      %202 = vst.msk [vmem:[#allocation2 + $0x38] sm:$0x1] %vm176, 0.0
      %203 = vst.msk [vmem:[#allocation2 + $0x58] sm:$0x1] %vm176, 0.0
      %204 = vst.msk [vmem:[#allocation2 + $0x78] sm:$0x1] %vm176, 0.0
      %205 = vst.msk [vmem:[#allocation2 + $0x98] sm:$0x1] %vm176, 0.0
      %206 = vst.msk [vmem:[#allocation2 + $0xb8] sm:$0x1] %vm176, 0.0
      %207 = vst.msk [vmem:[#allocation2 + $0xd8] sm:$0x1] %vm176, 0.0
      %208 = vst.msk [vmem:[#allocation2 + $0xf8] sm:$0x1] %vm176, 0.0
      %209 = vst.msk [vmem:[#allocation2 + $0x118] sm:$0x1] %vm176, 0.0
      %210 = vst.msk [vmem:[#allocation2 + $0x138] sm:$0x1] %vm176, 0.0
      %211 = vst.msk [vmem:[#allocation2 + $0x158] sm:$0x1] %vm176, 0.0
      %212 = vst.msk [vmem:[#allocation2 + $0x178] sm:$0x1] %vm176, 0.0
      %213 = vst.msk [vmem:[#allocation2 + $0x198] sm:$0x1] %vm176, 0.0
      %214 = vst.msk [vmem:[#allocation2 + $0x1b8] sm:$0x1] %vm176, 0.0
      %215 = vst.msk [vmem:[#allocation2 + $0x1d8] sm:$0x1] %vm176, 0.0
      %216 = vst.msk [vmem:[#allocation2 + $0x1f8] sm:$0x1] %vm176, 0.0
      %217 = vst.msk [vmem:[#allocation2 + $0x218] sm:$0x1] %vm176, 0.0
      %218 = vst.msk [vmem:[#allocation2 + $0x238] sm:$0x1] %vm176, 0.0
      %v219 = vld [vmem:[%s165] sm:$0xff]
      %v220 = vld [vmem:[%s165 + $0x8] sm:$0xff]
      %v221 = vld [vmem:[%s165 + $0x10] sm:$0xff]
      %v222 = vld [vmem:[%s165 + $0x18] sm:$0xff]
      %v223 = vld [vmem:[%s165 + $0x20] sm:$0xff]
      %v224 = vld [vmem:[%s165 + $0x28] sm:$0xff]
      %v225 = vld [vmem:[%s165 + $0x30] sm:$0xff]
      %v226 = vld [vmem:[%s165 + $0x38] sm:$0xff]
      %v227 = vld [vmem:[%s165 + $0x40] sm:$0xff]
      %v228 = vld [vmem:[%s165 + $0x48] sm:$0xff]
      %v229 = vld [vmem:[%s165 + $0x50] sm:$0xff]
      %v230 = vld [vmem:[%s165 + $0x58] sm:$0xff]
      %v231 = vld [vmem:[%s165 + $0x60] sm:$0xff]
      %v232 = vld [vmem:[%s165 + $0x68] sm:$0xff]
      %v233 = vld [vmem:[%s165 + $0x70] sm:$0xff]
      %v234 = vld [vmem:[%s165 + $0x78] sm:$0xff]
      %v235 = vld [vmem:[%s165 + $0x80] sm:$0xff]
      %v236 = vld [vmem:[%s165 + $0x88] sm:$0xff]
      %v237 = vld [vmem:[%s165 + $0x90] sm:$0xff]
      %v238 = vld [vmem:[%s165 + $0x98] sm:$0xff]
      %v239 = vld [vmem:[%s165 + $0xa0] sm:$0xff]
      %v240 = vld [vmem:[%s165 + $0xa8] sm:$0xff]
      %v241 = vld [vmem:[%s165 + $0xb0] sm:$0xff]
      %v242 = vld [vmem:[%s165 + $0xb8] sm:$0xff]
      %v243 = vld [vmem:[%s165 + $0xc0] sm:$0xff]
      %v244 = vld [vmem:[%s165 + $0xc8] sm:$0xff]
      %v245 = vld [vmem:[%s165 + $0xd0] sm:$0xff]
      %v246 = vld [vmem:[%s165 + $0xd8] sm:$0xff]
      %v247 = vld [vmem:[%s165 + $0xe0] sm:$0xff]
      %v248 = vld [vmem:[%s165 + $0xe8] sm:$0xff]
      %v249 = vld [vmem:[%s165 + $0xf0] sm:$0xff]
      %v250 = vld [vmem:[%s165 + $0xf8] sm:$0xff]
      %s251 = scalar_lea.vmem [#allocation2], 32
      %252 = vst.msk [vmem:[%s251 + $0x8] sm:$0xff] %vm172, %v219
      %253 = vst.msk [vmem:[%s251 + $0x10] sm:$0xff] %vm172, %v220
      %254 = vst.msk [vmem:[%s251 + $0x28] sm:$0xff] %vm172, %v221
      %255 = vst.msk [vmem:[%s251 + $0x30] sm:$0xff] %vm172, %v222
      %256 = vst.msk [vmem:[%s251 + $0x48] sm:$0xff] %vm172, %v223
      %257 = vst.msk [vmem:[%s251 + $0x50] sm:$0xff] %vm172, %v224
      %258 = vst.msk [vmem:[%s251 + $0x68] sm:$0xff] %vm172, %v225
      %259 = vst.msk [vmem:[%s251 + $0x70] sm:$0xff] %vm172, %v226
      %260 = vst.msk [vmem:[%s251 + $0x88] sm:$0xff] %vm172, %v227
      %261 = vst.msk [vmem:[%s251 + $0x90] sm:$0xff] %vm172, %v228
      %262 = vst.msk [vmem:[%s251 + $0xa8] sm:$0xff] %vm172, %v229
      %263 = vst.msk [vmem:[%s251 + $0xb0] sm:$0xff] %vm172, %v230
      %264 = vst.msk [vmem:[%s251 + $0xc8] sm:$0xff] %vm172, %v231
      %265 = vst.msk [vmem:[%s251 + $0xd0] sm:$0xff] %vm172, %v232
      %266 = vst.msk [vmem:[%s251 + $0xe8] sm:$0xff] %vm172, %v233
      %267 = vst.msk [vmem:[%s251 + $0xf0] sm:$0xff] %vm172, %v234
      %268 = vst.msk [vmem:[%s251 + $0x108] sm:$0xff] %vm172, %v235
      %269 = vst.msk [vmem:[%s251 + $0x110] sm:$0xff] %vm172, %v236
      %270 = vst.msk [vmem:[%s251 + $0x128] sm:$0xff] %vm172, %v237
      %271 = vst.msk [vmem:[%s251 + $0x130] sm:$0xff] %vm172, %v238
      %272 = vst.msk [vmem:[%s251 + $0x148] sm:$0xff] %vm172, %v239
      %273 = vst.msk [vmem:[%s251 + $0x150] sm:$0xff] %vm172, %v240
      %274 = vst.msk [vmem:[%s251 + $0x168] sm:$0xff] %vm172, %v241
      %275 = vst.msk [vmem:[%s251 + $0x170] sm:$0xff] %vm172, %v242
      %276 = vst.msk [vmem:[%s251 + $0x188] sm:$0xff] %vm172, %v243
      %277 = vst.msk [vmem:[%s251 + $0x190] sm:$0xff] %vm172, %v244
      %278 = vst.msk [vmem:[%s251 + $0x1a8] sm:$0xff] %vm172, %v245
      %279 = vst.msk [vmem:[%s251 + $0x1b0] sm:$0xff] %vm172, %v246
      %280 = vst.msk [vmem:[%s251 + $0x1c8] sm:$0xff] %vm172, %v247
      %281 = vst.msk [vmem:[%s251 + $0x1d0] sm:$0xff] %vm172, %v248
      %282 = vst.msk [vmem:[%s251 + $0x1e8] sm:$0xff] %vm172, %v249
      %283 = vst.msk [vmem:[%s251 + $0x1f0] sm:$0xff] %vm172, %v250
      %vm284 = vcmask 1047768
      %285 = vst.msk [vmem:[#allocation3] sm:$0xff] %vm284, 0
      %286 = vst.msk [vmem:[#allocation3 + $0x8] sm:$0xff] %vm284, 0
      %287 = vst.msk [vmem:[#allocation3 + $0x10] sm:$0xff] %vm284, 0
      %288 = vst.msk [vmem:[#allocation3 + $0x18] sm:$0xff] %vm284, 0
      %289 = vst.msk [vmem:[#allocation3 + $0x20] sm:$0xff] %vm284, 0
      %290 = vst.msk [vmem:[#allocation3 + $0x28] sm:$0xff] %vm284, 0
      %291 = vst.msk [vmem:[#allocation3 + $0x30] sm:$0xff] %vm284, 0
      %292 = vst.msk [vmem:[#allocation3 + $0x38] sm:$0xff] %vm284, 0
      %293 = vst.msk [vmem:[#allocation3 + $0x40] sm:$0xff] %vm284, 0
      %294 = vst.msk [vmem:[#allocation3 + $0x48] sm:$0xff] %vm284, 0
      %295 = vst.msk [vmem:[#allocation3 + $0x50] sm:$0xff] %vm284, 0
      %296 = vst.msk [vmem:[#allocation3 + $0x58] sm:$0xff] %vm284, 0
      %297 = vst.msk [vmem:[#allocation3 + $0x60] sm:$0xff] %vm284, 0
      %298 = vst.msk [vmem:[#allocation3 + $0x68] sm:$0xff] %vm284, 0
      %299 = vst.msk [vmem:[#allocation3 + $0x70] sm:$0xff] %vm284, 0
      %300 = vst.msk [vmem:[#allocation3 + $0x78] sm:$0xff] %vm284, 0
      %v301 = vld [vmem:[#allocation2 + $0x7] sm:$0xff]
      %v302 = vld [vmem:[#allocation2 + $0xf] sm:$0xff]
      %v303 = vld [vmem:[#allocation2 + $0x27] sm:$0xff]
      %v304 = vld [vmem:[#allocation2 + $0x2f] sm:$0xff]
      %v305 = vld [vmem:[#allocation2 + $0x47] sm:$0xff]
      %v306 = vld [vmem:[#allocation2 + $0x4f] sm:$0xff]
      %v307 = vld [vmem:[#allocation2 + $0x67] sm:$0xff]
      %v308 = vld [vmem:[#allocation2 + $0x6f] sm:$0xff]
      %v309 = vld [vmem:[#allocation2 + $0x87] sm:$0xff]
      %v310 = vld [vmem:[#allocation2 + $0x8f] sm:$0xff]
      %v311 = vld [vmem:[#allocation2 + $0xa7] sm:$0xff]
      %v312 = vld [vmem:[#allocation2 + $0xaf] sm:$0xff]
      %v313 = vld [vmem:[#allocation2 + $0xc7] sm:$0xff]
      %v314 = vld [vmem:[#allocation2 + $0xcf] sm:$0xff]
      %v315 = vld [vmem:[#allocation2 + $0xe7] sm:$0xff]
      %v316 = vld [vmem:[#allocation2 + $0xef] sm:$0xff]
      %v317 = vld [vmem:[#allocation2 + $0x107] sm:$0xff]
      %v318 = vld [vmem:[#allocation2 + $0x10f] sm:$0xff]
      %v319 = vld [vmem:[#allocation2 + $0x127] sm:$0xff]
      %v320 = vld [vmem:[#allocation2 + $0x12f] sm:$0xff]
      %v321 = vld [vmem:[#allocation2 + $0x147] sm:$0xff]
      %v322 = vld [vmem:[#allocation2 + $0x14f] sm:$0xff]
      %v323 = vld [vmem:[#allocation2 + $0x167] sm:$0xff]
      %v324 = vld [vmem:[#allocation2 + $0x16f] sm:$0xff]
      %v325 = vld [vmem:[#allocation2 + $0x187] sm:$0xff]
      %v326 = vld [vmem:[#allocation2 + $0x18f] sm:$0xff]
      %v327 = vld [vmem:[#allocation2 + $0x1a7] sm:$0xff]
      %v328 = vld [vmem:[#allocation2 + $0x1af] sm:$0xff]
      %v329 = vld [vmem:[#allocation2 + $0x1c7] sm:$0xff]
      %v330 = vld [vmem:[#allocation2 + $0x1cf] sm:$0xff]
      %v331 = vld [vmem:[#allocation2 + $0x1e7] sm:$0xff]
      %v332 = vld [vmem:[#allocation2 + $0x1ef] sm:$0xff]
      %v333 = vpack.c.bf16 %v302, %v301
      %v334 = vpack.c.bf16 %v304, %v303
      %v335 = vpack.c.bf16 %v306, %v305
      %v336 = vpack.c.bf16 %v308, %v307
      %v337 = vpack.c.bf16 %v310, %v309
      %v338 = vpack.c.bf16 %v312, %v311
      %v339 = vpack.c.bf16 %v314, %v313
      %v340 = vpack.c.bf16 %v316, %v315
      %v341 = vpack.c.bf16 %v318, %v317
      %v342 = vpack.c.bf16 %v320, %v319
      %v343 = vpack.c.bf16 %v322, %v321
      %v344 = vpack.c.bf16 %v324, %v323
      %v345 = vpack.c.bf16 %v326, %v325
      %v346 = vpack.c.bf16 %v328, %v327
      %v347 = vpack.c.bf16 %v330, %v329
      %v348 = vpack.c.bf16 %v332, %v331
      %349 = vst.msk [vmem:[#allocation3] sm:$0xff] %vm172, %v333
      %350 = vst.msk [vmem:[#allocation3 + $0x8] sm:$0xff] %vm172, %v334
      %351 = vst.msk [vmem:[#allocation3 + $0x10] sm:$0xff] %vm172, %v335
      %352 = vst.msk [vmem:[#allocation3 + $0x18] sm:$0xff] %vm172, %v336
      %353 = vst.msk [vmem:[#allocation3 + $0x20] sm:$0xff] %vm172, %v337
      %354 = vst.msk [vmem:[#allocation3 + $0x28] sm:$0xff] %vm172, %v338
      %355 = vst.msk [vmem:[#allocation3 + $0x30] sm:$0xff] %vm172, %v339
      %356 = vst.msk [vmem:[#allocation3 + $0x38] sm:$0xff] %vm172, %v340
      %357 = vst.msk [vmem:[#allocation3 + $0x40] sm:$0xff] %vm172, %v341
      %358 = vst.msk [vmem:[#allocation3 + $0x48] sm:$0xff] %vm172, %v342
      %359 = vst.msk [vmem:[#allocation3 + $0x50] sm:$0xff] %vm172, %v343
      %360 = vst.msk [vmem:[#allocation3 + $0x58] sm:$0xff] %vm172, %v344
      %361 = vst.msk [vmem:[#allocation3 + $0x60] sm:$0xff] %vm172, %v345
      %362 = vst.msk [vmem:[#allocation3 + $0x68] sm:$0xff] %vm172, %v346
      %363 = vst.msk [vmem:[#allocation3 + $0x70] sm:$0xff] %vm172, %v347
      %364 = vst.msk [vmem:[#allocation3 + $0x78] sm:$0xff] %vm172, %v348
      %v365 = vld [vmem:[#allocation2 + $0x8] sm:$0xff]
      %v366 = vld [vmem:[#allocation2 + $0x10] sm:$0xff]
      %v367 = vld [vmem:[#allocation2 + $0x28] sm:$0xff]
      %v368 = vld [vmem:[#allocation2 + $0x30] sm:$0xff]
      %v369 = vld [vmem:[#allocation2 + $0x48] sm:$0xff]
      %v370 = vld [vmem:[#allocation2 + $0x50] sm:$0xff]
      %v371 = vld [vmem:[#allocation2 + $0x68] sm:$0xff]
      %v372 = vld [vmem:[#allocation2 + $0x70] sm:$0xff]
      %v373 = vld [vmem:[#allocation2 + $0x88] sm:$0xff]
      %v374 = vld [vmem:[#allocation2 + $0x90] sm:$0xff]
      %v375 = vld [vmem:[#allocation2 + $0xa8] sm:$0xff]
      %v376 = vld [vmem:[#allocation2 + $0xb0] sm:$0xff]
      %v377 = vld [vmem:[#allocation2 + $0xc8] sm:$0xff]
      %v378 = vld [vmem:[#allocation2 + $0xd0] sm:$0xff]
      %v379 = vld [vmem:[#allocation2 + $0xe8] sm:$0xff]
      %v380 = vld [vmem:[#allocation2 + $0xf0] sm:$0xff]
      %v381 = vld [vmem:[#allocation2 + $0x108] sm:$0xff]
      %v382 = vld [vmem:[#allocation2 + $0x110] sm:$0xff]
      %v383 = vld [vmem:[#allocation2 + $0x128] sm:$0xff]
      %v384 = vld [vmem:[#allocation2 + $0x130] sm:$0xff]
      %v385 = vld [vmem:[#allocation2 + $0x148] sm:$0xff]
      %v386 = vld [vmem:[#allocation2 + $0x150] sm:$0xff]
      %v387 = vld [vmem:[#allocation2 + $0x168] sm:$0xff]
      %v388 = vld [vmem:[#allocation2 + $0x170] sm:$0xff]
      %v389 = vld [vmem:[#allocation2 + $0x188] sm:$0xff]
      %v390 = vld [vmem:[#allocation2 + $0x190] sm:$0xff]
      %v391 = vld [vmem:[#allocation2 + $0x1a8] sm:$0xff]
      %v392 = vld [vmem:[#allocation2 + $0x1b0] sm:$0xff]
      %v393 = vld [vmem:[#allocation2 + $0x1c8] sm:$0xff]
      %v394 = vld [vmem:[#allocation2 + $0x1d0] sm:$0xff]
      %v395 = vld [vmem:[#allocation2 + $0x1e8] sm:$0xff]
      %v396 = vld [vmem:[#allocation2 + $0x1f0] sm:$0xff]
      %v397 = vpack.c.bf16 %v366, %v365
      %v398 = vpack.c.bf16 %v368, %v367
      %v399 = vpack.c.bf16 %v370, %v369
      %v400 = vpack.c.bf16 %v372, %v371
      %v401 = vpack.c.bf16 %v374, %v373
      %v402 = vpack.c.bf16 %v376, %v375
      %v403 = vpack.c.bf16 %v378, %v377
      %v404 = vpack.c.bf16 %v380, %v379
      %v405 = vpack.c.bf16 %v382, %v381
      %v406 = vpack.c.bf16 %v384, %v383
      %v407 = vpack.c.bf16 %v386, %v385
      %v408 = vpack.c.bf16 %v388, %v387
      %v409 = vpack.c.bf16 %v390, %v389
      %v410 = vpack.c.bf16 %v392, %v391
      %v411 = vpack.c.bf16 %v394, %v393
      %v412 = vpack.c.bf16 %v396, %v395
      %429 = vrot.lane.b32.xlu0 %v397, 3
      %v430 = vpop.permute.xlu0 %429
      %431 = vrot.lane.b32.xlu0 %v398, 3
      %v432 = vpop.permute.xlu0 %431
      %433 = vrot.lane.b32.xlu0 %v399, 3
      %v434 = vpop.permute.xlu0 %433
      %435 = vrot.lane.b32.xlu0 %v400, 3
      %v436 = vpop.permute.xlu0 %435
      %437 = vrot.lane.b32.xlu0 %v401, 3
      %v438 = vpop.permute.xlu0 %437
      %439 = vrot.lane.b32.xlu0 %v402, 3
      %v440 = vpop.permute.xlu0 %439
      %441 = vrot.lane.b32.xlu0 %v403, 3
      %v442 = vpop.permute.xlu0 %441
      %443 = vrot.lane.b32.xlu0 %v404, 3
      %v444 = vpop.permute.xlu0 %443
      %445 = vrot.lane.b32.xlu0 %v405, 3
      %v446 = vpop.permute.xlu0 %445
      %447 = vrot.lane.b32.xlu0 %v406, 3
      %v448 = vpop.permute.xlu0 %447
      %449 = vrot.lane.b32.xlu0 %v407, 3
      %v450 = vpop.permute.xlu0 %449
      %451 = vrot.lane.b32.xlu0 %v408, 3
      %v452 = vpop.permute.xlu0 %451
      %453 = vrot.lane.b32.xlu0 %v409, 3
      %v454 = vpop.permute.xlu0 %453
      %455 = vrot.lane.b32.xlu0 %v410, 3
      %v456 = vpop.permute.xlu0 %455
      %457 = vrot.lane.b32.xlu0 %v411, 3
      %v458 = vpop.permute.xlu0 %457
      %459 = vrot.lane.b32.xlu0 %v412, 3
      %v460 = vpop.permute.xlu0 %459
      %vm477 = vcmask 48152
      %478 = vst.msk [vmem:[#allocation3] sm:$0xff] %vm477, %v430
      %479 = vst.msk [vmem:[#allocation3 + $0x8] sm:$0xff] %vm477, %v432
      %480 = vst.msk [vmem:[#allocation3 + $0x10] sm:$0xff] %vm477, %v434
      %481 = vst.msk [vmem:[#allocation3 + $0x18] sm:$0xff] %vm477, %v436
      %482 = vst.msk [vmem:[#allocation3 + $0x20] sm:$0xff] %vm477, %v438
      %483 = vst.msk [vmem:[#allocation3 + $0x28] sm:$0xff] %vm477, %v440
      %484 = vst.msk [vmem:[#allocation3 + $0x30] sm:$0xff] %vm477, %v442
      %485 = vst.msk [vmem:[#allocation3 + $0x38] sm:$0xff] %vm477, %v444
      %486 = vst.msk [vmem:[#allocation3 + $0x40] sm:$0xff] %vm477, %v446
      %487 = vst.msk [vmem:[#allocation3 + $0x48] sm:$0xff] %vm477, %v448
      %488 = vst.msk [vmem:[#allocation3 + $0x50] sm:$0xff] %vm477, %v450
      %489 = vst.msk [vmem:[#allocation3 + $0x58] sm:$0xff] %vm477, %v452
      %490 = vst.msk [vmem:[#allocation3 + $0x60] sm:$0xff] %vm477, %v454
      %491 = vst.msk [vmem:[#allocation3 + $0x68] sm:$0xff] %vm477, %v456
      %492 = vst.msk [vmem:[#allocation3 + $0x70] sm:$0xff] %vm477, %v458
      %493 = vst.msk [vmem:[#allocation3 + $0x78] sm:$0xff] %vm477, %v460
      %v494 = vld [vmem:[#allocation2 + $0x9] sm:$0xff]
      %v495 = vld [vmem:[#allocation2 + $0x11] sm:$0xff]
      %v496 = vld [vmem:[#allocation2 + $0x29] sm:$0xff]
      %v497 = vld [vmem:[#allocation2 + $0x31] sm:$0xff]
      %v498 = vld [vmem:[#allocation2 + $0x49] sm:$0xff]
      %v499 = vld [vmem:[#allocation2 + $0x51] sm:$0xff]
      %v500 = vld [vmem:[#allocation2 + $0x69] sm:$0xff]
      %v501 = vld [vmem:[#allocation2 + $0x71] sm:$0xff]
      %v502 = vld [vmem:[#allocation2 + $0x89] sm:$0xff]
      %v503 = vld [vmem:[#allocation2 + $0x91] sm:$0xff]
      %v504 = vld [vmem:[#allocation2 + $0xa9] sm:$0xff]
      %v505 = vld [vmem:[#allocation2 + $0xb1] sm:$0xff]
      %v506 = vld [vmem:[#allocation2 + $0xc9] sm:$0xff]
      %v507 = vld [vmem:[#allocation2 + $0xd1] sm:$0xff]
      %v508 = vld [vmem:[#allocation2 + $0xe9] sm:$0xff]
      %v509 = vld [vmem:[#allocation2 + $0xf1] sm:$0xff]
      %v510 = vld [vmem:[#allocation2 + $0x109] sm:$0xff]
      %v511 = vld [vmem:[#allocation2 + $0x111] sm:$0xff]
      %v512 = vld [vmem:[#allocation2 + $0x129] sm:$0xff]
      %v513 = vld [vmem:[#allocation2 + $0x131] sm:$0xff]
      %v514 = vld [vmem:[#allocation2 + $0x149] sm:$0xff]
      %v515 = vld [vmem:[#allocation2 + $0x151] sm:$0xff]
      %v516 = vld [vmem:[#allocation2 + $0x169] sm:$0xff]
      %v517 = vld [vmem:[#allocation2 + $0x171] sm:$0xff]
      %v518 = vld [vmem:[#allocation2 + $0x189] sm:$0xff]
      %v519 = vld [vmem:[#allocation2 + $0x191] sm:$0xff]
      %v520 = vld [vmem:[#allocation2 + $0x1a9] sm:$0xff]
      %v521 = vld [vmem:[#allocation2 + $0x1b1] sm:$0xff]
      %v522 = vld [vmem:[#allocation2 + $0x1c9] sm:$0xff]
      %v523 = vld [vmem:[#allocation2 + $0x1d1] sm:$0xff]
      %v524 = vld [vmem:[#allocation2 + $0x1e9] sm:$0xff]
      %v525 = vld [vmem:[#allocation2 + $0x1f1] sm:$0xff]
      %v526 = vpack.c.bf16 %v495, %v494
      %v527 = vpack.c.bf16 %v497, %v496
      %v528 = vpack.c.bf16 %v499, %v498
      %v529 = vpack.c.bf16 %v501, %v500
      %v530 = vpack.c.bf16 %v503, %v502
      %v531 = vpack.c.bf16 %v505, %v504
      %v532 = vpack.c.bf16 %v507, %v506
      %v533 = vpack.c.bf16 %v509, %v508
      %v534 = vpack.c.bf16 %v511, %v510
      %v535 = vpack.c.bf16 %v513, %v512
      %v536 = vpack.c.bf16 %v515, %v514
      %v537 = vpack.c.bf16 %v517, %v516
      %v538 = vpack.c.bf16 %v519, %v518
      %v539 = vpack.c.bf16 %v521, %v520
      %v540 = vpack.c.bf16 %v523, %v522
      %v541 = vpack.c.bf16 %v525, %v524
      %558 = vrot.lane.b32.xlu0 %v526, 6
      %v559 = vpop.permute.xlu0 %558
      %560 = vrot.lane.b32.xlu0 %v527, 6
      %v561 = vpop.permute.xlu0 %560
      %562 = vrot.lane.b32.xlu0 %v528, 6
      %v563 = vpop.permute.xlu0 %562
      %564 = vrot.lane.b32.xlu0 %v529, 6
      %v565 = vpop.permute.xlu0 %564
      %566 = vrot.lane.b32.xlu0 %v530, 6
      %v567 = vpop.permute.xlu0 %566
      %568 = vrot.lane.b32.xlu0 %v531, 6
      %v569 = vpop.permute.xlu0 %568
      %570 = vrot.lane.b32.xlu0 %v532, 6
      %v571 = vpop.permute.xlu0 %570
      %572 = vrot.lane.b32.xlu0 %v533, 6
      %v573 = vpop.permute.xlu0 %572
      %574 = vrot.lane.b32.xlu0 %v534, 6
      %v575 = vpop.permute.xlu0 %574
      %576 = vrot.lane.b32.xlu0 %v535, 6
      %v577 = vpop.permute.xlu0 %576
      %578 = vrot.lane.b32.xlu0 %v536, 6
      %v579 = vpop.permute.xlu0 %578
      %580 = vrot.lane.b32.xlu0 %v537, 6
      %v581 = vpop.permute.xlu0 %580
      %582 = vrot.lane.b32.xlu0 %v538, 6
      %v583 = vpop.permute.xlu0 %582
      %584 = vrot.lane.b32.xlu0 %v539, 6
      %v585 = vpop.permute.xlu0 %584
      %586 = vrot.lane.b32.xlu0 %v540, 6
      %v587 = vpop.permute.xlu0 %586
      %588 = vrot.lane.b32.xlu0 %v541, 6
      %v589 = vpop.permute.xlu0 %588
      %vm606 = vcmask 72752
      %607 = vst.msk [vmem:[#allocation3] sm:$0xff] %vm606, %v559
      %608 = vst.msk [vmem:[#allocation3 + $0x8] sm:$0xff] %vm606, %v561
      %609 = vst.msk [vmem:[#allocation3 + $0x10] sm:$0xff] %vm606, %v563
      %610 = vst.msk [vmem:[#allocation3 + $0x18] sm:$0xff] %vm606, %v565
      %611 = vst.msk [vmem:[#allocation3 + $0x20] sm:$0xff] %vm606, %v567
      %612 = vst.msk [vmem:[#allocation3 + $0x28] sm:$0xff] %vm606, %v569
      %613 = vst.msk [vmem:[#allocation3 + $0x30] sm:$0xff] %vm606, %v571
      %614 = vst.msk [vmem:[#allocation3 + $0x38] sm:$0xff] %vm606, %v573
      %615 = vst.msk [vmem:[#allocation3 + $0x40] sm:$0xff] %vm606, %v575
      %616 = vst.msk [vmem:[#allocation3 + $0x48] sm:$0xff] %vm606, %v577
      %617 = vst.msk [vmem:[#allocation3 + $0x50] sm:$0xff] %vm606, %v579
      %618 = vst.msk [vmem:[#allocation3 + $0x58] sm:$0xff] %vm606, %v581
      %619 = vst.msk [vmem:[#allocation3 + $0x60] sm:$0xff] %vm606, %v583
      %620 = vst.msk [vmem:[#allocation3 + $0x68] sm:$0xff] %vm606, %v585
      %621 = vst.msk [vmem:[#allocation3 + $0x70] sm:$0xff] %vm606, %v587
      %622 = vst.msk [vmem:[#allocation3 + $0x78] sm:$0xff] %vm606, %v589
      %v623 = vld [vmem:[%s251 + $0x7] sm:$0xff]
      %v624 = vld [vmem:[%s251 + $0xf] sm:$0xff]
      %v625 = vld [vmem:[%s251 + $0x27] sm:$0xff]
      %v626 = vld [vmem:[%s251 + $0x2f] sm:$0xff]
      %v627 = vld [vmem:[%s251 + $0x47] sm:$0xff]
      %v628 = vld [vmem:[%s251 + $0x4f] sm:$0xff]
      %v629 = vld [vmem:[%s251 + $0x67] sm:$0xff]
      %v630 = vld [vmem:[%s251 + $0x6f] sm:$0xff]
      %v631 = vld [vmem:[%s251 + $0x87] sm:$0xff]
      %v632 = vld [vmem:[%s251 + $0x8f] sm:$0xff]
      %v633 = vld [vmem:[%s251 + $0xa7] sm:$0xff]
      %v634 = vld [vmem:[%s251 + $0xaf] sm:$0xff]
      %v635 = vld [vmem:[%s251 + $0xc7] sm:$0xff]
      %v636 = vld [vmem:[%s251 + $0xcf] sm:$0xff]
      %v637 = vld [vmem:[%s251 + $0xe7] sm:$0xff]
      %v638 = vld [vmem:[%s251 + $0xef] sm:$0xff]
      %v639 = vld [vmem:[%s251 + $0x107] sm:$0xff]
      %v640 = vld [vmem:[%s251 + $0x10f] sm:$0xff]
      %v641 = vld [vmem:[%s251 + $0x127] sm:$0xff]
      %v642 = vld [vmem:[%s251 + $0x12f] sm:$0xff]
      %v643 = vld [vmem:[%s251 + $0x147] sm:$0xff]
      %v644 = vld [vmem:[%s251 + $0x14f] sm:$0xff]
      %v645 = vld [vmem:[%s251 + $0x167] sm:$0xff]
      %v646 = vld [vmem:[%s251 + $0x16f] sm:$0xff]
      %v647 = vld [vmem:[%s251 + $0x187] sm:$0xff]
      %v648 = vld [vmem:[%s251 + $0x18f] sm:$0xff]
      %v649 = vld [vmem:[%s251 + $0x1a7] sm:$0xff]
      %v650 = vld [vmem:[%s251 + $0x1af] sm:$0xff]
      %v651 = vld [vmem:[%s251 + $0x1c7] sm:$0xff]
      %v652 = vld [vmem:[%s251 + $0x1cf] sm:$0xff]
      %v653 = vld [vmem:[%s251 + $0x1e7] sm:$0xff]
      %v654 = vld [vmem:[%s251 + $0x1ef] sm:$0xff]
      %v655 = vpack.c.bf16 %v624, %v623
      %v656 = vpack.c.bf16 %v626, %v625
      %v657 = vpack.c.bf16 %v628, %v627
      %v658 = vpack.c.bf16 %v630, %v629
      %v659 = vpack.c.bf16 %v632, %v631
      %v660 = vpack.c.bf16 %v634, %v633
      %v661 = vpack.c.bf16 %v636, %v635
      %v662 = vpack.c.bf16 %v638, %v637
      %v663 = vpack.c.bf16 %v640, %v639
      %v664 = vpack.c.bf16 %v642, %v641
      %v665 = vpack.c.bf16 %v644, %v643
      %v666 = vpack.c.bf16 %v646, %v645
      %v667 = vpack.c.bf16 %v648, %v647
      %v668 = vpack.c.bf16 %v650, %v649
      %v669 = vpack.c.bf16 %v652, %v651
      %v670 = vpack.c.bf16 %v654, %v653
      %687 = vrot.lane.b32.xlu0 %v655, 9
      %v688 = vpop.permute.xlu0 %687
      %689 = vrot.lane.b32.xlu0 %v656, 9
      %v690 = vpop.permute.xlu0 %689
      %691 = vrot.lane.b32.xlu0 %v657, 9
      %v692 = vpop.permute.xlu0 %691
      %693 = vrot.lane.b32.xlu0 %v658, 9
      %v694 = vpop.permute.xlu0 %693
      %695 = vrot.lane.b32.xlu0 %v659, 9
      %v696 = vpop.permute.xlu0 %695
      %697 = vrot.lane.b32.xlu0 %v660, 9
      %v698 = vpop.permute.xlu0 %697
      %699 = vrot.lane.b32.xlu0 %v661, 9
      %v700 = vpop.permute.xlu0 %699
      %701 = vrot.lane.b32.xlu0 %v662, 9
      %v702 = vpop.permute.xlu0 %701
      %703 = vrot.lane.b32.xlu0 %v663, 9
      %v704 = vpop.permute.xlu0 %703
      %705 = vrot.lane.b32.xlu0 %v664, 9
      %v706 = vpop.permute.xlu0 %705
      %707 = vrot.lane.b32.xlu0 %v665, 9
      %v708 = vpop.permute.xlu0 %707
      %709 = vrot.lane.b32.xlu0 %v666, 9
      %v710 = vpop.permute.xlu0 %709
      %711 = vrot.lane.b32.xlu0 %v667, 9
      %v712 = vpop.permute.xlu0 %711
      %713 = vrot.lane.b32.xlu0 %v668, 9
      %v714 = vpop.permute.xlu0 %713
      %715 = vrot.lane.b32.xlu0 %v669, 9
      %v716 = vpop.permute.xlu0 %715
      %717 = vrot.lane.b32.xlu0 %v670, 9
      %v718 = vpop.permute.xlu0 %717
      %vm735 = vcmask 97352
      %736 = vst.msk [vmem:[#allocation3] sm:$0xff] %vm735, %v688
      %737 = vst.msk [vmem:[#allocation3 + $0x8] sm:$0xff] %vm735, %v690
      %738 = vst.msk [vmem:[#allocation3 + $0x10] sm:$0xff] %vm735, %v692
      %739 = vst.msk [vmem:[#allocation3 + $0x18] sm:$0xff] %vm735, %v694
      %740 = vst.msk [vmem:[#allocation3 + $0x20] sm:$0xff] %vm735, %v696
      %741 = vst.msk [vmem:[#allocation3 + $0x28] sm:$0xff] %vm735, %v698
      %742 = vst.msk [vmem:[#allocation3 + $0x30] sm:$0xff] %vm735, %v700
      %743 = vst.msk [vmem:[#allocation3 + $0x38] sm:$0xff] %vm735, %v702
      %744 = vst.msk [vmem:[#allocation3 + $0x40] sm:$0xff] %vm735, %v704
      %745 = vst.msk [vmem:[#allocation3 + $0x48] sm:$0xff] %vm735, %v706
      %746 = vst.msk [vmem:[#allocation3 + $0x50] sm:$0xff] %vm735, %v708
      %747 = vst.msk [vmem:[#allocation3 + $0x58] sm:$0xff] %vm735, %v710
      %748 = vst.msk [vmem:[#allocation3 + $0x60] sm:$0xff] %vm735, %v712
      %749 = vst.msk [vmem:[#allocation3 + $0x68] sm:$0xff] %vm735, %v714
      %750 = vst.msk [vmem:[#allocation3 + $0x70] sm:$0xff] %vm735, %v716
      %751 = vst.msk [vmem:[#allocation3 + $0x78] sm:$0xff] %vm735, %v718
      %v752 = vld [vmem:[%s251 + $0x8] sm:$0xff]
      %v753 = vld [vmem:[%s251 + $0x10] sm:$0xff]
      %v754 = vld [vmem:[%s251 + $0x28] sm:$0xff]
      %v755 = vld [vmem:[%s251 + $0x30] sm:$0xff]
      %v756 = vld [vmem:[%s251 + $0x48] sm:$0xff]
      %v757 = vld [vmem:[%s251 + $0x50] sm:$0xff]
      %v758 = vld [vmem:[%s251 + $0x68] sm:$0xff]
      %v759 = vld [vmem:[%s251 + $0x70] sm:$0xff]
      %v760 = vld [vmem:[%s251 + $0x88] sm:$0xff]
      %v761 = vld [vmem:[%s251 + $0x90] sm:$0xff]
      %v762 = vld [vmem:[%s251 + $0xa8] sm:$0xff]
      %v763 = vld [vmem:[%s251 + $0xb0] sm:$0xff]
      %v764 = vld [vmem:[%s251 + $0xc8] sm:$0xff]
      %v765 = vld [vmem:[%s251 + $0xd0] sm:$0xff]
      %v766 = vld [vmem:[%s251 + $0xe8] sm:$0xff]
      %v767 = vld [vmem:[%s251 + $0xf0] sm:$0xff]
      %v768 = vld [vmem:[%s251 + $0x108] sm:$0xff]
      %v769 = vld [vmem:[%s251 + $0x110] sm:$0xff]
      %v770 = vld [vmem:[%s251 + $0x128] sm:$0xff]
      %v771 = vld [vmem:[%s251 + $0x130] sm:$0xff]
      %v772 = vld [vmem:[%s251 + $0x148] sm:$0xff]
      %v773 = vld [vmem:[%s251 + $0x150] sm:$0xff]
      %v774 = vld [vmem:[%s251 + $0x168] sm:$0xff]
      %v775 = vld [vmem:[%s251 + $0x170] sm:$0xff]
      %v776 = vld [vmem:[%s251 + $0x188] sm:$0xff]
      %v777 = vld [vmem:[%s251 + $0x190] sm:$0xff]
      %v778 = vld [vmem:[%s251 + $0x1a8] sm:$0xff]
      %v779 = vld [vmem:[%s251 + $0x1b0] sm:$0xff]
      %v780 = vld [vmem:[%s251 + $0x1c8] sm:$0xff]
      %v781 = vld [vmem:[%s251 + $0x1d0] sm:$0xff]
      %v782 = vld [vmem:[%s251 + $0x1e8] sm:$0xff]
      %v783 = vld [vmem:[%s251 + $0x1f0] sm:$0xff]
      %v784 = vpack.c.bf16 %v753, %v752
      %v785 = vpack.c.bf16 %v755, %v754
      %v786 = vpack.c.bf16 %v757, %v756
      %v787 = vpack.c.bf16 %v759, %v758
      %v788 = vpack.c.bf16 %v761, %v760
      %v789 = vpack.c.bf16 %v763, %v762
      %v790 = vpack.c.bf16 %v765, %v764
      %v791 = vpack.c.bf16 %v767, %v766
      %v792 = vpack.c.bf16 %v769, %v768
      %v793 = vpack.c.bf16 %v771, %v770
      %v794 = vpack.c.bf16 %v773, %v772
      %v795 = vpack.c.bf16 %v775, %v774
      %v796 = vpack.c.bf16 %v777, %v776
      %v797 = vpack.c.bf16 %v779, %v778
      %v798 = vpack.c.bf16 %v781, %v780
      %v799 = vpack.c.bf16 %v783, %v782
      %816 = vrot.lane.b32.xlu0 %v784, 12
      %v817 = vpop.permute.xlu0 %816
      %818 = vrot.lane.b32.xlu0 %v785, 12
      %v819 = vpop.permute.xlu0 %818
      %820 = vrot.lane.b32.xlu0 %v786, 12
      %v821 = vpop.permute.xlu0 %820
      %822 = vrot.lane.b32.xlu0 %v787, 12
      %v823 = vpop.permute.xlu0 %822
      %824 = vrot.lane.b32.xlu0 %v788, 12
      %v825 = vpop.permute.xlu0 %824
      %826 = vrot.lane.b32.xlu0 %v789, 12
      %v827 = vpop.permute.xlu0 %826
      %828 = vrot.lane.b32.xlu0 %v790, 12
      %v829 = vpop.permute.xlu0 %828
      %830 = vrot.lane.b32.xlu0 %v791, 12
      %v831 = vpop.permute.xlu0 %830
      %832 = vrot.lane.b32.xlu0 %v792, 12
      %v833 = vpop.permute.xlu0 %832
      %834 = vrot.lane.b32.xlu0 %v793, 12
      %v835 = vpop.permute.xlu0 %834
      %836 = vrot.lane.b32.xlu0 %v794, 12
      %v837 = vpop.permute.xlu0 %836
      %838 = vrot.lane.b32.xlu0 %v795, 12
      %v839 = vpop.permute.xlu0 %838
      %840 = vrot.lane.b32.xlu0 %v796, 12
      %v841 = vpop.permute.xlu0 %840
      %842 = vrot.lane.b32.xlu0 %v797, 12
      %v843 = vpop.permute.xlu0 %842
      %844 = vrot.lane.b32.xlu0 %v798, 12
      %v845 = vpop.permute.xlu0 %844
      %846 = vrot.lane.b32.xlu0 %v799, 12
      %v847 = vpop.permute.xlu0 %846
      %vm864 = vcmask 121952
      %865 = vst.msk [vmem:[#allocation3] sm:$0xff] %vm864, %v817
      %866 = vst.msk [vmem:[#allocation3 + $0x8] sm:$0xff] %vm864, %v819
      %867 = vst.msk [vmem:[#allocation3 + $0x10] sm:$0xff] %vm864, %v821
      %868 = vst.msk [vmem:[#allocation3 + $0x18] sm:$0xff] %vm864, %v823
      %869 = vst.msk [vmem:[#allocation3 + $0x20] sm:$0xff] %vm864, %v825
      %870 = vst.msk [vmem:[#allocation3 + $0x28] sm:$0xff] %vm864, %v827
      %871 = vst.msk [vmem:[#allocation3 + $0x30] sm:$0xff] %vm864, %v829
      %872 = vst.msk [vmem:[#allocation3 + $0x38] sm:$0xff] %vm864, %v831
      %873 = vst.msk [vmem:[#allocation3 + $0x40] sm:$0xff] %vm864, %v833
      %874 = vst.msk [vmem:[#allocation3 + $0x48] sm:$0xff] %vm864, %v835
      %875 = vst.msk [vmem:[#allocation3 + $0x50] sm:$0xff] %vm864, %v837
      %876 = vst.msk [vmem:[#allocation3 + $0x58] sm:$0xff] %vm864, %v839
      %877 = vst.msk [vmem:[#allocation3 + $0x60] sm:$0xff] %vm864, %v841
      %878 = vst.msk [vmem:[#allocation3 + $0x68] sm:$0xff] %vm864, %v843
      %879 = vst.msk [vmem:[#allocation3 + $0x70] sm:$0xff] %vm864, %v845
      %880 = vst.msk [vmem:[#allocation3 + $0x78] sm:$0xff] %vm864, %v847
      %v881 = vld [vmem:[%s251 + $0x9] sm:$0xff]
      %v882 = vld [vmem:[%s251 + $0x11] sm:$0xff]
      %v883 = vld [vmem:[%s251 + $0x29] sm:$0xff]
      %v884 = vld [vmem:[%s251 + $0x31] sm:$0xff]
      %v885 = vld [vmem:[%s251 + $0x49] sm:$0xff]
      %v886 = vld [vmem:[%s251 + $0x51] sm:$0xff]
      %v887 = vld [vmem:[%s251 + $0x69] sm:$0xff]
      %v888 = vld [vmem:[%s251 + $0x71] sm:$0xff]
      %v889 = vld [vmem:[%s251 + $0x89] sm:$0xff]
      %v890 = vld [vmem:[%s251 + $0x91] sm:$0xff]
      %v891 = vld [vmem:[%s251 + $0xa9] sm:$0xff]
      %v892 = vld [vmem:[%s251 + $0xb1] sm:$0xff]
      %v893 = vld [vmem:[%s251 + $0xc9] sm:$0xff]
      %v894 = vld [vmem:[%s251 + $0xd1] sm:$0xff]
      %v895 = vld [vmem:[%s251 + $0xe9] sm:$0xff]
      %v896 = vld [vmem:[%s251 + $0xf1] sm:$0xff]
      %v897 = vld [vmem:[%s251 + $0x109] sm:$0xff]
      %v898 = vld [vmem:[%s251 + $0x111] sm:$0xff]
      %v899 = vld [vmem:[%s251 + $0x129] sm:$0xff]
      %v900 = vld [vmem:[%s251 + $0x131] sm:$0xff]
      %v901 = vld [vmem:[%s251 + $0x149] sm:$0xff]
      %v902 = vld [vmem:[%s251 + $0x151] sm:$0xff]
      %v903 = vld [vmem:[%s251 + $0x169] sm:$0xff]
      %v904 = vld [vmem:[%s251 + $0x171] sm:$0xff]
      %v905 = vld [vmem:[%s251 + $0x189] sm:$0xff]
      %v906 = vld [vmem:[%s251 + $0x191] sm:$0xff]
      %v907 = vld [vmem:[%s251 + $0x1a9] sm:$0xff]
      %v908 = vld [vmem:[%s251 + $0x1b1] sm:$0xff]
      %v909 = vld [vmem:[%s251 + $0x1c9] sm:$0xff]
      %v910 = vld [vmem:[%s251 + $0x1d1] sm:$0xff]
      %v911 = vld [vmem:[%s251 + $0x1e9] sm:$0xff]
      %v912 = vld [vmem:[%s251 + $0x1f1] sm:$0xff]
      %v913 = vpack.c.bf16 %v882, %v881
      %v914 = vpack.c.bf16 %v884, %v883
      %v915 = vpack.c.bf16 %v886, %v885
      %v916 = vpack.c.bf16 %v888, %v887
      %v917 = vpack.c.bf16 %v890, %v889
      %v918 = vpack.c.bf16 %v892, %v891
      %v919 = vpack.c.bf16 %v894, %v893
      %v920 = vpack.c.bf16 %v896, %v895
      %v921 = vpack.c.bf16 %v898, %v897
      %v922 = vpack.c.bf16 %v900, %v899
      %v923 = vpack.c.bf16 %v902, %v901
      %v924 = vpack.c.bf16 %v904, %v903
      %v925 = vpack.c.bf16 %v906, %v905
      %v926 = vpack.c.bf16 %v908, %v907
      %v927 = vpack.c.bf16 %v910, %v909
      %v928 = vpack.c.bf16 %v912, %v911
      %945 = vrot.lane.b32.xlu0 %v913, 15
      %v946 = vpop.permute.xlu0 %945
      %947 = vrot.lane.b32.xlu0 %v914, 15
      %v948 = vpop.permute.xlu0 %947
      %949 = vrot.lane.b32.xlu0 %v915, 15
      %v950 = vpop.permute.xlu0 %949
      %951 = vrot.lane.b32.xlu0 %v916, 15
      %v952 = vpop.permute.xlu0 %951
      %953 = vrot.lane.b32.xlu0 %v917, 15
      %v954 = vpop.permute.xlu0 %953
      %955 = vrot.lane.b32.xlu0 %v918, 15
      %v956 = vpop.permute.xlu0 %955
      %957 = vrot.lane.b32.xlu0 %v919, 15
      %v958 = vpop.permute.xlu0 %957
      %959 = vrot.lane.b32.xlu0 %v920, 15
      %v960 = vpop.permute.xlu0 %959
      %961 = vrot.lane.b32.xlu0 %v921, 15
      %v962 = vpop.permute.xlu0 %961
      %963 = vrot.lane.b32.xlu0 %v922, 15
      %v964 = vpop.permute.xlu0 %963
      %965 = vrot.lane.b32.xlu0 %v923, 15
      %v966 = vpop.permute.xlu0 %965
      %967 = vrot.lane.b32.xlu0 %v924, 15
      %v968 = vpop.permute.xlu0 %967
      %969 = vrot.lane.b32.xlu0 %v925, 15
      %v970 = vpop.permute.xlu0 %969
      %971 = vrot.lane.b32.xlu0 %v926, 15
      %v972 = vpop.permute.xlu0 %971
      %973 = vrot.lane.b32.xlu0 %v927, 15
      %v974 = vpop.permute.xlu0 %973
      %975 = vrot.lane.b32.xlu0 %v928, 15
      %v976 = vpop.permute.xlu0 %975
      %vm993 = vcmask 146552
      %994 = vst.msk [vmem:[#allocation3] sm:$0xff] %vm993, %v946
      %995 = vst.msk [vmem:[#allocation3 + $0x8] sm:$0xff] %vm993, %v948
      %996 = vst.msk [vmem:[#allocation3 + $0x10] sm:$0xff] %vm993, %v950
      %997 = vst.msk [vmem:[#allocation3 + $0x18] sm:$0xff] %vm993, %v952
      %998 = vst.msk [vmem:[#allocation3 + $0x20] sm:$0xff] %vm993, %v954
      %999 = vst.msk [vmem:[#allocation3 + $0x28] sm:$0xff] %vm993, %v956
      %1000 = vst.msk [vmem:[#allocation3 + $0x30] sm:$0xff] %vm993, %v958
      %1001 = vst.msk [vmem:[#allocation3 + $0x38] sm:$0xff] %vm993, %v960
      %1002 = vst.msk [vmem:[#allocation3 + $0x40] sm:$0xff] %vm993, %v962
      %1003 = vst.msk [vmem:[#allocation3 + $0x48] sm:$0xff] %vm993, %v964
      %1004 = vst.msk [vmem:[#allocation3 + $0x50] sm:$0xff] %vm993, %v966
      %1005 = vst.msk [vmem:[#allocation3 + $0x58] sm:$0xff] %vm993, %v968
      %1006 = vst.msk [vmem:[#allocation3 + $0x60] sm:$0xff] %vm993, %v970
      %1007 = vst.msk [vmem:[#allocation3 + $0x68] sm:$0xff] %vm993, %v972
      %1008 = vst.msk [vmem:[#allocation3 + $0x70] sm:$0xff] %vm993, %v974
      %1009 = vst.msk [vmem:[#allocation3 + $0x78] sm:$0xff] %vm993, %v976
      %s1010 = scalar_lea.vmem [#allocation2], 64
      %v1011 = vld [vmem:[%s1010 + $0x7] sm:$0xff]
      %v1012 = vld [vmem:[%s1010 + $0xf] sm:$0xff]
      %v1013 = vld [vmem:[%s1010 + $0x27] sm:$0xff]
      %v1014 = vld [vmem:[%s1010 + $0x2f] sm:$0xff]
      %v1015 = vld [vmem:[%s1010 + $0x47] sm:$0xff]
      %v1016 = vld [vmem:[%s1010 + $0x4f] sm:$0xff]
      %v1017 = vld [vmem:[%s1010 + $0x67] sm:$0xff]
      %v1018 = vld [vmem:[%s1010 + $0x6f] sm:$0xff]
      %v1019 = vld [vmem:[%s1010 + $0x87] sm:$0xff]
      %v1020 = vld [vmem:[%s1010 + $0x8f] sm:$0xff]
      %v1021 = vld [vmem:[%s1010 + $0xa7] sm:$0xff]
      %v1022 = vld [vmem:[%s1010 + $0xaf] sm:$0xff]
      %v1023 = vld [vmem:[%s1010 + $0xc7] sm:$0xff]
      %v1024 = vld [vmem:[%s1010 + $0xcf] sm:$0xff]
      %v1025 = vld [vmem:[%s1010 + $0xe7] sm:$0xff]
      %v1026 = vld [vmem:[%s1010 + $0xef] sm:$0xff]
      %v1027 = vld [vmem:[%s1010 + $0x107] sm:$0xff]
      %v1028 = vld [vmem:[%s1010 + $0x10f] sm:$0xff]
      %v1029 = vld [vmem:[%s1010 + $0x127] sm:$0xff]
      %v1030 = vld [vmem:[%s1010 + $0x12f] sm:$0xff]
      %v1031 = vld [vmem:[%s1010 + $0x147] sm:$0xff]
      %v1032 = vld [vmem:[%s1010 + $0x14f] sm:$0xff]
      %v1033 = vld [vmem:[%s1010 + $0x167] sm:$0xff]
      %v1034 = vld [vmem:[%s1010 + $0x16f] sm:$0xff]
      %v1035 = vld [vmem:[%s1010 + $0x187] sm:$0xff]
      %v1036 = vld [vmem:[%s1010 + $0x18f] sm:$0xff]
      %v1037 = vld [vmem:[%s1010 + $0x1a7] sm:$0xff]
      %v1038 = vld [vmem:[%s1010 + $0x1af] sm:$0xff]
      %v1039 = vld [vmem:[%s1010 + $0x1c7] sm:$0xff]
      %v1040 = vld [vmem:[%s1010 + $0x1cf] sm:$0xff]
      %v1041 = vld [vmem:[%s1010 + $0x1e7] sm:$0xff]
      %v1042 = vld [vmem:[%s1010 + $0x1ef] sm:$0xff]
      %v1043 = vpack.c.bf16 %v1012, %v1011
      %v1044 = vpack.c.bf16 %v1014, %v1013
      %v1045 = vpack.c.bf16 %v1016, %v1015
      %v1046 = vpack.c.bf16 %v1018, %v1017
      %v1047 = vpack.c.bf16 %v1020, %v1019
      %v1048 = vpack.c.bf16 %v1022, %v1021
      %v1049 = vpack.c.bf16 %v1024, %v1023
      %v1050 = vpack.c.bf16 %v1026, %v1025
      %v1051 = vpack.c.bf16 %v1028, %v1027
      %v1052 = vpack.c.bf16 %v1030, %v1029
      %v1053 = vpack.c.bf16 %v1032, %v1031
      %v1054 = vpack.c.bf16 %v1034, %v1033
      %v1055 = vpack.c.bf16 %v1036, %v1035
      %v1056 = vpack.c.bf16 %v1038, %v1037
      %v1057 = vpack.c.bf16 %v1040, %v1039
      %v1058 = vpack.c.bf16 %v1042, %v1041
      %1075 = vrot.lane.b32.xlu0 %v1043, 18
      %v1076 = vpop.permute.xlu0 %1075
      %1077 = vrot.lane.b32.xlu0 %v1044, 18
      %v1078 = vpop.permute.xlu0 %1077
      %1079 = vrot.lane.b32.xlu0 %v1045, 18
      %v1080 = vpop.permute.xlu0 %1079
      %1081 = vrot.lane.b32.xlu0 %v1046, 18
      %v1082 = vpop.permute.xlu0 %1081
      %1083 = vrot.lane.b32.xlu0 %v1047, 18
      %v1084 = vpop.permute.xlu0 %1083
      %1085 = vrot.lane.b32.xlu0 %v1048, 18
      %v1086 = vpop.permute.xlu0 %1085
      %1087 = vrot.lane.b32.xlu0 %v1049, 18
      %v1088 = vpop.permute.xlu0 %1087
      %1089 = vrot.lane.b32.xlu0 %v1050, 18
      %v1090 = vpop.permute.xlu0 %1089
      %1091 = vrot.lane.b32.xlu0 %v1051, 18
      %v1092 = vpop.permute.xlu0 %1091
      %1093 = vrot.lane.b32.xlu0 %v1052, 18
      %v1094 = vpop.permute.xlu0 %1093
      %1095 = vrot.lane.b32.xlu0 %v1053, 18
      %v1096 = vpop.permute.xlu0 %1095
      %1097 = vrot.lane.b32.xlu0 %v1054, 18
      %v1098 = vpop.permute.xlu0 %1097
      %1099 = vrot.lane.b32.xlu0 %v1055, 18
      %v1100 = vpop.permute.xlu0 %1099
      %1101 = vrot.lane.b32.xlu0 %v1056, 18
      %v1102 = vpop.permute.xlu0 %1101
      %1103 = vrot.lane.b32.xlu0 %v1057, 18
      %v1104 = vpop.permute.xlu0 %1103
      %1105 = vrot.lane.b32.xlu0 %v1058, 18
      %v1106 = vpop.permute.xlu0 %1105
      %vm1123 = vcmask 171152
      %1124 = vst.msk [vmem:[#allocation3] sm:$0xff] %vm1123, %v1076
      %1125 = vst.msk [vmem:[#allocation3 + $0x8] sm:$0xff] %vm1123, %v1078
      %1126 = vst.msk [vmem:[#allocation3 + $0x10] sm:$0xff] %vm1123, %v1080
      %1127 = vst.msk [vmem:[#allocation3 + $0x18] sm:$0xff] %vm1123, %v1082
      %1128 = vst.msk [vmem:[#allocation3 + $0x20] sm:$0xff] %vm1123, %v1084
      %1129 = vst.msk [vmem:[#allocation3 + $0x28] sm:$0xff] %vm1123, %v1086
      %1130 = vst.msk [vmem:[#allocation3 + $0x30] sm:$0xff] %vm1123, %v1088
      %1131 = vst.msk [vmem:[#allocation3 + $0x38] sm:$0xff] %vm1123, %v1090
      %1132 = vst.msk [vmem:[#allocation3 + $0x40] sm:$0xff] %vm1123, %v1092
      %1133 = vst.msk [vmem:[#allocation3 + $0x48] sm:$0xff] %vm1123, %v1094
      %1134 = vst.msk [vmem:[#allocation3 + $0x50] sm:$0xff] %vm1123, %v1096
      %1135 = vst.msk [vmem:[#allocation3 + $0x58] sm:$0xff] %vm1123, %v1098
      %1136 = vst.msk [vmem:[#allocation3 + $0x60] sm:$0xff] %vm1123, %v1100
      %1137 = vst.msk [vmem:[#allocation3 + $0x68] sm:$0xff] %vm1123, %v1102
      %1138 = vst.msk [vmem:[#allocation3 + $0x70] sm:$0xff] %vm1123, %v1104
      %1139 = vst.msk [vmem:[#allocation3 + $0x78] sm:$0xff] %vm1123, %v1106
      %v1140 = vld [vmem:[%s1010 + $0x8] sm:$0xff]
      %v1141 = vld [vmem:[%s1010 + $0x10] sm:$0xff]
      %v1142 = vld [vmem:[%s1010 + $0x28] sm:$0xff]
      %v1143 = vld [vmem:[%s1010 + $0x30] sm:$0xff]
      %v1144 = vld [vmem:[%s1010 + $0x48] sm:$0xff]
      %v1145 = vld [vmem:[%s1010 + $0x50] sm:$0xff]
      %v1146 = vld [vmem:[%s1010 + $0x68] sm:$0xff]
      %v1147 = vld [vmem:[%s1010 + $0x70] sm:$0xff]
      %v1148 = vld [vmem:[%s1010 + $0x88] sm:$0xff]
      %v1149 = vld [vmem:[%s1010 + $0x90] sm:$0xff]
      %v1150 = vld [vmem:[%s1010 + $0xa8] sm:$0xff]
      %v1151 = vld [vmem:[%s1010 + $0xb0] sm:$0xff]
      %v1152 = vld [vmem:[%s1010 + $0xc8] sm:$0xff]
      %v1153 = vld [vmem:[%s1010 + $0xd0] sm:$0xff]
      %v1154 = vld [vmem:[%s1010 + $0xe8] sm:$0xff]
      %v1155 = vld [vmem:[%s1010 + $0xf0] sm:$0xff]
      %v1156 = vld [vmem:[%s1010 + $0x108] sm:$0xff]
      %v1157 = vld [vmem:[%s1010 + $0x110] sm:$0xff]
      %v1158 = vld [vmem:[%s1010 + $0x128] sm:$0xff]
      %v1159 = vld [vmem:[%s1010 + $0x130] sm:$0xff]
      %v1160 = vld [vmem:[%s1010 + $0x148] sm:$0xff]
      %v1161 = vld [vmem:[%s1010 + $0x150] sm:$0xff]
      %v1162 = vld [vmem:[%s1010 + $0x168] sm:$0xff]
      %v1163 = vld [vmem:[%s1010 + $0x170] sm:$0xff]
      %v1164 = vld [vmem:[%s1010 + $0x188] sm:$0xff]
      %v1165 = vld [vmem:[%s1010 + $0x190] sm:$0xff]
      %v1166 = vld [vmem:[%s1010 + $0x1a8] sm:$0xff]
      %v1167 = vld [vmem:[%s1010 + $0x1b0] sm:$0xff]
      %v1168 = vld [vmem:[%s1010 + $0x1c8] sm:$0xff]
      %v1169 = vld [vmem:[%s1010 + $0x1d0] sm:$0xff]
      %v1170 = vld [vmem:[%s1010 + $0x1e8] sm:$0xff]
      %v1171 = vld [vmem:[%s1010 + $0x1f0] sm:$0xff]
      %v1172 = vpack.c.bf16 %v1141, %v1140
      %v1173 = vpack.c.bf16 %v1143, %v1142
      %v1174 = vpack.c.bf16 %v1145, %v1144
      %v1175 = vpack.c.bf16 %v1147, %v1146
      %v1176 = vpack.c.bf16 %v1149, %v1148
      %v1177 = vpack.c.bf16 %v1151, %v1150
      %v1178 = vpack.c.bf16 %v1153, %v1152
      %v1179 = vpack.c.bf16 %v1155, %v1154
      %v1180 = vpack.c.bf16 %v1157, %v1156
      %v1181 = vpack.c.bf16 %v1159, %v1158
      %v1182 = vpack.c.bf16 %v1161, %v1160
      %v1183 = vpack.c.bf16 %v1163, %v1162
      %v1184 = vpack.c.bf16 %v1165, %v1164
      %v1185 = vpack.c.bf16 %v1167, %v1166
      %v1186 = vpack.c.bf16 %v1169, %v1168
      %v1187 = vpack.c.bf16 %v1171, %v1170
      %1204 = vrot.lane.b32.xlu0 %v1172, 21
      %v1205 = vpop.permute.xlu0 %1204
      %1206 = vrot.lane.b32.xlu0 %v1173, 21
      %v1207 = vpop.permute.xlu0 %1206
      %1208 = vrot.lane.b32.xlu0 %v1174, 21
      %v1209 = vpop.permute.xlu0 %1208
      %1210 = vrot.lane.b32.xlu0 %v1175, 21
      %v1211 = vpop.permute.xlu0 %1210
      %1212 = vrot.lane.b32.xlu0 %v1176, 21
      %v1213 = vpop.permute.xlu0 %1212
      %1214 = vrot.lane.b32.xlu0 %v1177, 21
      %v1215 = vpop.permute.xlu0 %1214
      %1216 = vrot.lane.b32.xlu0 %v1178, 21
      %v1217 = vpop.permute.xlu0 %1216
      %1218 = vrot.lane.b32.xlu0 %v1179, 21
      %v1219 = vpop.permute.xlu0 %1218
      %1220 = vrot.lane.b32.xlu0 %v1180, 21
      %v1221 = vpop.permute.xlu0 %1220
      %1222 = vrot.lane.b32.xlu0 %v1181, 21
      %v1223 = vpop.permute.xlu0 %1222
      %1224 = vrot.lane.b32.xlu0 %v1182, 21
      %v1225 = vpop.permute.xlu0 %1224
      %1226 = vrot.lane.b32.xlu0 %v1183, 21
      %v1227 = vpop.permute.xlu0 %1226
      %1228 = vrot.lane.b32.xlu0 %v1184, 21
      %v1229 = vpop.permute.xlu0 %1228
      %1230 = vrot.lane.b32.xlu0 %v1185, 21
      %v1231 = vpop.permute.xlu0 %1230
      %1232 = vrot.lane.b32.xlu0 %v1186, 21
      %v1233 = vpop.permute.xlu0 %1232
      %1234 = vrot.lane.b32.xlu0 %v1187, 21
      %v1235 = vpop.permute.xlu0 %1234
      %vm1252 = vcmask 195752
      %1253 = vst.msk [vmem:[#allocation3] sm:$0xff] %vm1252, %v1205
      %1254 = vst.msk [vmem:[#allocation3 + $0x8] sm:$0xff] %vm1252, %v1207
      %1255 = vst.msk [vmem:[#allocation3 + $0x10] sm:$0xff] %vm1252, %v1209
      %1256 = vst.msk [vmem:[#allocation3 + $0x18] sm:$0xff] %vm1252, %v1211
      %1257 = vst.msk [vmem:[#allocation3 + $0x20] sm:$0xff] %vm1252, %v1213
      %1258 = vst.msk [vmem:[#allocation3 + $0x28] sm:$0xff] %vm1252, %v1215
      %1259 = vst.msk [vmem:[#allocation3 + $0x30] sm:$0xff] %vm1252, %v1217
      %1260 = vst.msk [vmem:[#allocation3 + $0x38] sm:$0xff] %vm1252, %v1219
      %1261 = vst.msk [vmem:[#allocation3 + $0x40] sm:$0xff] %vm1252, %v1221
      %1262 = vst.msk [vmem:[#allocation3 + $0x48] sm:$0xff] %vm1252, %v1223
      %1263 = vst.msk [vmem:[#allocation3 + $0x50] sm:$0xff] %vm1252, %v1225
      %1264 = vst.msk [vmem:[#allocation3 + $0x58] sm:$0xff] %vm1252, %v1227
      %1265 = vst.msk [vmem:[#allocation3 + $0x60] sm:$0xff] %vm1252, %v1229
      %1266 = vst.msk [vmem:[#allocation3 + $0x68] sm:$0xff] %vm1252, %v1231
      %1267 = vst.msk [vmem:[#allocation3 + $0x70] sm:$0xff] %vm1252, %v1233
      %1268 = vst.msk [vmem:[#allocation3 + $0x78] sm:$0xff] %vm1252, %v1235
      %v1269 = vld [vmem:[%s1010 + $0x9] sm:$0xff]
      %v1270 = vld [vmem:[%s1010 + $0x11] sm:$0xff]
      %v1271 = vld [vmem:[%s1010 + $0x29] sm:$0xff]
      %v1272 = vld [vmem:[%s1010 + $0x31] sm:$0xff]
      %v1273 = vld [vmem:[%s1010 + $0x49] sm:$0xff]
      %v1274 = vld [vmem:[%s1010 + $0x51] sm:$0xff]
      %v1275 = vld [vmem:[%s1010 + $0x69] sm:$0xff]
      %v1276 = vld [vmem:[%s1010 + $0x71] sm:$0xff]
      %v1277 = vld [vmem:[%s1010 + $0x89] sm:$0xff]
      %v1278 = vld [vmem:[%s1010 + $0x91] sm:$0xff]
      %v1279 = vld [vmem:[%s1010 + $0xa9] sm:$0xff]
      %v1280 = vld [vmem:[%s1010 + $0xb1] sm:$0xff]
      %v1281 = vld [vmem:[%s1010 + $0xc9] sm:$0xff]
      %v1282 = vld [vmem:[%s1010 + $0xd1] sm:$0xff]
      %v1283 = vld [vmem:[%s1010 + $0xe9] sm:$0xff]
      %v1284 = vld [vmem:[%s1010 + $0xf1] sm:$0xff]
      %v1285 = vld [vmem:[%s1010 + $0x109] sm:$0xff]
      %v1286 = vld [vmem:[%s1010 + $0x111] sm:$0xff]
      %v1287 = vld [vmem:[%s1010 + $0x129] sm:$0xff]
      %v1288 = vld [vmem:[%s1010 + $0x131] sm:$0xff]
      %v1289 = vld [vmem:[%s1010 + $0x149] sm:$0xff]
      %v1290 = vld [vmem:[%s1010 + $0x151] sm:$0xff]
      %v1291 = vld [vmem:[%s1010 + $0x169] sm:$0xff]
      %v1292 = vld [vmem:[%s1010 + $0x171] sm:$0xff]
      %v1293 = vld [vmem:[%s1010 + $0x189] sm:$0xff]
      %v1294 = vld [vmem:[%s1010 + $0x191] sm:$0xff]
      %v1295 = vld [vmem:[%s1010 + $0x1a9] sm:$0xff]
      %v1296 = vld [vmem:[%s1010 + $0x1b1] sm:$0xff]
      %v1297 = vld [vmem:[%s1010 + $0x1c9] sm:$0xff]
      %v1298 = vld [vmem:[%s1010 + $0x1d1] sm:$0xff]
      %v1299 = vld [vmem:[%s1010 + $0x1e9] sm:$0xff]
      %v1300 = vld [vmem:[%s1010 + $0x1f1] sm:$0xff]
      %v1301 = vpack.c.bf16 %v1270, %v1269
      %v1302 = vpack.c.bf16 %v1272, %v1271
      %v1303 = vpack.c.bf16 %v1274, %v1273
      %v1304 = vpack.c.bf16 %v1276, %v1275
      %v1305 = vpack.c.bf16 %v1278, %v1277
      %v1306 = vpack.c.bf16 %v1280, %v1279
      %v1307 = vpack.c.bf16 %v1282, %v1281
      %v1308 = vpack.c.bf16 %v1284, %v1283
      %v1309 = vpack.c.bf16 %v1286, %v1285
      %v1310 = vpack.c.bf16 %v1288, %v1287
      %v1311 = vpack.c.bf16 %v1290, %v1289
      %v1312 = vpack.c.bf16 %v1292, %v1291
      %v1313 = vpack.c.bf16 %v1294, %v1293
      %v1314 = vpack.c.bf16 %v1296, %v1295
      %v1315 = vpack.c.bf16 %v1298, %v1297
      %v1316 = vpack.c.bf16 %v1300, %v1299
      %1333 = vrot.lane.b32.xlu0 %v1301, 24
      %v1334 = vpop.permute.xlu0 %1333
      %1335 = vrot.lane.b32.xlu0 %v1302, 24
      %v1336 = vpop.permute.xlu0 %1335
      %1337 = vrot.lane.b32.xlu0 %v1303, 24
      %v1338 = vpop.permute.xlu0 %1337
      %1339 = vrot.lane.b32.xlu0 %v1304, 24
      %v1340 = vpop.permute.xlu0 %1339
      %1341 = vrot.lane.b32.xlu0 %v1305, 24
      %v1342 = vpop.permute.xlu0 %1341
      %1343 = vrot.lane.b32.xlu0 %v1306, 24
      %v1344 = vpop.permute.xlu0 %1343
      %1345 = vrot.lane.b32.xlu0 %v1307, 24
      %v1346 = vpop.permute.xlu0 %1345
      %1347 = vrot.lane.b32.xlu0 %v1308, 24
      %v1348 = vpop.permute.xlu0 %1347
      %1349 = vrot.lane.b32.xlu0 %v1309, 24
      %v1350 = vpop.permute.xlu0 %1349
      %1351 = vrot.lane.b32.xlu0 %v1310, 24
      %v1352 = vpop.permute.xlu0 %1351
      %1353 = vrot.lane.b32.xlu0 %v1311, 24
      %v1354 = vpop.permute.xlu0 %1353
      %1355 = vrot.lane.b32.xlu0 %v1312, 24
      %v1356 = vpop.permute.xlu0 %1355
      %1357 = vrot.lane.b32.xlu0 %v1313, 24
      %v1358 = vpop.permute.xlu0 %1357
      %1359 = vrot.lane.b32.xlu0 %v1314, 24
      %v1360 = vpop.permute.xlu0 %1359
      %1361 = vrot.lane.b32.xlu0 %v1315, 24
      %v1362 = vpop.permute.xlu0 %1361
      %1363 = vrot.lane.b32.xlu0 %v1316, 24
      %v1364 = vpop.permute.xlu0 %1363
      %vm1381 = vcmask 220352
      %1382 = vst.msk [vmem:[#allocation3] sm:$0xff] %vm1381, %v1334
      %1383 = vst.msk [vmem:[#allocation3 + $0x8] sm:$0xff] %vm1381, %v1336
      %1384 = vst.msk [vmem:[#allocation3 + $0x10] sm:$0xff] %vm1381, %v1338
      %1385 = vst.msk [vmem:[#allocation3 + $0x18] sm:$0xff] %vm1381, %v1340
      %1386 = vst.msk [vmem:[#allocation3 + $0x20] sm:$0xff] %vm1381, %v1342
      %1387 = vst.msk [vmem:[#allocation3 + $0x28] sm:$0xff] %vm1381, %v1344
      %1388 = vst.msk [vmem:[#allocation3 + $0x30] sm:$0xff] %vm1381, %v1346
      %1389 = vst.msk [vmem:[#allocation3 + $0x38] sm:$0xff] %vm1381, %v1348
      %1390 = vst.msk [vmem:[#allocation3 + $0x40] sm:$0xff] %vm1381, %v1350
      %1391 = vst.msk [vmem:[#allocation3 + $0x48] sm:$0xff] %vm1381, %v1352
      %1392 = vst.msk [vmem:[#allocation3 + $0x50] sm:$0xff] %vm1381, %v1354
      %1393 = vst.msk [vmem:[#allocation3 + $0x58] sm:$0xff] %vm1381, %v1356
      %1394 = vst.msk [vmem:[#allocation3 + $0x60] sm:$0xff] %vm1381, %v1358
      %1395 = vst.msk [vmem:[#allocation3 + $0x68] sm:$0xff] %vm1381, %v1360
      %1396 = vst.msk [vmem:[#allocation3 + $0x70] sm:$0xff] %vm1381, %v1362
      %1397 = vst.msk [vmem:[#allocation3 + $0x78] sm:$0xff] %vm1381, %v1364
      %v1398 = vld [vmem:[#allocation3] sm:$0xff]
      %v1399 = vld [vmem:[#allocation3 + $0x8] sm:$0xff]
      %v1400 = vld [vmem:[#allocation3 + $0x10] sm:$0xff]
      %v1401 = vld [vmem:[#allocation3 + $0x18] sm:$0xff]
      %v1402 = vld [vmem:[#allocation3 + $0x20] sm:$0xff]
      %v1403 = vld [vmem:[#allocation3 + $0x28] sm:$0xff]
      %v1404 = vld [vmem:[#allocation3 + $0x30] sm:$0xff]
      %v1405 = vld [vmem:[#allocation3 + $0x38] sm:$0xff]
      %v1406 = vld [vmem:[#allocation3 + $0x40] sm:$0xff]
      %v1407 = vld [vmem:[#allocation3 + $0x48] sm:$0xff]
      %v1408 = vld [vmem:[#allocation3 + $0x50] sm:$0xff]
      %v1409 = vld [vmem:[#allocation3 + $0x58] sm:$0xff]
      %v1410 = vld [vmem:[#allocation3 + $0x60] sm:$0xff]
      %v1411 = vld [vmem:[#allocation3 + $0x68] sm:$0xff]
      %v1412 = vld [vmem:[#allocation3 + $0x70] sm:$0xff]
      %v1413 = vld [vmem:[#allocation3 + $0x78] sm:$0xff]
      %v1414 = vld [vmem:[%s1] sm:$0xf]
      %v1415 = vld [vmem:[%s1 + $0x4] sm:$0xf]
      %v1416 = vld [vmem:[%s1 + $0x8] sm:$0xf]
      %v1417 = vld [vmem:[%s1 + $0xc] sm:$0xf]
      %v1418 = vld [vmem:[%s1 + $0x10] sm:$0xf]
      %v1419 = vld [vmem:[%s1 + $0x14] sm:$0xf]
      %v1420 = vld [vmem:[%s1 + $0x18] sm:$0xf]
      %v1421 = vld [vmem:[%s1 + $0x1c] sm:$0xf]
      %v1422 = vld [vmem:[%s1 + $0x20] sm:$0xf]
      %v1423 = vld [vmem:[%s1 + $0x24] sm:$0xf]
      %v1424 = vld [vmem:[%s1 + $0x28] sm:$0xf]
      %v1425 = vld [vmem:[%s1 + $0x2c] sm:$0xf]
      %v1426 = vld [vmem:[%s1 + $0x30] sm:$0xf]
      %v1427 = vld [vmem:[%s1 + $0x34] sm:$0xf]
      %v1428 = vld [vmem:[%s1 + $0x38] sm:$0xf]
      %v1429 = vld [vmem:[%s1 + $0x3c] sm:$0xf]
      %v1430 = vld [vmem:[%s2] sm:$0x1]
      %v1432 = vlaneseq
      %v1433 = vshrl.u32 %v1432, 7
      %v1434 = vsub.s32 0, %v1433
      %v1435 = vrot.slane %v1430, %v1434
      %v1453 = vunpack.c.l.b16 %v1414
      %v1454 = vunpack.c.l.b16 %v1415
      %v1455 = vunpack.c.l.b16 %v1416
      %v1456 = vunpack.c.l.b16 %v1417
      %v1457 = vunpack.c.l.b16 %v1418
      %v1458 = vunpack.c.l.b16 %v1419
      %v1459 = vunpack.c.l.b16 %v1420
      %v1460 = vunpack.c.l.b16 %v1421
      %v1461 = vunpack.c.l.b16 %v1422
      %v1462 = vunpack.c.l.b16 %v1423
      %v1463 = vunpack.c.l.b16 %v1424
      %v1464 = vunpack.c.l.b16 %v1425
      %v1465 = vunpack.c.l.b16 %v1426
      %v1466 = vunpack.c.l.b16 %v1427
      %v1467 = vunpack.c.l.b16 %v1428
      %v1468 = vunpack.c.l.b16 %v1429
      %v1469 = vpack.c.b16 %v1454, %v1453
      %v1470 = vpack.c.b16 %v1456, %v1455
      %v1471 = vpack.c.b16 %v1458, %v1457
      %v1472 = vpack.c.b16 %v1460, %v1459
      %v1473 = vpack.c.b16 %v1462, %v1461
      %v1474 = vpack.c.b16 %v1464, %v1463
      %v1475 = vpack.c.b16 %v1466, %v1465
      %v1476 = vpack.c.b16 %v1468, %v1467
      %1485 = vmatprep.subr.bf16.mxu0 0
      %1486 = vmatpush1.bf16.msra.mxu0 %v1469
      %1487 = vmatprep.subr.bf16.mxu0 0
      %1488 = vmatpush1.bf16.msra.mxu0 %v1470
      %1489 = vmatprep.subr.bf16.mxu0 0
      %1490 = vmatpush1.bf16.msra.mxu0 %v1471
      %1491 = vmatprep.subr.bf16.mxu0 0
      %1492 = vmatpush1.bf16.msra.mxu0 %v1472
      %1493 = vmatprep.subr.bf16.mxu0 0
      %1494 = vmatpush1.bf16.msra.mxu0 %v1473
      %1495 = vmatprep.subr.bf16.mxu0 0
      %1496 = vmatpush1.bf16.msra.mxu0 %v1474
      %1497 = vmatprep.subr.bf16.mxu0 0
      %1498 = vmatpush1.bf16.msra.mxu0 %v1475
      %1499 = vmatprep.subr.bf16.mxu0 0
      %1500 = vmatpush1.bf16.msra.mxu0 %v1476
      %1501 = vmatprep.subr.bf16.mxu0 0
      %1502 = vmatpush1.bf16.msra.mxu0 0
      %1503 = vmatprep.subr.bf16.mxu0 0
      %1504 = vmatpush1.bf16.msra.mxu0 0
      %1505 = vmatprep.subr.bf16.mxu0 0
      %1506 = vmatpush1.bf16.msra.mxu0 0
      %1507 = vmatprep.subr.bf16.mxu0 0
      %1508 = vmatpush1.bf16.msra.mxu0 0
      %1509 = vmatprep.subr.bf16.mxu0 0
      %1510 = vmatpush1.bf16.msra.mxu0 0
      %1511 = vmatprep.subr.bf16.mxu0 0
      %1512 = vmatpush1.bf16.msra.mxu0 0
      %1513 = vmatprep.subr.bf16.mxu0 0
      %1514 = vmatpush1.bf16.msra.mxu0 0
      %1515 = vmatprep.subr.bf16.mxu0 0
      %1516 = vmatpush1.bf16.msra.mxu0 0
      %1517 = vmatprep.mubr.bf16.mxu0 0
      %1518 = vmatmul.mubr.bf16.gmra.mrb[0].mxu0 %v1398
      %v1519 = vpop.f32.mrb[0].mxu0
      %v1520 = vadd.f32 %v1435, %v1519
      %v1521 = vpop.f32.mrb[0].mxu0
      %v1522 = vpop.f32.mrb[0].mxu0
      %v1523 = vadd.f32 %v1435, %v1522
      %v1524 = vpop.f32.mrb[0].mxu0
      %1525 = vmatprep.mubr.bf16.mxu0 0
      %1526 = vmatmul.mubr.bf16.gmra.mrb[0].mxu0 %v1399
      %v1527 = vpop.f32.mrb[0].mxu0
      %v1528 = vadd.f32 %v1435, %v1527
      %v1529 = vpop.f32.mrb[0].mxu0
      %v1530 = vpop.f32.mrb[0].mxu0
      %v1531 = vadd.f32 %v1435, %v1530
      %v1532 = vpop.f32.mrb[0].mxu0
      %1533 = vmatprep.mubr.bf16.mxu0 0
      %1534 = vmatmul.mubr.bf16.gmra.mrb[0].mxu0 %v1400
      %v1535 = vpop.f32.mrb[0].mxu0
      %v1536 = vadd.f32 %v1435, %v1535
      %v1537 = vpop.f32.mrb[0].mxu0
      %v1538 = vpop.f32.mrb[0].mxu0
      %v1539 = vadd.f32 %v1435, %v1538
      %v1540 = vpop.f32.mrb[0].mxu0
      %1541 = vmatprep.mubr.bf16.mxu0 0
      %1542 = vmatmul.mubr.bf16.gmra.mrb[0].mxu0 %v1401
      %v1543 = vpop.f32.mrb[0].mxu0
      %v1544 = vadd.f32 %v1435, %v1543
      %v1545 = vpop.f32.mrb[0].mxu0
      %v1546 = vpop.f32.mrb[0].mxu0
      %v1547 = vadd.f32 %v1435, %v1546
      %v1548 = vpop.f32.mrb[0].mxu0
      %1549 = vmatprep.mubr.bf16.mxu0 0
      %1550 = vmatmul.mubr.bf16.gmra.mrb[0].mxu0 %v1402
      %v1551 = vpop.f32.mrb[0].mxu0
      %v1552 = vadd.f32 %v1435, %v1551
      %v1553 = vpop.f32.mrb[0].mxu0
      %v1554 = vpop.f32.mrb[0].mxu0
      %v1555 = vadd.f32 %v1435, %v1554
      %v1556 = vpop.f32.mrb[0].mxu0
      %1557 = vmatprep.mubr.bf16.mxu0 0
      %1558 = vmatmul.mubr.bf16.gmra.mrb[0].mxu0 %v1403
      %v1559 = vpop.f32.mrb[0].mxu0
      %v1560 = vadd.f32 %v1435, %v1559
      %v1561 = vpop.f32.mrb[0].mxu0
      %v1562 = vpop.f32.mrb[0].mxu0
      %v1563 = vadd.f32 %v1435, %v1562
      %v1564 = vpop.f32.mrb[0].mxu0
      %1565 = vmatprep.mubr.bf16.mxu0 0
      %1566 = vmatmul.mubr.bf16.gmra.mrb[0].mxu0 %v1404
      %v1567 = vpop.f32.mrb[0].mxu0
      %v1568 = vadd.f32 %v1435, %v1567
      %v1569 = vpop.f32.mrb[0].mxu0
      %v1570 = vpop.f32.mrb[0].mxu0
      %v1571 = vadd.f32 %v1435, %v1570
      %v1572 = vpop.f32.mrb[0].mxu0
      %1573 = vmatprep.mubr.bf16.mxu0 0
      %1574 = vmatmul.mubr.bf16.gmra.mrb[0].mxu0 %v1405
      %v1575 = vpop.f32.mrb[0].mxu0
      %v1576 = vadd.f32 %v1435, %v1575
      %v1577 = vpop.f32.mrb[0].mxu0
      %v1578 = vpop.f32.mrb[0].mxu0
      %v1579 = vadd.f32 %v1435, %v1578
      %v1580 = vpop.f32.mrb[0].mxu0
      %1581 = vmatprep.mubr.bf16.mxu0 0
      %1582 = vmatmul.mubr.bf16.gmra.mrb[0].mxu0 %v1406
      %v1583 = vpop.f32.mrb[0].mxu0
      %v1584 = vadd.f32 %v1435, %v1583
      %v1585 = vpop.f32.mrb[0].mxu0
      %v1586 = vpop.f32.mrb[0].mxu0
      %v1587 = vadd.f32 %v1435, %v1586
      %v1588 = vpop.f32.mrb[0].mxu0
      %1589 = vmatprep.mubr.bf16.mxu0 0
      %1590 = vmatmul.mubr.bf16.gmra.mrb[0].mxu0 %v1407
      %v1591 = vpop.f32.mrb[0].mxu0
      %v1592 = vadd.f32 %v1435, %v1591
      %v1593 = vpop.f32.mrb[0].mxu0
      %v1594 = vpop.f32.mrb[0].mxu0
      %v1595 = vadd.f32 %v1435, %v1594
      %v1596 = vpop.f32.mrb[0].mxu0
      %1597 = vmatprep.mubr.bf16.mxu0 0
      %1598 = vmatmul.mubr.bf16.gmra.mrb[0].mxu0 %v1408
      %v1599 = vpop.f32.mrb[0].mxu0
      %v1600 = vadd.f32 %v1435, %v1599
      %v1601 = vpop.f32.mrb[0].mxu0
      %v1602 = vpop.f32.mrb[0].mxu0
      %v1603 = vadd.f32 %v1435, %v1602
      %v1604 = vpop.f32.mrb[0].mxu0
      %1605 = vmatprep.mubr.bf16.mxu0 0
      %1606 = vmatmul.mubr.bf16.gmra.mrb[0].mxu0 %v1409
      %v1607 = vpop.f32.mrb[0].mxu0
      %v1608 = vadd.f32 %v1435, %v1607
      %v1609 = vpop.f32.mrb[0].mxu0
      %v1610 = vpop.f32.mrb[0].mxu0
      %v1611 = vadd.f32 %v1435, %v1610
      %v1612 = vpop.f32.mrb[0].mxu0
      %1613 = vmatprep.mubr.bf16.mxu0 0
      %1614 = vmatmul.mubr.bf16.gmra.mrb[0].mxu0 %v1410
      %v1615 = vpop.f32.mrb[0].mxu0
      %v1616 = vadd.f32 %v1435, %v1615
      %v1617 = vpop.f32.mrb[0].mxu0
      %v1618 = vpop.f32.mrb[0].mxu0
      %v1619 = vadd.f32 %v1435, %v1618
      %v1620 = vpop.f32.mrb[0].mxu0
      %1621 = vmatprep.mubr.bf16.mxu0 0
      %1622 = vmatmul.mubr.bf16.gmra.mrb[0].mxu0 %v1411
      %v1623 = vpop.f32.mrb[0].mxu0
      %v1624 = vadd.f32 %v1435, %v1623
      %v1625 = vpop.f32.mrb[0].mxu0
      %v1626 = vpop.f32.mrb[0].mxu0
      %v1627 = vadd.f32 %v1435, %v1626
      %v1628 = vpop.f32.mrb[0].mxu0
      %1629 = vmatprep.mubr.bf16.mxu0 0
      %1630 = vmatmul.mubr.bf16.gmra.mrb[0].mxu0 %v1412
      %v1631 = vpop.f32.mrb[0].mxu0
      %v1632 = vadd.f32 %v1435, %v1631
      %v1633 = vpop.f32.mrb[0].mxu0
      %v1634 = vpop.f32.mrb[0].mxu0
      %v1635 = vadd.f32 %v1435, %v1634
      %v1636 = vpop.f32.mrb[0].mxu0
      %1637 = vmatprep.mubr.bf16.mxu0 0
      %1638 = vmatmul.mubr.bf16.gmra.mrb[0].mxu0 %v1413
      %v1639 = vpop.f32.mrb[0].mxu0
      %v1640 = vadd.f32 %v1435, %v1639
      %v1641 = vpop.f32.mrb[0].mxu0
      %v1642 = vpop.f32.mrb[0].mxu0
      %v1643 = vadd.f32 %v1435, %v1642
      %v1644 = vpop.f32.mrb[0].mxu0
      %1645 = vdwg.mxu0
      %v1646 = vmax.f32 %v1520, 0.0
      %v1647 = vmax.f32 %v1523, 0.0
      %v1648 = vmax.f32 %v1528, 0.0
      %v1649 = vmax.f32 %v1531, 0.0
      %v1650 = vmax.f32 %v1536, 0.0
      %v1651 = vmax.f32 %v1539, 0.0
      %v1652 = vmax.f32 %v1544, 0.0
      %v1653 = vmax.f32 %v1547, 0.0
      %v1654 = vmax.f32 %v1552, 0.0
      %v1655 = vmax.f32 %v1555, 0.0
      %v1656 = vmax.f32 %v1560, 0.0
      %v1657 = vmax.f32 %v1563, 0.0
      %v1658 = vmax.f32 %v1568, 0.0
      %v1659 = vmax.f32 %v1571, 0.0
      %v1660 = vmax.f32 %v1576, 0.0
      %v1661 = vmax.f32 %v1579, 0.0
      %v1662 = vmax.f32 %v1584, 0.0
      %v1663 = vmax.f32 %v1587, 0.0
      %v1664 = vmax.f32 %v1592, 0.0
      %v1665 = vmax.f32 %v1595, 0.0
      %v1666 = vmax.f32 %v1600, 0.0
      %v1667 = vmax.f32 %v1603, 0.0
      %v1668 = vmax.f32 %v1608, 0.0
      %v1669 = vmax.f32 %v1611, 0.0
      %v1670 = vmax.f32 %v1616, 0.0
      %v1671 = vmax.f32 %v1619, 0.0
      %v1672 = vmax.f32 %v1624, 0.0
      %v1673 = vmax.f32 %v1627, 0.0
      %v1674 = vmax.f32 %v1632, 0.0
      %v1675 = vmax.f32 %v1635, 0.0
      %v1676 = vmax.f32 %v1640, 0.0
      %v1677 = vmax.f32 %v1643, 0.0
      %v1710 = vcombine.high %v1646, %v1646
      %v1712 = vunpack.c.l.s4 1983009808
      %v1713 = vunpack.c.0.s8 %v1712
      %v1714 = vlaneseq
      %v1715 = vshrl.u32 %v1714, 7
      %v1716 = vsub.s32 %v1713, %v1715
      %v1717 = vrot.slane %v1646, %v1716
      %v1719 = vunpack.c.l.s4 1983009808
      %v1720 = vunpack.c.0.s8 %v1719
      %v1721 = vlaneseq
      %v1722 = vshrl.u32 %v1721, 7
      %v1723 = vsub.s32 %v1720, %v1722
      %v1724 = vrot.slane %v1710, %v1723
      %v1725 = vcombine.high %v1717, %v1717
      %v1726 = vcombine.high %v1724, %v1724
      %v1727 = vcombine.high %v1647, %v1647
      %v1729 = vunpack.c.l.s4 1983009808
      %v1730 = vunpack.c.0.s8 %v1729
      %v1731 = vlaneseq
      %v1732 = vshrl.u32 %v1731, 7
      %v1733 = vsub.s32 %v1730, %v1732
      %v1734 = vrot.slane %v1647, %v1733
      %v1736 = vunpack.c.l.s4 1983009808
      %v1737 = vunpack.c.0.s8 %v1736
      %v1738 = vlaneseq
      %v1739 = vshrl.u32 %v1738, 7
      %v1740 = vsub.s32 %v1737, %v1739
      %v1741 = vrot.slane %v1727, %v1740
      %v1742 = vcombine.high %v1734, %v1734
      %v1743 = vcombine.high %v1741, %v1741
      %v1744 = vcombine.high %v1648, %v1648
      %v1746 = vunpack.c.l.s4 1983009808
      %v1747 = vunpack.c.0.s8 %v1746
      %v1748 = vlaneseq
      %v1749 = vshrl.u32 %v1748, 7
      %v1750 = vsub.s32 %v1747, %v1749
      %v1751 = vrot.slane %v1648, %v1750
      %v1753 = vunpack.c.l.s4 1983009808
      %v1754 = vunpack.c.0.s8 %v1753
      %v1755 = vlaneseq
      %v1756 = vshrl.u32 %v1755, 7
      %v1757 = vsub.s32 %v1754, %v1756
      %v1758 = vrot.slane %v1744, %v1757
      %v1759 = vcombine.high %v1751, %v1751
      %v1760 = vcombine.high %v1758, %v1758
      %v1761 = vcombine.high %v1649, %v1649
      %v1763 = vunpack.c.l.s4 1983009808
      %v1764 = vunpack.c.0.s8 %v1763
      %v1765 = vlaneseq
      %v1766 = vshrl.u32 %v1765, 7
      %v1767 = vsub.s32 %v1764, %v1766
      %v1768 = vrot.slane %v1649, %v1767
      %v1770 = vunpack.c.l.s4 1983009808
      %v1771 = vunpack.c.0.s8 %v1770
      %v1772 = vlaneseq
      %v1773 = vshrl.u32 %v1772, 7
      %v1774 = vsub.s32 %v1771, %v1773
      %v1775 = vrot.slane %v1761, %v1774
      %v1776 = vcombine.high %v1768, %v1768
      %v1777 = vcombine.high %v1775, %v1775
      %v1778 = vcombine.high %v1650, %v1650
      %v1780 = vunpack.c.l.s4 1983009808
      %v1781 = vunpack.c.0.s8 %v1780
      %v1782 = vlaneseq
      %v1783 = vshrl.u32 %v1782, 7
      %v1784 = vsub.s32 %v1781, %v1783
      %v1785 = vrot.slane %v1650, %v1784
      %v1787 = vunpack.c.l.s4 1983009808
      %v1788 = vunpack.c.0.s8 %v1787
      %v1789 = vlaneseq
      %v1790 = vshrl.u32 %v1789, 7
      %v1791 = vsub.s32 %v1788, %v1790
      %v1792 = vrot.slane %v1778, %v1791
      %v1793 = vcombine.high %v1785, %v1785
      %v1794 = vcombine.high %v1792, %v1792
      %v1795 = vcombine.high %v1651, %v1651
      %v1797 = vunpack.c.l.s4 1983009808
      %v1798 = vunpack.c.0.s8 %v1797
      %v1799 = vlaneseq
      %v1800 = vshrl.u32 %v1799, 7
      %v1801 = vsub.s32 %v1798, %v1800
      %v1802 = vrot.slane %v1651, %v1801
      %v1804 = vunpack.c.l.s4 1983009808
      %v1805 = vunpack.c.0.s8 %v1804
      %v1806 = vlaneseq
      %v1807 = vshrl.u32 %v1806, 7
      %v1808 = vsub.s32 %v1805, %v1807
      %v1809 = vrot.slane %v1795, %v1808
      %v1810 = vcombine.high %v1802, %v1802
      %v1811 = vcombine.high %v1809, %v1809
      %v1812 = vcombine.high %v1652, %v1652
      %v1814 = vunpack.c.l.s4 1983009808
      %v1815 = vunpack.c.0.s8 %v1814
      %v1816 = vlaneseq
      %v1817 = vshrl.u32 %v1816, 7
      %v1818 = vsub.s32 %v1815, %v1817
      %v1819 = vrot.slane %v1652, %v1818
      %v1821 = vunpack.c.l.s4 1983009808
      %v1822 = vunpack.c.0.s8 %v1821
      %v1823 = vlaneseq
      %v1824 = vshrl.u32 %v1823, 7
      %v1825 = vsub.s32 %v1822, %v1824
      %v1826 = vrot.slane %v1812, %v1825
      %v1827 = vcombine.high %v1819, %v1819
      %v1828 = vcombine.high %v1826, %v1826
      %v1829 = vcombine.high %v1653, %v1653
      %v1831 = vunpack.c.l.s4 1983009808
      %v1832 = vunpack.c.0.s8 %v1831
      %v1833 = vlaneseq
      %v1834 = vshrl.u32 %v1833, 7
      %v1835 = vsub.s32 %v1832, %v1834
      %v1836 = vrot.slane %v1653, %v1835
      %v1838 = vunpack.c.l.s4 1983009808
      %v1839 = vunpack.c.0.s8 %v1838
      %v1840 = vlaneseq
      %v1841 = vshrl.u32 %v1840, 7
      %v1842 = vsub.s32 %v1839, %v1841
      %v1843 = vrot.slane %v1829, %v1842
      %v1844 = vcombine.high %v1836, %v1836
      %v1845 = vcombine.high %v1843, %v1843
      %v1846 = vcombine.high %v1654, %v1654
      %v1848 = vunpack.c.l.s4 1983009808
      %v1849 = vunpack.c.0.s8 %v1848
      %v1850 = vlaneseq
      %v1851 = vshrl.u32 %v1850, 7
      %v1852 = vsub.s32 %v1849, %v1851
      %v1853 = vrot.slane %v1654, %v1852
      %v1855 = vunpack.c.l.s4 1983009808
      %v1856 = vunpack.c.0.s8 %v1855
      %v1857 = vlaneseq
      %v1858 = vshrl.u32 %v1857, 7
      %v1859 = vsub.s32 %v1856, %v1858
      %v1860 = vrot.slane %v1846, %v1859
      %v1861 = vcombine.high %v1853, %v1853
      %v1862 = vcombine.high %v1860, %v1860
      %v1863 = vcombine.high %v1655, %v1655
      %v1865 = vunpack.c.l.s4 1983009808
      %v1866 = vunpack.c.0.s8 %v1865
      %v1867 = vlaneseq
      %v1868 = vshrl.u32 %v1867, 7
      %v1869 = vsub.s32 %v1866, %v1868
      %v1870 = vrot.slane %v1655, %v1869
      %v1872 = vunpack.c.l.s4 1983009808
      %v1873 = vunpack.c.0.s8 %v1872
      %v1874 = vlaneseq
      %v1875 = vshrl.u32 %v1874, 7
      %v1876 = vsub.s32 %v1873, %v1875
      %v1877 = vrot.slane %v1863, %v1876
      %v1878 = vcombine.high %v1870, %v1870
      %v1879 = vcombine.high %v1877, %v1877
      %v1880 = vcombine.high %v1656, %v1656
      %v1882 = vunpack.c.l.s4 1983009808
      %v1883 = vunpack.c.0.s8 %v1882
      %v1884 = vlaneseq
      %v1885 = vshrl.u32 %v1884, 7
      %v1886 = vsub.s32 %v1883, %v1885
      %v1887 = vrot.slane %v1656, %v1886
      %v1889 = vunpack.c.l.s4 1983009808
      %v1890 = vunpack.c.0.s8 %v1889
      %v1891 = vlaneseq
      %v1892 = vshrl.u32 %v1891, 7
      %v1893 = vsub.s32 %v1890, %v1892
      %v1894 = vrot.slane %v1880, %v1893
      %v1895 = vcombine.high %v1887, %v1887
      %v1896 = vcombine.high %v1894, %v1894
      %v1897 = vcombine.high %v1657, %v1657
      %v1899 = vunpack.c.l.s4 1983009808
      %v1900 = vunpack.c.0.s8 %v1899
      %v1901 = vlaneseq
      %v1902 = vshrl.u32 %v1901, 7
      %v1903 = vsub.s32 %v1900, %v1902
      %v1904 = vrot.slane %v1657, %v1903
      %v1906 = vunpack.c.l.s4 1983009808
      %v1907 = vunpack.c.0.s8 %v1906
      %v1908 = vlaneseq
      %v1909 = vshrl.u32 %v1908, 7
      %v1910 = vsub.s32 %v1907, %v1909
      %v1911 = vrot.slane %v1897, %v1910
      %v1912 = vcombine.high %v1904, %v1904
      %v1913 = vcombine.high %v1911, %v1911
      %v1914 = vcombine.high %v1658, %v1658
      %v1916 = vunpack.c.l.s4 1983009808
      %v1917 = vunpack.c.0.s8 %v1916
      %v1918 = vlaneseq
      %v1919 = vshrl.u32 %v1918, 7
      %v1920 = vsub.s32 %v1917, %v1919
      %v1921 = vrot.slane %v1658, %v1920
      %v1923 = vunpack.c.l.s4 1983009808
      %v1924 = vunpack.c.0.s8 %v1923
      %v1925 = vlaneseq
      %v1926 = vshrl.u32 %v1925, 7
      %v1927 = vsub.s32 %v1924, %v1926
      %v1928 = vrot.slane %v1914, %v1927
      %v1929 = vcombine.high %v1921, %v1921
      %v1930 = vcombine.high %v1928, %v1928
      %v1931 = vcombine.high %v1659, %v1659
      %v1933 = vunpack.c.l.s4 1983009808
      %v1934 = vunpack.c.0.s8 %v1933
      %v1935 = vlaneseq
      %v1936 = vshrl.u32 %v1935, 7
      %v1937 = vsub.s32 %v1934, %v1936
      %v1938 = vrot.slane %v1659, %v1937
      %v1940 = vunpack.c.l.s4 1983009808
      %v1941 = vunpack.c.0.s8 %v1940
      %v1942 = vlaneseq
      %v1943 = vshrl.u32 %v1942, 7
      %v1944 = vsub.s32 %v1941, %v1943
      %v1945 = vrot.slane %v1931, %v1944
      %v1946 = vcombine.high %v1938, %v1938
      %v1947 = vcombine.high %v1945, %v1945
      %v1948 = vcombine.high %v1660, %v1660
      %v1950 = vunpack.c.l.s4 1983009808
      %v1951 = vunpack.c.0.s8 %v1950
      %v1952 = vlaneseq
      %v1953 = vshrl.u32 %v1952, 7
      %v1954 = vsub.s32 %v1951, %v1953
      %v1955 = vrot.slane %v1660, %v1954
      %v1957 = vunpack.c.l.s4 1983009808
      %v1958 = vunpack.c.0.s8 %v1957
      %v1959 = vlaneseq
      %v1960 = vshrl.u32 %v1959, 7
      %v1961 = vsub.s32 %v1958, %v1960
      %v1962 = vrot.slane %v1948, %v1961
      %v1963 = vcombine.high %v1955, %v1955
      %v1964 = vcombine.high %v1962, %v1962
      %v1965 = vcombine.high %v1661, %v1661
      %v1967 = vunpack.c.l.s4 1983009808
      %v1968 = vunpack.c.0.s8 %v1967
      %v1969 = vlaneseq
      %v1970 = vshrl.u32 %v1969, 7
      %v1971 = vsub.s32 %v1968, %v1970
      %v1972 = vrot.slane %v1661, %v1971
      %v1974 = vunpack.c.l.s4 1983009808
      %v1975 = vunpack.c.0.s8 %v1974
      %v1976 = vlaneseq
      %v1977 = vshrl.u32 %v1976, 7
      %v1978 = vsub.s32 %v1975, %v1977
      %v1979 = vrot.slane %v1965, %v1978
      %v1980 = vcombine.high %v1972, %v1972
      %v1981 = vcombine.high %v1979, %v1979
      %v1982 = vcombine.high %v1662, %v1662
      %v1984 = vunpack.c.l.s4 1983009808
      %v1985 = vunpack.c.0.s8 %v1984
      %v1986 = vlaneseq
      %v1987 = vshrl.u32 %v1986, 7
      %v1988 = vsub.s32 %v1985, %v1987
      %v1989 = vrot.slane %v1662, %v1988
      %v1991 = vunpack.c.l.s4 1983009808
      %v1992 = vunpack.c.0.s8 %v1991
      %v1993 = vlaneseq
      %v1994 = vshrl.u32 %v1993, 7
      %v1995 = vsub.s32 %v1992, %v1994
      %v1996 = vrot.slane %v1982, %v1995
      %v1997 = vcombine.high %v1989, %v1989
      %v1998 = vcombine.high %v1996, %v1996
      %v1999 = vcombine.high %v1663, %v1663
      %v2001 = vunpack.c.l.s4 1983009808
      %v2002 = vunpack.c.0.s8 %v2001
      %v2003 = vlaneseq
      %v2004 = vshrl.u32 %v2003, 7
      %v2005 = vsub.s32 %v2002, %v2004
      %v2006 = vrot.slane %v1663, %v2005
      %v2008 = vunpack.c.l.s4 1983009808
      %v2009 = vunpack.c.0.s8 %v2008
      %v2010 = vlaneseq
      %v2011 = vshrl.u32 %v2010, 7
      %v2012 = vsub.s32 %v2009, %v2011
      %v2013 = vrot.slane %v1999, %v2012
      %v2014 = vcombine.high %v2006, %v2006
      %v2015 = vcombine.high %v2013, %v2013
      %v2016 = vcombine.high %v1664, %v1664
      %v2018 = vunpack.c.l.s4 1983009808
      %v2019 = vunpack.c.0.s8 %v2018
      %v2020 = vlaneseq
      %v2021 = vshrl.u32 %v2020, 7
      %v2022 = vsub.s32 %v2019, %v2021
      %v2023 = vrot.slane %v1664, %v2022
      %v2025 = vunpack.c.l.s4 1983009808
      %v2026 = vunpack.c.0.s8 %v2025
      %v2027 = vlaneseq
      %v2028 = vshrl.u32 %v2027, 7
      %v2029 = vsub.s32 %v2026, %v2028
      %v2030 = vrot.slane %v2016, %v2029
      %v2031 = vcombine.high %v2023, %v2023
      %v2032 = vcombine.high %v2030, %v2030
      %v2033 = vcombine.high %v1665, %v1665
      %v2035 = vunpack.c.l.s4 1983009808
      %v2036 = vunpack.c.0.s8 %v2035
      %v2037 = vlaneseq
      %v2038 = vshrl.u32 %v2037, 7
      %v2039 = vsub.s32 %v2036, %v2038
      %v2040 = vrot.slane %v1665, %v2039
      %v2042 = vunpack.c.l.s4 1983009808
      %v2043 = vunpack.c.0.s8 %v2042
      %v2044 = vlaneseq
      %v2045 = vshrl.u32 %v2044, 7
      %v2046 = vsub.s32 %v2043, %v2045
      %v2047 = vrot.slane %v2033, %v2046
      %v2048 = vcombine.high %v2040, %v2040
      %v2049 = vcombine.high %v2047, %v2047
      %v2050 = vcombine.high %v1666, %v1666
      %v2052 = vunpack.c.l.s4 1983009808
      %v2053 = vunpack.c.0.s8 %v2052
      %v2054 = vlaneseq
      %v2055 = vshrl.u32 %v2054, 7
      %v2056 = vsub.s32 %v2053, %v2055
      %v2057 = vrot.slane %v1666, %v2056
      %v2059 = vunpack.c.l.s4 1983009808
      %v2060 = vunpack.c.0.s8 %v2059
      %v2061 = vlaneseq
      %v2062 = vshrl.u32 %v2061, 7
      %v2063 = vsub.s32 %v2060, %v2062
      %v2064 = vrot.slane %v2050, %v2063
      %v2065 = vcombine.high %v2057, %v2057
      %v2066 = vcombine.high %v2064, %v2064
      %v2067 = vcombine.high %v1667, %v1667
      %v2069 = vunpack.c.l.s4 1983009808
      %v2070 = vunpack.c.0.s8 %v2069
      %v2071 = vlaneseq
      %v2072 = vshrl.u32 %v2071, 7
      %v2073 = vsub.s32 %v2070, %v2072
      %v2074 = vrot.slane %v1667, %v2073
      %v2076 = vunpack.c.l.s4 1983009808
      %v2077 = vunpack.c.0.s8 %v2076
      %v2078 = vlaneseq
      %v2079 = vshrl.u32 %v2078, 7
      %v2080 = vsub.s32 %v2077, %v2079
      %v2081 = vrot.slane %v2067, %v2080
      %v2082 = vcombine.high %v2074, %v2074
      %v2083 = vcombine.high %v2081, %v2081
      %v2084 = vcombine.high %v1668, %v1668
      %v2086 = vunpack.c.l.s4 1983009808
      %v2087 = vunpack.c.0.s8 %v2086
      %v2088 = vlaneseq
      %v2089 = vshrl.u32 %v2088, 7
      %v2090 = vsub.s32 %v2087, %v2089
      %v2091 = vrot.slane %v1668, %v2090
      %v2093 = vunpack.c.l.s4 1983009808
      %v2094 = vunpack.c.0.s8 %v2093
      %v2095 = vlaneseq
      %v2096 = vshrl.u32 %v2095, 7
      %v2097 = vsub.s32 %v2094, %v2096
      %v2098 = vrot.slane %v2084, %v2097
      %v2099 = vcombine.high %v2091, %v2091
      %v2100 = vcombine.high %v2098, %v2098
      %v2101 = vcombine.high %v1669, %v1669
      %v2103 = vunpack.c.l.s4 1983009808
      %v2104 = vunpack.c.0.s8 %v2103
      %v2105 = vlaneseq
      %v2106 = vshrl.u32 %v2105, 7
      %v2107 = vsub.s32 %v2104, %v2106
      %v2108 = vrot.slane %v1669, %v2107
      %v2110 = vunpack.c.l.s4 1983009808
      %v2111 = vunpack.c.0.s8 %v2110
      %v2112 = vlaneseq
      %v2113 = vshrl.u32 %v2112, 7
      %v2114 = vsub.s32 %v2111, %v2113
      %v2115 = vrot.slane %v2101, %v2114
      %v2116 = vcombine.high %v2108, %v2108
      %v2117 = vcombine.high %v2115, %v2115
      %v2118 = vcombine.high %v1670, %v1670
      %v2120 = vunpack.c.l.s4 1983009808
      %v2121 = vunpack.c.0.s8 %v2120
      %v2122 = vlaneseq
      %v2123 = vshrl.u32 %v2122, 7
      %v2124 = vsub.s32 %v2121, %v2123
      %v2125 = vrot.slane %v1670, %v2124
      %v2127 = vunpack.c.l.s4 1983009808
      %v2128 = vunpack.c.0.s8 %v2127
      %v2129 = vlaneseq
      %v2130 = vshrl.u32 %v2129, 7
      %v2131 = vsub.s32 %v2128, %v2130
      %v2132 = vrot.slane %v2118, %v2131
      %v2133 = vcombine.high %v2125, %v2125
      %v2134 = vcombine.high %v2132, %v2132
      %v2135 = vcombine.high %v1671, %v1671
      %v2137 = vunpack.c.l.s4 1983009808
      %v2138 = vunpack.c.0.s8 %v2137
      %v2139 = vlaneseq
      %v2140 = vshrl.u32 %v2139, 7
      %v2141 = vsub.s32 %v2138, %v2140
      %v2142 = vrot.slane %v1671, %v2141
      %v2144 = vunpack.c.l.s4 1983009808
      %v2145 = vunpack.c.0.s8 %v2144
      %v2146 = vlaneseq
      %v2147 = vshrl.u32 %v2146, 7
      %v2148 = vsub.s32 %v2145, %v2147
      %v2149 = vrot.slane %v2135, %v2148
      %v2150 = vcombine.high %v2142, %v2142
      %v2151 = vcombine.high %v2149, %v2149
      %v2152 = vcombine.high %v1672, %v1672
      %v2154 = vunpack.c.l.s4 1983009808
      %v2155 = vunpack.c.0.s8 %v2154
      %v2156 = vlaneseq
      %v2157 = vshrl.u32 %v2156, 7
      %v2158 = vsub.s32 %v2155, %v2157
      %v2159 = vrot.slane %v1672, %v2158
      %v2161 = vunpack.c.l.s4 1983009808
      %v2162 = vunpack.c.0.s8 %v2161
      %v2163 = vlaneseq
      %v2164 = vshrl.u32 %v2163, 7
      %v2165 = vsub.s32 %v2162, %v2164
      %v2166 = vrot.slane %v2152, %v2165
      %v2167 = vcombine.high %v2159, %v2159
      %v2168 = vcombine.high %v2166, %v2166
      %v2169 = vcombine.high %v1673, %v1673
      %v2171 = vunpack.c.l.s4 1983009808
      %v2172 = vunpack.c.0.s8 %v2171
      %v2173 = vlaneseq
      %v2174 = vshrl.u32 %v2173, 7
      %v2175 = vsub.s32 %v2172, %v2174
      %v2176 = vrot.slane %v1673, %v2175
      %v2178 = vunpack.c.l.s4 1983009808
      %v2179 = vunpack.c.0.s8 %v2178
      %v2180 = vlaneseq
      %v2181 = vshrl.u32 %v2180, 7
      %v2182 = vsub.s32 %v2179, %v2181
      %v2183 = vrot.slane %v2169, %v2182
      %v2184 = vcombine.high %v2176, %v2176
      %v2185 = vcombine.high %v2183, %v2183
      %v2186 = vcombine.high %v1674, %v1674
      %v2188 = vunpack.c.l.s4 1983009808
      %v2189 = vunpack.c.0.s8 %v2188
      %v2190 = vlaneseq
      %v2191 = vshrl.u32 %v2190, 7
      %v2192 = vsub.s32 %v2189, %v2191
      %v2193 = vrot.slane %v1674, %v2192
      %v2195 = vunpack.c.l.s4 1983009808
      %v2196 = vunpack.c.0.s8 %v2195
      %v2197 = vlaneseq
      %v2198 = vshrl.u32 %v2197, 7
      %v2199 = vsub.s32 %v2196, %v2198
      %v2200 = vrot.slane %v2186, %v2199
      %v2201 = vcombine.high %v2193, %v2193
      %v2202 = vcombine.high %v2200, %v2200
      %v2203 = vcombine.high %v1675, %v1675
      %v2205 = vunpack.c.l.s4 1983009808
      %v2206 = vunpack.c.0.s8 %v2205
      %v2207 = vlaneseq
      %v2208 = vshrl.u32 %v2207, 7
      %v2209 = vsub.s32 %v2206, %v2208
      %v2210 = vrot.slane %v1675, %v2209
      %v2212 = vunpack.c.l.s4 1983009808
      %v2213 = vunpack.c.0.s8 %v2212
      %v2214 = vlaneseq
      %v2215 = vshrl.u32 %v2214, 7
      %v2216 = vsub.s32 %v2213, %v2215
      %v2217 = vrot.slane %v2203, %v2216
      %v2218 = vcombine.high %v2210, %v2210
      %v2219 = vcombine.high %v2217, %v2217
      %v2220 = vcombine.high %v1676, %v1676
      %v2222 = vunpack.c.l.s4 1983009808
      %v2223 = vunpack.c.0.s8 %v2222
      %v2224 = vlaneseq
      %v2225 = vshrl.u32 %v2224, 7
      %v2226 = vsub.s32 %v2223, %v2225
      %v2227 = vrot.slane %v1676, %v2226
      %v2229 = vunpack.c.l.s4 1983009808
      %v2230 = vunpack.c.0.s8 %v2229
      %v2231 = vlaneseq
      %v2232 = vshrl.u32 %v2231, 7
      %v2233 = vsub.s32 %v2230, %v2232
      %v2234 = vrot.slane %v2220, %v2233
      %v2235 = vcombine.high %v2227, %v2227
      %v2236 = vcombine.high %v2234, %v2234
      %v2237 = vcombine.high %v1677, %v1677
      %v2239 = vunpack.c.l.s4 1983009808
      %v2240 = vunpack.c.0.s8 %v2239
      %v2241 = vlaneseq
      %v2242 = vshrl.u32 %v2241, 7
      %v2243 = vsub.s32 %v2240, %v2242
      %v2244 = vrot.slane %v1677, %v2243
      %v2246 = vunpack.c.l.s4 1983009808
      %v2247 = vunpack.c.0.s8 %v2246
      %v2248 = vlaneseq
      %v2249 = vshrl.u32 %v2248, 7
      %v2250 = vsub.s32 %v2247, %v2249
      %v2251 = vrot.slane %v2237, %v2250
      %v2252 = vcombine.high %v2244, %v2244
      %v2253 = vcombine.high %v2251, %v2251
      %v2382 = vrot.slane %v1717, 7
      %v2383 = vrot.slane %v2382, 2
      %v2384 = vrot.slane %v1725, 7
      %v2385 = vrot.slane %v2384, 2
      %v2386 = vrot.slane %v1724, 7
      %v2387 = vrot.slane %v2386, 2
      %v2388 = vrot.slane %v1726, 7
      %v2389 = vrot.slane %v2388, 2
      %v2390 = vrot.slane %v1734, 7
      %v2391 = vrot.slane %v2390, 2
      %v2392 = vrot.slane %v1742, 7
      %v2393 = vrot.slane %v2392, 2
      %v2394 = vrot.slane %v1741, 7
      %v2395 = vrot.slane %v2394, 2
      %v2396 = vrot.slane %v1743, 7
      %v2397 = vrot.slane %v2396, 2
      %v2398 = vrot.slane %v1751, 7
      %v2399 = vrot.slane %v2398, 2
      %v2400 = vrot.slane %v1759, 7
      %v2401 = vrot.slane %v2400, 2
      %v2402 = vrot.slane %v1758, 7
      %v2403 = vrot.slane %v2402, 2
      %v2404 = vrot.slane %v1760, 7
      %v2405 = vrot.slane %v2404, 2
      %v2406 = vrot.slane %v1768, 7
      %v2407 = vrot.slane %v2406, 2
      %v2408 = vrot.slane %v1776, 7
      %v2409 = vrot.slane %v2408, 2
      %v2410 = vrot.slane %v1775, 7
      %v2411 = vrot.slane %v2410, 2
      %v2412 = vrot.slane %v1777, 7
      %v2413 = vrot.slane %v2412, 2
      %v2414 = vrot.slane %v1785, 7
      %v2415 = vrot.slane %v2414, 2
      %v2416 = vrot.slane %v1793, 7
      %v2417 = vrot.slane %v2416, 2
      %v2418 = vrot.slane %v1792, 7
      %v2419 = vrot.slane %v2418, 2
      %v2420 = vrot.slane %v1794, 7
      %v2421 = vrot.slane %v2420, 2
      %v2422 = vrot.slane %v1802, 7
      %v2423 = vrot.slane %v2422, 2
      %v2424 = vrot.slane %v1810, 7
      %v2425 = vrot.slane %v2424, 2
      %v2426 = vrot.slane %v1809, 7
      %v2427 = vrot.slane %v2426, 2
      %v2428 = vrot.slane %v1811, 7
      %v2429 = vrot.slane %v2428, 2
      %v2430 = vrot.slane %v1819, 7
      %v2431 = vrot.slane %v2430, 2
      %v2432 = vrot.slane %v1827, 7
      %v2433 = vrot.slane %v2432, 2
      %v2434 = vrot.slane %v1826, 7
      %v2435 = vrot.slane %v2434, 2
      %v2436 = vrot.slane %v1828, 7
      %v2437 = vrot.slane %v2436, 2
      %v2438 = vrot.slane %v1836, 7
      %v2439 = vrot.slane %v2438, 2
      %v2440 = vrot.slane %v1844, 7
      %v2441 = vrot.slane %v2440, 2
      %v2442 = vrot.slane %v1843, 7
      %v2443 = vrot.slane %v2442, 2
      %v2444 = vrot.slane %v1845, 7
      %v2445 = vrot.slane %v2444, 2
      %v2446 = vrot.slane %v1853, 7
      %v2447 = vrot.slane %v2446, 2
      %v2448 = vrot.slane %v1861, 7
      %v2449 = vrot.slane %v2448, 2
      %v2450 = vrot.slane %v1860, 7
      %v2451 = vrot.slane %v2450, 2
      %v2452 = vrot.slane %v1862, 7
      %v2453 = vrot.slane %v2452, 2
      %v2454 = vrot.slane %v1870, 7
      %v2455 = vrot.slane %v2454, 2
      %v2456 = vrot.slane %v1878, 7
      %v2457 = vrot.slane %v2456, 2
      %v2458 = vrot.slane %v1877, 7
      %v2459 = vrot.slane %v2458, 2
      %v2460 = vrot.slane %v1879, 7
      %v2461 = vrot.slane %v2460, 2
      %v2462 = vrot.slane %v1887, 7
      %v2463 = vrot.slane %v2462, 2
      %v2464 = vrot.slane %v1895, 7
      %v2465 = vrot.slane %v2464, 2
      %v2466 = vrot.slane %v1894, 7
      %v2467 = vrot.slane %v2466, 2
      %v2468 = vrot.slane %v1896, 7
      %v2469 = vrot.slane %v2468, 2
      %v2470 = vrot.slane %v1904, 7
      %v2471 = vrot.slane %v2470, 2
      %v2472 = vrot.slane %v1912, 7
      %v2473 = vrot.slane %v2472, 2
      %v2474 = vrot.slane %v1911, 7
      %v2475 = vrot.slane %v2474, 2
      %v2476 = vrot.slane %v1913, 7
      %v2477 = vrot.slane %v2476, 2
      %v2478 = vrot.slane %v1921, 7
      %v2479 = vrot.slane %v2478, 2
      %v2480 = vrot.slane %v1929, 7
      %v2481 = vrot.slane %v2480, 2
      %v2482 = vrot.slane %v1928, 7
      %v2483 = vrot.slane %v2482, 2
      %v2484 = vrot.slane %v1930, 7
      %v2485 = vrot.slane %v2484, 2
      %v2486 = vrot.slane %v1938, 7
      %v2487 = vrot.slane %v2486, 2
      %v2488 = vrot.slane %v1946, 7
      %v2489 = vrot.slane %v2488, 2
      %v2490 = vrot.slane %v1945, 7
      %v2491 = vrot.slane %v2490, 2
      %v2492 = vrot.slane %v1947, 7
      %v2493 = vrot.slane %v2492, 2
      %v2494 = vrot.slane %v1955, 7
      %v2495 = vrot.slane %v2494, 2
      %v2496 = vrot.slane %v1963, 7
      %v2497 = vrot.slane %v2496, 2
      %v2498 = vrot.slane %v1962, 7
      %v2499 = vrot.slane %v2498, 2
      %v2500 = vrot.slane %v1964, 7
      %v2501 = vrot.slane %v2500, 2
      %v2502 = vrot.slane %v1972, 7
      %v2503 = vrot.slane %v2502, 2
      %v2504 = vrot.slane %v1980, 7
      %v2505 = vrot.slane %v2504, 2
      %v2506 = vrot.slane %v1979, 7
      %v2507 = vrot.slane %v2506, 2
      %v2508 = vrot.slane %v1981, 7
      %v2509 = vrot.slane %v2508, 2
      %v2510 = vrot.slane %v1989, 7
      %v2511 = vrot.slane %v2510, 2
      %v2512 = vrot.slane %v1997, 7
      %v2513 = vrot.slane %v2512, 2
      %v2514 = vrot.slane %v1996, 7
      %v2515 = vrot.slane %v2514, 2
      %v2516 = vrot.slane %v1998, 7
      %v2517 = vrot.slane %v2516, 2
      %v2518 = vrot.slane %v2006, 7
      %v2519 = vrot.slane %v2518, 2
      %v2520 = vrot.slane %v2014, 7
      %v2521 = vrot.slane %v2520, 2
      %v2522 = vrot.slane %v2013, 7
      %v2523 = vrot.slane %v2522, 2
      %v2524 = vrot.slane %v2015, 7
      %v2525 = vrot.slane %v2524, 2
      %v2526 = vrot.slane %v2023, 7
      %v2527 = vrot.slane %v2526, 2
      %v2528 = vrot.slane %v2031, 7
      %v2529 = vrot.slane %v2528, 2
      %v2530 = vrot.slane %v2030, 7
      %v2531 = vrot.slane %v2530, 2
      %v2532 = vrot.slane %v2032, 7
      %v2533 = vrot.slane %v2532, 2
      %v2534 = vrot.slane %v2040, 7
      %v2535 = vrot.slane %v2534, 2
      %v2536 = vrot.slane %v2048, 7
      %v2537 = vrot.slane %v2536, 2
      %v2538 = vrot.slane %v2047, 7
      %v2539 = vrot.slane %v2538, 2
      %v2540 = vrot.slane %v2049, 7
      %v2541 = vrot.slane %v2540, 2
      %v2542 = vrot.slane %v2057, 7
      %v2543 = vrot.slane %v2542, 2
      %v2544 = vrot.slane %v2065, 7
      %v2545 = vrot.slane %v2544, 2
      %v2546 = vrot.slane %v2064, 7
      %v2547 = vrot.slane %v2546, 2
      %v2548 = vrot.slane %v2066, 7
      %v2549 = vrot.slane %v2548, 2
      %v2550 = vrot.slane %v2074, 7
      %v2551 = vrot.slane %v2550, 2
      %v2552 = vrot.slane %v2082, 7
      %v2553 = vrot.slane %v2552, 2
      %v2554 = vrot.slane %v2081, 7
      %v2555 = vrot.slane %v2554, 2
      %v2556 = vrot.slane %v2083, 7
      %v2557 = vrot.slane %v2556, 2
      %v2558 = vrot.slane %v2091, 7
      %v2559 = vrot.slane %v2558, 2
      %v2560 = vrot.slane %v2099, 7
      %v2561 = vrot.slane %v2560, 2
      %v2562 = vrot.slane %v2098, 7
      %v2563 = vrot.slane %v2562, 2
      %v2564 = vrot.slane %v2100, 7
      %v2565 = vrot.slane %v2564, 2
      %v2566 = vrot.slane %v2108, 7
      %v2567 = vrot.slane %v2566, 2
      %v2568 = vrot.slane %v2116, 7
      %v2569 = vrot.slane %v2568, 2
      %v2570 = vrot.slane %v2115, 7
      %v2571 = vrot.slane %v2570, 2
      %v2572 = vrot.slane %v2117, 7
      %v2573 = vrot.slane %v2572, 2
      %v2574 = vrot.slane %v2125, 7
      %v2575 = vrot.slane %v2574, 2
      %v2576 = vrot.slane %v2133, 7
      %v2577 = vrot.slane %v2576, 2
      %v2578 = vrot.slane %v2132, 7
      %v2579 = vrot.slane %v2578, 2
      %v2580 = vrot.slane %v2134, 7
      %v2581 = vrot.slane %v2580, 2
      %v2582 = vrot.slane %v2142, 7
      %v2583 = vrot.slane %v2582, 2
      %v2584 = vrot.slane %v2150, 7
      %v2585 = vrot.slane %v2584, 2
      %v2586 = vrot.slane %v2149, 7
      %v2587 = vrot.slane %v2586, 2
      %v2588 = vrot.slane %v2151, 7
      %v2589 = vrot.slane %v2588, 2
      %v2590 = vrot.slane %v2159, 7
      %v2591 = vrot.slane %v2590, 2
      %v2592 = vrot.slane %v2167, 7
      %v2593 = vrot.slane %v2592, 2
      %v2594 = vrot.slane %v2166, 7
      %v2595 = vrot.slane %v2594, 2
      %v2596 = vrot.slane %v2168, 7
      %v2597 = vrot.slane %v2596, 2
      %v2598 = vrot.slane %v2176, 7
      %v2599 = vrot.slane %v2598, 2
      %v2600 = vrot.slane %v2184, 7
      %v2601 = vrot.slane %v2600, 2
      %v2602 = vrot.slane %v2183, 7
      %v2603 = vrot.slane %v2602, 2
      %v2604 = vrot.slane %v2185, 7
      %v2605 = vrot.slane %v2604, 2
      %v2606 = vrot.slane %v2193, 7
      %v2607 = vrot.slane %v2606, 2
      %v2608 = vrot.slane %v2201, 7
      %v2609 = vrot.slane %v2608, 2
      %v2610 = vrot.slane %v2200, 7
      %v2611 = vrot.slane %v2610, 2
      %v2612 = vrot.slane %v2202, 7
      %v2613 = vrot.slane %v2612, 2
      %v2614 = vrot.slane %v2210, 7
      %v2615 = vrot.slane %v2614, 2
      %v2616 = vrot.slane %v2218, 7
      %v2617 = vrot.slane %v2616, 2
      %v2618 = vrot.slane %v2217, 7
      %v2619 = vrot.slane %v2618, 2
      %v2620 = vrot.slane %v2219, 7
      %v2621 = vrot.slane %v2620, 2
      %v2622 = vrot.slane %v2227, 7
      %v2623 = vrot.slane %v2622, 2
      %v2624 = vrot.slane %v2235, 7
      %v2625 = vrot.slane %v2624, 2
      %v2626 = vrot.slane %v2234, 7
      %v2627 = vrot.slane %v2626, 2
      %v2628 = vrot.slane %v2236, 7
      %v2629 = vrot.slane %v2628, 2
      %v2630 = vrot.slane %v2244, 7
      %v2631 = vrot.slane %v2630, 2
      %v2632 = vrot.slane %v2252, 7
      %v2633 = vrot.slane %v2632, 2
      %v2634 = vrot.slane %v2251, 7
      %v2635 = vrot.slane %v2634, 2
      %v2636 = vrot.slane %v2253, 7
      %v2637 = vrot.slane %v2636, 2
      %v2766 = vmax.f32 %v1717, %v2383
      %v2767 = vmax.f32 %v1725, %v2385
      %v2768 = vmax.f32 %v1724, %v2387
      %v2769 = vmax.f32 %v1726, %v2389
      %v2770 = vmax.f32 %v1734, %v2391
      %v2771 = vmax.f32 %v1742, %v2393
      %v2772 = vmax.f32 %v1741, %v2395
      %v2773 = vmax.f32 %v1743, %v2397
      %v2774 = vmax.f32 %v1751, %v2399
      %v2775 = vmax.f32 %v1759, %v2401
      %v2776 = vmax.f32 %v1758, %v2403
      %v2777 = vmax.f32 %v1760, %v2405
      %v2778 = vmax.f32 %v1768, %v2407
      %v2779 = vmax.f32 %v1776, %v2409
      %v2780 = vmax.f32 %v1775, %v2411
      %v2781 = vmax.f32 %v1777, %v2413
      %v2782 = vmax.f32 %v1785, %v2415
      %v2783 = vmax.f32 %v1793, %v2417
      %v2784 = vmax.f32 %v1792, %v2419
      %v2785 = vmax.f32 %v1794, %v2421
      %v2786 = vmax.f32 %v1802, %v2423
      %v2787 = vmax.f32 %v1810, %v2425
      %v2788 = vmax.f32 %v1809, %v2427
      %v2789 = vmax.f32 %v1811, %v2429
      %v2790 = vmax.f32 %v1819, %v2431
      %v2791 = vmax.f32 %v1827, %v2433
      %v2792 = vmax.f32 %v1826, %v2435
      %v2793 = vmax.f32 %v1828, %v2437
      %v2794 = vmax.f32 %v1836, %v2439
      %v2795 = vmax.f32 %v1844, %v2441
      %v2796 = vmax.f32 %v1843, %v2443
      %v2797 = vmax.f32 %v1845, %v2445
      %v2798 = vmax.f32 %v1853, %v2447
      %v2799 = vmax.f32 %v1861, %v2449
      %v2800 = vmax.f32 %v1860, %v2451
      %v2801 = vmax.f32 %v1862, %v2453
      %v2802 = vmax.f32 %v1870, %v2455
      %v2803 = vmax.f32 %v1878, %v2457
      %v2804 = vmax.f32 %v1877, %v2459
      %v2805 = vmax.f32 %v1879, %v2461
      %v2806 = vmax.f32 %v1887, %v2463
      %v2807 = vmax.f32 %v1895, %v2465
      %v2808 = vmax.f32 %v1894, %v2467
      %v2809 = vmax.f32 %v1896, %v2469
      %v2810 = vmax.f32 %v1904, %v2471
      %v2811 = vmax.f32 %v1912, %v2473
      %v2812 = vmax.f32 %v1911, %v2475
      %v2813 = vmax.f32 %v1913, %v2477
      %v2814 = vmax.f32 %v1921, %v2479
      %v2815 = vmax.f32 %v1929, %v2481
      %v2816 = vmax.f32 %v1928, %v2483
      %v2817 = vmax.f32 %v1930, %v2485
      %v2818 = vmax.f32 %v1938, %v2487
      %v2819 = vmax.f32 %v1946, %v2489
      %v2820 = vmax.f32 %v1945, %v2491
      %v2821 = vmax.f32 %v1947, %v2493
      %v2822 = vmax.f32 %v1955, %v2495
      %v2823 = vmax.f32 %v1963, %v2497
      %v2824 = vmax.f32 %v1962, %v2499
      %v2825 = vmax.f32 %v1964, %v2501
      %v2826 = vmax.f32 %v1972, %v2503
      %v2827 = vmax.f32 %v1980, %v2505
      %v2828 = vmax.f32 %v1979, %v2507
      %v2829 = vmax.f32 %v1981, %v2509
      %v2830 = vmax.f32 %v1989, %v2511
      %v2831 = vmax.f32 %v1997, %v2513
      %v2832 = vmax.f32 %v1996, %v2515
      %v2833 = vmax.f32 %v1998, %v2517
      %v2834 = vmax.f32 %v2006, %v2519
      %v2835 = vmax.f32 %v2014, %v2521
      %v2836 = vmax.f32 %v2013, %v2523
      %v2837 = vmax.f32 %v2015, %v2525
      %v2838 = vmax.f32 %v2023, %v2527
      %v2839 = vmax.f32 %v2031, %v2529
      %v2840 = vmax.f32 %v2030, %v2531
      %v2841 = vmax.f32 %v2032, %v2533
      %v2842 = vmax.f32 %v2040, %v2535
      %v2843 = vmax.f32 %v2048, %v2537
      %v2844 = vmax.f32 %v2047, %v2539
      %v2845 = vmax.f32 %v2049, %v2541
      %v2846 = vmax.f32 %v2057, %v2543
      %v2847 = vmax.f32 %v2065, %v2545
      %v2848 = vmax.f32 %v2064, %v2547
      %v2849 = vmax.f32 %v2066, %v2549
      %v2850 = vmax.f32 %v2074, %v2551
      %v2851 = vmax.f32 %v2082, %v2553
      %v2852 = vmax.f32 %v2081, %v2555
      %v2853 = vmax.f32 %v2083, %v2557
      %v2854 = vmax.f32 %v2091, %v2559
      %v2855 = vmax.f32 %v2099, %v2561
      %v2856 = vmax.f32 %v2098, %v2563
      %v2857 = vmax.f32 %v2100, %v2565
      %v2858 = vmax.f32 %v2108, %v2567
      %v2859 = vmax.f32 %v2116, %v2569
      %v2860 = vmax.f32 %v2115, %v2571
      %v2861 = vmax.f32 %v2117, %v2573
      %v2862 = vmax.f32 %v2125, %v2575
      %v2863 = vmax.f32 %v2133, %v2577
      %v2864 = vmax.f32 %v2132, %v2579
      %v2865 = vmax.f32 %v2134, %v2581
      %v2866 = vmax.f32 %v2142, %v2583
      %v2867 = vmax.f32 %v2150, %v2585
      %v2868 = vmax.f32 %v2149, %v2587
      %v2869 = vmax.f32 %v2151, %v2589
      %v2870 = vmax.f32 %v2159, %v2591
      %v2871 = vmax.f32 %v2167, %v2593
      %v2872 = vmax.f32 %v2166, %v2595
      %v2873 = vmax.f32 %v2168, %v2597
      %v2874 = vmax.f32 %v2176, %v2599
      %v2875 = vmax.f32 %v2184, %v2601
      %v2876 = vmax.f32 %v2183, %v2603
      %v2877 = vmax.f32 %v2185, %v2605
      %v2878 = vmax.f32 %v2193, %v2607
      %v2879 = vmax.f32 %v2201, %v2609
      %v2880 = vmax.f32 %v2200, %v2611
      %v2881 = vmax.f32 %v2202, %v2613
      %v2882 = vmax.f32 %v2210, %v2615
      %v2883 = vmax.f32 %v2218, %v2617
      %v2884 = vmax.f32 %v2217, %v2619
      %v2885 = vmax.f32 %v2219, %v2621
      %v2886 = vmax.f32 %v2227, %v2623
      %v2887 = vmax.f32 %v2235, %v2625
      %v2888 = vmax.f32 %v2234, %v2627
      %v2889 = vmax.f32 %v2236, %v2629
      %v2890 = vmax.f32 %v2244, %v2631
      %v2891 = vmax.f32 %v2252, %v2633
      %v2892 = vmax.f32 %v2251, %v2635
      %v2893 = vmax.f32 %v2253, %v2637
      %v2894 = vmax.f32 %v2766, %v2774
      %v2895 = vmax.f32 %v2767, %v2775
      %v2896 = vmax.f32 %v2768, %v2776
      %v2897 = vmax.f32 %v2769, %v2777
      %v2898 = vmax.f32 %v2770, %v2778
      %v2899 = vmax.f32 %v2771, %v2779
      %v2900 = vmax.f32 %v2772, %v2780
      %v2901 = vmax.f32 %v2773, %v2781
      %v2902 = vmax.f32 %v2782, %v2790
      %v2903 = vmax.f32 %v2783, %v2791
      %v2904 = vmax.f32 %v2784, %v2792
      %v2905 = vmax.f32 %v2785, %v2793
      %v2906 = vmax.f32 %v2786, %v2794
      %v2907 = vmax.f32 %v2787, %v2795
      %v2908 = vmax.f32 %v2788, %v2796
      %v2909 = vmax.f32 %v2789, %v2797
      %v2910 = vmax.f32 %v2798, %v2806
      %v2911 = vmax.f32 %v2799, %v2807
      %v2912 = vmax.f32 %v2800, %v2808
      %v2913 = vmax.f32 %v2801, %v2809
      %v2914 = vmax.f32 %v2802, %v2810
      %v2915 = vmax.f32 %v2803, %v2811
      %v2916 = vmax.f32 %v2804, %v2812
      %v2917 = vmax.f32 %v2805, %v2813
      %v2918 = vmax.f32 %v2814, %v2822
      %v2919 = vmax.f32 %v2815, %v2823
      %v2920 = vmax.f32 %v2816, %v2824
      %v2921 = vmax.f32 %v2817, %v2825
      %v2922 = vmax.f32 %v2818, %v2826
      %v2923 = vmax.f32 %v2819, %v2827
      %v2924 = vmax.f32 %v2820, %v2828
      %v2925 = vmax.f32 %v2821, %v2829
      %v2926 = vmax.f32 %v2830, %v2838
      %v2927 = vmax.f32 %v2831, %v2839
      %v2928 = vmax.f32 %v2832, %v2840
      %v2929 = vmax.f32 %v2833, %v2841
      %v2930 = vmax.f32 %v2834, %v2842
      %v2931 = vmax.f32 %v2835, %v2843
      %v2932 = vmax.f32 %v2836, %v2844
      %v2933 = vmax.f32 %v2837, %v2845
      %v2934 = vmax.f32 %v2846, %v2854
      %v2935 = vmax.f32 %v2847, %v2855
      %v2936 = vmax.f32 %v2848, %v2856
      %v2937 = vmax.f32 %v2849, %v2857
      %v2938 = vmax.f32 %v2850, %v2858
      %v2939 = vmax.f32 %v2851, %v2859
      %v2940 = vmax.f32 %v2852, %v2860
      %v2941 = vmax.f32 %v2853, %v2861
      %v2942 = vmax.f32 %v2862, %v2870
      %v2943 = vmax.f32 %v2863, %v2871
      %v2944 = vmax.f32 %v2864, %v2872
      %v2945 = vmax.f32 %v2865, %v2873
      %v2946 = vmax.f32 %v2866, %v2874
      %v2947 = vmax.f32 %v2867, %v2875
      %v2948 = vmax.f32 %v2868, %v2876
      %v2949 = vmax.f32 %v2869, %v2877
      %v2950 = vmax.f32 %v2878, %v2886
      %v2951 = vmax.f32 %v2879, %v2887
      %v2952 = vmax.f32 %v2880, %v2888
      %v2953 = vmax.f32 %v2881, %v2889
      %v2954 = vmax.f32 %v2882, %v2890
      %v2955 = vmax.f32 %v2883, %v2891
      %v2956 = vmax.f32 %v2884, %v2892
      %v2957 = vmax.f32 %v2885, %v2893
      %v3022 = vlaneseq
      %v3023 = vshrl.u32 %v3022, 7
      %v3024 = vsub.s32 0, %v3023
      %v3025 = vrot.slane %v2894, %v3024
      %v3026 = vlaneseq
      %v3027 = vshrl.u32 %v3026, 7
      %v3028 = vsub.s32 0, %v3027
      %v3029 = vrot.slane %v2895, %v3028
      %v3030 = vlaneseq
      %v3031 = vshrl.u32 %v3030, 7
      %v3032 = vsub.s32 0, %v3031
      %v3033 = vrot.slane %v2896, %v3032
      %v3034 = vlaneseq
      %v3035 = vshrl.u32 %v3034, 7
      %v3036 = vsub.s32 0, %v3035
      %v3037 = vrot.slane %v2897, %v3036
      %v3038 = vlaneseq
      %v3039 = vshrl.u32 %v3038, 7
      %v3040 = vsub.s32 0, %v3039
      %v3041 = vrot.slane %v2898, %v3040
      %v3042 = vlaneseq
      %v3043 = vshrl.u32 %v3042, 7
      %v3044 = vsub.s32 0, %v3043
      %v3045 = vrot.slane %v2899, %v3044
      %v3046 = vlaneseq
      %v3047 = vshrl.u32 %v3046, 7
      %v3048 = vsub.s32 0, %v3047
      %v3049 = vrot.slane %v2900, %v3048
      %v3050 = vlaneseq
      %v3051 = vshrl.u32 %v3050, 7
      %v3052 = vsub.s32 0, %v3051
      %v3053 = vrot.slane %v2901, %v3052
      %v3054 = vlaneseq
      %v3055 = vshrl.u32 %v3054, 7
      %v3056 = vsub.s32 0, %v3055
      %v3057 = vrot.slane %v2902, %v3056
      %v3058 = vlaneseq
      %v3059 = vshrl.u32 %v3058, 7
      %v3060 = vsub.s32 0, %v3059
      %v3061 = vrot.slane %v2903, %v3060
      %v3062 = vlaneseq
      %v3063 = vshrl.u32 %v3062, 7
      %v3064 = vsub.s32 0, %v3063
      %v3065 = vrot.slane %v2904, %v3064
      %v3066 = vlaneseq
      %v3067 = vshrl.u32 %v3066, 7
      %v3068 = vsub.s32 0, %v3067
      %v3069 = vrot.slane %v2905, %v3068
      %v3070 = vlaneseq
      %v3071 = vshrl.u32 %v3070, 7
      %v3072 = vsub.s32 0, %v3071
      %v3073 = vrot.slane %v2906, %v3072
      %v3074 = vlaneseq
      %v3075 = vshrl.u32 %v3074, 7
      %v3076 = vsub.s32 0, %v3075
      %v3077 = vrot.slane %v2907, %v3076
      %v3078 = vlaneseq
      %v3079 = vshrl.u32 %v3078, 7
      %v3080 = vsub.s32 0, %v3079
      %v3081 = vrot.slane %v2908, %v3080
      %v3082 = vlaneseq
      %v3083 = vshrl.u32 %v3082, 7
      %v3084 = vsub.s32 0, %v3083
      %v3085 = vrot.slane %v2909, %v3084
      %v3086 = vlaneseq
      %v3087 = vshrl.u32 %v3086, 7
      %v3088 = vsub.s32 0, %v3087
      %v3089 = vrot.slane %v2910, %v3088
      %v3090 = vlaneseq
      %v3091 = vshrl.u32 %v3090, 7
      %v3092 = vsub.s32 0, %v3091
      %v3093 = vrot.slane %v2911, %v3092
      %v3094 = vlaneseq
      %v3095 = vshrl.u32 %v3094, 7
      %v3096 = vsub.s32 0, %v3095
      %v3097 = vrot.slane %v2912, %v3096
      %v3098 = vlaneseq
      %v3099 = vshrl.u32 %v3098, 7
      %v3100 = vsub.s32 0, %v3099
      %v3101 = vrot.slane %v2913, %v3100
      %v3102 = vlaneseq
      %v3103 = vshrl.u32 %v3102, 7
      %v3104 = vsub.s32 0, %v3103
      %v3105 = vrot.slane %v2914, %v3104
      %v3106 = vlaneseq
      %v3107 = vshrl.u32 %v3106, 7
      %v3108 = vsub.s32 0, %v3107
      %v3109 = vrot.slane %v2915, %v3108
      %v3110 = vlaneseq
      %v3111 = vshrl.u32 %v3110, 7
      %v3112 = vsub.s32 0, %v3111
      %v3113 = vrot.slane %v2916, %v3112
      %v3114 = vlaneseq
      %v3115 = vshrl.u32 %v3114, 7
      %v3116 = vsub.s32 0, %v3115
      %v3117 = vrot.slane %v2917, %v3116
      %v3118 = vlaneseq
      %v3119 = vshrl.u32 %v3118, 7
      %v3120 = vsub.s32 0, %v3119
      %v3121 = vrot.slane %v2918, %v3120
      %v3122 = vlaneseq
      %v3123 = vshrl.u32 %v3122, 7
      %v3124 = vsub.s32 0, %v3123
      %v3125 = vrot.slane %v2919, %v3124
      %v3126 = vlaneseq
      %v3127 = vshrl.u32 %v3126, 7
      %v3128 = vsub.s32 0, %v3127
      %v3129 = vrot.slane %v2920, %v3128
      %v3130 = vlaneseq
      %v3131 = vshrl.u32 %v3130, 7
      %v3132 = vsub.s32 0, %v3131
      %v3133 = vrot.slane %v2921, %v3132
      %v3134 = vlaneseq
      %v3135 = vshrl.u32 %v3134, 7
      %v3136 = vsub.s32 0, %v3135
      %v3137 = vrot.slane %v2922, %v3136
      %v3138 = vlaneseq
      %v3139 = vshrl.u32 %v3138, 7
      %v3140 = vsub.s32 0, %v3139
      %v3141 = vrot.slane %v2923, %v3140
      %v3142 = vlaneseq
      %v3143 = vshrl.u32 %v3142, 7
      %v3144 = vsub.s32 0, %v3143
      %v3145 = vrot.slane %v2924, %v3144
      %v3146 = vlaneseq
      %v3147 = vshrl.u32 %v3146, 7
      %v3148 = vsub.s32 0, %v3147
      %v3149 = vrot.slane %v2925, %v3148
      %v3150 = vlaneseq
      %v3151 = vshrl.u32 %v3150, 7
      %v3152 = vsub.s32 0, %v3151
      %v3153 = vrot.slane %v2926, %v3152
      %v3154 = vlaneseq
      %v3155 = vshrl.u32 %v3154, 7
      %v3156 = vsub.s32 0, %v3155
      %v3157 = vrot.slane %v2927, %v3156
      %v3158 = vlaneseq
      %v3159 = vshrl.u32 %v3158, 7
      %v3160 = vsub.s32 0, %v3159
      %v3161 = vrot.slane %v2928, %v3160
      %v3162 = vlaneseq
      %v3163 = vshrl.u32 %v3162, 7
      %v3164 = vsub.s32 0, %v3163
      %v3165 = vrot.slane %v2929, %v3164
      %v3166 = vlaneseq
      %v3167 = vshrl.u32 %v3166, 7
      %v3168 = vsub.s32 0, %v3167
      %v3169 = vrot.slane %v2930, %v3168
      %v3170 = vlaneseq
      %v3171 = vshrl.u32 %v3170, 7
      %v3172 = vsub.s32 0, %v3171
      %v3173 = vrot.slane %v2931, %v3172
      %v3174 = vlaneseq
      %v3175 = vshrl.u32 %v3174, 7
      %v3176 = vsub.s32 0, %v3175
      %v3177 = vrot.slane %v2932, %v3176
      %v3178 = vlaneseq
      %v3179 = vshrl.u32 %v3178, 7
      %v3180 = vsub.s32 0, %v3179
      %v3181 = vrot.slane %v2933, %v3180
      %v3182 = vlaneseq
      %v3183 = vshrl.u32 %v3182, 7
      %v3184 = vsub.s32 0, %v3183
      %v3185 = vrot.slane %v2934, %v3184
      %v3186 = vlaneseq
      %v3187 = vshrl.u32 %v3186, 7
      %v3188 = vsub.s32 0, %v3187
      %v3189 = vrot.slane %v2935, %v3188
      %v3190 = vlaneseq
      %v3191 = vshrl.u32 %v3190, 7
      %v3192 = vsub.s32 0, %v3191
      %v3193 = vrot.slane %v2936, %v3192
      %v3194 = vlaneseq
      %v3195 = vshrl.u32 %v3194, 7
      %v3196 = vsub.s32 0, %v3195
      %v3197 = vrot.slane %v2937, %v3196
      %v3198 = vlaneseq
      %v3199 = vshrl.u32 %v3198, 7
      %v3200 = vsub.s32 0, %v3199
      %v3201 = vrot.slane %v2938, %v3200
      %v3202 = vlaneseq
      %v3203 = vshrl.u32 %v3202, 7
      %v3204 = vsub.s32 0, %v3203
      %v3205 = vrot.slane %v2939, %v3204
      %v3206 = vlaneseq
      %v3207 = vshrl.u32 %v3206, 7
      %v3208 = vsub.s32 0, %v3207
      %v3209 = vrot.slane %v2940, %v3208
      %v3210 = vlaneseq
      %v3211 = vshrl.u32 %v3210, 7
      %v3212 = vsub.s32 0, %v3211
      %v3213 = vrot.slane %v2941, %v3212
      %v3214 = vlaneseq
      %v3215 = vshrl.u32 %v3214, 7
      %v3216 = vsub.s32 0, %v3215
      %v3217 = vrot.slane %v2942, %v3216
      %v3218 = vlaneseq
      %v3219 = vshrl.u32 %v3218, 7
      %v3220 = vsub.s32 0, %v3219
      %v3221 = vrot.slane %v2943, %v3220
      %v3222 = vlaneseq
      %v3223 = vshrl.u32 %v3222, 7
      %v3224 = vsub.s32 0, %v3223
      %v3225 = vrot.slane %v2944, %v3224
      %v3226 = vlaneseq
      %v3227 = vshrl.u32 %v3226, 7
      %v3228 = vsub.s32 0, %v3227
      %v3229 = vrot.slane %v2945, %v3228
      %v3230 = vlaneseq
      %v3231 = vshrl.u32 %v3230, 7
      %v3232 = vsub.s32 0, %v3231
      %v3233 = vrot.slane %v2946, %v3232
      %v3234 = vlaneseq
      %v3235 = vshrl.u32 %v3234, 7
      %v3236 = vsub.s32 0, %v3235
      %v3237 = vrot.slane %v2947, %v3236
      %v3238 = vlaneseq
      %v3239 = vshrl.u32 %v3238, 7
      %v3240 = vsub.s32 0, %v3239
      %v3241 = vrot.slane %v2948, %v3240
      %v3242 = vlaneseq
      %v3243 = vshrl.u32 %v3242, 7
      %v3244 = vsub.s32 0, %v3243
      %v3245 = vrot.slane %v2949, %v3244
      %v3246 = vlaneseq
      %v3247 = vshrl.u32 %v3246, 7
      %v3248 = vsub.s32 0, %v3247
      %v3249 = vrot.slane %v2950, %v3248
      %v3250 = vlaneseq
      %v3251 = vshrl.u32 %v3250, 7
      %v3252 = vsub.s32 0, %v3251
      %v3253 = vrot.slane %v2951, %v3252
      %v3254 = vlaneseq
      %v3255 = vshrl.u32 %v3254, 7
      %v3256 = vsub.s32 0, %v3255
      %v3257 = vrot.slane %v2952, %v3256
      %v3258 = vlaneseq
      %v3259 = vshrl.u32 %v3258, 7
      %v3260 = vsub.s32 0, %v3259
      %v3261 = vrot.slane %v2953, %v3260
      %v3262 = vlaneseq
      %v3263 = vshrl.u32 %v3262, 7
      %v3264 = vsub.s32 0, %v3263
      %v3265 = vrot.slane %v2954, %v3264
      %v3266 = vlaneseq
      %v3267 = vshrl.u32 %v3266, 7
      %v3268 = vsub.s32 0, %v3267
      %v3269 = vrot.slane %v2955, %v3268
      %v3270 = vlaneseq
      %v3271 = vshrl.u32 %v3270, 7
      %v3272 = vsub.s32 0, %v3271
      %v3273 = vrot.slane %v2956, %v3272
      %v3274 = vlaneseq
      %v3275 = vshrl.u32 %v3274, 7
      %v3276 = vsub.s32 0, %v3275
      %v3277 = vrot.slane %v2957, %v3276
      %vm3278 = vcmask 1041409
      %v3279 = vsel %vm3278, %v3029, %v3025
      %vm3280 = vcmask 1042434
      %v3281 = vsel %vm3280, %v3033, %v3279
      %vm3282 = vcmask 1043459
      %v3283 = vsel %vm3282, %v3037, %v3281
      %vm3284 = vcmask 1044484
      %v3285 = vsel %vm3284, %v3041, %v3283
      %vm3286 = vcmask 1045509
      %v3287 = vsel %vm3286, %v3045, %v3285
      %vm3288 = vcmask 1046534
      %v3289 = vsel %vm3288, %v3049, %v3287
      %vm3290 = vcmask 1047559
      %v3291 = vsel %vm3290, %v3053, %v3289
      %v3292 = vsel %vm3278, %v3061, %v3057
      %v3293 = vsel %vm3280, %v3065, %v3292
      %v3294 = vsel %vm3282, %v3069, %v3293
      %v3295 = vsel %vm3284, %v3073, %v3294
      %v3296 = vsel %vm3286, %v3077, %v3295
      %v3297 = vsel %vm3288, %v3081, %v3296
      %v3298 = vsel %vm3290, %v3085, %v3297
      %v3299 = vsel %vm3278, %v3093, %v3089
      %v3300 = vsel %vm3280, %v3097, %v3299
      %v3301 = vsel %vm3282, %v3101, %v3300
      %v3302 = vsel %vm3284, %v3105, %v3301
      %v3303 = vsel %vm3286, %v3109, %v3302
      %v3304 = vsel %vm3288, %v3113, %v3303
      %v3305 = vsel %vm3290, %v3117, %v3304
      %v3306 = vsel %vm3278, %v3125, %v3121
      %v3307 = vsel %vm3280, %v3129, %v3306
      %v3308 = vsel %vm3282, %v3133, %v3307
      %v3309 = vsel %vm3284, %v3137, %v3308
      %v3310 = vsel %vm3286, %v3141, %v3309
      %v3311 = vsel %vm3288, %v3145, %v3310
      %v3312 = vsel %vm3290, %v3149, %v3311
      %v3313 = vsel %vm3278, %v3157, %v3153
      %v3314 = vsel %vm3280, %v3161, %v3313
      %v3315 = vsel %vm3282, %v3165, %v3314
      %v3316 = vsel %vm3284, %v3169, %v3315
      %v3317 = vsel %vm3286, %v3173, %v3316
      %v3318 = vsel %vm3288, %v3177, %v3317
      %v3319 = vsel %vm3290, %v3181, %v3318
      %v3320 = vsel %vm3278, %v3189, %v3185
      %v3321 = vsel %vm3280, %v3193, %v3320
      %v3322 = vsel %vm3282, %v3197, %v3321
      %v3323 = vsel %vm3284, %v3201, %v3322
      %v3324 = vsel %vm3286, %v3205, %v3323
      %v3325 = vsel %vm3288, %v3209, %v3324
      %v3326 = vsel %vm3290, %v3213, %v3325
      %v3327 = vsel %vm3278, %v3221, %v3217
      %v3328 = vsel %vm3280, %v3225, %v3327
      %v3329 = vsel %vm3282, %v3229, %v3328
      %v3330 = vsel %vm3284, %v3233, %v3329
      %v3331 = vsel %vm3286, %v3237, %v3330
      %v3332 = vsel %vm3288, %v3241, %v3331
      %v3333 = vsel %vm3290, %v3245, %v3332
      %v3334 = vsel %vm3278, %v3253, %v3249
      %v3335 = vsel %vm3280, %v3257, %v3334
      %v3336 = vsel %vm3282, %v3261, %v3335
      %v3337 = vsel %vm3284, %v3265, %v3336
      %v3338 = vsel %vm3286, %v3269, %v3337
      %v3339 = vsel %vm3288, %v3273, %v3338
      %v3340 = vsel %vm3290, %v3277, %v3339
      %3349 = vst [vmem:[%s170] sm:$0xff] %v3291
      %3350 = vst [vmem:[%s170 + $0x8] sm:$0xff] %v3298
      %3351 = vst [vmem:[%s170 + $0x10] sm:$0xff] %v3305
      %3352 = vst [vmem:[%s170 + $0x18] sm:$0xff] %v3312
      %3353 = vst [vmem:[%s170 + $0x20] sm:$0xff] %v3319
      %3354 = vst [vmem:[%s170 + $0x28] sm:$0xff] %v3326
      %3355 = vst [vmem:[%s170 + $0x30] sm:$0xff] %v3333
      %3356 = vst [vmem:[%s170 + $0x38] sm:$0xff] %v3340
      %p3357 = scmp.lt.s32.totalorder %s14, 1
      %s3358 = scalar_select %p3357, %s14, 1
      %s3359 = smul.addr %s3358, 8
      %s3360 = smul.addr %s3359, 8
      %s3361 = scalar_lea.vmem %s3, %s3360
      // Predicated region
      $region33: #{_lambda_.6} parent=31 // pred_check
        %p3362 = pneg %p100
      $region34: #{_lambda_.6} parent=31 // pred_check_branch
        %3364 = sbr.rel (%p3362) target = $region36
      $region35: #{_lambda_.6} parent=31 // pred_region
        _
      $region36: #{_lambda_.6} parent=31 // pred_fallthru
        _
    $region32: #{_lambda_.6} parent=5 // pred_fallthru
      _
    %p3365 = scmp.le.s32.totalorder 2, %s9
    // Predicated region
    $region37: #{_lambda_.6} parent=5 // pred_check
      %p3366 = pneg %p3365
    $region38: #{_lambda_.6} parent=5 // pred_check_branch
      %3368 = sbr.rel (%p3366) target = $region40
    $region39: #{_lambda_.6} parent=5 // pred_region
      %s3369 = ssub.s32 %s9, 2
      // Predicated region
      $region41: #{_lambda_.6} parent=39 // pred_check
        %p3370 = pneg %p106
      $region42: #{_lambda_.6} parent=39 // pred_check_branch
        %3372 = sbr.rel (%p3370) target = $region44
      $region43: #{_lambda_.6} parent=39 // pred_region
        %p3373 = scmp.lt.s32.totalorder %s15, 1
        %s3374 = scalar_select %p3373, %s15, 1
        %s3375 = smul.addr %s3374, 8
        %s3376 = smul.addr %s3375, 8
        %s3377 = scalar_lea.vmem %s3, %s3376
      $region44: #{_lambda_.6} parent=39 // pred_fallthru
        _
    $region40: #{_lambda_.6} parent=5 // pred_fallthru
      _
  $region6: #{_lambda_.6} parent=0 // loop_footer
    %s13 = sadd.s32 1, %s9
  $region7: #{_lambda_.6} parent=0 // loop_footer_branch
    %8 = sbr.rel target = $region3
  $region8: #{_lambda_.6} parent=0 // loop_exit
    _

// kernel: _lambda_.11
$region0: #{_lambda_.11}
  #allocation0 [shape = 'u32[]', space=smem, size = 0x4, offset = 0x4, fixed_abs, tag = 'smem constant byte address 0x4 - core index']
  #allocation1 [shape = 'u32[144,128]{1,0:T(1,128)}', space=vmem, size = 0x12000, scoped, tag = 'internal scratch']
  %s0 = inlined_call_operand.vmem [shape: f32[2,2,2,128], index: 0, kind: input, shape index: {}]
  %s1 = inlined_call_operand.vmem [shape: bf16[128,128], index: 1, kind: input, shape index: {}]
  %s2 = inlined_call_operand.vmem [shape: f32[1,128], index: 2, kind: input, shape index: {}]
  %s3 = inlined_call_operand.hbm [shape: f32[2,128], index: 3, kind: output, shape index: {}]
  %s4 = sld [smem:[#allocation0]]
  $region22: #{_lambda_.11} parent=0
    _
  %s6 = ssub.s32 1, %s4
  %s7 = scalar_select 0, %s6, %s4
  $region1: #{_lambda_.11} parent=0
    #allocation2 [shape = 'u8[1024]{0}', space=vmem, size = 0x400, scoped, tag = 'output window, operand 0, single buffered']
    #allocation3 [shape = 's32[1]{0}', space=sflag, size = 0x4, scoped, tag = 'scoped memory for _lambda_.11']
    %8 = vsyncpa [#allocation3], 0
    // Predicated region
    $region2: #{_lambda_.11} parent=1 // pred_check
      _
    $region3: #{_lambda_.11} parent=1 // pred_check_branch
      %10 = sbr.rel (0) target = $region5
    $region4: #{_lambda_.11} parent=1 // pred_region
      _
    $region5: #{_lambda_.11} parent=1 // pred_fallthru
      _
    // Predicated region
    $region6: #{_lambda_.11} parent=1 // pred_check
      _
    $region7: #{_lambda_.11} parent=1 // pred_check_branch
      %12 = sbr.rel (0) target = $region9
    $region8: #{_lambda_.11} parent=1 // pred_region
      _
    $region9: #{_lambda_.11} parent=1 // pred_fallthru
      _
    // Predicated region
    $region10: #{_lambda_.11} parent=1 // pred_check
      _
    $region11: #{_lambda_.11} parent=1 // pred_check_branch
      %14 = sbr.rel (0) target = $region13
    $region12: #{_lambda_.11} parent=1 // pred_region
      _
    $region13: #{_lambda_.11} parent=1 // pred_fallthru
      _
    %v16 = vld [vmem:[%s0] sm:$0x3]
    %v17 = vld [vmem:[%s0 + $0x2] sm:$0x3]
    %v18 = vld [vmem:[%s0 + $0x4] sm:$0x3]
    %v19 = vld [vmem:[%s0 + $0x6] sm:$0x3]
    %vm20 = vcmask 1041408
    %v21 = vsel %vm20, %v16, 0.0
    %v22 = vsel %vm20, %v17, 0.0
    %v23 = vadd.f32 %v21, %v22
    %v24 = vrot.slane %v23, 4
    %v25 = vadd.f32 %v23, %v24
    %v26 = vrot.slane %v25, 2
    %v27 = vadd.f32 %v25, %v26
    %v28 = vrot.slane %v27, 1
    %v29 = vadd.f32 %v27, %v28
    %v30 = vsel %vm20, %v18, 0.0
    %v31 = vsel %vm20, %v19, 0.0
    %v32 = vadd.f32 %v30, %v31
    %v33 = vrot.slane %v32, 4
    %v34 = vadd.f32 %v32, %v33
    %v35 = vrot.slane %v34, 2
    %v36 = vadd.f32 %v34, %v35
    %v37 = vrot.slane %v36, 1
    %v38 = vadd.f32 %v36, %v37
    %v39 = vrcp.pop 4.0
    %v40 = vmul.f32 %v29, %v39
    %v41 = vmul.f32 %v38, %v39
    %v42 = vpack.c.bf16 %v40, %v40
    %v43 = vpack.c.bf16 %v41, %v41
    %v44 = vld [vmem:[%s1] sm:$0xf]
    %v45 = vld [vmem:[%s1 + $0x4] sm:$0xf]
    %v46 = vld [vmem:[%s1 + $0x8] sm:$0xf]
    %v47 = vld [vmem:[%s1 + $0xc] sm:$0xf]
    %v48 = vld [vmem:[%s1 + $0x10] sm:$0xf]
    %v49 = vld [vmem:[%s1 + $0x14] sm:$0xf]
    %v50 = vld [vmem:[%s1 + $0x18] sm:$0xf]
    %v51 = vld [vmem:[%s1 + $0x1c] sm:$0xf]
    %v52 = vld [vmem:[%s1 + $0x20] sm:$0xf]
    %v53 = vld [vmem:[%s1 + $0x24] sm:$0xf]
    %v54 = vld [vmem:[%s1 + $0x28] sm:$0xf]
    %v55 = vld [vmem:[%s1 + $0x2c] sm:$0xf]
    %v56 = vld [vmem:[%s1 + $0x30] sm:$0xf]
    %v57 = vld [vmem:[%s1 + $0x34] sm:$0xf]
    %v58 = vld [vmem:[%s1 + $0x38] sm:$0xf]
    %v59 = vld [vmem:[%s1 + $0x3c] sm:$0xf]
    %v60 = vld [vmem:[%s2] sm:$0x1]
    %v62 = vlaneseq
    %v63 = vshrl.u32 %v62, 7
    %v64 = vsub.s32 0, %v63
    %v65 = vrot.slane %v60, %v64
    %v69 = vunpack.c.l.b16 %v42
    %v70 = vunpack.c.l.b16 %v43
    %vm71 = vcmask 1041409
    %v72 = vsel %vm71, %v70, %v69
    %v73 = vpack.c.b16 %v72, %v72
    %v91 = vunpack.c.l.b16 %v44
    %v92 = vunpack.c.l.b16 %v45
    %v93 = vunpack.c.l.b16 %v46
    %v94 = vunpack.c.l.b16 %v47
    %v95 = vunpack.c.l.b16 %v48
    %v96 = vunpack.c.l.b16 %v49
    %v97 = vunpack.c.l.b16 %v50
    %v98 = vunpack.c.l.b16 %v51
    %v99 = vunpack.c.l.b16 %v52
    %v100 = vunpack.c.l.b16 %v53
    %v101 = vunpack.c.l.b16 %v54
    %v102 = vunpack.c.l.b16 %v55
    %v103 = vunpack.c.l.b16 %v56
    %v104 = vunpack.c.l.b16 %v57
    %v105 = vunpack.c.l.b16 %v58
    %v106 = vunpack.c.l.b16 %v59
    %v107 = vpack.c.b16 %v92, %v91
    %v108 = vpack.c.b16 %v94, %v93
    %v109 = vpack.c.b16 %v96, %v95
    %v110 = vpack.c.b16 %v98, %v97
    %v111 = vpack.c.b16 %v100, %v99
    %v112 = vpack.c.b16 %v102, %v101
    %v113 = vpack.c.b16 %v104, %v103
    %v114 = vpack.c.b16 %v106, %v105
    %123 = vmatprep.subr.bf16.mxu0 0
    %124 = vmatpush1.bf16.msra.mxu0 %v107
    %125 = vmatprep.subr.bf16.mxu0 0
    %126 = vmatpush1.bf16.msra.mxu0 %v108
    %127 = vmatprep.subr.bf16.mxu0 0
    %128 = vmatpush1.bf16.msra.mxu0 %v109
    %129 = vmatprep.subr.bf16.mxu0 0
    %130 = vmatpush1.bf16.msra.mxu0 %v110
    %131 = vmatprep.subr.bf16.mxu0 0
    %132 = vmatpush1.bf16.msra.mxu0 %v111
    %133 = vmatprep.subr.bf16.mxu0 0
    %134 = vmatpush1.bf16.msra.mxu0 %v112
    %135 = vmatprep.subr.bf16.mxu0 0
    %136 = vmatpush1.bf16.msra.mxu0 %v113
    %137 = vmatprep.subr.bf16.mxu0 0
    %138 = vmatpush1.bf16.msra.mxu0 %v114
    %139 = vmatprep.subr.bf16.mxu0 0
    %140 = vmatpush1.bf16.msra.mxu0 0
    %141 = vmatprep.subr.bf16.mxu0 0
    %142 = vmatpush1.bf16.msra.mxu0 0
    %143 = vmatprep.subr.bf16.mxu0 0
    %144 = vmatpush1.bf16.msra.mxu0 0
    %145 = vmatprep.subr.bf16.mxu0 0
    %146 = vmatpush1.bf16.msra.mxu0 0
    %147 = vmatprep.subr.bf16.mxu0 0
    %148 = vmatpush1.bf16.msra.mxu0 0
    %149 = vmatprep.subr.bf16.mxu0 0
    %150 = vmatpush1.bf16.msra.mxu0 0
    %151 = vmatprep.subr.bf16.mxu0 0
    %152 = vmatpush1.bf16.msra.mxu0 0
    %153 = vmatprep.subr.bf16.mxu0 0
    %154 = vmatpush1.bf16.msra.mxu0 0
    %155 = vmatprep.mubr.bf16.mxu0 0
    %156 = vmatmul.mubr.bf16.gmra.mrb[0].mxu0 %v73
    %v157 = vpop.f32.mrb[0].mxu0
    %v158 = vadd.f32 %v65, %v157
    %v159 = vpop.f32.mrb[0].mxu0
    %v160 = vpop.f32.mrb[0].mxu0
    %v161 = vpop.f32.mrb[0].mxu0
    %162 = vdwg.mxu0
    %163 = vst [vmem:[#allocation2] sm:$0x3] %v158
    // Predicated region
    $region14: #{_lambda_.11} parent=1 // pred_check
      _
    $region15: #{_lambda_.11} parent=1 // pred_check_branch
      %165 = sbr.rel (0) target = $region17
    $region16: #{_lambda_.11} parent=1 // pred_region
      %s167 = ssub.s32 32, 32
      %168 = vsyncadd [#allocation3], %s167
      %s170 = sshll.u32 [#allocation2], 4
      %s171 = int_to_ptr.vmem [resolvable:$true] %s170
      %173 = dma.vmem_to_hbm [thread:$0]  %s171, 32, %s3, [#allocation3]
    $region17: #{_lambda_.11} parent=1 // pred_fallthru
      _
    // Predicated region
    $region18: #{_lambda_.11} parent=1 // pred_check
      _
    $region19: #{_lambda_.11} parent=1 // pred_check_branch
      %175 = sbr.rel (0) target = $region21
    $region20: #{_lambda_.11} parent=1 // pred_region
      %176 = dma.done [#allocation3], 32
    $region21: #{_lambda_.11} parent=1 // pred_fallthru
      _
    %177 = vsyncpa [#allocation3], 1

</llo_original>
